<compile_context>
chip_gen: v7x
topology: tpu7x:2x2x1
jax: 0.10.0
libtpu: 0.0.40
codegen_flags: <defaults>
</compile_context>

<pallas_src>
import functools
import math

import numpy as np
import jax
import jax.numpy as jnp
from jax import lax
from jax.experimental import pallas as pl
from jax.experimental.pallas import tpu as pltpu


# ------------------------------ Pallas kernel ------------------------------ #

def _rrdb_kernel(x_ref, wd_ref, bd_ref, wb_ref, bb_ref, o_ref,
                 feat_ref, patch_ref, *,
                 H, W, K, in_ch, growth, n_layers, n_rdb,
                 C_pad, C_total, OFF, SPAN, b_tile,
                 act_slope, post_dense_scale, rrdb_res_scale):
    """One RRDB forward for b_tile images (side-by-side along lanes).

    x_ref    : (b_tile, in_ch, H*W)                 input images, spatial flat
    wd_ref   : (n_rdb, n_layers, growth, K*K*C_pad) packed dense conv weights
                (dense_scale folded; columns [cin_l*K*K:) are zero and unread)
    bd_ref   : (n_rdb, n_layers, growth, 1)         dense biases (scale folded)
    wb_ref   : (n_rdb, in_ch, C_total)              1x1 bottleneck (rdb_res_scale folded)
    bb_ref   : (n_rdb, in_ch, 1)
    o_ref    : (b_tile, in_ch, H*W)
    feat_ref : (C_total, b_tile*SPAN)  f32  feature map, per-image zero halo
    patch_ref: (C_pad*K*K, b_tile*H*W) f32  incremental im2col cache
    """
    HW = H * W
    KK = K * K
    ph = K // 2
    f32 = jnp.float32

    # Zero only the halo columns that shifted tap reads can touch (rows
    # [0, C_pad)).  Cheap (aligned (C_pad, OFF) stores) and correct for any
    # megacore sharding of the "parallel" grid axis (see header comment).
    zblk = jnp.zeros((C_pad, OFF), f32)
    for b in range(b_tile):
        base = b * SPAN
        feat_ref[0:C_pad, base:base + OFF] = zblk
        feat_ref[0:C_pad, base + OFF + HW:base + SPAN] = zblk

    # RRDB input occupies channel rows [0, in_ch), interior columns.
    for b in range(b_tile):
        ib = b * SPAN + OFF
        feat_ref[0:in_ch, ib:ib + HW] = x_ref[b].astype(f32)

    # Column-wrap masks: a flat shift of sy*W + sx is invalid only where the
    # pixel column wraps across an image row; vertical out-of-range reads land
    # in the zero halo and need no mask.  (Hoisted out of all loops.)
    col = lax.broadcasted_iota(jnp.int32, (1, HW), 1) % W
    sx_mask = {sx: (col + sx >= 0) & (col + sx < W) for sx in range(-ph, ph + 1)}

    def extract(c0, gs):
        """im2col-extract taps of feat channels [c0, c0+gs) into the patch cache.

        Patch-row layout (must match _pack_params): the channel group starting
        at global channel c0 occupies rows [c0*KK, (c0+gs)*KK), tap-major within
        the group: row = c0*KK + k*gs + (c - c0)."""
        base_row = c0 * KK
        for b in range(b_tile):
            ib = b * SPAN + OFF
            for ky in range(K):
                for kx in range(K):
                    sy, sx = ky - ph, kx - ph
                    k = ky * K + kx
                    a = ib + sy * W + sx
                    t = feat_ref[c0:c0 + gs, a:a + HW]      # direct ref slice
                    if sx != 0:
                        t = jnp.where(sx_mask[sx], t, 0.0)
                    patch_ref[base_row + k * gs:base_row + (k + 1) * gs,
                              b * HW:(b + 1) * HW] = t

    for r in range(n_rdb):
        # Taps of the (new) RDB input channels -> patch rows [0, in_ch*KK).
        extract(0, in_ch)

        # ----- dense layers: KxK conv -> bias -> LeakyReLU (scale folded) -----
        for l in range(n_layers):
            cin = in_ch + l * growth
            rows = cin * KK
            w_l = wd_ref[r, l][:, 0:rows]                   # (growth, rows)
            z = jnp.dot(w_l, patch_ref[0:rows, :],
                        preferred_element_type=f32) + bd_ref[r, l]
            z = jnp.maximum(z, act_slope * z)               # LeakyReLU(0.2)
            if post_dense_scale != 1.0:                     # only if not folded
                z = z * post_dense_scale
            c0 = in_ch + l * growth
            for b in range(b_tile):
                ib = b * SPAN + OFF
                feat_ref[c0:c0 + growth, ib:ib + HW] = z[:, b * HW:(b + 1) * HW]
            if l < n_layers - 1:        # last layer's output is never conv'd again
                extract(c0, growth)

        # ----- 1x1 bottleneck (rdb_res_scale folded) + RDB residual -----------
        for b in range(b_tile):
            ib = b * SPAN + OFF
            full = feat_ref[0:C_total, ib:ib + HW]          # (C_total, HW)
            y = jnp.dot(wb_ref[r], full, preferred_element_type=f32) + bb_ref[r]
            y = y + full[0:in_ch, :]
            feat_ref[0:in_ch, ib:ib + HW] = y               # input of next RDB

    # ----- fused RRDB residual: body(x)*rrdb_res_scale + x ---------------------
    for b in range(b_tile):
        ib = b * SPAN + OFF
        out = feat_ref[0:in_ch, ib:ib + HW] * rrdb_res_scale + x_ref[b].astype(f32)
        o_ref[b] = out.astype(o_ref.dtype)


# --------------------------- wrapper / param packing ----------------------- #

def _pack_params(params, in_ch, growth, K, n_layers, dense_scale, rdb_res_scale):
    """Pack weights into a few dense, VMEM-resident arrays.

    Dense conv weights become (growth, K*K*C_pad) with columns ordered exactly
    like the patch-cache rows (channel-group-major, tap-major within a group)
    so layer l contracts one contiguous [0, cin_l*K*K) slab; columns past
    cin_l*K*K are zero and never read.  dense_scale is folded into wd/bd
    (exact for dense_scale >= 0), rdb_res_scale into wb/bb (always exact).
    """
    KK = K * K
    C_pad = in_ch + (n_layers - 1) * growth
    fold_dense = dense_scale >= 0.0
    s_d = dense_scale if fold_dense else 1.0

    def col_of(c, k):
        if c < in_ch:
            c0, gs = 0, in_ch
        else:
            g = (c - in_ch) // growth
            c0, gs = in_ch + g * growth, growth
        return c0 * KK + k * gs + (c - c0)

    wd, bd, wb, bb = [], [], [], []
    for p in params:
        wls, bls = [], []
        for (w, b) in p["dense"]:                           # w: (K, K, cin, growth)
            cin = w.shape[2]
            # source columns ordered (tap k, channel c)
            wt = jnp.transpose(w.reshape(KK, cin, growth), (2, 0, 1)
                               ).reshape(growth, KK * cin)
            order = np.empty(KK * cin, dtype=np.int32)      # order[dst] = src
            for k in range(KK):
                for c in range(cin):
                    order[col_of(c, k)] = k * cin + c
            wt = wt[:, order] * s_d
            wt = jnp.pad(wt, ((0, 0), (0, KK * (C_pad - cin))))
            wls.append(wt)
            bls.append(b.reshape(growth, 1) * s_d)
        wd.append(jnp.stack(wls))
        bd.append(jnp.stack(bls))
        wbt, bbt = p["bottle"]                               # wbt: (1,1,C_total,in_ch)
        wb.append(wbt[0, 0].T * rdb_res_scale)               # (in_ch, C_total)
        bb.append(bbt.reshape(in_ch, 1) * rdb_res_scale)
    post_dense_scale = 1.0 if fold_dense else dense_scale
    return (jnp.stack(wd), jnp.stack(bd), jnp.stack(wb), jnp.stack(bb),
            post_dense_scale)


def residual_rdb_forward(x_nchw, params, *, dense_scale=1.0, rdb_res_scale=0.2,
                         rrdb_res_scale=0.2, act_slope=0.2, b_tile=None):
    N, C, H, W = x_nchw.shape
    HW = H * W
    n_rdb = len(params)
    n_layers = len(params[0]["dense"])
    K = params[0]["dense"][0][0].shape[0]
    growth = params[0]["dense"][0][0].shape[3]
    ph = K // 2
    C_pad = C + (n_layers - 1) * growth
    C_total = C + n_layers * growth
    # Halo big enough for any KxK flat shift (ph*W + ph), rounded to a 128-lane
    # tile so interior loads/stores start lane-aligned (unmasked vst hot path).
    OFF = ((ph * W + ph + 127) // 128) * 128
    SPAN = 2 * OFF + HW

    if b_tile is None:
        # Coarsen the grid (serial loop on v5e/v6e) to amortize per-step
        # overhead and fatten matmul N, but keep >= 2 grid steps when possible
        # so both of v7x's TensorCores get work under "parallel" sharding.
        b_tile = N // 2 if (N >= 2 and N % 2 == 0) else 1
    assert N % b_tile == 0, "b_tile must divide the batch"

    wd, bd, wb, bb, post_dense_scale = _pack_params(
        params, C, growth, K, n_layers, dense_scale, rdb_res_scale)
    x_flat = x_nchw.reshape(N, C, HW)                        # NCHW -> (N,C,HW): free view

    kernel = functools.partial(
        _rrdb_kernel, H=H, W=W, K=K, in_ch=C, growth=growth,
        n_layers=n_layers, n_rdb=n_rdb, C_pad=C_pad, C_total=C_total,
        OFF=OFF, SPAN=SPAN, b_tile=b_tile, act_slope=act_slope,
        post_dense_scale=post_dense_scale, rrdb_res_scale=rrdb_res_scale)

    out_flat = pl.pallas_call(
        kernel,
        out_shape=jax.ShapeDtypeStruct((N, C, HW), x_nchw.dtype),
        grid_spec=pltpu.PrefetchScalarGridSpec(
            num_scalar_prefetch=0,
            grid=(N // b_tile,),
            in_specs=[
                pl.BlockSpec((b_tile, C, HW), lambda n: (n, 0, 0)),
                # weights/biases: constant index_map -> fetched once, VMEM-resident
                pl.BlockSpec(wd.shape, lambda n: (0, 0, 0, 0)),
                pl.BlockSpec(bd.shape, lambda n: (0, 0, 0, 0)),
                pl.BlockSpec(wb.shape, lambda n: (0, 0, 0)),
                pl.BlockSpec(bb.shape, lambda n: (0, 0, 0)),
            ],
            out_specs=pl.BlockSpec((b_tile, C, HW), lambda n: (n, 0, 0)),
            scratch_shapes=[
                pltpu.VMEM((C_total, b_tile * SPAN), jnp.float32),      # feature map
                pltpu.VMEM((C_pad * K * K, b_tile * HW), jnp.float32),  # im2col cache
            ],
        ),
        compiler_params=pltpu.CompilerParams(
            dimension_semantics=("parallel",),
            # Tiny at these shapes; raise toward ~100 MiB on v5e/v6e for
            # production sizes (v7x needs the H-tile axis instead, see TODO).
            vmem_limit_bytes=32 * 1024 * 1024),
    )(x_flat, wd, bd, wb, bb)
    return out_flat.reshape(N, C, H, W)


# ------------------------- parameters & JAX reference ---------------------- #

def init_params(key, in_channels, growth_rate, kernel_size, n_dense_layers, n_rdb):
    """PyTorch-Conv2d-style uniform init; weights stored HWIO."""
    params = []
    for _ in range(n_rdb):
        ch = in_channels
        dense = []
        for _ in range(n_dense_layers):
            key, k1, k2 = jax.random.split(key, 3)
            fan_in = ch * kernel_size * kernel_size
            bound = 1.0 / math.sqrt(fan_in)
            w = jax.random.uniform(k1, (kernel_size, kernel_size, ch, growth_rate),
                                   jnp.float32, -bound, bound)
            bb = jax.random.uniform(k2, (growth_rate,), jnp.float32, -bound, bound)
            dense.append((w, bb))
            ch += growth_rate
        key, k1, k2 = jax.random.split(key, 3)
        bound = 1.0 / math.sqrt(ch)
        wb = jax.random.uniform(k1, (1, 1, ch, in_channels), jnp.float32, -bound, bound)
        bnb = jax.random.uniform(k2, (in_channels,), jnp.float32, -bound, bound)
        params.append({"dense": dense, "bottle": (wb, bnb)})
    return params


def _conv_ref(x, w, b):
    y = lax.conv_general_dilated(x, w, (1, 1), "SAME",
                                 dimension_numbers=("NHWC", "HWIO", "NHWC"))
    return y + b


def residual_rdb_ref(x_nchw, params, *, dense_scale=1.0, rdb_res_scale=0.2,
                     rrdb_res_scale=0.2, act_slope=0.2):
    x = jnp.transpose(x_nchw, (0, 2, 3, 1))
    y = x
    for p in params:
        rdb_in = y
        h = y
        for (w, b) in p["dense"]:
            d = _conv_ref(h, w, b)
            d = jnp.where(d >= 0, d, act_slope * d) * dense_scale
            h = jnp.concatenate([h, d], axis=-1)
        wb, bb = p["bottle"]
        y = _conv_ref(h, wb, bb) * rdb_res_scale + rdb_in
    out = y * rrdb_res_scale + x
    return jnp.transpose(out, (0, 3, 1, 2))


# ----------------------------------- main ----------------------------------- #

if __name__ == "__main__":
    in_channels = 4
    growth_rate = 4
    kernel_size = 3
    n_dense_layers = 4
    n_rdb = 3

    key = jax.random.PRNGKey(0)
    kx, kp = jax.random.split(key)
    x = jax.random.normal(kx, (2, in_channels, 16, 16), jnp.float32)  # NCHW like PyTorch
    params = init_params(kp, in_channels, growth_rate, kernel_size,
                         n_dense_layers, n_rdb)

    out = jax.block_until_ready(residual_rdb_forward(x, params))
    ref = jax.block_until_ready(residual_rdb_ref(x, params))

    assert out.shape == x.shape and out.dtype == x.dtype
    err = float(jnp.max(jnp.abs(out - ref)))
    assert err < 1e-4, f"max abs err {err}"

    print("KERNEL_OK")
</pallas_src>

<mosaic_0001>
module attributes {stable_mosaic.version = 11 : i64} {
  func.func @_rrdb_kernel(%arg0: i32, %arg1: memref<1x4x256xf32, #tpu.memory_space<vmem>>, %arg2: memref<3x4x4x144xf32, #tpu.memory_space<vmem>>, %arg3: memref<3x4x4x1xf32, #tpu.memory_space<vmem>>, %arg4: memref<3x4x20xf32, #tpu.memory_space<vmem>>, %arg5: memref<3x4x1xf32, #tpu.memory_space<vmem>>, %arg6: memref<1x4x256xf32, #tpu.memory_space<vmem>>, %arg7: memref<20x512xf32, #tpu.memory_space<vmem>>, %arg8: memref<144x256xf32, #tpu.memory_space<vmem>>) attributes {dimension_semantics = [#tpu.dimension_semantics<parallel>], iteration_bounds = array<i64: 2>, scalar_prefetch = 0 : i64, scratch_operands = 2 : i64, tpu.core_type = #tpu.core_type<tc>, window_params = [{transform_indices = @transform_0, window_bounds = array<i64: 1, 4, 256>}, {pipeline_mode = #tpu.pipeline_mode<synchronous>, transform_indices = @transform_1, window_bounds = array<i64: 3, 4, 4, 144>}, {pipeline_mode = #tpu.pipeline_mode<synchronous>, transform_indices = @transform_2, window_bounds = array<i64: 3, 4, 4, 1>}, {pipeline_mode = #tpu.pipeline_mode<synchronous>, transform_indices = @transform_3, window_bounds = array<i64: 3, 4, 20>}, {pipeline_mode = #tpu.pipeline_mode<synchronous>, transform_indices = @transform_4, window_bounds = array<i64: 3, 4, 1>}, {transform_indices = @transform_5, window_bounds = array<i64: 1, 4, 256>}]} {
    %cst = arith.constant 0.000000e+00 : f32
    %0 = vector.broadcast %cst : f32 to vector<16x128xf32>
    %c0 = arith.constant 0 : index
    %c0_0 = arith.constant 0 : index
    %1 = vector.load %arg7[%c0, %c0_0] : memref<20x512xf32, #tpu.memory_space<vmem>>, vector<16x128xf32>
    tpu.vector_store %arg7[%c0, %c0_0], %0 {strides = array<i32>} : memref<20x512xf32, #tpu.memory_space<vmem>>, vector<16x128xf32>,
    %c0_1 = arith.constant 0 : index
    %c384 = arith.constant 384 : index
    %2 = vector.load %arg7[%c0_1, %c384] : memref<20x512xf32, #tpu.memory_space<vmem>>, vector<16x128xf32>
    tpu.vector_store %arg7[%c0_1, %c384], %0 {strides = array<i32>} : memref<20x512xf32, #tpu.memory_space<vmem>>, vector<16x128xf32>,
    %c0_2 = arith.constant 0 : index
    %c0_3 = arith.constant 0 : index
    %c0_4 = arith.constant 0 : index
    %3 = vector.load %arg1[%c0_2, %c0_3, %c0_4] : memref<1x4x256xf32, #tpu.memory_space<vmem>>, vector<1x4x256xf32>
    %4 = vector.shape_cast %3 : vector<1x4x256xf32> to vector<4x256xf32>
    %c0_5 = arith.constant 0 : index
    %c128 = arith.constant 128 : index
    %5 = vector.load %arg7[%c0_5, %c128] : memref<20x512xf32, #tpu.memory_space<vmem>>, vector<4x256xf32>
    tpu.vector_store %arg7[%c0_5, %c128], %4 {strides = array<i32>} : memref<20x512xf32, #tpu.memory_space<vmem>>, vector<4x256xf32>,
    %6 = tpu.iota {dimensions = array<i32: 1>} : vector<1x256xi32>
    %c16_i32 = arith.constant 16 : i32
    %c0_i32 = arith.constant 0 : i32
    %7 = arith.cmpi eq, %c16_i32, %c0_i32 : i32
    %c1_i32 = arith.constant 1 : i32
    %8 = arith.select %7, %c1_i32, %c16_i32 : i32
    %9 = vector.broadcast %8 : i32 to vector<1x256xi32>
    %10 = arith.remsi %6, %9 : vector<1x256xi32>
    %c0_i32_6 = arith.constant 0 : i32
    %11 = vector.broadcast %c0_i32_6 : i32 to vector<1x256xi32>
    %12 = arith.cmpi ne, %10, %11 : vector<1x256xi32>
    %c0_i32_7 = arith.constant 0 : i32
    %13 = vector.broadcast %c0_i32_7 : i32 to vector<1x256xi32>
    %14 = arith.cmpi slt, %10, %13 : vector<1x256xi32>
    %c0_i32_8 = arith.constant 0 : i32
    %15 = arith.cmpi slt, %8, %c0_i32_8 : i32
    %16 = vector.broadcast %15 : i1 to vector<1x256xi1>
    %17 = vector.broadcast %16 : vector<1x256xi1> to vector<1x256xi1>
    %18 = arith.xori %14, %17 : vector<1x256xi1>
    %19 = arith.andi %18, %12 : vector<1x256xi1>
    %20 = vector.broadcast %8 : i32 to vector<1x256xi32>
    %21 = arith.addi %10, %20 : vector<1x256xi32>
    %22 = arith.select %19, %21, %10 : vector<1x256xi1>, vector<1x256xi32>
    %c-1_i32 = arith.constant -1 : i32
    %23 = vector.broadcast %c-1_i32 : i32 to vector<1x256xi32>
    %24 = arith.addi %22, %23 : vector<1x256xi32>
    %c0_i32_9 = arith.constant 0 : i32
    %25 = vector.broadcast %c0_i32_9 : i32 to vector<1x256xi32>
    %26 = arith.cmpi sge, %24, %25 : vector<1x256xi32>
    %c-1_i32_10 = arith.constant -1 : i32
    %27 = vector.broadcast %c-1_i32_10 : i32 to vector<1x256xi32>
    %28 = arith.addi %22, %27 : vector<1x256xi32>
    %c16_i32_11 = arith.constant 16 : i32
    %29 = vector.broadcast %c16_i32_11 : i32 to vector<1x256xi32>
    %30 = arith.cmpi slt, %28, %29 : vector<1x256xi32>
    %31 = arith.andi %26, %30 : vector<1x256xi1>
    %c1_i32_12 = arith.constant 1 : i32
    %32 = vector.broadcast %c1_i32_12 : i32 to vector<1x256xi32>
    %33 = arith.addi %22, %32 : vector<1x256xi32>
    %c0_i32_13 = arith.constant 0 : i32
    %34 = vector.broadcast %c0_i32_13 : i32 to vector<1x256xi32>
    %35 = arith.cmpi sge, %33, %34 : vector<1x256xi32>
    %c1_i32_14 = arith.constant 1 : i32
    %36 = vector.broadcast %c1_i32_14 : i32 to vector<1x256xi32>
    %37 = arith.addi %22, %36 : vector<1x256xi32>
    %c16_i32_15 = arith.constant 16 : i32
    %38 = vector.broadcast %c16_i32_15 : i32 to vector<1x256xi32>
    %39 = arith.cmpi slt, %37, %38 : vector<1x256xi32>
    %40 = arith.andi %35, %39 : vector<1x256xi1>
    %c0_16 = arith.constant 0 : index
    %c111 = arith.constant 111 : index
    %41 = vector.load %arg7[%c0_16, %c111] : memref<20x512xf32, #tpu.memory_space<vmem>>, vector<4x256xf32>
    %cst_17 = arith.constant 0.000000e+00 : f32
    %42 = vector.shape_cast %31 : vector<1x256xi1> to vector<1x256xi1>
    %43 = vector.broadcast %42 : vector<1x256xi1> to vector<4x256xi1>
    %44 = vector.broadcast %cst_17 : f32 to vector<4x256xf32>
    %45 = arith.select %43, %41, %44 : vector<4x256xi1>, vector<4x256xf32>
    %c0_18 = arith.constant 0 : index
    %c0_19 = arith.constant 0 : index
    %46 = vector.load %arg8[%c0_18, %c0_19] : memref<144x256xf32, #tpu.memory_space<vmem>>, vector<4x256xf32>
    tpu.vector_store %arg8[%c0_18, %c0_19], %45 {strides = array<i32>} : memref<144x256xf32, #tpu.memory_space<vmem>>, vector<4x256xf32>,
    %c0_20 = arith.constant 0 : index
    %c112 = arith.constant 112 : index
    %47 = vector.load %arg7[%c0_20, %c112] : memref<20x512xf32, #tpu.memory_space<vmem>>, vector<4x256xf32>
    %c4 = arith.constant 4 : index
    %c0_21 = arith.constant 0 : index
    %48 = vector.load %arg8[%c4, %c0_21] : memref<144x256xf32, #tpu.memory_space<vmem>>, vector<4x256xf32>
    tpu.vector_store %arg8[%c4, %c0_21], %47 {strides = array<i32>} : memref<144x256xf32, #tpu.memory_space<vmem>>, vector<4x256xf32>,
    %c0_22 = arith.constant 0 : index
    %c113 = arith.constant 113 : index
    %49 = vector.load %arg7[%c0_22, %c113] : memref<20x512xf32, #tpu.memory_space<vmem>>, vector<4x256xf32>
    %cst_23 = arith.constant 0.000000e+00 : f32
    %50 = vector.shape_cast %40 : vector<1x256xi1> to vector<1x256xi1>
    %51 = vector.broadcast %50 : vector<1x256xi1> to vector<4x256xi1>
    %52 = vector.broadcast %cst_23 : f32 to vector<4x256xf32>
    %53 = arith.select %51, %49, %52 : vector<4x256xi1>, vector<4x256xf32>
    %c8 = arith.constant 8 : index
    %c0_24 = arith.constant 0 : index
    %54 = vector.load %arg8[%c8, %c0_24] : memref<144x256xf32, #tpu.memory_space<vmem>>, vector<4x256xf32>
    tpu.vector_store %arg8[%c8, %c0_24], %53 {strides = array<i32>} : memref<144x256xf32, #tpu.memory_space<vmem>>, vector<4x256xf32>,
    %c0_25 = arith.constant 0 : index
    %c127 = arith.constant 127 : index
    %55 = vector.load %arg7[%c0_25, %c127] : memref<20x512xf32, #tpu.memory_space<vmem>>, vector<4x256xf32>
    %cst_26 = arith.constant 0.000000e+00 : f32
    %56 = vector.shape_cast %31 : vector<1x256xi1> to vector<1x256xi1>
    %57 = vector.broadcast %56 : vector<1x256xi1> to vector<4x256xi1>
    %58 = vector.broadcast %cst_26 : f32 to vector<4x256xf32>
    %59 = arith.select %57, %55, %58 : vector<4x256xi1>, vector<4x256xf32>
    %c12 = arith.constant 12 : index
    %c0_27 = arith.constant 0 : index
    %60 = vector.load %arg8[%c12, %c0_27] : memref<144x256xf32, #tpu.memory_space<vmem>>, vector<4x256xf32>
    tpu.vector_store %arg8[%c12, %c0_27], %59 {strides = array<i32>} : memref<144x256xf32, #tpu.memory_space<vmem>>, vector<4x256xf32>,
    %c0_28 = arith.constant 0 : index
    %c128_29 = arith.constant 128 : index
    %61 = vector.load %arg7[%c0_28, %c128_29] : memref<20x512xf32, #tpu.memory_space<vmem>>, vector<4x256xf32>
    %c16 = arith.constant 16 : index
    %c0_30 = arith.constant 0 : index
    %62 = vector.load %arg8[%c16, %c0_30] : memref<144x256xf32, #tpu.memory_space<vmem>>, vector<4x256xf32>
    tpu.vector_store %arg8[%c16, %c0_30], %61 {strides = array<i32>} : memref<144x256xf32, #tpu.memory_space<vmem>>, vector<4x256xf32>,
    %c0_31 = arith.constant 0 : index
    %c129 = arith.constant 129 : index
    %63 = vector.load %arg7[%c0_31, %c129] : memref<20x512xf32, #tpu.memory_space<vmem>>, vector<4x256xf32>
    %cst_32 = arith.constant 0.000000e+00 : f32
    %64 = vector.shape_cast %40 : vector<1x256xi1> to vector<1x256xi1>
    %65 = vector.broadcast %64 : vector<1x256xi1> to vector<4x256xi1>
    %66 = vector.broadcast %cst_32 : f32 to vector<4x256xf32>
    %67 = arith.select %65, %63, %66 : vector<4x256xi1>, vector<4x256xf32>
    %c20 = arith.constant 20 : index
    %c0_33 = arith.constant 0 : index
    %68 = vector.load %arg8[%c20, %c0_33] : memref<144x256xf32, #tpu.memory_space<vmem>>, vector<4x256xf32>
    tpu.vector_store %arg8[%c20, %c0_33], %67 {strides = array<i32>} : memref<144x256xf32, #tpu.memory_space<vmem>>, vector<4x256xf32>,
    %c0_34 = arith.constant 0 : index
    %c143 = arith.constant 143 : index
    %69 = vector.load %arg7[%c0_34, %c143] : memref<20x512xf32, #tpu.memory_space<vmem>>, vector<4x256xf32>
    %cst_35 = arith.constant 0.000000e+00 : f32
    %70 = vector.shape_cast %31 : vector<1x256xi1> to vector<1x256xi1>
    %71 = vector.broadcast %70 : vector<1x256xi1> to vector<4x256xi1>
    %72 = vector.broadcast %cst_35 : f32 to vector<4x256xf32>
    %73 = arith.select %71, %69, %72 : vector<4x256xi1>, vector<4x256xf32>
    %c24 = arith.constant 24 : index
    %c0_36 = arith.constant 0 : index
    %74 = vector.load %arg8[%c24, %c0_36] : memref<144x256xf32, #tpu.memory_space<vmem>>, vector<4x256xf32>
    tpu.vector_store %arg8[%c24, %c0_36], %73 {strides = array<i32>} : memref<144x256xf32, #tpu.memory_space<vmem>>, vector<4x256xf32>,
    %c0_37 = arith.constant 0 : index
    %c144 = arith.constant 144 : index
    %75 = vector.load %arg7[%c0_37, %c144] : memref<20x512xf32, #tpu.memory_space<vmem>>, vector<4x256xf32>
    %c28 = arith.constant 28 : index
    %c0_38 = arith.constant 0 : index
    %76 = vector.load %arg8[%c28, %c0_38] : memref<144x256xf32, #tpu.memory_space<vmem>>, vector<4x256xf32>
    tpu.vector_store %arg8[%c28, %c0_38], %75 {strides = array<i32>} : memref<144x256xf32, #tpu.memory_space<vmem>>, vector<4x256xf32>,
    %c0_39 = arith.constant 0 : index
    %c145 = arith.constant 145 : index
    %77 = vector.load %arg7[%c0_39, %c145] : memref<20x512xf32, #tpu.memory_space<vmem>>, vector<4x256xf32>
    %cst_40 = arith.constant 0.000000e+00 : f32
    %78 = vector.shape_cast %40 : vector<1x256xi1> to vector<1x256xi1>
    %79 = vector.broadcast %78 : vector<1x256xi1> to vector<4x256xi1>
    %80 = vector.broadcast %cst_40 : f32 to vector<4x256xf32>
    %81 = arith.select %79, %77, %80 : vector<4x256xi1>, vector<4x256xf32>
    %c32 = arith.constant 32 : index
    %c0_41 = arith.constant 0 : index
    %82 = vector.load %arg8[%c32, %c0_41] : memref<144x256xf32, #tpu.memory_space<vmem>>, vector<4x256xf32>
    tpu.vector_store %arg8[%c32, %c0_41], %81 {strides = array<i32>} : memref<144x256xf32, #tpu.memory_space<vmem>>, vector<4x256xf32>,
    %c0_42 = arith.constant 0 : index
    %c0_43 = arith.constant 0 : index
    %c0_44 = arith.constant 0 : index
    %c0_45 = arith.constant 0 : index
    %83 = vector.load %arg2[%c0_42, %c0_43, %c0_44, %c0_45] : memref<3x4x4x144xf32, #tpu.memory_space<vmem>>, vector<1x1x4x144xf32>
    %84 = vector.shape_cast %83 : vector<1x1x4x144xf32> to vector<4x144xf32>
    %85 = vector.extract_strided_slice %84 {offsets = [0, 0], sizes = [4, 36], strides = [1, 1]} : vector<4x144xf32> to vector<4x36xf32>
    %c0_46 = arith.constant 0 : index
    %c0_47 = arith.constant 0 : index
    %86 = vector.load %arg8[%c0_46, %c0_47] : memref<144x256xf32, #tpu.memory_space<vmem>>, vector<36x256xf32>
    %cst_48 = arith.constant dense<0.000000e+00> : vector<4x256xf32>
    %87 = tpu.matmul %85, %86, %cst_48 {dimension_numbers = #tpu.dot_dimension_numbers<[1], [0], [0], [1], [0, 0, 1, 1], [], []>} : vector<4x36xf32>, vector<36x256xf32>, vector<4x256xf32> -> vector<4x256xf32>
    %c0_49 = arith.constant 0 : index
    %c0_50 = arith.constant 0 : index
    %c0_51 = arith.constant 0 : index
    %c0_52 = arith.constant 0 : index
    %88 = vector.load %arg3[%c0_49, %c0_50, %c0_51, %c0_52] : memref<3x4x4x1xf32, #tpu.memory_space<vmem>>, vector<1x1x4x1xf32>
    %89 = vector.shape_cast %88 : vector<1x1x4x1xf32> to vector<4x1xf32>
    %90 = vector.broadcast %89 : vector<4x1xf32> to vector<4x256xf32>
    %91 = arith.addf %87, %90 : vector<4x256xf32>
    %cst_53 = arith.constant 2.000000e-01 : f32
    %92 = vector.broadcast %cst_53 : f32 to vector<4x256xf32>
    %93 = arith.mulf %92, %91 : vector<4x256xf32>
    %94 = arith.maximumf %91, %93 : vector<4x256xf32>
    %c4_54 = arith.constant 4 : index
    %c128_55 = arith.constant 128 : index
    %95 = vector.load %arg7[%c4_54, %c128_55] : memref<20x512xf32, #tpu.memory_space<vmem>>, vector<4x256xf32>
    tpu.vector_store %arg7[%c4_54, %c128_55], %94 {strides = array<i32>} : memref<20x512xf32, #tpu.memory_space<vmem>>, vector<4x256xf32>,
    %c4_56 = arith.constant 4 : index
    %c111_57 = arith.constant 111 : index
    %96 = vector.load %arg7[%c4_56, %c111_57] : memref<20x512xf32, #tpu.memory_space<vmem>>, vector<4x256xf32>
    %cst_58 = arith.constant 0.000000e+00 : f32
    %97 = vector.shape_cast %31 : vector<1x256xi1> to vector<1x256xi1>
    %98 = vector.broadcast %97 : vector<1x256xi1> to vector<4x256xi1>
    %99 = vector.broadcast %cst_58 : f32 to vector<4x256xf32>
    %100 = arith.select %98, %96, %99 : vector<4x256xi1>, vector<4x256xf32>
    %c36 = arith.constant 36 : index
    %c0_59 = arith.constant 0 : index
    %101 = vector.load %arg8[%c36, %c0_59] : memref<144x256xf32, #tpu.memory_space<vmem>>, vector<4x256xf32>
    tpu.vector_store %arg8[%c36, %c0_59], %100 {strides = array<i32>} : memref<144x256xf32, #tpu.memory_space<vmem>>, vector<4x256xf32>,
    %c4_60 = arith.constant 4 : index
    %c112_61 = arith.constant 112 : index
    %102 = vector.load %arg7[%c4_60, %c112_61] : memref<20x512xf32, #tpu.memory_space<vmem>>, vector<4x256xf32>
    %c40 = arith.constant 40 : index
    %c0_62 = arith.constant 0 : index
    %103 = vector.load %arg8[%c40, %c0_62] : memref<144x256xf32, #tpu.memory_space<vmem>>, vector<4x256xf32>
    tpu.vector_store %arg8[%c40, %c0_62], %102 {strides = array<i32>} : memref<144x256xf32, #tpu.memory_space<vmem>>, vector<4x256xf32>,
    %c4_63 = arith.constant 4 : index
    %c113_64 = arith.constant 113 : index
    %104 = vector.load %arg7[%c4_63, %c113_64] : memref<20x512xf32, #tpu.memory_space<vmem>>, vector<4x256xf32>
    %cst_65 = arith.constant 0.000000e+00 : f32
    %105 = vector.shape_cast %40 : vector<1x256xi1> to vector<1x256xi1>
    %106 = vector.broadcast %105 : vector<1x256xi1> to vector<4x256xi1>
    %107 = vector.broadcast %cst_65 : f32 to vector<4x256xf32>
    %108 = arith.select %106, %104, %107 : vector<4x256xi1>, vector<4x256xf32>
    %c44 = arith.constant 44 : index
    %c0_66 = arith.constant 0 : index
    %109 = vector.load %arg8[%c44, %c0_66] : memref<144x256xf32, #tpu.memory_space<vmem>>, vector<4x256xf32>
    tpu.vector_store %arg8[%c44, %c0_66], %108 {strides = array<i32>} : memref<144x256xf32, #tpu.memory_space<vmem>>, vector<4x256xf32>,
    %c4_67 = arith.constant 4 : index
    %c127_68 = arith.constant 127 : index
    %110 = vector.load %arg7[%c4_67, %c127_68] : memref<20x512xf32, #tpu.memory_space<vmem>>, vector<4x256xf32>
    %cst_69 = arith.constant 0.000000e+00 : f32
    %111 = vector.shape_cast %31 : vector<1x256xi1> to vector<1x256xi1>
    %112 = vector.broadcast %111 : vector<1x256xi1> to vector<4x256xi1>
    %113 = vector.broadcast %cst_69 : f32 to vector<4x256xf32>
    %114 = arith.select %112, %110, %113 : vector<4x256xi1>, vector<4x256xf32>
    %c48 = arith.constant 48 : index
    %c0_70 = arith.constant 0 : index
    %115 = vector.load %arg8[%c48, %c0_70] : memref<144x256xf32, #tpu.memory_space<vmem>>, vector<4x256xf32>
    tpu.vector_store %arg8[%c48, %c0_70], %114 {strides = array<i32>} : memref<144x256xf32, #tpu.memory_space<vmem>>, vector<4x256xf32>,
    %c4_71 = arith.constant 4 : index
    %c128_72 = arith.constant 128 : index
    %116 = vector.load %arg7[%c4_71, %c128_72] : memref<20x512xf32, #tpu.memory_space<vmem>>, vector<4x256xf32>
    %c52 = arith.constant 52 : index
    %c0_73 = arith.constant 0 : index
    %117 = vector.load %arg8[%c52, %c0_73] : memref<144x256xf32, #tpu.memory_space<vmem>>, vector<4x256xf32>
    tpu.vector_store %arg8[%c52, %c0_73], %116 {strides = array<i32>} : memref<144x256xf32, #tpu.memory_space<vmem>>, vector<4x256xf32>,
    %c4_74 = arith.constant 4 : index
    %c129_75 = arith.constant 129 : index
    %118 = vector.load %arg7[%c4_74, %c129_75] : memref<20x512xf32, #tpu.memory_space<vmem>>, vector<4x256xf32>
    %cst_76 = arith.constant 0.000000e+00 : f32
    %119 = vector.shape_cast %40 : vector<1x256xi1> to vector<1x256xi1>
    %120 = vector.broadcast %119 : vector<1x256xi1> to vector<4x256xi1>
    %121 = vector.broadcast %cst_76 : f32 to vector<4x256xf32>
    %122 = arith.select %120, %118, %121 : vector<4x256xi1>, vector<4x256xf32>
    %c56 = arith.constant 56 : index
    %c0_77 = arith.constant 0 : index
    %123 = vector.load %arg8[%c56, %c0_77] : memref<144x256xf32, #tpu.memory_space<vmem>>, vector<4x256xf32>
    tpu.vector_store %arg8[%c56, %c0_77], %122 {strides = array<i32>} : memref<144x256xf32, #tpu.memory_space<vmem>>, vector<4x256xf32>,
    %c4_78 = arith.constant 4 : index
    %c143_79 = arith.constant 143 : index
    %124 = vector.load %arg7[%c4_78, %c143_79] : memref<20x512xf32, #tpu.memory_space<vmem>>, vector<4x256xf32>
    %cst_80 = arith.constant 0.000000e+00 : f32
    %125 = vector.shape_cast %31 : vector<1x256xi1> to vector<1x256xi1>
    %126 = vector.broadcast %125 : vector<1x256xi1> to vector<4x256xi1>
    %127 = vector.broadcast %cst_80 : f32 to vector<4x256xf32>
    %128 = arith.select %126, %124, %127 : vector<4x256xi1>, vector<4x256xf32>
    %c60 = arith.constant 60 : index
    %c0_81 = arith.constant 0 : index
    %129 = vector.load %arg8[%c60, %c0_81] : memref<144x256xf32, #tpu.memory_space<vmem>>, vector<4x256xf32>
    tpu.vector_store %arg8[%c60, %c0_81], %128 {strides = array<i32>} : memref<144x256xf32, #tpu.memory_space<vmem>>, vector<4x256xf32>,
    %c4_82 = arith.constant 4 : index
    %c144_83 = arith.constant 144 : index
    %130 = vector.load %arg7[%c4_82, %c144_83] : memref<20x512xf32, #tpu.memory_space<vmem>>, vector<4x256xf32>
    %c64 = arith.constant 64 : index
    %c0_84 = arith.constant 0 : index
    %131 = vector.load %arg8[%c64, %c0_84] : memref<144x256xf32, #tpu.memory_space<vmem>>, vector<4x256xf32>
    tpu.vector_store %arg8[%c64, %c0_84], %130 {strides = array<i32>} : memref<144x256xf32, #tpu.memory_space<vmem>>, vector<4x256xf32>,
    %c4_85 = arith.constant 4 : index
    %c145_86 = arith.constant 145 : index
    %132 = vector.load %arg7[%c4_85, %c145_86] : memref<20x512xf32, #tpu.memory_space<vmem>>, vector<4x256xf32>
    %cst_87 = arith.constant 0.000000e+00 : f32
    %133 = vector.shape_cast %40 : vector<1x256xi1> to vector<1x256xi1>
    %134 = vector.broadcast %133 : vector<1x256xi1> to vector<4x256xi1>
    %135 = vector.broadcast %cst_87 : f32 to vector<4x256xf32>
    %136 = arith.select %134, %132, %135 : vector<4x256xi1>, vector<4x256xf32>
    %c68 = arith.constant 68 : index
    %c0_88 = arith.constant 0 : index
    %137 = vector.load %arg8[%c68, %c0_88] : memref<144x256xf32, #tpu.memory_space<vmem>>, vector<4x256xf32>
    tpu.vector_store %arg8[%c68, %c0_88], %136 {strides = array<i32>} : memref<144x256xf32, #tpu.memory_space<vmem>>, vector<4x256xf32>,
    %c0_89 = arith.constant 0 : index
    %c1 = arith.constant 1 : index
    %c0_90 = arith.constant 0 : index
    %c0_91 = arith.constant 0 : index
    %138 = vector.load %arg2[%c0_89, %c1, %c0_90, %c0_91] : memref<3x4x4x144xf32, #tpu.memory_space<vmem>>, vector<1x1x4x144xf32>
    %139 = vector.shape_cast %138 : vector<1x1x4x144xf32> to vector<4x144xf32>
    %140 = vector.extract_strided_slice %139 {offsets = [0, 0], sizes = [4, 72], strides = [1, 1]} : vector<4x144xf32> to vector<4x72xf32>
    %c0_92 = arith.constant 0 : index
    %c0_93 = arith.constant 0 : index
    %141 = vector.load %arg8[%c0_92, %c0_93] : memref<144x256xf32, #tpu.memory_space<vmem>>, vector<72x256xf32>
    %cst_94 = arith.constant dense<0.000000e+00> : vector<4x256xf32>
    %142 = tpu.matmul %140, %141, %cst_94 {dimension_numbers = #tpu.dot_dimension_numbers<[1], [0], [0], [1], [0, 0, 1, 1], [], []>} : vector<4x72xf32>, vector<72x256xf32>, vector<4x256xf32> -> vector<4x256xf32>
    %c0_95 = arith.constant 0 : index
    %c1_96 = arith.constant 1 : index
    %c0_97 = arith.constant 0 : index
    %c0_98 = arith.constant 0 : index
    %143 = vector.load %arg3[%c0_95, %c1_96, %c0_97, %c0_98] : memref<3x4x4x1xf32, #tpu.memory_space<vmem>>, vector<1x1x4x1xf32>
    %144 = vector.shape_cast %143 : vector<1x1x4x1xf32> to vector<4x1xf32>
    %145 = vector.broadcast %144 : vector<4x1xf32> to vector<4x256xf32>
    %146 = arith.addf %142, %145 : vector<4x256xf32>
    %cst_99 = arith.constant 2.000000e-01 : f32
    %147 = vector.broadcast %cst_99 : f32 to vector<4x256xf32>
    %148 = arith.mulf %147, %146 : vector<4x256xf32>
    %149 = arith.maximumf %146, %148 : vector<4x256xf32>
    %c8_100 = arith.constant 8 : index
    %c128_101 = arith.constant 128 : index
    %150 = vector.load %arg7[%c8_100, %c128_101] : memref<20x512xf32, #tpu.memory_space<vmem>>, vector<4x256xf32>
    tpu.vector_store %arg7[%c8_100, %c128_101], %149 {strides = array<i32>} : memref<20x512xf32, #tpu.memory_space<vmem>>, vector<4x256xf32>,
    %c8_102 = arith.constant 8 : index
    %c111_103 = arith.constant 111 : index
    %151 = vector.load %arg7[%c8_102, %c111_103] : memref<20x512xf32, #tpu.memory_space<vmem>>, vector<4x256xf32>
    %cst_104 = arith.constant 0.000000e+00 : f32
    %152 = vector.shape_cast %31 : vector<1x256xi1> to vector<1x256xi1>
    %153 = vector.broadcast %152 : vector<1x256xi1> to vector<4x256xi1>
    %154 = vector.broadcast %cst_104 : f32 to vector<4x256xf32>
    %155 = arith.select %153, %151, %154 : vector<4x256xi1>, vector<4x256xf32>
    %c72 = arith.constant 72 : index
    %c0_105 = arith.constant 0 : index
    %156 = vector.load %arg8[%c72, %c0_105] : memref<144x256xf32, #tpu.memory_space<vmem>>, vector<4x256xf32>
    tpu.vector_store %arg8[%c72, %c0_105], %155 {strides = array<i32>} : memref<144x256xf32, #tpu.memory_space<vmem>>, vector<4x256xf32>,
    %c8_106 = arith.constant 8 : index
    %c112_107 = arith.constant 112 : index
    %157 = vector.load %arg7[%c8_106, %c112_107] : memref<20x512xf32, #tpu.memory_space<vmem>>, vector<4x256xf32>
    %c76 = arith.constant 76 : index
    %c0_108 = arith.constant 0 : index
    %158 = vector.load %arg8[%c76, %c0_108] : memref<144x256xf32, #tpu.memory_space<vmem>>, vector<4x256xf32>
    tpu.vector_store %arg8[%c76, %c0_108], %157 {strides = array<i32>} : memref<144x256xf32, #tpu.memory_space<vmem>>, vector<4x256xf32>,
    %c8_109 = arith.constant 8 : index
    %c113_110 = arith.constant 113 : index
    %159 = vector.load %arg7[%c8_109, %c113_110] : memref<20x512xf32, #tpu.memory_space<vmem>>, vector<4x256xf32>
    %cst_111 = arith.constant 0.000000e+00 : f32
    %160 = vector.shape_cast %40 : vector<1x256xi1> to vector<1x256xi1>
    %161 = vector.broadcast %160 : vector<1x256xi1> to vector<4x256xi1>
    %162 = vector.broadcast %cst_111 : f32 to vector<4x256xf32>
    %163 = arith.select %161, %159, %162 : vector<4x256xi1>, vector<4x256xf32>
    %c80 = arith.constant 80 : index
    %c0_112 = arith.constant 0 : index
    %164 = vector.load %arg8[%c80, %c0_112] : memref<144x256xf32, #tpu.memory_space<vmem>>, vector<4x256xf32>
    tpu.vector_store %arg8[%c80, %c0_112], %163 {strides = array<i32>} : memref<144x256xf32, #tpu.memory_space<vmem>>, vector<4x256xf32>,
    %c8_113 = arith.constant 8 : index
    %c127_114 = arith.constant 127 : index
    %165 = vector.load %arg7[%c8_113, %c127_114] : memref<20x512xf32, #tpu.memory_space<vmem>>, vector<4x256xf32>
    %cst_115 = arith.constant 0.000000e+00 : f32
    %166 = vector.shape_cast %31 : vector<1x256xi1> to vector<1x256xi1>
    %167 = vector.broadcast %166 : vector<1x256xi1> to vector<4x256xi1>
    %168 = vector.broadcast %cst_115 : f32 to vector<4x256xf32>
    %169 = arith.select %167, %165, %168 : vector<4x256xi1>, vector<4x256xf32>
    %c84 = arith.constant 84 : index
    %c0_116 = arith.constant 0 : index
    %170 = vector.load %arg8[%c84, %c0_116] : memref<144x256xf32, #tpu.memory_space<vmem>>, vector<4x256xf32>
    tpu.vector_store %arg8[%c84, %c0_116], %169 {strides = array<i32>} : memref<144x256xf32, #tpu.memory_space<vmem>>, vector<4x256xf32>,
    %c8_117 = arith.constant 8 : index
    %c128_118 = arith.constant 128 : index
    %171 = vector.load %arg7[%c8_117, %c128_118] : memref<20x512xf32, #tpu.memory_space<vmem>>, vector<4x256xf32>
    %c88 = arith.constant 88 : index
    %c0_119 = arith.constant 0 : index
    %172 = vector.load %arg8[%c88, %c0_119] : memref<144x256xf32, #tpu.memory_space<vmem>>, vector<4x256xf32>
    tpu.vector_store %arg8[%c88, %c0_119], %171 {strides = array<i32>} : memref<144x256xf32, #tpu.memory_space<vmem>>, vector<4x256xf32>,
    %c8_120 = arith.constant 8 : index
    %c129_121 = arith.constant 129 : index
    %173 = vector.load %arg7[%c8_120, %c129_121] : memref<20x512xf32, #tpu.memory_space<vmem>>, vector<4x256xf32>
    %cst_122 = arith.constant 0.000000e+00 : f32
    %174 = vector.shape_cast %40 : vector<1x256xi1> to vector<1x256xi1>
    %175 = vector.broadcast %174 : vector<1x256xi1> to vector<4x256xi1>
    %176 = vector.broadcast %cst_122 : f32 to vector<4x256xf32>
    %177 = arith.select %175, %173, %176 : vector<4x256xi1>, vector<4x256xf32>
    %c92 = arith.constant 92 : index
    %c0_123 = arith.constant 0 : index
    %178 = vector.load %arg8[%c92, %c0_123] : memref<144x256xf32, #tpu.memory_space<vmem>>, vector<4x256xf32>
    tpu.vector_store %arg8[%c92, %c0_123], %177 {strides = array<i32>} : memref<144x256xf32, #tpu.memory_space<vmem>>, vector<4x256xf32>,
    %c8_124 = arith.constant 8 : index
    %c143_125 = arith.constant 143 : index
    %179 = vector.load %arg7[%c8_124, %c143_125] : memref<20x512xf32, #tpu.memory_space<vmem>>, vector<4x256xf32>
    %cst_126 = arith.constant 0.000000e+00 : f32
    %180 = vector.shape_cast %31 : vector<1x256xi1> to vector<1x256xi1>
    %181 = vector.broadcast %180 : vector<1x256xi1> to vector<4x256xi1>
    %182 = vector.broadcast %cst_126 : f32 to vector<4x256xf32>
    %183 = arith.select %181, %179, %182 : vector<4x256xi1>, vector<4x256xf32>
    %c96 = arith.constant 96 : index
    %c0_127 = arith.constant 0 : index
    %184 = vector.load %arg8[%c96, %c0_127] : memref<144x256xf32, #tpu.memory_space<vmem>>, vector<4x256xf32>
    tpu.vector_store %arg8[%c96, %c0_127], %183 {strides = array<i32>} : memref<144x256xf32, #tpu.memory_space<vmem>>, vector<4x256xf32>,
    %c8_128 = arith.constant 8 : index
    %c144_129 = arith.constant 144 : index
    %185 = vector.load %arg7[%c8_128, %c144_129] : memref<20x512xf32, #tpu.memory_space<vmem>>, vector<4x256xf32>
    %c100 = arith.constant 100 : index
    %c0_130 = arith.constant 0 : index
    %186 = vector.load %arg8[%c100, %c0_130] : memref<144x256xf32, #tpu.memory_space<vmem>>, vector<4x256xf32>
    tpu.vector_store %arg8[%c100, %c0_130], %185 {strides = array<i32>} : memref<144x256xf32, #tpu.memory_space<vmem>>, vector<4x256xf32>,
    %c8_131 = arith.constant 8 : index
    %c145_132 = arith.constant 145 : index
    %187 = vector.load %arg7[%c8_131, %c145_132] : memref<20x512xf32, #tpu.memory_space<vmem>>, vector<4x256xf32>
    %cst_133 = arith.constant 0.000000e+00 : f32
    %188 = vector.shape_cast %40 : vector<1x256xi1> to vector<1x256xi1>
    %189 = vector.broadcast %188 : vector<1x256xi1> to vector<4x256xi1>
    %190 = vector.broadcast %cst_133 : f32 to vector<4x256xf32>
    %191 = arith.select %189, %187, %190 : vector<4x256xi1>, vector<4x256xf32>
    %c104 = arith.constant 104 : index
    %c0_134 = arith.constant 0 : index
    %192 = vector.load %arg8[%c104, %c0_134] : memref<144x256xf32, #tpu.memory_space<vmem>>, vector<4x256xf32>
    tpu.vector_store %arg8[%c104, %c0_134], %191 {strides = array<i32>} : memref<144x256xf32, #tpu.memory_space<vmem>>, vector<4x256xf32>,
    %c0_135 = arith.constant 0 : index
    %c2 = arith.constant 2 : index
    %c0_136 = arith.constant 0 : index
    %c0_137 = arith.constant 0 : index
    %193 = vector.load %arg2[%c0_135, %c2, %c0_136, %c0_137] : memref<3x4x4x144xf32, #tpu.memory_space<vmem>>, vector<1x1x4x144xf32>
    %194 = vector.shape_cast %193 : vector<1x1x4x144xf32> to vector<4x144xf32>
    %195 = vector.extract_strided_slice %194 {offsets = [0, 0], sizes = [4, 108], strides = [1, 1]} : vector<4x144xf32> to vector<4x108xf32>
    %c0_138 = arith.constant 0 : index
    %c0_139 = arith.constant 0 : index
    %196 = vector.load %arg8[%c0_138, %c0_139] : memref<144x256xf32, #tpu.memory_space<vmem>>, vector<108x256xf32>
    %cst_140 = arith.constant dense<0.000000e+00> : vector<4x256xf32>
    %197 = tpu.matmul %195, %196, %cst_140 {dimension_numbers = #tpu.dot_dimension_numbers<[1], [0], [0], [1], [0, 0, 1, 1], [], []>} : vector<4x108xf32>, vector<108x256xf32>, vector<4x256xf32> -> vector<4x256xf32>
    %c0_141 = arith.constant 0 : index
    %c2_142 = arith.constant 2 : index
    %c0_143 = arith.constant 0 : index
    %c0_144 = arith.constant 0 : index
    %198 = vector.load %arg3[%c0_141, %c2_142, %c0_143, %c0_144] : memref<3x4x4x1xf32, #tpu.memory_space<vmem>>, vector<1x1x4x1xf32>
    %199 = vector.shape_cast %198 : vector<1x1x4x1xf32> to vector<4x1xf32>
    %200 = vector.broadcast %199 : vector<4x1xf32> to vector<4x256xf32>
    %201 = arith.addf %197, %200 : vector<4x256xf32>
    %cst_145 = arith.constant 2.000000e-01 : f32
    %202 = vector.broadcast %cst_145 : f32 to vector<4x256xf32>
    %203 = arith.mulf %202, %201 : vector<4x256xf32>
    %204 = arith.maximumf %201, %203 : vector<4x256xf32>
    %c12_146 = arith.constant 12 : index
    %c128_147 = arith.constant 128 : index
    %205 = vector.load %arg7[%c12_146, %c128_147] : memref<20x512xf32, #tpu.memory_space<vmem>>, vector<4x256xf32>
    tpu.vector_store %arg7[%c12_146, %c128_147], %204 {strides = array<i32>} : memref<20x512xf32, #tpu.memory_space<vmem>>, vector<4x256xf32>,
    %c12_148 = arith.constant 12 : index
    %c111_149 = arith.constant 111 : index
    %206 = vector.load %arg7[%c12_148, %c111_149] : memref<20x512xf32, #tpu.memory_space<vmem>>, vector<4x256xf32>
    %cst_150 = arith.constant 0.000000e+00 : f32
    %207 = vector.shape_cast %31 : vector<1x256xi1> to vector<1x256xi1>
    %208 = vector.broadcast %207 : vector<1x256xi1> to vector<4x256xi1>
    %209 = vector.broadcast %cst_150 : f32 to vector<4x256xf32>
    %210 = arith.select %208, %206, %209 : vector<4x256xi1>, vector<4x256xf32>
    %c108 = arith.constant 108 : index
    %c0_151 = arith.constant 0 : index
    %211 = vector.load %arg8[%c108, %c0_151] : memref<144x256xf32, #tpu.memory_space<vmem>>, vector<4x256xf32>
    tpu.vector_store %arg8[%c108, %c0_151], %210 {strides = array<i32>} : memref<144x256xf32, #tpu.memory_space<vmem>>, vector<4x256xf32>,
    %c12_152 = arith.constant 12 : index
    %c112_153 = arith.constant 112 : index
    %212 = vector.load %arg7[%c12_152, %c112_153] : memref<20x512xf32, #tpu.memory_space<vmem>>, vector<4x256xf32>
    %c112_154 = arith.constant 112 : index
    %c0_155 = arith.constant 0 : index
    %213 = vector.load %arg8[%c112_154, %c0_155] : memref<144x256xf32, #tpu.memory_space<vmem>>, vector<4x256xf32>
    tpu.vector_store %arg8[%c112_154, %c0_155], %212 {strides = array<i32>} : memref<144x256xf32, #tpu.memory_space<vmem>>, vector<4x256xf32>,
    %c12_156 = arith.constant 12 : index
    %c113_157 = arith.constant 113 : index
    %214 = vector.load %arg7[%c12_156, %c113_157] : memref<20x512xf32, #tpu.memory_space<vmem>>, vector<4x256xf32>
    %cst_158 = arith.constant 0.000000e+00 : f32
    %215 = vector.shape_cast %40 : vector<1x256xi1> to vector<1x256xi1>
    %216 = vector.broadcast %215 : vector<1x256xi1> to vector<4x256xi1>
    %217 = vector.broadcast %cst_158 : f32 to vector<4x256xf32>
    %218 = arith.select %216, %214, %217 : vector<4x256xi1>, vector<4x256xf32>
    %c116 = arith.constant 116 : index
    %c0_159 = arith.constant 0 : index
    %219 = vector.load %arg8[%c116, %c0_159] : memref<144x256xf32, #tpu.memory_space<vmem>>, vector<4x256xf32>
    tpu.vector_store %arg8[%c116, %c0_159], %218 {strides = array<i32>} : memref<144x256xf32, #tpu.memory_space<vmem>>, vector<4x256xf32>,
    %c12_160 = arith.constant 12 : index
    %c127_161 = arith.constant 127 : index
    %220 = vector.load %arg7[%c12_160, %c127_161] : memref<20x512xf32, #tpu.memory_space<vmem>>, vector<4x256xf32>
    %cst_162 = arith.constant 0.000000e+00 : f32
    %221 = vector.shape_cast %31 : vector<1x256xi1> to vector<1x256xi1>
    %222 = vector.broadcast %221 : vector<1x256xi1> to vector<4x256xi1>
    %223 = vector.broadcast %cst_162 : f32 to vector<4x256xf32>
    %224 = arith.select %222, %220, %223 : vector<4x256xi1>, vector<4x256xf32>
    %c120 = arith.constant 120 : index
    %c0_163 = arith.constant 0 : index
    %225 = vector.load %arg8[%c120, %c0_163] : memref<144x256xf32, #tpu.memory_space<vmem>>, vector<4x256xf32>
    tpu.vector_store %arg8[%c120, %c0_163], %224 {strides = array<i32>} : memref<144x256xf32, #tpu.memory_space<vmem>>, vector<4x256xf32>,
    %c12_164 = arith.constant 12 : index
    %c128_165 = arith.constant 128 : index
    %226 = vector.load %arg7[%c12_164, %c128_165] : memref<20x512xf32, #tpu.memory_space<vmem>>, vector<4x256xf32>
    %c124 = arith.constant 124 : index
    %c0_166 = arith.constant 0 : index
    %227 = vector.load %arg8[%c124, %c0_166] : memref<144x256xf32, #tpu.memory_space<vmem>>, vector<4x256xf32>
    tpu.vector_store %arg8[%c124, %c0_166], %226 {strides = array<i32>} : memref<144x256xf32, #tpu.memory_space<vmem>>, vector<4x256xf32>,
    %c12_167 = arith.constant 12 : index
    %c129_168 = arith.constant 129 : index
    %228 = vector.load %arg7[%c12_167, %c129_168] : memref<20x512xf32, #tpu.memory_space<vmem>>, vector<4x256xf32>
    %cst_169 = arith.constant 0.000000e+00 : f32
    %229 = vector.shape_cast %40 : vector<1x256xi1> to vector<1x256xi1>
    %230 = vector.broadcast %229 : vector<1x256xi1> to vector<4x256xi1>
    %231 = vector.broadcast %cst_169 : f32 to vector<4x256xf32>
    %232 = arith.select %230, %228, %231 : vector<4x256xi1>, vector<4x256xf32>
    %c128_170 = arith.constant 128 : index
    %c0_171 = arith.constant 0 : index
    %233 = vector.load %arg8[%c128_170, %c0_171] : memref<144x256xf32, #tpu.memory_space<vmem>>, vector<4x256xf32>
    tpu.vector_store %arg8[%c128_170, %c0_171], %232 {strides = array<i32>} : memref<144x256xf32, #tpu.memory_space<vmem>>, vector<4x256xf32>,
    %c12_172 = arith.constant 12 : index
    %c143_173 = arith.constant 143 : index
    %234 = vector.load %arg7[%c12_172, %c143_173] : memref<20x512xf32, #tpu.memory_space<vmem>>, vector<4x256xf32>
    %cst_174 = arith.constant 0.000000e+00 : f32
    %235 = vector.shape_cast %31 : vector<1x256xi1> to vector<1x256xi1>
    %236 = vector.broadcast %235 : vector<1x256xi1> to vector<4x256xi1>
    %237 = vector.broadcast %cst_174 : f32 to vector<4x256xf32>
    %238 = arith.select %236, %234, %237 : vector<4x256xi1>, vector<4x256xf32>
    %c132 = arith.constant 132 : index
    %c0_175 = arith.constant 0 : index
    %239 = vector.load %arg8[%c132, %c0_175] : memref<144x256xf32, #tpu.memory_space<vmem>>, vector<4x256xf32>
    tpu.vector_store %arg8[%c132, %c0_175], %238 {strides = array<i32>} : memref<144x256xf32, #tpu.memory_space<vmem>>, vector<4x256xf32>,
    %c12_176 = arith.constant 12 : index
    %c144_177 = arith.constant 144 : index
    %240 = vector.load %arg7[%c12_176, %c144_177] : memref<20x512xf32, #tpu.memory_space<vmem>>, vector<4x256xf32>
    %c136 = arith.constant 136 : index
    %c0_178 = arith.constant 0 : index
    %241 = vector.load %arg8[%c136, %c0_178] : memref<144x256xf32, #tpu.memory_space<vmem>>, vector<4x256xf32>
    tpu.vector_store %arg8[%c136, %c0_178], %240 {strides = array<i32>} : memref<144x256xf32, #tpu.memory_space<vmem>>, vector<4x256xf32>,
    %c12_179 = arith.constant 12 : index
    %c145_180 = arith.constant 145 : index
    %242 = vector.load %arg7[%c12_179, %c145_180] : memref<20x512xf32, #tpu.memory_space<vmem>>, vector<4x256xf32>
    %cst_181 = arith.constant 0.000000e+00 : f32
    %243 = vector.shape_cast %40 : vector<1x256xi1> to vector<1x256xi1>
    %244 = vector.broadcast %243 : vector<1x256xi1> to vector<4x256xi1>
    %245 = vector.broadcast %cst_181 : f32 to vector<4x256xf32>
    %246 = arith.select %244, %242, %245 : vector<4x256xi1>, vector<4x256xf32>
    %c140 = arith.constant 140 : index
    %c0_182 = arith.constant 0 : index
    %247 = vector.load %arg8[%c140, %c0_182] : memref<144x256xf32, #tpu.memory_space<vmem>>, vector<4x256xf32>
    tpu.vector_store %arg8[%c140, %c0_182], %246 {strides = array<i32>} : memref<144x256xf32, #tpu.memory_space<vmem>>, vector<4x256xf32>,
    %c0_183 = arith.constant 0 : index
    %c3 = arith.constant 3 : index
    %c0_184 = arith.constant 0 : index
    %c0_185 = arith.constant 0 : index
    %248 = vector.load %arg2[%c0_183, %c3, %c0_184, %c0_185] : memref<3x4x4x144xf32, #tpu.memory_space<vmem>>, vector<1x1x4x144xf32>
    %249 = vector.shape_cast %248 : vector<1x1x4x144xf32> to vector<4x144xf32>
    %c0_186 = arith.constant 0 : index
    %c0_187 = arith.constant 0 : index
    %250 = vector.load %arg8[%c0_186, %c0_187] : memref<144x256xf32, #tpu.memory_space<vmem>>, vector<144x256xf32>
    %cst_188 = arith.constant dense<0.000000e+00> : vector<4x256xf32>
    %251 = tpu.matmul %249, %250, %cst_188 {dimension_numbers = #tpu.dot_dimension_numbers<[1], [0], [0], [1], [0, 0, 1, 1], [], []>} : vector<4x144xf32>, vector<144x256xf32>, vector<4x256xf32> -> vector<4x256xf32>
    %c0_189 = arith.constant 0 : index
    %c3_190 = arith.constant 3 : index
    %c0_191 = arith.constant 0 : index
    %c0_192 = arith.constant 0 : index
    %252 = vector.load %arg3[%c0_189, %c3_190, %c0_191, %c0_192] : memref<3x4x4x1xf32, #tpu.memory_space<vmem>>, vector<1x1x4x1xf32>
    %253 = vector.shape_cast %252 : vector<1x1x4x1xf32> to vector<4x1xf32>
    %254 = vector.broadcast %253 : vector<4x1xf32> to vector<4x256xf32>
    %255 = arith.addf %251, %254 : vector<4x256xf32>
    %cst_193 = arith.constant 2.000000e-01 : f32
    %256 = vector.broadcast %cst_193 : f32 to vector<4x256xf32>
    %257 = arith.mulf %256, %255 : vector<4x256xf32>
    %258 = arith.maximumf %255, %257 : vector<4x256xf32>
    %c16_194 = arith.constant 16 : index
    %c128_195 = arith.constant 128 : index
    %259 = vector.load %arg7[%c16_194, %c128_195] : memref<20x512xf32, #tpu.memory_space<vmem>>, vector<4x256xf32>
    tpu.vector_store %arg7[%c16_194, %c128_195], %258 {strides = array<i32>} : memref<20x512xf32, #tpu.memory_space<vmem>>, vector<4x256xf32>,
    %c0_196 = arith.constant 0 : index
    %c128_197 = arith.constant 128 : index
    %260 = vector.load %arg7[%c0_196, %c128_197] : memref<20x512xf32, #tpu.memory_space<vmem>>, vector<20x256xf32>
    %c0_198 = arith.constant 0 : index
    %c0_199 = arith.constant 0 : index
    %c0_200 = arith.constant 0 : index
    %261 = vector.load %arg4[%c0_198, %c0_199, %c0_200] : memref<3x4x20xf32, #tpu.memory_space<vmem>>, vector<1x4x20xf32>
    %262 = vector.shape_cast %261 : vector<1x4x20xf32> to vector<4x20xf32>
    %cst_201 = arith.constant dense<0.000000e+00> : vector<4x256xf32>
    %263 = tpu.matmul %262, %260, %cst_201 {dimension_numbers = #tpu.dot_dimension_numbers<[1], [0], [0], [1], [0, 0, 1, 1], [], []>} : vector<4x20xf32>, vector<20x256xf32>, vector<4x256xf32> -> vector<4x256xf32>
    %c0_202 = arith.constant 0 : index
    %c0_203 = arith.constant 0 : index
    %c0_204 = arith.constant 0 : index
    %264 = vector.load %arg5[%c0_202, %c0_203, %c0_204] : memref<3x4x1xf32, #tpu.memory_space<vmem>>, vector<1x4x1xf32>
    %265 = vector.shape_cast %264 : vector<1x4x1xf32> to vector<4x1xf32>
    %266 = vector.broadcast %265 : vector<4x1xf32> to vector<4x256xf32>
    %267 = arith.addf %263, %266 : vector<4x256xf32>
    %268 = vector.extract_strided_slice %260 {offsets = [0, 0], sizes = [4, 256], strides = [1, 1]} : vector<20x256xf32> to vector<4x256xf32>
    %269 = arith.addf %267, %268 : vector<4x256xf32>
    %c0_205 = arith.constant 0 : index
    %c128_206 = arith.constant 128 : index
    %270 = vector.load %arg7[%c0_205, %c128_206] : memref<20x512xf32, #tpu.memory_space<vmem>>, vector<4x256xf32>
    tpu.vector_store %arg7[%c0_205, %c128_206], %269 {strides = array<i32>} : memref<20x512xf32, #tpu.memory_space<vmem>>, vector<4x256xf32>,
    %c0_207 = arith.constant 0 : index
    %c111_208 = arith.constant 111 : index
    %271 = vector.load %arg7[%c0_207, %c111_208] : memref<20x512xf32, #tpu.memory_space<vmem>>, vector<4x256xf32>
    %cst_209 = arith.constant 0.000000e+00 : f32
    %272 = vector.shape_cast %31 : vector<1x256xi1> to vector<1x256xi1>
    %273 = vector.broadcast %272 : vector<1x256xi1> to vector<4x256xi1>
    %274 = vector.broadcast %cst_209 : f32 to vector<4x256xf32>
    %275 = arith.select %273, %271, %274 : vector<4x256xi1>, vector<4x256xf32>
    %c0_210 = arith.constant 0 : index
    %c0_211 = arith.constant 0 : index
    %276 = vector.load %arg8[%c0_210, %c0_211] : memref<144x256xf32, #tpu.memory_space<vmem>>, vector<4x256xf32>
    tpu.vector_store %arg8[%c0_210, %c0_211], %275 {strides = array<i32>} : memref<144x256xf32, #tpu.memory_space<vmem>>, vector<4x256xf32>,
    %c0_212 = arith.constant 0 : index
    %c112_213 = arith.constant 112 : index
    %277 = vector.load %arg7[%c0_212, %c112_213] : memref<20x512xf32, #tpu.memory_space<vmem>>, vector<4x256xf32>
    %c4_214 = arith.constant 4 : index
    %c0_215 = arith.constant 0 : index
    %278 = vector.load %arg8[%c4_214, %c0_215] : memref<144x256xf32, #tpu.memory_space<vmem>>, vector<4x256xf32>
    tpu.vector_store %arg8[%c4_214, %c0_215], %277 {strides = array<i32>} : memref<144x256xf32, #tpu.memory_space<vmem>>, vector<4x256xf32>,
    %c0_216 = arith.constant 0 : index
    %c113_217 = arith.constant 113 : index
    %279 = vector.load %arg7[%c0_216, %c113_217] : memref<20x512xf32, #tpu.memory_space<vmem>>, vector<4x256xf32>
    %cst_218 = arith.constant 0.000000e+00 : f32
    %280 = vector.shape_cast %40 : vector<1x256xi1> to vector<1x256xi1>
    %281 = vector.broadcast %280 : vector<1x256xi1> to vector<4x256xi1>
    %282 = vector.broadcast %cst_218 : f32 to vector<4x256xf32>
    %283 = arith.select %281, %279, %282 : vector<4x256xi1>, vector<4x256xf32>
    %c8_219 = arith.constant 8 : index
    %c0_220 = arith.constant 0 : index
    %284 = vector.load %arg8[%c8_219, %c0_220] : memref<144x256xf32, #tpu.memory_space<vmem>>, vector<4x256xf32>
    tpu.vector_store %arg8[%c8_219, %c0_220], %283 {strides = array<i32>} : memref<144x256xf32, #tpu.memory_space<vmem>>, vector<4x256xf32>,
    %c0_221 = arith.constant 0 : index
    %c127_222 = arith.constant 127 : index
    %285 = vector.load %arg7[%c0_221, %c127_222] : memref<20x512xf32, #tpu.memory_space<vmem>>, vector<4x256xf32>
    %cst_223 = arith.constant 0.000000e+00 : f32
    %286 = vector.shape_cast %31 : vector<1x256xi1> to vector<1x256xi1>
    %287 = vector.broadcast %286 : vector<1x256xi1> to vector<4x256xi1>
    %288 = vector.broadcast %cst_223 : f32 to vector<4x256xf32>
    %289 = arith.select %287, %285, %288 : vector<4x256xi1>, vector<4x256xf32>
    %c12_224 = arith.constant 12 : index
    %c0_225 = arith.constant 0 : index
    %290 = vector.load %arg8[%c12_224, %c0_225] : memref<144x256xf32, #tpu.memory_space<vmem>>, vector<4x256xf32>
    tpu.vector_store %arg8[%c12_224, %c0_225], %289 {strides = array<i32>} : memref<144x256xf32, #tpu.memory_space<vmem>>, vector<4x256xf32>,
    %c0_226 = arith.constant 0 : index
    %c128_227 = arith.constant 128 : index
    %291 = vector.load %arg7[%c0_226, %c128_227] : memref<20x512xf32, #tpu.memory_space<vmem>>, vector<4x256xf32>
    %c16_228 = arith.constant 16 : index
    %c0_229 = arith.constant 0 : index
    %292 = vector.load %arg8[%c16_228, %c0_229] : memref<144x256xf32, #tpu.memory_space<vmem>>, vector<4x256xf32>
    tpu.vector_store %arg8[%c16_228, %c0_229], %291 {strides = array<i32>} : memref<144x256xf32, #tpu.memory_space<vmem>>, vector<4x256xf32>,
    %c0_230 = arith.constant 0 : index
    %c129_231 = arith.constant 129 : index
    %293 = vector.load %arg7[%c0_230, %c129_231] : memref<20x512xf32, #tpu.memory_space<vmem>>, vector<4x256xf32>
    %cst_232 = arith.constant 0.000000e+00 : f32
    %294 = vector.shape_cast %40 : vector<1x256xi1> to vector<1x256xi1>
    %295 = vector.broadcast %294 : vector<1x256xi1> to vector<4x256xi1>
    %296 = vector.broadcast %cst_232 : f32 to vector<4x256xf32>
    %297 = arith.select %295, %293, %296 : vector<4x256xi1>, vector<4x256xf32>
    %c20_233 = arith.constant 20 : index
    %c0_234 = arith.constant 0 : index
    %298 = vector.load %arg8[%c20_233, %c0_234] : memref<144x256xf32, #tpu.memory_space<vmem>>, vector<4x256xf32>
    tpu.vector_store %arg8[%c20_233, %c0_234], %297 {strides = array<i32>} : memref<144x256xf32, #tpu.memory_space<vmem>>, vector<4x256xf32>,
    %c0_235 = arith.constant 0 : index
    %c143_236 = arith.constant 143 : index
    %299 = vector.load %arg7[%c0_235, %c143_236] : memref<20x512xf32, #tpu.memory_space<vmem>>, vector<4x256xf32>
    %cst_237 = arith.constant 0.000000e+00 : f32
    %300 = vector.shape_cast %31 : vector<1x256xi1> to vector<1x256xi1>
    %301 = vector.broadcast %300 : vector<1x256xi1> to vector<4x256xi1>
    %302 = vector.broadcast %cst_237 : f32 to vector<4x256xf32>
    %303 = arith.select %301, %299, %302 : vector<4x256xi1>, vector<4x256xf32>
    %c24_238 = arith.constant 24 : index
    %c0_239 = arith.constant 0 : index
    %304 = vector.load %arg8[%c24_238, %c0_239] : memref<144x256xf32, #tpu.memory_space<vmem>>, vector<4x256xf32>
    tpu.vector_store %arg8[%c24_238, %c0_239], %303 {strides = array<i32>} : memref<144x256xf32, #tpu.memory_space<vmem>>, vector<4x256xf32>,
    %c0_240 = arith.constant 0 : index
    %c144_241 = arith.constant 144 : index
    %305 = vector.load %arg7[%c0_240, %c144_241] : memref<20x512xf32, #tpu.memory_space<vmem>>, vector<4x256xf32>
    %c28_242 = arith.constant 28 : index
    %c0_243 = arith.constant 0 : index
    %306 = vector.load %arg8[%c28_242, %c0_243] : memref<144x256xf32, #tpu.memory_space<vmem>>, vector<4x256xf32>
    tpu.vector_store %arg8[%c28_242, %c0_243], %305 {strides = array<i32>} : memref<144x256xf32, #tpu.memory_space<vmem>>, vector<4x256xf32>,
    %c0_244 = arith.constant 0 : index
    %c145_245 = arith.constant 145 : index
    %307 = vector.load %arg7[%c0_244, %c145_245] : memref<20x512xf32, #tpu.memory_space<vmem>>, vector<4x256xf32>
    %cst_246 = arith.constant 0.000000e+00 : f32
    %308 = vector.shape_cast %40 : vector<1x256xi1> to vector<1x256xi1>
    %309 = vector.broadcast %308 : vector<1x256xi1> to vector<4x256xi1>
    %310 = vector.broadcast %cst_246 : f32 to vector<4x256xf32>
    %311 = arith.select %309, %307, %310 : vector<4x256xi1>, vector<4x256xf32>
    %c32_247 = arith.constant 32 : index
    %c0_248 = arith.constant 0 : index
    %312 = vector.load %arg8[%c32_247, %c0_248] : memref<144x256xf32, #tpu.memory_space<vmem>>, vector<4x256xf32>
    tpu.vector_store %arg8[%c32_247, %c0_248], %311 {strides = array<i32>} : memref<144x256xf32, #tpu.memory_space<vmem>>, vector<4x256xf32>,
    %c1_249 = arith.constant 1 : index
    %c0_250 = arith.constant 0 : index
    %c0_251 = arith.constant 0 : index
    %c0_252 = arith.constant 0 : index
    %313 = vector.load %arg2[%c1_249, %c0_250, %c0_251, %c0_252] : memref<3x4x4x144xf32, #tpu.memory_space<vmem>>, vector<1x1x4x144xf32>
    %314 = vector.shape_cast %313 : vector<1x1x4x144xf32> to vector<4x144xf32>
    %315 = vector.extract_strided_slice %314 {offsets = [0, 0], sizes = [4, 36], strides = [1, 1]} : vector<4x144xf32> to vector<4x36xf32>
    %c0_253 = arith.constant 0 : index
    %c0_254 = arith.constant 0 : index
    %316 = vector.load %arg8[%c0_253, %c0_254] : memref<144x256xf32, #tpu.memory_space<vmem>>, vector<36x256xf32>
    %cst_255 = arith.constant dense<0.000000e+00> : vector<4x256xf32>
    %317 = tpu.matmul %315, %316, %cst_255 {dimension_numbers = #tpu.dot_dimension_numbers<[1], [0], [0], [1], [0, 0, 1, 1], [], []>} : vector<4x36xf32>, vector<36x256xf32>, vector<4x256xf32> -> vector<4x256xf32>
    %c1_256 = arith.constant 1 : index
    %c0_257 = arith.constant 0 : index
    %c0_258 = arith.constant 0 : index
    %c0_259 = arith.constant 0 : index
    %318 = vector.load %arg3[%c1_256, %c0_257, %c0_258, %c0_259] : memref<3x4x4x1xf32, #tpu.memory_space<vmem>>, vector<1x1x4x1xf32>
    %319 = vector.shape_cast %318 : vector<1x1x4x1xf32> to vector<4x1xf32>
    %320 = vector.broadcast %319 : vector<4x1xf32> to vector<4x256xf32>
    %321 = arith.addf %317, %320 : vector<4x256xf32>
    %cst_260 = arith.constant 2.000000e-01 : f32
    %322 = vector.broadcast %cst_260 : f32 to vector<4x256xf32>
    %323 = arith.mulf %322, %321 : vector<4x256xf32>
    %324 = arith.maximumf %321, %323 : vector<4x256xf32>
    %c4_261 = arith.constant 4 : index
    %c128_262 = arith.constant 128 : index
    %325 = vector.load %arg7[%c4_261, %c128_262] : memref<20x512xf32, #tpu.memory_space<vmem>>, vector<4x256xf32>
    tpu.vector_store %arg7[%c4_261, %c128_262], %324 {strides = array<i32>} : memref<20x512xf32, #tpu.memory_space<vmem>>, vector<4x256xf32>,
    %c4_263 = arith.constant 4 : index
    %c111_264 = arith.constant 111 : index
    %326 = vector.load %arg7[%c4_263, %c111_264] : memref<20x512xf32, #tpu.memory_space<vmem>>, vector<4x256xf32>
    %cst_265 = arith.constant 0.000000e+00 : f32
    %327 = vector.shape_cast %31 : vector<1x256xi1> to vector<1x256xi1>
    %328 = vector.broadcast %327 : vector<1x256xi1> to vector<4x256xi1>
    %329 = vector.broadcast %cst_265 : f32 to vector<4x256xf32>
    %330 = arith.select %328, %326, %329 : vector<4x256xi1>, vector<4x256xf32>
    %c36_266 = arith.constant 36 : index
    %c0_267 = arith.constant 0 : index
    %331 = vector.load %arg8[%c36_266, %c0_267] : memref<144x256xf32, #tpu.memory_space<vmem>>, vector<4x256xf32>
    tpu.vector_store %arg8[%c36_266, %c0_267], %330 {strides = array<i32>} : memref<144x256xf32, #tpu.memory_space<vmem>>, vector<4x256xf32>,
    %c4_268 = arith.constant 4 : index
    %c112_269 = arith.constant 112 : index
    %332 = vector.load %arg7[%c4_268, %c112_269] : memref<20x512xf32, #tpu.memory_space<vmem>>, vector<4x256xf32>
    %c40_270 = arith.constant 40 : index
    %c0_271 = arith.constant 0 : index
    %333 = vector.load %arg8[%c40_270, %c0_271] : memref<144x256xf32, #tpu.memory_space<vmem>>, vector<4x256xf32>
    tpu.vector_store %arg8[%c40_270, %c0_271], %332 {strides = array<i32>} : memref<144x256xf32, #tpu.memory_space<vmem>>, vector<4x256xf32>,
    %c4_272 = arith.constant 4 : index
    %c113_273 = arith.constant 113 : index
    %334 = vector.load %arg7[%c4_272, %c113_273] : memref<20x512xf32, #tpu.memory_space<vmem>>, vector<4x256xf32>
    %cst_274 = arith.constant 0.000000e+00 : f32
    %335 = vector.shape_cast %40 : vector<1x256xi1> to vector<1x256xi1>
    %336 = vector.broadcast %335 : vector<1x256xi1> to vector<4x256xi1>
    %337 = vector.broadcast %cst_274 : f32 to vector<4x256xf32>
    %338 = arith.select %336, %334, %337 : vector<4x256xi1>, vector<4x256xf32>
    %c44_275 = arith.constant 44 : index
    %c0_276 = arith.constant 0 : index
    %339 = vector.load %arg8[%c44_275, %c0_276] : memref<144x256xf32, #tpu.memory_space<vmem>>, vector<4x256xf32>
    tpu.vector_store %arg8[%c44_275, %c0_276], %338 {strides = array<i32>} : memref<144x256xf32, #tpu.memory_space<vmem>>, vector<4x256xf32>,
    %c4_277 = arith.constant 4 : index
    %c127_278 = arith.constant 127 : index
    %340 = vector.load %arg7[%c4_277, %c127_278] : memref<20x512xf32, #tpu.memory_space<vmem>>, vector<4x256xf32>
    %cst_279 = arith.constant 0.000000e+00 : f32
    %341 = vector.shape_cast %31 : vector<1x256xi1> to vector<1x256xi1>
    %342 = vector.broadcast %341 : vector<1x256xi1> to vector<4x256xi1>
    %343 = vector.broadcast %cst_279 : f32 to vector<4x256xf32>
    %344 = arith.select %342, %340, %343 : vector<4x256xi1>, vector<4x256xf32>
    %c48_280 = arith.constant 48 : index
    %c0_281 = arith.constant 0 : index
    %345 = vector.load %arg8[%c48_280, %c0_281] : memref<144x256xf32, #tpu.memory_space<vmem>>, vector<4x256xf32>
    tpu.vector_store %arg8[%c48_280, %c0_281], %344 {strides = array<i32>} : memref<144x256xf32, #tpu.memory_space<vmem>>, vector<4x256xf32>,
    %c4_282 = arith.constant 4 : index
    %c128_283 = arith.constant 128 : index
    %346 = vector.load %arg7[%c4_282, %c128_283] : memref<20x512xf32, #tpu.memory_space<vmem>>, vector<4x256xf32>
    %c52_284 = arith.constant 52 : index
    %c0_285 = arith.constant 0 : index
    %347 = vector.load %arg8[%c52_284, %c0_285] : memref<144x256xf32, #tpu.memory_space<vmem>>, vector<4x256xf32>
    tpu.vector_store %arg8[%c52_284, %c0_285], %346 {strides = array<i32>} : memref<144x256xf32, #tpu.memory_space<vmem>>, vector<4x256xf32>,
    %c4_286 = arith.constant 4 : index
    %c129_287 = arith.constant 129 : index
    %348 = vector.load %arg7[%c4_286, %c129_287] : memref<20x512xf32, #tpu.memory_space<vmem>>, vector<4x256xf32>
    %cst_288 = arith.constant 0.000000e+00 : f32
    %349 = vector.shape_cast %40 : vector<1x256xi1> to vector<1x256xi1>
    %350 = vector.broadcast %349 : vector<1x256xi1> to vector<4x256xi1>
    %351 = vector.broadcast %cst_288 : f32 to vector<4x256xf32>
    %352 = arith.select %350, %348, %351 : vector<4x256xi1>, vector<4x256xf32>
    %c56_289 = arith.constant 56 : index
    %c0_290 = arith.constant 0 : index
    %353 = vector.load %arg8[%c56_289, %c0_290] : memref<144x256xf32, #tpu.memory_space<vmem>>, vector<4x256xf32>
    tpu.vector_store %arg8[%c56_289, %c0_290], %352 {strides = array<i32>} : memref<144x256xf32, #tpu.memory_space<vmem>>, vector<4x256xf32>,
    %c4_291 = arith.constant 4 : index
    %c143_292 = arith.constant 143 : index
    %354 = vector.load %arg7[%c4_291, %c143_292] : memref<20x512xf32, #tpu.memory_space<vmem>>, vector<4x256xf32>
    %cst_293 = arith.constant 0.000000e+00 : f32
    %355 = vector.shape_cast %31 : vector<1x256xi1> to vector<1x256xi1>
    %356 = vector.broadcast %355 : vector<1x256xi1> to vector<4x256xi1>
    %357 = vector.broadcast %cst_293 : f32 to vector<4x256xf32>
    %358 = arith.select %356, %354, %357 : vector<4x256xi1>, vector<4x256xf32>
    %c60_294 = arith.constant 60 : index
    %c0_295 = arith.constant 0 : index
    %359 = vector.load %arg8[%c60_294, %c0_295] : memref<144x256xf32, #tpu.memory_space<vmem>>, vector<4x256xf32>
    tpu.vector_store %arg8[%c60_294, %c0_295], %358 {strides = array<i32>} : memref<144x256xf32, #tpu.memory_space<vmem>>, vector<4x256xf32>,
    %c4_296 = arith.constant 4 : index
    %c144_297 = arith.constant 144 : index
    %360 = vector.load %arg7[%c4_296, %c144_297] : memref<20x512xf32, #tpu.memory_space<vmem>>, vector<4x256xf32>
    %c64_298 = arith.constant 64 : index
    %c0_299 = arith.constant 0 : index
    %361 = vector.load %arg8[%c64_298, %c0_299] : memref<144x256xf32, #tpu.memory_space<vmem>>, vector<4x256xf32>
    tpu.vector_store %arg8[%c64_298, %c0_299], %360 {strides = array<i32>} : memref<144x256xf32, #tpu.memory_space<vmem>>, vector<4x256xf32>,
    %c4_300 = arith.constant 4 : index
    %c145_301 = arith.constant 145 : index
    %362 = vector.load %arg7[%c4_300, %c145_301] : memref<20x512xf32, #tpu.memory_space<vmem>>, vector<4x256xf32>
    %cst_302 = arith.constant 0.000000e+00 : f32
    %363 = vector.shape_cast %40 : vector<1x256xi1> to vector<1x256xi1>
    %364 = vector.broadcast %363 : vector<1x256xi1> to vector<4x256xi1>
    %365 = vector.broadcast %cst_302 : f32 to vector<4x256xf32>
    %366 = arith.select %364, %362, %365 : vector<4x256xi1>, vector<4x256xf32>
    %c68_303 = arith.constant 68 : index
    %c0_304 = arith.constant 0 : index
    %367 = vector.load %arg8[%c68_303, %c0_304] : memref<144x256xf32, #tpu.memory_space<vmem>>, vector<4x256xf32>
    tpu.vector_store %arg8[%c68_303, %c0_304], %366 {strides = array<i32>} : memref<144x256xf32, #tpu.memory_space<vmem>>, vector<4x256xf32>,
    %c1_305 = arith.constant 1 : index
    %c1_306 = arith.constant 1 : index
    %c0_307 = arith.constant 0 : index
    %c0_308 = arith.constant 0 : index
    %368 = vector.load %arg2[%c1_305, %c1_306, %c0_307, %c0_308] : memref<3x4x4x144xf32, #tpu.memory_space<vmem>>, vector<1x1x4x144xf32>
    %369 = vector.shape_cast %368 : vector<1x1x4x144xf32> to vector<4x144xf32>
    %370 = vector.extract_strided_slice %369 {offsets = [0, 0], sizes = [4, 72], strides = [1, 1]} : vector<4x144xf32> to vector<4x72xf32>
    %c0_309 = arith.constant 0 : index
    %c0_310 = arith.constant 0 : index
    %371 = vector.load %arg8[%c0_309, %c0_310] : memref<144x256xf32, #tpu.memory_space<vmem>>, vector<72x256xf32>
    %cst_311 = arith.constant dense<0.000000e+00> : vector<4x256xf32>
    %372 = tpu.matmul %370, %371, %cst_311 {dimension_numbers = #tpu.dot_dimension_numbers<[1], [0], [0], [1], [0, 0, 1, 1], [], []>} : vector<4x72xf32>, vector<72x256xf32>, vector<4x256xf32> -> vector<4x256xf32>
    %c1_312 = arith.constant 1 : index
    %c1_313 = arith.constant 1 : index
    %c0_314 = arith.constant 0 : index
    %c0_315 = arith.constant 0 : index
    %373 = vector.load %arg3[%c1_312, %c1_313, %c0_314, %c0_315] : memref<3x4x4x1xf32, #tpu.memory_space<vmem>>, vector<1x1x4x1xf32>
    %374 = vector.shape_cast %373 : vector<1x1x4x1xf32> to vector<4x1xf32>
    %375 = vector.broadcast %374 : vector<4x1xf32> to vector<4x256xf32>
    %376 = arith.addf %372, %375 : vector<4x256xf32>
    %cst_316 = arith.constant 2.000000e-01 : f32
    %377 = vector.broadcast %cst_316 : f32 to vector<4x256xf32>
    %378 = arith.mulf %377, %376 : vector<4x256xf32>
    %379 = arith.maximumf %376, %378 : vector<4x256xf32>
    %c8_317 = arith.constant 8 : index
    %c128_318 = arith.constant 128 : index
    %380 = vector.load %arg7[%c8_317, %c128_318] : memref<20x512xf32, #tpu.memory_space<vmem>>, vector<4x256xf32>
    tpu.vector_store %arg7[%c8_317, %c128_318], %379 {strides = array<i32>} : memref<20x512xf32, #tpu.memory_space<vmem>>, vector<4x256xf32>,
    %c8_319 = arith.constant 8 : index
    %c111_320 = arith.constant 111 : index
    %381 = vector.load %arg7[%c8_319, %c111_320] : memref<20x512xf32, #tpu.memory_space<vmem>>, vector<4x256xf32>
    %cst_321 = arith.constant 0.000000e+00 : f32
    %382 = vector.shape_cast %31 : vector<1x256xi1> to vector<1x256xi1>
    %383 = vector.broadcast %382 : vector<1x256xi1> to vector<4x256xi1>
    %384 = vector.broadcast %cst_321 : f32 to vector<4x256xf32>
    %385 = arith.select %383, %381, %384 : vector<4x256xi1>, vector<4x256xf32>
    %c72_322 = arith.constant 72 : index
    %c0_323 = arith.constant 0 : index
    %386 = vector.load %arg8[%c72_322, %c0_323] : memref<144x256xf32, #tpu.memory_space<vmem>>, vector<4x256xf32>
    tpu.vector_store %arg8[%c72_322, %c0_323], %385 {strides = array<i32>} : memref<144x256xf32, #tpu.memory_space<vmem>>, vector<4x256xf32>,
    %c8_324 = arith.constant 8 : index
    %c112_325 = arith.constant 112 : index
    %387 = vector.load %arg7[%c8_324, %c112_325] : memref<20x512xf32, #tpu.memory_space<vmem>>, vector<4x256xf32>
    %c76_326 = arith.constant 76 : index
    %c0_327 = arith.constant 0 : index
    %388 = vector.load %arg8[%c76_326, %c0_327] : memref<144x256xf32, #tpu.memory_space<vmem>>, vector<4x256xf32>
    tpu.vector_store %arg8[%c76_326, %c0_327], %387 {strides = array<i32>} : memref<144x256xf32, #tpu.memory_space<vmem>>, vector<4x256xf32>,
    %c8_328 = arith.constant 8 : index
    %c113_329 = arith.constant 113 : index
    %389 = vector.load %arg7[%c8_328, %c113_329] : memref<20x512xf32, #tpu.memory_space<vmem>>, vector<4x256xf32>
    %cst_330 = arith.constant 0.000000e+00 : f32
    %390 = vector.shape_cast %40 : vector<1x256xi1> to vector<1x256xi1>
    %391 = vector.broadcast %390 : vector<1x256xi1> to vector<4x256xi1>
    %392 = vector.broadcast %cst_330 : f32 to vector<4x256xf32>
    %393 = arith.select %391, %389, %392 : vector<4x256xi1>, vector<4x256xf32>
    %c80_331 = arith.constant 80 : index
    %c0_332 = arith.constant 0 : index
    %394 = vector.load %arg8[%c80_331, %c0_332] : memref<144x256xf32, #tpu.memory_space<vmem>>, vector<4x256xf32>
    tpu.vector_store %arg8[%c80_331, %c0_332], %393 {strides = array<i32>} : memref<144x256xf32, #tpu.memory_space<vmem>>, vector<4x256xf32>,
    %c8_333 = arith.constant 8 : index
    %c127_334 = arith.constant 127 : index
    %395 = vector.load %arg7[%c8_333, %c127_334] : memref<20x512xf32, #tpu.memory_space<vmem>>, vector<4x256xf32>
    %cst_335 = arith.constant 0.000000e+00 : f32
    %396 = vector.shape_cast %31 : vector<1x256xi1> to vector<1x256xi1>
    %397 = vector.broadcast %396 : vector<1x256xi1> to vector<4x256xi1>
    %398 = vector.broadcast %cst_335 : f32 to vector<4x256xf32>
    %399 = arith.select %397, %395, %398 : vector<4x256xi1>, vector<4x256xf32>
    %c84_336 = arith.constant 84 : index
    %c0_337 = arith.constant 0 : index
    %400 = vector.load %arg8[%c84_336, %c0_337] : memref<144x256xf32, #tpu.memory_space<vmem>>, vector<4x256xf32>
    tpu.vector_store %arg8[%c84_336, %c0_337], %399 {strides = array<i32>} : memref<144x256xf32, #tpu.memory_space<vmem>>, vector<4x256xf32>,
    %c8_338 = arith.constant 8 : index
    %c128_339 = arith.constant 128 : index
    %401 = vector.load %arg7[%c8_338, %c128_339] : memref<20x512xf32, #tpu.memory_space<vmem>>, vector<4x256xf32>
    %c88_340 = arith.constant 88 : index
    %c0_341 = arith.constant 0 : index
    %402 = vector.load %arg8[%c88_340, %c0_341] : memref<144x256xf32, #tpu.memory_space<vmem>>, vector<4x256xf32>
    tpu.vector_store %arg8[%c88_340, %c0_341], %401 {strides = array<i32>} : memref<144x256xf32, #tpu.memory_space<vmem>>, vector<4x256xf32>,
    %c8_342 = arith.constant 8 : index
    %c129_343 = arith.constant 129 : index
    %403 = vector.load %arg7[%c8_342, %c129_343] : memref<20x512xf32, #tpu.memory_space<vmem>>, vector<4x256xf32>
    %cst_344 = arith.constant 0.000000e+00 : f32
    %404 = vector.shape_cast %40 : vector<1x256xi1> to vector<1x256xi1>
    %405 = vector.broadcast %404 : vector<1x256xi1> to vector<4x256xi1>
    %406 = vector.broadcast %cst_344 : f32 to vector<4x256xf32>
    %407 = arith.select %405, %403, %406 : vector<4x256xi1>, vector<4x256xf32>
    %c92_345 = arith.constant 92 : index
    %c0_346 = arith.constant 0 : index
    %408 = vector.load %arg8[%c92_345, %c0_346] : memref<144x256xf32, #tpu.memory_space<vmem>>, vector<4x256xf32>
    tpu.vector_store %arg8[%c92_345, %c0_346], %407 {strides = array<i32>} : memref<144x256xf32, #tpu.memory_space<vmem>>, vector<4x256xf32>,
    %c8_347 = arith.constant 8 : index
    %c143_348 = arith.constant 143 : index
    %409 = vector.load %arg7[%c8_347, %c143_348] : memref<20x512xf32, #tpu.memory_space<vmem>>, vector<4x256xf32>
    %cst_349 = arith.constant 0.000000e+00 : f32
    %410 = vector.shape_cast %31 : vector<1x256xi1> to vector<1x256xi1>
    %411 = vector.broadcast %410 : vector<1x256xi1> to vector<4x256xi1>
    %412 = vector.broadcast %cst_349 : f32 to vector<4x256xf32>
    %413 = arith.select %411, %409, %412 : vector<4x256xi1>, vector<4x256xf32>
    %c96_350 = arith.constant 96 : index
    %c0_351 = arith.constant 0 : index
    %414 = vector.load %arg8[%c96_350, %c0_351] : memref<144x256xf32, #tpu.memory_space<vmem>>, vector<4x256xf32>
    tpu.vector_store %arg8[%c96_350, %c0_351], %413 {strides = array<i32>} : memref<144x256xf32, #tpu.memory_space<vmem>>, vector<4x256xf32>,
    %c8_352 = arith.constant 8 : index
    %c144_353 = arith.constant 144 : index
    %415 = vector.load %arg7[%c8_352, %c144_353] : memref<20x512xf32, #tpu.memory_space<vmem>>, vector<4x256xf32>
    %c100_354 = arith.constant 100 : index
    %c0_355 = arith.constant 0 : index
    %416 = vector.load %arg8[%c100_354, %c0_355] : memref<144x256xf32, #tpu.memory_space<vmem>>, vector<4x256xf32>
    tpu.vector_store %arg8[%c100_354, %c0_355], %415 {strides = array<i32>} : memref<144x256xf32, #tpu.memory_space<vmem>>, vector<4x256xf32>,
    %c8_356 = arith.constant 8 : index
    %c145_357 = arith.constant 145 : index
    %417 = vector.load %arg7[%c8_356, %c145_357] : memref<20x512xf32, #tpu.memory_space<vmem>>, vector<4x256xf32>
    %cst_358 = arith.constant 0.000000e+00 : f32
    %418 = vector.shape_cast %40 : vector<1x256xi1> to vector<1x256xi1>
    %419 = vector.broadcast %418 : vector<1x256xi1> to vector<4x256xi1>
    %420 = vector.broadcast %cst_358 : f32 to vector<4x256xf32>
    %421 = arith.select %419, %417, %420 : vector<4x256xi1>, vector<4x256xf32>
    %c104_359 = arith.constant 104 : index
    %c0_360 = arith.constant 0 : index
    %422 = vector.load %arg8[%c104_359, %c0_360] : memref<144x256xf32, #tpu.memory_space<vmem>>, vector<4x256xf32>
    tpu.vector_store %arg8[%c104_359, %c0_360], %421 {strides = array<i32>} : memref<144x256xf32, #tpu.memory_space<vmem>>, vector<4x256xf32>,
    %c1_361 = arith.constant 1 : index
    %c2_362 = arith.constant 2 : index
    %c0_363 = arith.constant 0 : index
    %c0_364 = arith.constant 0 : index
    %423 = vector.load %arg2[%c1_361, %c2_362, %c0_363, %c0_364] : memref<3x4x4x144xf32, #tpu.memory_space<vmem>>, vector<1x1x4x144xf32>
    %424 = vector.shape_cast %423 : vector<1x1x4x144xf32> to vector<4x144xf32>
    %425 = vector.extract_strided_slice %424 {offsets = [0, 0], sizes = [4, 108], strides = [1, 1]} : vector<4x144xf32> to vector<4x108xf32>
    %c0_365 = arith.constant 0 : index
    %c0_366 = arith.constant 0 : index
    %426 = vector.load %arg8[%c0_365, %c0_366] : memref<144x256xf32, #tpu.memory_space<vmem>>, vector<108x256xf32>
    %cst_367 = arith.constant dense<0.000000e+00> : vector<4x256xf32>
    %427 = tpu.matmul %425, %426, %cst_367 {dimension_numbers = #tpu.dot_dimension_numbers<[1], [0], [0], [1], [0, 0, 1, 1], [], []>} : vector<4x108xf32>, vector<108x256xf32>, vector<4x256xf32> -> vector<4x256xf32>
    %c1_368 = arith.constant 1 : index
    %c2_369 = arith.constant 2 : index
    %c0_370 = arith.constant 0 : index
    %c0_371 = arith.constant 0 : index
    %428 = vector.load %arg3[%c1_368, %c2_369, %c0_370, %c0_371] : memref<3x4x4x1xf32, #tpu.memory_space<vmem>>, vector<1x1x4x1xf32>
    %429 = vector.shape_cast %428 : vector<1x1x4x1xf32> to vector<4x1xf32>
    %430 = vector.broadcast %429 : vector<4x1xf32> to vector<4x256xf32>
    %431 = arith.addf %427, %430 : vector<4x256xf32>
    %cst_372 = arith.constant 2.000000e-01 : f32
    %432 = vector.broadcast %cst_372 : f32 to vector<4x256xf32>
    %433 = arith.mulf %432, %431 : vector<4x256xf32>
    %434 = arith.maximumf %431, %433 : vector<4x256xf32>
    %c12_373 = arith.constant 12 : index
    %c128_374 = arith.constant 128 : index
    %435 = vector.load %arg7[%c12_373, %c128_374] : memref<20x512xf32, #tpu.memory_space<vmem>>, vector<4x256xf32>
    tpu.vector_store %arg7[%c12_373, %c128_374], %434 {strides = array<i32>} : memref<20x512xf32, #tpu.memory_space<vmem>>, vector<4x256xf32>,
    %c12_375 = arith.constant 12 : index
    %c111_376 = arith.constant 111 : index
    %436 = vector.load %arg7[%c12_375, %c111_376] : memref<20x512xf32, #tpu.memory_space<vmem>>, vector<4x256xf32>
    %cst_377 = arith.constant 0.000000e+00 : f32
    %437 = vector.shape_cast %31 : vector<1x256xi1> to vector<1x256xi1>
    %438 = vector.broadcast %437 : vector<1x256xi1> to vector<4x256xi1>
    %439 = vector.broadcast %cst_377 : f32 to vector<4x256xf32>
    %440 = arith.select %438, %436, %439 : vector<4x256xi1>, vector<4x256xf32>
    %c108_378 = arith.constant 108 : index
    %c0_379 = arith.constant 0 : index
    %441 = vector.load %arg8[%c108_378, %c0_379] : memref<144x256xf32, #tpu.memory_space<vmem>>, vector<4x256xf32>
    tpu.vector_store %arg8[%c108_378, %c0_379], %440 {strides = array<i32>} : memref<144x256xf32, #tpu.memory_space<vmem>>, vector<4x256xf32>,
    %c12_380 = arith.constant 12 : index
    %c112_381 = arith.constant 112 : index
    %442 = vector.load %arg7[%c12_380, %c112_381] : memref<20x512xf32, #tpu.memory_space<vmem>>, vector<4x256xf32>
    %c112_382 = arith.constant 112 : index
    %c0_383 = arith.constant 0 : index
    %443 = vector.load %arg8[%c112_382, %c0_383] : memref<144x256xf32, #tpu.memory_space<vmem>>, vector<4x256xf32>
    tpu.vector_store %arg8[%c112_382, %c0_383], %442 {strides = array<i32>} : memref<144x256xf32, #tpu.memory_space<vmem>>, vector<4x256xf32>,
    %c12_384 = arith.constant 12 : index
    %c113_385 = arith.constant 113 : index
    %444 = vector.load %arg7[%c12_384, %c113_385] : memref<20x512xf32, #tpu.memory_space<vmem>>, vector<4x256xf32>
    %cst_386 = arith.constant 0.000000e+00 : f32
    %445 = vector.shape_cast %40 : vector<1x256xi1> to vector<1x256xi1>
    %446 = vector.broadcast %445 : vector<1x256xi1> to vector<4x256xi1>
    %447 = vector.broadcast %cst_386 : f32 to vector<4x256xf32>
    %448 = arith.select %446, %444, %447 : vector<4x256xi1>, vector<4x256xf32>
    %c116_387 = arith.constant 116 : index
    %c0_388 = arith.constant 0 : index
    %449 = vector.load %arg8[%c116_387, %c0_388] : memref<144x256xf32, #tpu.memory_space<vmem>>, vector<4x256xf32>
    tpu.vector_store %arg8[%c116_387, %c0_388], %448 {strides = array<i32>} : memref<144x256xf32, #tpu.memory_space<vmem>>, vector<4x256xf32>,
    %c12_389 = arith.constant 12 : index
    %c127_390 = arith.constant 127 : index
    %450 = vector.load %arg7[%c12_389, %c127_390] : memref<20x512xf32, #tpu.memory_space<vmem>>, vector<4x256xf32>
    %cst_391 = arith.constant 0.000000e+00 : f32
    %451 = vector.shape_cast %31 : vector<1x256xi1> to vector<1x256xi1>
    %452 = vector.broadcast %451 : vector<1x256xi1> to vector<4x256xi1>
    %453 = vector.broadcast %cst_391 : f32 to vector<4x256xf32>
    %454 = arith.select %452, %450, %453 : vector<4x256xi1>, vector<4x256xf32>
    %c120_392 = arith.constant 120 : index
    %c0_393 = arith.constant 0 : index
    %455 = vector.load %arg8[%c120_392, %c0_393] : memref<144x256xf32, #tpu.memory_space<vmem>>, vector<4x256xf32>
    tpu.vector_store %arg8[%c120_392, %c0_393], %454 {strides = array<i32>} : memref<144x256xf32, #tpu.memory_space<vmem>>, vector<4x256xf32>,
    %c12_394 = arith.constant 12 : index
    %c128_395 = arith.constant 128 : index
    %456 = vector.load %arg7[%c12_394, %c128_395] : memref<20x512xf32, #tpu.memory_space<vmem>>, vector<4x256xf32>
    %c124_396 = arith.constant 124 : index
    %c0_397 = arith.constant 0 : index
    %457 = vector.load %arg8[%c124_396, %c0_397] : memref<144x256xf32, #tpu.memory_space<vmem>>, vector<4x256xf32>
    tpu.vector_store %arg8[%c124_396, %c0_397], %456 {strides = array<i32>} : memref<144x256xf32, #tpu.memory_space<vmem>>, vector<4x256xf32>,
    %c12_398 = arith.constant 12 : index
    %c129_399 = arith.constant 129 : index
    %458 = vector.load %arg7[%c12_398, %c129_399] : memref<20x512xf32, #tpu.memory_space<vmem>>, vector<4x256xf32>
    %cst_400 = arith.constant 0.000000e+00 : f32
    %459 = vector.shape_cast %40 : vector<1x256xi1> to vector<1x256xi1>
    %460 = vector.broadcast %459 : vector<1x256xi1> to vector<4x256xi1>
    %461 = vector.broadcast %cst_400 : f32 to vector<4x256xf32>
    %462 = arith.select %460, %458, %461 : vector<4x256xi1>, vector<4x256xf32>
    %c128_401 = arith.constant 128 : index
    %c0_402 = arith.constant 0 : index
    %463 = vector.load %arg8[%c128_401, %c0_402] : memref<144x256xf32, #tpu.memory_space<vmem>>, vector<4x256xf32>
    tpu.vector_store %arg8[%c128_401, %c0_402], %462 {strides = array<i32>} : memref<144x256xf32, #tpu.memory_space<vmem>>, vector<4x256xf32>,
    %c12_403 = arith.constant 12 : index
    %c143_404 = arith.constant 143 : index
    %464 = vector.load %arg7[%c12_403, %c143_404] : memref<20x512xf32, #tpu.memory_space<vmem>>, vector<4x256xf32>
    %cst_405 = arith.constant 0.000000e+00 : f32
    %465 = vector.shape_cast %31 : vector<1x256xi1> to vector<1x256xi1>
    %466 = vector.broadcast %465 : vector<1x256xi1> to vector<4x256xi1>
    %467 = vector.broadcast %cst_405 : f32 to vector<4x256xf32>
    %468 = arith.select %466, %464, %467 : vector<4x256xi1>, vector<4x256xf32>
    %c132_406 = arith.constant 132 : index
    %c0_407 = arith.constant 0 : index
    %469 = vector.load %arg8[%c132_406, %c0_407] : memref<144x256xf32, #tpu.memory_space<vmem>>, vector<4x256xf32>
    tpu.vector_store %arg8[%c132_406, %c0_407], %468 {strides = array<i32>} : memref<144x256xf32, #tpu.memory_space<vmem>>, vector<4x256xf32>,
    %c12_408 = arith.constant 12 : index
    %c144_409 = arith.constant 144 : index
    %470 = vector.load %arg7[%c12_408, %c144_409] : memref<20x512xf32, #tpu.memory_space<vmem>>, vector<4x256xf32>
    %c136_410 = arith.constant 136 : index
    %c0_411 = arith.constant 0 : index
    %471 = vector.load %arg8[%c136_410, %c0_411] : memref<144x256xf32, #tpu.memory_space<vmem>>, vector<4x256xf32>
    tpu.vector_store %arg8[%c136_410, %c0_411], %470 {strides = array<i32>} : memref<144x256xf32, #tpu.memory_space<vmem>>, vector<4x256xf32>,
    %c12_412 = arith.constant 12 : index
    %c145_413 = arith.constant 145 : index
    %472 = vector.load %arg7[%c12_412, %c145_413] : memref<20x512xf32, #tpu.memory_space<vmem>>, vector<4x256xf32>
    %cst_414 = arith.constant 0.000000e+00 : f32
    %473 = vector.shape_cast %40 : vector<1x256xi1> to vector<1x256xi1>
    %474 = vector.broadcast %473 : vector<1x256xi1> to vector<4x256xi1>
    %475 = vector.broadcast %cst_414 : f32 to vector<4x256xf32>
    %476 = arith.select %474, %472, %475 : vector<4x256xi1>, vector<4x256xf32>
    %c140_415 = arith.constant 140 : index
    %c0_416 = arith.constant 0 : index
    %477 = vector.load %arg8[%c140_415, %c0_416] : memref<144x256xf32, #tpu.memory_space<vmem>>, vector<4x256xf32>
    tpu.vector_store %arg8[%c140_415, %c0_416], %476 {strides = array<i32>} : memref<144x256xf32, #tpu.memory_space<vmem>>, vector<4x256xf32>,
    %c1_417 = arith.constant 1 : index
    %c3_418 = arith.constant 3 : index
    %c0_419 = arith.constant 0 : index
    %c0_420 = arith.constant 0 : index
    %478 = vector.load %arg2[%c1_417, %c3_418, %c0_419, %c0_420] : memref<3x4x4x144xf32, #tpu.memory_space<vmem>>, vector<1x1x4x144xf32>
    %479 = vector.shape_cast %478 : vector<1x1x4x144xf32> to vector<4x144xf32>
    %c0_421 = arith.constant 0 : index
    %c0_422 = arith.constant 0 : index
    %480 = vector.load %arg8[%c0_421, %c0_422] : memref<144x256xf32, #tpu.memory_space<vmem>>, vector<144x256xf32>
    %cst_423 = arith.constant dense<0.000000e+00> : vector<4x256xf32>
    %481 = tpu.matmul %479, %480, %cst_423 {dimension_numbers = #tpu.dot_dimension_numbers<[1], [0], [0], [1], [0, 0, 1, 1], [], []>} : vector<4x144xf32>, vector<144x256xf32>, vector<4x256xf32> -> vector<4x256xf32>
    %c1_424 = arith.constant 1 : index
    %c3_425 = arith.constant 3 : index
    %c0_426 = arith.constant 0 : index
    %c0_427 = arith.constant 0 : index
    %482 = vector.load %arg3[%c1_424, %c3_425, %c0_426, %c0_427] : memref<3x4x4x1xf32, #tpu.memory_space<vmem>>, vector<1x1x4x1xf32>
    %483 = vector.shape_cast %482 : vector<1x1x4x1xf32> to vector<4x1xf32>
    %484 = vector.broadcast %483 : vector<4x1xf32> to vector<4x256xf32>
    %485 = arith.addf %481, %484 : vector<4x256xf32>
    %cst_428 = arith.constant 2.000000e-01 : f32
    %486 = vector.broadcast %cst_428 : f32 to vector<4x256xf32>
    %487 = arith.mulf %486, %485 : vector<4x256xf32>
    %488 = arith.maximumf %485, %487 : vector<4x256xf32>
    %c16_429 = arith.constant 16 : index
    %c128_430 = arith.constant 128 : index
    %489 = vector.load %arg7[%c16_429, %c128_430] : memref<20x512xf32, #tpu.memory_space<vmem>>, vector<4x256xf32>
    tpu.vector_store %arg7[%c16_429, %c128_430], %488 {strides = array<i32>} : memref<20x512xf32, #tpu.memory_space<vmem>>, vector<4x256xf32>,
    %c0_431 = arith.constant 0 : index
    %c128_432 = arith.constant 128 : index
    %490 = vector.load %arg7[%c0_431, %c128_432] : memref<20x512xf32, #tpu.memory_space<vmem>>, vector<20x256xf32>
    %c1_433 = arith.constant 1 : index
    %c0_434 = arith.constant 0 : index
    %c0_435 = arith.constant 0 : index
    %491 = vector.load %arg4[%c1_433, %c0_434, %c0_435] : memref<3x4x20xf32, #tpu.memory_space<vmem>>, vector<1x4x20xf32>
    %492 = vector.shape_cast %491 : vector<1x4x20xf32> to vector<4x20xf32>
    %cst_436 = arith.constant dense<0.000000e+00> : vector<4x256xf32>
    %493 = tpu.matmul %492, %490, %cst_436 {dimension_numbers = #tpu.dot_dimension_numbers<[1], [0], [0], [1], [0, 0, 1, 1], [], []>} : vector<4x20xf32>, vector<20x256xf32>, vector<4x256xf32> -> vector<4x256xf32>
    %c1_437 = arith.constant 1 : index
    %c0_438 = arith.constant 0 : index
    %c0_439 = arith.constant 0 : index
    %494 = vector.load %arg5[%c1_437, %c0_438, %c0_439] : memref<3x4x1xf32, #tpu.memory_space<vmem>>, vector<1x4x1xf32>
    %495 = vector.shape_cast %494 : vector<1x4x1xf32> to vector<4x1xf32>
    %496 = vector.broadcast %495 : vector<4x1xf32> to vector<4x256xf32>
    %497 = arith.addf %493, %496 : vector<4x256xf32>
    %498 = vector.extract_strided_slice %490 {offsets = [0, 0], sizes = [4, 256], strides = [1, 1]} : vector<20x256xf32> to vector<4x256xf32>
    %499 = arith.addf %497, %498 : vector<4x256xf32>
    %c0_440 = arith.constant 0 : index
    %c128_441 = arith.constant 128 : index
    %500 = vector.load %arg7[%c0_440, %c128_441] : memref<20x512xf32, #tpu.memory_space<vmem>>, vector<4x256xf32>
    tpu.vector_store %arg7[%c0_440, %c128_441], %499 {strides = array<i32>} : memref<20x512xf32, #tpu.memory_space<vmem>>, vector<4x256xf32>,
    %c0_442 = arith.constant 0 : index
    %c111_443 = arith.constant 111 : index
    %501 = vector.load %arg7[%c0_442, %c111_443] : memref<20x512xf32, #tpu.memory_space<vmem>>, vector<4x256xf32>
    %cst_444 = arith.constant 0.000000e+00 : f32
    %502 = vector.shape_cast %31 : vector<1x256xi1> to vector<1x256xi1>
    %503 = vector.broadcast %502 : vector<1x256xi1> to vector<4x256xi1>
    %504 = vector.broadcast %cst_444 : f32 to vector<4x256xf32>
    %505 = arith.select %503, %501, %504 : vector<4x256xi1>, vector<4x256xf32>
    %c0_445 = arith.constant 0 : index
    %c0_446 = arith.constant 0 : index
    %506 = vector.load %arg8[%c0_445, %c0_446] : memref<144x256xf32, #tpu.memory_space<vmem>>, vector<4x256xf32>
    tpu.vector_store %arg8[%c0_445, %c0_446], %505 {strides = array<i32>} : memref<144x256xf32, #tpu.memory_space<vmem>>, vector<4x256xf32>,
    %c0_447 = arith.constant 0 : index
    %c112_448 = arith.constant 112 : index
    %507 = vector.load %arg7[%c0_447, %c112_448] : memref<20x512xf32, #tpu.memory_space<vmem>>, vector<4x256xf32>
    %c4_449 = arith.constant 4 : index
    %c0_450 = arith.constant 0 : index
    %508 = vector.load %arg8[%c4_449, %c0_450] : memref<144x256xf32, #tpu.memory_space<vmem>>, vector<4x256xf32>
    tpu.vector_store %arg8[%c4_449, %c0_450], %507 {strides = array<i32>} : memref<144x256xf32, #tpu.memory_space<vmem>>, vector<4x256xf32>,
    %c0_451 = arith.constant 0 : index
    %c113_452 = arith.constant 113 : index
    %509 = vector.load %arg7[%c0_451, %c113_452] : memref<20x512xf32, #tpu.memory_space<vmem>>, vector<4x256xf32>
    %cst_453 = arith.constant 0.000000e+00 : f32
    %510 = vector.shape_cast %40 : vector<1x256xi1> to vector<1x256xi1>
    %511 = vector.broadcast %510 : vector<1x256xi1> to vector<4x256xi1>
    %512 = vector.broadcast %cst_453 : f32 to vector<4x256xf32>
    %513 = arith.select %511, %509, %512 : vector<4x256xi1>, vector<4x256xf32>
    %c8_454 = arith.constant 8 : index
    %c0_455 = arith.constant 0 : index
    %514 = vector.load %arg8[%c8_454, %c0_455] : memref<144x256xf32, #tpu.memory_space<vmem>>, vector<4x256xf32>
    tpu.vector_store %arg8[%c8_454, %c0_455], %513 {strides = array<i32>} : memref<144x256xf32, #tpu.memory_space<vmem>>, vector<4x256xf32>,
    %c0_456 = arith.constant 0 : index
    %c127_457 = arith.constant 127 : index
    %515 = vector.load %arg7[%c0_456, %c127_457] : memref<20x512xf32, #tpu.memory_space<vmem>>, vector<4x256xf32>
    %cst_458 = arith.constant 0.000000e+00 : f32
    %516 = vector.shape_cast %31 : vector<1x256xi1> to vector<1x256xi1>
    %517 = vector.broadcast %516 : vector<1x256xi1> to vector<4x256xi1>
    %518 = vector.broadcast %cst_458 : f32 to vector<4x256xf32>
    %519 = arith.select %517, %515, %518 : vector<4x256xi1>, vector<4x256xf32>
    %c12_459 = arith.constant 12 : index
    %c0_460 = arith.constant 0 : index
    %520 = vector.load %arg8[%c12_459, %c0_460] : memref<144x256xf32, #tpu.memory_space<vmem>>, vector<4x256xf32>
    tpu.vector_store %arg8[%c12_459, %c0_460], %519 {strides = array<i32>} : memref<144x256xf32, #tpu.memory_space<vmem>>, vector<4x256xf32>,
    %c0_461 = arith.constant 0 : index
    %c128_462 = arith.constant 128 : index
    %521 = vector.load %arg7[%c0_461, %c128_462] : memref<20x512xf32, #tpu.memory_space<vmem>>, vector<4x256xf32>
    %c16_463 = arith.constant 16 : index
    %c0_464 = arith.constant 0 : index
    %522 = vector.load %arg8[%c16_463, %c0_464] : memref<144x256xf32, #tpu.memory_space<vmem>>, vector<4x256xf32>
    tpu.vector_store %arg8[%c16_463, %c0_464], %521 {strides = array<i32>} : memref<144x256xf32, #tpu.memory_space<vmem>>, vector<4x256xf32>,
    %c0_465 = arith.constant 0 : index
    %c129_466 = arith.constant 129 : index
    %523 = vector.load %arg7[%c0_465, %c129_466] : memref<20x512xf32, #tpu.memory_space<vmem>>, vector<4x256xf32>
    %cst_467 = arith.constant 0.000000e+00 : f32
    %524 = vector.shape_cast %40 : vector<1x256xi1> to vector<1x256xi1>
    %525 = vector.broadcast %524 : vector<1x256xi1> to vector<4x256xi1>
    %526 = vector.broadcast %cst_467 : f32 to vector<4x256xf32>
    %527 = arith.select %525, %523, %526 : vector<4x256xi1>, vector<4x256xf32>
    %c20_468 = arith.constant 20 : index
    %c0_469 = arith.constant 0 : index
    %528 = vector.load %arg8[%c20_468, %c0_469] : memref<144x256xf32, #tpu.memory_space<vmem>>, vector<4x256xf32>
    tpu.vector_store %arg8[%c20_468, %c0_469], %527 {strides = array<i32>} : memref<144x256xf32, #tpu.memory_space<vmem>>, vector<4x256xf32>,
    %c0_470 = arith.constant 0 : index
    %c143_471 = arith.constant 143 : index
    %529 = vector.load %arg7[%c0_470, %c143_471] : memref<20x512xf32, #tpu.memory_space<vmem>>, vector<4x256xf32>
    %cst_472 = arith.constant 0.000000e+00 : f32
    %530 = vector.shape_cast %31 : vector<1x256xi1> to vector<1x256xi1>
    %531 = vector.broadcast %530 : vector<1x256xi1> to vector<4x256xi1>
    %532 = vector.broadcast %cst_472 : f32 to vector<4x256xf32>
    %533 = arith.select %531, %529, %532 : vector<4x256xi1>, vector<4x256xf32>
    %c24_473 = arith.constant 24 : index
    %c0_474 = arith.constant 0 : index
    %534 = vector.load %arg8[%c24_473, %c0_474] : memref<144x256xf32, #tpu.memory_space<vmem>>, vector<4x256xf32>
    tpu.vector_store %arg8[%c24_473, %c0_474], %533 {strides = array<i32>} : memref<144x256xf32, #tpu.memory_space<vmem>>, vector<4x256xf32>,
    %c0_475 = arith.constant 0 : index
    %c144_476 = arith.constant 144 : index
    %535 = vector.load %arg7[%c0_475, %c144_476] : memref<20x512xf32, #tpu.memory_space<vmem>>, vector<4x256xf32>
    %c28_477 = arith.constant 28 : index
    %c0_478 = arith.constant 0 : index
    %536 = vector.load %arg8[%c28_477, %c0_478] : memref<144x256xf32, #tpu.memory_space<vmem>>, vector<4x256xf32>
    tpu.vector_store %arg8[%c28_477, %c0_478], %535 {strides = array<i32>} : memref<144x256xf32, #tpu.memory_space<vmem>>, vector<4x256xf32>,
    %c0_479 = arith.constant 0 : index
    %c145_480 = arith.constant 145 : index
    %537 = vector.load %arg7[%c0_479, %c145_480] : memref<20x512xf32, #tpu.memory_space<vmem>>, vector<4x256xf32>
    %cst_481 = arith.constant 0.000000e+00 : f32
    %538 = vector.shape_cast %40 : vector<1x256xi1> to vector<1x256xi1>
    %539 = vector.broadcast %538 : vector<1x256xi1> to vector<4x256xi1>
    %540 = vector.broadcast %cst_481 : f32 to vector<4x256xf32>
    %541 = arith.select %539, %537, %540 : vector<4x256xi1>, vector<4x256xf32>
    %c32_482 = arith.constant 32 : index
    %c0_483 = arith.constant 0 : index
    %542 = vector.load %arg8[%c32_482, %c0_483] : memref<144x256xf32, #tpu.memory_space<vmem>>, vector<4x256xf32>
    tpu.vector_store %arg8[%c32_482, %c0_483], %541 {strides = array<i32>} : memref<144x256xf32, #tpu.memory_space<vmem>>, vector<4x256xf32>,
    %c2_484 = arith.constant 2 : index
    %c0_485 = arith.constant 0 : index
    %c0_486 = arith.constant 0 : index
    %c0_487 = arith.constant 0 : index
    %543 = vector.load %arg2[%c2_484, %c0_485, %c0_486, %c0_487] : memref<3x4x4x144xf32, #tpu.memory_space<vmem>>, vector<1x1x4x144xf32>
    %544 = vector.shape_cast %543 : vector<1x1x4x144xf32> to vector<4x144xf32>
    %545 = vector.extract_strided_slice %544 {offsets = [0, 0], sizes = [4, 36], strides = [1, 1]} : vector<4x144xf32> to vector<4x36xf32>
    %c0_488 = arith.constant 0 : index
    %c0_489 = arith.constant 0 : index
    %546 = vector.load %arg8[%c0_488, %c0_489] : memref<144x256xf32, #tpu.memory_space<vmem>>, vector<36x256xf32>
    %cst_490 = arith.constant dense<0.000000e+00> : vector<4x256xf32>
    %547 = tpu.matmul %545, %546, %cst_490 {dimension_numbers = #tpu.dot_dimension_numbers<[1], [0], [0], [1], [0, 0, 1, 1], [], []>} : vector<4x36xf32>, vector<36x256xf32>, vector<4x256xf32> -> vector<4x256xf32>
    %c2_491 = arith.constant 2 : index
    %c0_492 = arith.constant 0 : index
    %c0_493 = arith.constant 0 : index
    %c0_494 = arith.constant 0 : index
    %548 = vector.load %arg3[%c2_491, %c0_492, %c0_493, %c0_494] : memref<3x4x4x1xf32, #tpu.memory_space<vmem>>, vector<1x1x4x1xf32>
    %549 = vector.shape_cast %548 : vector<1x1x4x1xf32> to vector<4x1xf32>
    %550 = vector.broadcast %549 : vector<4x1xf32> to vector<4x256xf32>
    %551 = arith.addf %547, %550 : vector<4x256xf32>
    %cst_495 = arith.constant 2.000000e-01 : f32
    %552 = vector.broadcast %cst_495 : f32 to vector<4x256xf32>
    %553 = arith.mulf %552, %551 : vector<4x256xf32>
    %554 = arith.maximumf %551, %553 : vector<4x256xf32>
    %c4_496 = arith.constant 4 : index
    %c128_497 = arith.constant 128 : index
    %555 = vector.load %arg7[%c4_496, %c128_497] : memref<20x512xf32, #tpu.memory_space<vmem>>, vector<4x256xf32>
    tpu.vector_store %arg7[%c4_496, %c128_497], %554 {strides = array<i32>} : memref<20x512xf32, #tpu.memory_space<vmem>>, vector<4x256xf32>,
    %c4_498 = arith.constant 4 : index
    %c111_499 = arith.constant 111 : index
    %556 = vector.load %arg7[%c4_498, %c111_499] : memref<20x512xf32, #tpu.memory_space<vmem>>, vector<4x256xf32>
    %cst_500 = arith.constant 0.000000e+00 : f32
    %557 = vector.shape_cast %31 : vector<1x256xi1> to vector<1x256xi1>
    %558 = vector.broadcast %557 : vector<1x256xi1> to vector<4x256xi1>
    %559 = vector.broadcast %cst_500 : f32 to vector<4x256xf32>
    %560 = arith.select %558, %556, %559 : vector<4x256xi1>, vector<4x256xf32>
    %c36_501 = arith.constant 36 : index
    %c0_502 = arith.constant 0 : index
    %561 = vector.load %arg8[%c36_501, %c0_502] : memref<144x256xf32, #tpu.memory_space<vmem>>, vector<4x256xf32>
    tpu.vector_store %arg8[%c36_501, %c0_502], %560 {strides = array<i32>} : memref<144x256xf32, #tpu.memory_space<vmem>>, vector<4x256xf32>,
    %c4_503 = arith.constant 4 : index
    %c112_504 = arith.constant 112 : index
    %562 = vector.load %arg7[%c4_503, %c112_504] : memref<20x512xf32, #tpu.memory_space<vmem>>, vector<4x256xf32>
    %c40_505 = arith.constant 40 : index
    %c0_506 = arith.constant 0 : index
    %563 = vector.load %arg8[%c40_505, %c0_506] : memref<144x256xf32, #tpu.memory_space<vmem>>, vector<4x256xf32>
    tpu.vector_store %arg8[%c40_505, %c0_506], %562 {strides = array<i32>} : memref<144x256xf32, #tpu.memory_space<vmem>>, vector<4x256xf32>,
    %c4_507 = arith.constant 4 : index
    %c113_508 = arith.constant 113 : index
    %564 = vector.load %arg7[%c4_507, %c113_508] : memref<20x512xf32, #tpu.memory_space<vmem>>, vector<4x256xf32>
    %cst_509 = arith.constant 0.000000e+00 : f32
    %565 = vector.shape_cast %40 : vector<1x256xi1> to vector<1x256xi1>
    %566 = vector.broadcast %565 : vector<1x256xi1> to vector<4x256xi1>
    %567 = vector.broadcast %cst_509 : f32 to vector<4x256xf32>
    %568 = arith.select %566, %564, %567 : vector<4x256xi1>, vector<4x256xf32>
    %c44_510 = arith.constant 44 : index
    %c0_511 = arith.constant 0 : index
    %569 = vector.load %arg8[%c44_510, %c0_511] : memref<144x256xf32, #tpu.memory_space<vmem>>, vector<4x256xf32>
    tpu.vector_store %arg8[%c44_510, %c0_511], %568 {strides = array<i32>} : memref<144x256xf32, #tpu.memory_space<vmem>>, vector<4x256xf32>,
    %c4_512 = arith.constant 4 : index
    %c127_513 = arith.constant 127 : index
    %570 = vector.load %arg7[%c4_512, %c127_513] : memref<20x512xf32, #tpu.memory_space<vmem>>, vector<4x256xf32>
    %cst_514 = arith.constant 0.000000e+00 : f32
    %571 = vector.shape_cast %31 : vector<1x256xi1> to vector<1x256xi1>
    %572 = vector.broadcast %571 : vector<1x256xi1> to vector<4x256xi1>
    %573 = vector.broadcast %cst_514 : f32 to vector<4x256xf32>
    %574 = arith.select %572, %570, %573 : vector<4x256xi1>, vector<4x256xf32>
    %c48_515 = arith.constant 48 : index
    %c0_516 = arith.constant 0 : index
    %575 = vector.load %arg8[%c48_515, %c0_516] : memref<144x256xf32, #tpu.memory_space<vmem>>, vector<4x256xf32>
    tpu.vector_store %arg8[%c48_515, %c0_516], %574 {strides = array<i32>} : memref<144x256xf32, #tpu.memory_space<vmem>>, vector<4x256xf32>,
    %c4_517 = arith.constant 4 : index
    %c128_518 = arith.constant 128 : index
    %576 = vector.load %arg7[%c4_517, %c128_518] : memref<20x512xf32, #tpu.memory_space<vmem>>, vector<4x256xf32>
    %c52_519 = arith.constant 52 : index
    %c0_520 = arith.constant 0 : index
    %577 = vector.load %arg8[%c52_519, %c0_520] : memref<144x256xf32, #tpu.memory_space<vmem>>, vector<4x256xf32>
    tpu.vector_store %arg8[%c52_519, %c0_520], %576 {strides = array<i32>} : memref<144x256xf32, #tpu.memory_space<vmem>>, vector<4x256xf32>,
    %c4_521 = arith.constant 4 : index
    %c129_522 = arith.constant 129 : index
    %578 = vector.load %arg7[%c4_521, %c129_522] : memref<20x512xf32, #tpu.memory_space<vmem>>, vector<4x256xf32>
    %cst_523 = arith.constant 0.000000e+00 : f32
    %579 = vector.shape_cast %40 : vector<1x256xi1> to vector<1x256xi1>
    %580 = vector.broadcast %579 : vector<1x256xi1> to vector<4x256xi1>
    %581 = vector.broadcast %cst_523 : f32 to vector<4x256xf32>
    %582 = arith.select %580, %578, %581 : vector<4x256xi1>, vector<4x256xf32>
    %c56_524 = arith.constant 56 : index
    %c0_525 = arith.constant 0 : index
    %583 = vector.load %arg8[%c56_524, %c0_525] : memref<144x256xf32, #tpu.memory_space<vmem>>, vector<4x256xf32>
    tpu.vector_store %arg8[%c56_524, %c0_525], %582 {strides = array<i32>} : memref<144x256xf32, #tpu.memory_space<vmem>>, vector<4x256xf32>,
    %c4_526 = arith.constant 4 : index
    %c143_527 = arith.constant 143 : index
    %584 = vector.load %arg7[%c4_526, %c143_527] : memref<20x512xf32, #tpu.memory_space<vmem>>, vector<4x256xf32>
    %cst_528 = arith.constant 0.000000e+00 : f32
    %585 = vector.shape_cast %31 : vector<1x256xi1> to vector<1x256xi1>
    %586 = vector.broadcast %585 : vector<1x256xi1> to vector<4x256xi1>
    %587 = vector.broadcast %cst_528 : f32 to vector<4x256xf32>
    %588 = arith.select %586, %584, %587 : vector<4x256xi1>, vector<4x256xf32>
    %c60_529 = arith.constant 60 : index
    %c0_530 = arith.constant 0 : index
    %589 = vector.load %arg8[%c60_529, %c0_530] : memref<144x256xf32, #tpu.memory_space<vmem>>, vector<4x256xf32>
    tpu.vector_store %arg8[%c60_529, %c0_530], %588 {strides = array<i32>} : memref<144x256xf32, #tpu.memory_space<vmem>>, vector<4x256xf32>,
    %c4_531 = arith.constant 4 : index
    %c144_532 = arith.constant 144 : index
    %590 = vector.load %arg7[%c4_531, %c144_532] : memref<20x512xf32, #tpu.memory_space<vmem>>, vector<4x256xf32>
    %c64_533 = arith.constant 64 : index
    %c0_534 = arith.constant 0 : index
    %591 = vector.load %arg8[%c64_533, %c0_534] : memref<144x256xf32, #tpu.memory_space<vmem>>, vector<4x256xf32>
    tpu.vector_store %arg8[%c64_533, %c0_534], %590 {strides = array<i32>} : memref<144x256xf32, #tpu.memory_space<vmem>>, vector<4x256xf32>,
    %c4_535 = arith.constant 4 : index
    %c145_536 = arith.constant 145 : index
    %592 = vector.load %arg7[%c4_535, %c145_536] : memref<20x512xf32, #tpu.memory_space<vmem>>, vector<4x256xf32>
    %cst_537 = arith.constant 0.000000e+00 : f32
    %593 = vector.shape_cast %40 : vector<1x256xi1> to vector<1x256xi1>
    %594 = vector.broadcast %593 : vector<1x256xi1> to vector<4x256xi1>
    %595 = vector.broadcast %cst_537 : f32 to vector<4x256xf32>
    %596 = arith.select %594, %592, %595 : vector<4x256xi1>, vector<4x256xf32>
    %c68_538 = arith.constant 68 : index
    %c0_539 = arith.constant 0 : index
    %597 = vector.load %arg8[%c68_538, %c0_539] : memref<144x256xf32, #tpu.memory_space<vmem>>, vector<4x256xf32>
    tpu.vector_store %arg8[%c68_538, %c0_539], %596 {strides = array<i32>} : memref<144x256xf32, #tpu.memory_space<vmem>>, vector<4x256xf32>,
    %c2_540 = arith.constant 2 : index
    %c1_541 = arith.constant 1 : index
    %c0_542 = arith.constant 0 : index
    %c0_543 = arith.constant 0 : index
    %598 = vector.load %arg2[%c2_540, %c1_541, %c0_542, %c0_543] : memref<3x4x4x144xf32, #tpu.memory_space<vmem>>, vector<1x1x4x144xf32>
    %599 = vector.shape_cast %598 : vector<1x1x4x144xf32> to vector<4x144xf32>
    %600 = vector.extract_strided_slice %599 {offsets = [0, 0], sizes = [4, 72], strides = [1, 1]} : vector<4x144xf32> to vector<4x72xf32>
    %c0_544 = arith.constant 0 : index
    %c0_545 = arith.constant 0 : index
    %601 = vector.load %arg8[%c0_544, %c0_545] : memref<144x256xf32, #tpu.memory_space<vmem>>, vector<72x256xf32>
    %cst_546 = arith.constant dense<0.000000e+00> : vector<4x256xf32>
    %602 = tpu.matmul %600, %601, %cst_546 {dimension_numbers = #tpu.dot_dimension_numbers<[1], [0], [0], [1], [0, 0, 1, 1], [], []>} : vector<4x72xf32>, vector<72x256xf32>, vector<4x256xf32> -> vector<4x256xf32>
    %c2_547 = arith.constant 2 : index
    %c1_548 = arith.constant 1 : index
    %c0_549 = arith.constant 0 : index
    %c0_550 = arith.constant 0 : index
    %603 = vector.load %arg3[%c2_547, %c1_548, %c0_549, %c0_550] : memref<3x4x4x1xf32, #tpu.memory_space<vmem>>, vector<1x1x4x1xf32>
    %604 = vector.shape_cast %603 : vector<1x1x4x1xf32> to vector<4x1xf32>
    %605 = vector.broadcast %604 : vector<4x1xf32> to vector<4x256xf32>
    %606 = arith.addf %602, %605 : vector<4x256xf32>
    %cst_551 = arith.constant 2.000000e-01 : f32
    %607 = vector.broadcast %cst_551 : f32 to vector<4x256xf32>
    %608 = arith.mulf %607, %606 : vector<4x256xf32>
    %609 = arith.maximumf %606, %608 : vector<4x256xf32>
    %c8_552 = arith.constant 8 : index
    %c128_553 = arith.constant 128 : index
    %610 = vector.load %arg7[%c8_552, %c128_553] : memref<20x512xf32, #tpu.memory_space<vmem>>, vector<4x256xf32>
    tpu.vector_store %arg7[%c8_552, %c128_553], %609 {strides = array<i32>} : memref<20x512xf32, #tpu.memory_space<vmem>>, vector<4x256xf32>,
    %c8_554 = arith.constant 8 : index
    %c111_555 = arith.constant 111 : index
    %611 = vector.load %arg7[%c8_554, %c111_555] : memref<20x512xf32, #tpu.memory_space<vmem>>, vector<4x256xf32>
    %cst_556 = arith.constant 0.000000e+00 : f32
    %612 = vector.shape_cast %31 : vector<1x256xi1> to vector<1x256xi1>
    %613 = vector.broadcast %612 : vector<1x256xi1> to vector<4x256xi1>
    %614 = vector.broadcast %cst_556 : f32 to vector<4x256xf32>
    %615 = arith.select %613, %611, %614 : vector<4x256xi1>, vector<4x256xf32>
    %c72_557 = arith.constant 72 : index
    %c0_558 = arith.constant 0 : index
    %616 = vector.load %arg8[%c72_557, %c0_558] : memref<144x256xf32, #tpu.memory_space<vmem>>, vector<4x256xf32>
    tpu.vector_store %arg8[%c72_557, %c0_558], %615 {strides = array<i32>} : memref<144x256xf32, #tpu.memory_space<vmem>>, vector<4x256xf32>,
    %c8_559 = arith.constant 8 : index
    %c112_560 = arith.constant 112 : index
    %617 = vector.load %arg7[%c8_559, %c112_560] : memref<20x512xf32, #tpu.memory_space<vmem>>, vector<4x256xf32>
    %c76_561 = arith.constant 76 : index
    %c0_562 = arith.constant 0 : index
    %618 = vector.load %arg8[%c76_561, %c0_562] : memref<144x256xf32, #tpu.memory_space<vmem>>, vector<4x256xf32>
    tpu.vector_store %arg8[%c76_561, %c0_562], %617 {strides = array<i32>} : memref<144x256xf32, #tpu.memory_space<vmem>>, vector<4x256xf32>,
    %c8_563 = arith.constant 8 : index
    %c113_564 = arith.constant 113 : index
    %619 = vector.load %arg7[%c8_563, %c113_564] : memref<20x512xf32, #tpu.memory_space<vmem>>, vector<4x256xf32>
    %cst_565 = arith.constant 0.000000e+00 : f32
    %620 = vector.shape_cast %40 : vector<1x256xi1> to vector<1x256xi1>
    %621 = vector.broadcast %620 : vector<1x256xi1> to vector<4x256xi1>
    %622 = vector.broadcast %cst_565 : f32 to vector<4x256xf32>
    %623 = arith.select %621, %619, %622 : vector<4x256xi1>, vector<4x256xf32>
    %c80_566 = arith.constant 80 : index
    %c0_567 = arith.constant 0 : index
    %624 = vector.load %arg8[%c80_566, %c0_567] : memref<144x256xf32, #tpu.memory_space<vmem>>, vector<4x256xf32>
    tpu.vector_store %arg8[%c80_566, %c0_567], %623 {strides = array<i32>} : memref<144x256xf32, #tpu.memory_space<vmem>>, vector<4x256xf32>,
    %c8_568 = arith.constant 8 : index
    %c127_569 = arith.constant 127 : index
    %625 = vector.load %arg7[%c8_568, %c127_569] : memref<20x512xf32, #tpu.memory_space<vmem>>, vector<4x256xf32>
    %cst_570 = arith.constant 0.000000e+00 : f32
    %626 = vector.shape_cast %31 : vector<1x256xi1> to vector<1x256xi1>
    %627 = vector.broadcast %626 : vector<1x256xi1> to vector<4x256xi1>
    %628 = vector.broadcast %cst_570 : f32 to vector<4x256xf32>
    %629 = arith.select %627, %625, %628 : vector<4x256xi1>, vector<4x256xf32>
    %c84_571 = arith.constant 84 : index
    %c0_572 = arith.constant 0 : index
    %630 = vector.load %arg8[%c84_571, %c0_572] : memref<144x256xf32, #tpu.memory_space<vmem>>, vector<4x256xf32>
    tpu.vector_store %arg8[%c84_571, %c0_572], %629 {strides = array<i32>} : memref<144x256xf32, #tpu.memory_space<vmem>>, vector<4x256xf32>,
    %c8_573 = arith.constant 8 : index
    %c128_574 = arith.constant 128 : index
    %631 = vector.load %arg7[%c8_573, %c128_574] : memref<20x512xf32, #tpu.memory_space<vmem>>, vector<4x256xf32>
    %c88_575 = arith.constant 88 : index
    %c0_576 = arith.constant 0 : index
    %632 = vector.load %arg8[%c88_575, %c0_576] : memref<144x256xf32, #tpu.memory_space<vmem>>, vector<4x256xf32>
    tpu.vector_store %arg8[%c88_575, %c0_576], %631 {strides = array<i32>} : memref<144x256xf32, #tpu.memory_space<vmem>>, vector<4x256xf32>,
    %c8_577 = arith.constant 8 : index
    %c129_578 = arith.constant 129 : index
    %633 = vector.load %arg7[%c8_577, %c129_578] : memref<20x512xf32, #tpu.memory_space<vmem>>, vector<4x256xf32>
    %cst_579 = arith.constant 0.000000e+00 : f32
    %634 = vector.shape_cast %40 : vector<1x256xi1> to vector<1x256xi1>
    %635 = vector.broadcast %634 : vector<1x256xi1> to vector<4x256xi1>
    %636 = vector.broadcast %cst_579 : f32 to vector<4x256xf32>
    %637 = arith.select %635, %633, %636 : vector<4x256xi1>, vector<4x256xf32>
    %c92_580 = arith.constant 92 : index
    %c0_581 = arith.constant 0 : index
    %638 = vector.load %arg8[%c92_580, %c0_581] : memref<144x256xf32, #tpu.memory_space<vmem>>, vector<4x256xf32>
    tpu.vector_store %arg8[%c92_580, %c0_581], %637 {strides = array<i32>} : memref<144x256xf32, #tpu.memory_space<vmem>>, vector<4x256xf32>,
    %c8_582 = arith.constant 8 : index
    %c143_583 = arith.constant 143 : index
    %639 = vector.load %arg7[%c8_582, %c143_583] : memref<20x512xf32, #tpu.memory_space<vmem>>, vector<4x256xf32>
    %cst_584 = arith.constant 0.000000e+00 : f32
    %640 = vector.shape_cast %31 : vector<1x256xi1> to vector<1x256xi1>
    %641 = vector.broadcast %640 : vector<1x256xi1> to vector<4x256xi1>
    %642 = vector.broadcast %cst_584 : f32 to vector<4x256xf32>
    %643 = arith.select %641, %639, %642 : vector<4x256xi1>, vector<4x256xf32>
    %c96_585 = arith.constant 96 : index
    %c0_586 = arith.constant 0 : index
    %644 = vector.load %arg8[%c96_585, %c0_586] : memref<144x256xf32, #tpu.memory_space<vmem>>, vector<4x256xf32>
    tpu.vector_store %arg8[%c96_585, %c0_586], %643 {strides = array<i32>} : memref<144x256xf32, #tpu.memory_space<vmem>>, vector<4x256xf32>,
    %c8_587 = arith.constant 8 : index
    %c144_588 = arith.constant 144 : index
    %645 = vector.load %arg7[%c8_587, %c144_588] : memref<20x512xf32, #tpu.memory_space<vmem>>, vector<4x256xf32>
    %c100_589 = arith.constant 100 : index
    %c0_590 = arith.constant 0 : index
    %646 = vector.load %arg8[%c100_589, %c0_590] : memref<144x256xf32, #tpu.memory_space<vmem>>, vector<4x256xf32>
    tpu.vector_store %arg8[%c100_589, %c0_590], %645 {strides = array<i32>} : memref<144x256xf32, #tpu.memory_space<vmem>>, vector<4x256xf32>,
    %c8_591 = arith.constant 8 : index
    %c145_592 = arith.constant 145 : index
    %647 = vector.load %arg7[%c8_591, %c145_592] : memref<20x512xf32, #tpu.memory_space<vmem>>, vector<4x256xf32>
    %cst_593 = arith.constant 0.000000e+00 : f32
    %648 = vector.shape_cast %40 : vector<1x256xi1> to vector<1x256xi1>
    %649 = vector.broadcast %648 : vector<1x256xi1> to vector<4x256xi1>
    %650 = vector.broadcast %cst_593 : f32 to vector<4x256xf32>
    %651 = arith.select %649, %647, %650 : vector<4x256xi1>, vector<4x256xf32>
    %c104_594 = arith.constant 104 : index
    %c0_595 = arith.constant 0 : index
    %652 = vector.load %arg8[%c104_594, %c0_595] : memref<144x256xf32, #tpu.memory_space<vmem>>, vector<4x256xf32>
    tpu.vector_store %arg8[%c104_594, %c0_595], %651 {strides = array<i32>} : memref<144x256xf32, #tpu.memory_space<vmem>>, vector<4x256xf32>,
    %c2_596 = arith.constant 2 : index
    %c2_597 = arith.constant 2 : index
    %c0_598 = arith.constant 0 : index
    %c0_599 = arith.constant 0 : index
    %653 = vector.load %arg2[%c2_596, %c2_597, %c0_598, %c0_599] : memref<3x4x4x144xf32, #tpu.memory_space<vmem>>, vector<1x1x4x144xf32>
    %654 = vector.shape_cast %653 : vector<1x1x4x144xf32> to vector<4x144xf32>
    %655 = vector.extract_strided_slice %654 {offsets = [0, 0], sizes = [4, 108], strides = [1, 1]} : vector<4x144xf32> to vector<4x108xf32>
    %c0_600 = arith.constant 0 : index
    %c0_601 = arith.constant 0 : index
    %656 = vector.load %arg8[%c0_600, %c0_601] : memref<144x256xf32, #tpu.memory_space<vmem>>, vector<108x256xf32>
    %cst_602 = arith.constant dense<0.000000e+00> : vector<4x256xf32>
    %657 = tpu.matmul %655, %656, %cst_602 {dimension_numbers = #tpu.dot_dimension_numbers<[1], [0], [0], [1], [0, 0, 1, 1], [], []>} : vector<4x108xf32>, vector<108x256xf32>, vector<4x256xf32> -> vector<4x256xf32>
    %c2_603 = arith.constant 2 : index
    %c2_604 = arith.constant 2 : index
    %c0_605 = arith.constant 0 : index
    %c0_606 = arith.constant 0 : index
    %658 = vector.load %arg3[%c2_603, %c2_604, %c0_605, %c0_606] : memref<3x4x4x1xf32, #tpu.memory_space<vmem>>, vector<1x1x4x1xf32>
    %659 = vector.shape_cast %658 : vector<1x1x4x1xf32> to vector<4x1xf32>
    %660 = vector.broadcast %659 : vector<4x1xf32> to vector<4x256xf32>
    %661 = arith.addf %657, %660 : vector<4x256xf32>
    %cst_607 = arith.constant 2.000000e-01 : f32
    %662 = vector.broadcast %cst_607 : f32 to vector<4x256xf32>
    %663 = arith.mulf %662, %661 : vector<4x256xf32>
    %664 = arith.maximumf %661, %663 : vector<4x256xf32>
    %c12_608 = arith.constant 12 : index
    %c128_609 = arith.constant 128 : index
    %665 = vector.load %arg7[%c12_608, %c128_609] : memref<20x512xf32, #tpu.memory_space<vmem>>, vector<4x256xf32>
    tpu.vector_store %arg7[%c12_608, %c128_609], %664 {strides = array<i32>} : memref<20x512xf32, #tpu.memory_space<vmem>>, vector<4x256xf32>,
    %c12_610 = arith.constant 12 : index
    %c111_611 = arith.constant 111 : index
    %666 = vector.load %arg7[%c12_610, %c111_611] : memref<20x512xf32, #tpu.memory_space<vmem>>, vector<4x256xf32>
    %cst_612 = arith.constant 0.000000e+00 : f32
    %667 = vector.shape_cast %31 : vector<1x256xi1> to vector<1x256xi1>
    %668 = vector.broadcast %667 : vector<1x256xi1> to vector<4x256xi1>
    %669 = vector.broadcast %cst_612 : f32 to vector<4x256xf32>
    %670 = arith.select %668, %666, %669 : vector<4x256xi1>, vector<4x256xf32>
    %c108_613 = arith.constant 108 : index
    %c0_614 = arith.constant 0 : index
    %671 = vector.load %arg8[%c108_613, %c0_614] : memref<144x256xf32, #tpu.memory_space<vmem>>, vector<4x256xf32>
    tpu.vector_store %arg8[%c108_613, %c0_614], %670 {strides = array<i32>} : memref<144x256xf32, #tpu.memory_space<vmem>>, vector<4x256xf32>,
    %c12_615 = arith.constant 12 : index
    %c112_616 = arith.constant 112 : index
    %672 = vector.load %arg7[%c12_615, %c112_616] : memref<20x512xf32, #tpu.memory_space<vmem>>, vector<4x256xf32>
    %c112_617 = arith.constant 112 : index
    %c0_618 = arith.constant 0 : index
    %673 = vector.load %arg8[%c112_617, %c0_618] : memref<144x256xf32, #tpu.memory_space<vmem>>, vector<4x256xf32>
    tpu.vector_store %arg8[%c112_617, %c0_618], %672 {strides = array<i32>} : memref<144x256xf32, #tpu.memory_space<vmem>>, vector<4x256xf32>,
    %c12_619 = arith.constant 12 : index
    %c113_620 = arith.constant 113 : index
    %674 = vector.load %arg7[%c12_619, %c113_620] : memref<20x512xf32, #tpu.memory_space<vmem>>, vector<4x256xf32>
    %cst_621 = arith.constant 0.000000e+00 : f32
    %675 = vector.shape_cast %40 : vector<1x256xi1> to vector<1x256xi1>
    %676 = vector.broadcast %675 : vector<1x256xi1> to vector<4x256xi1>
    %677 = vector.broadcast %cst_621 : f32 to vector<4x256xf32>
    %678 = arith.select %676, %674, %677 : vector<4x256xi1>, vector<4x256xf32>
    %c116_622 = arith.constant 116 : index
    %c0_623 = arith.constant 0 : index
    %679 = vector.load %arg8[%c116_622, %c0_623] : memref<144x256xf32, #tpu.memory_space<vmem>>, vector<4x256xf32>
    tpu.vector_store %arg8[%c116_622, %c0_623], %678 {strides = array<i32>} : memref<144x256xf32, #tpu.memory_space<vmem>>, vector<4x256xf32>,
    %c12_624 = arith.constant 12 : index
    %c127_625 = arith.constant 127 : index
    %680 = vector.load %arg7[%c12_624, %c127_625] : memref<20x512xf32, #tpu.memory_space<vmem>>, vector<4x256xf32>
    %cst_626 = arith.constant 0.000000e+00 : f32
    %681 = vector.shape_cast %31 : vector<1x256xi1> to vector<1x256xi1>
    %682 = vector.broadcast %681 : vector<1x256xi1> to vector<4x256xi1>
    %683 = vector.broadcast %cst_626 : f32 to vector<4x256xf32>
    %684 = arith.select %682, %680, %683 : vector<4x256xi1>, vector<4x256xf32>
    %c120_627 = arith.constant 120 : index
    %c0_628 = arith.constant 0 : index
    %685 = vector.load %arg8[%c120_627, %c0_628] : memref<144x256xf32, #tpu.memory_space<vmem>>, vector<4x256xf32>
    tpu.vector_store %arg8[%c120_627, %c0_628], %684 {strides = array<i32>} : memref<144x256xf32, #tpu.memory_space<vmem>>, vector<4x256xf32>,
    %c12_629 = arith.constant 12 : index
    %c128_630 = arith.constant 128 : index
    %686 = vector.load %arg7[%c12_629, %c128_630] : memref<20x512xf32, #tpu.memory_space<vmem>>, vector<4x256xf32>
    %c124_631 = arith.constant 124 : index
    %c0_632 = arith.constant 0 : index
    %687 = vector.load %arg8[%c124_631, %c0_632] : memref<144x256xf32, #tpu.memory_space<vmem>>, vector<4x256xf32>
    tpu.vector_store %arg8[%c124_631, %c0_632], %686 {strides = array<i32>} : memref<144x256xf32, #tpu.memory_space<vmem>>, vector<4x256xf32>,
    %c12_633 = arith.constant 12 : index
    %c129_634 = arith.constant 129 : index
    %688 = vector.load %arg7[%c12_633, %c129_634] : memref<20x512xf32, #tpu.memory_space<vmem>>, vector<4x256xf32>
    %cst_635 = arith.constant 0.000000e+00 : f32
    %689 = vector.shape_cast %40 : vector<1x256xi1> to vector<1x256xi1>
    %690 = vector.broadcast %689 : vector<1x256xi1> to vector<4x256xi1>
    %691 = vector.broadcast %cst_635 : f32 to vector<4x256xf32>
    %692 = arith.select %690, %688, %691 : vector<4x256xi1>, vector<4x256xf32>
    %c128_636 = arith.constant 128 : index
    %c0_637 = arith.constant 0 : index
    %693 = vector.load %arg8[%c128_636, %c0_637] : memref<144x256xf32, #tpu.memory_space<vmem>>, vector<4x256xf32>
    tpu.vector_store %arg8[%c128_636, %c0_637], %692 {strides = array<i32>} : memref<144x256xf32, #tpu.memory_space<vmem>>, vector<4x256xf32>,
    %c12_638 = arith.constant 12 : index
    %c143_639 = arith.constant 143 : index
    %694 = vector.load %arg7[%c12_638, %c143_639] : memref<20x512xf32, #tpu.memory_space<vmem>>, vector<4x256xf32>
    %cst_640 = arith.constant 0.000000e+00 : f32
    %695 = vector.shape_cast %31 : vector<1x256xi1> to vector<1x256xi1>
    %696 = vector.broadcast %695 : vector<1x256xi1> to vector<4x256xi1>
    %697 = vector.broadcast %cst_640 : f32 to vector<4x256xf32>
    %698 = arith.select %696, %694, %697 : vector<4x256xi1>, vector<4x256xf32>
    %c132_641 = arith.constant 132 : index
    %c0_642 = arith.constant 0 : index
    %699 = vector.load %arg8[%c132_641, %c0_642] : memref<144x256xf32, #tpu.memory_space<vmem>>, vector<4x256xf32>
    tpu.vector_store %arg8[%c132_641, %c0_642], %698 {strides = array<i32>} : memref<144x256xf32, #tpu.memory_space<vmem>>, vector<4x256xf32>,
    %c12_643 = arith.constant 12 : index
    %c144_644 = arith.constant 144 : index
    %700 = vector.load %arg7[%c12_643, %c144_644] : memref<20x512xf32, #tpu.memory_space<vmem>>, vector<4x256xf32>
    %c136_645 = arith.constant 136 : index
    %c0_646 = arith.constant 0 : index
    %701 = vector.load %arg8[%c136_645, %c0_646] : memref<144x256xf32, #tpu.memory_space<vmem>>, vector<4x256xf32>
    tpu.vector_store %arg8[%c136_645, %c0_646], %700 {strides = array<i32>} : memref<144x256xf32, #tpu.memory_space<vmem>>, vector<4x256xf32>,
    %c12_647 = arith.constant 12 : index
    %c145_648 = arith.constant 145 : index
    %702 = vector.load %arg7[%c12_647, %c145_648] : memref<20x512xf32, #tpu.memory_space<vmem>>, vector<4x256xf32>
    %cst_649 = arith.constant 0.000000e+00 : f32
    %703 = vector.shape_cast %40 : vector<1x256xi1> to vector<1x256xi1>
    %704 = vector.broadcast %703 : vector<1x256xi1> to vector<4x256xi1>
    %705 = vector.broadcast %cst_649 : f32 to vector<4x256xf32>
    %706 = arith.select %704, %702, %705 : vector<4x256xi1>, vector<4x256xf32>
    %c140_650 = arith.constant 140 : index
    %c0_651 = arith.constant 0 : index
    %707 = vector.load %arg8[%c140_650, %c0_651] : memref<144x256xf32, #tpu.memory_space<vmem>>, vector<4x256xf32>
    tpu.vector_store %arg8[%c140_650, %c0_651], %706 {strides = array<i32>} : memref<144x256xf32, #tpu.memory_space<vmem>>, vector<4x256xf32>,
    %c2_652 = arith.constant 2 : index
    %c3_653 = arith.constant 3 : index
    %c0_654 = arith.constant 0 : index
    %c0_655 = arith.constant 0 : index
    %708 = vector.load %arg2[%c2_652, %c3_653, %c0_654, %c0_655] : memref<3x4x4x144xf32, #tpu.memory_space<vmem>>, vector<1x1x4x144xf32>
    %709 = vector.shape_cast %708 : vector<1x1x4x144xf32> to vector<4x144xf32>
    %c0_656 = arith.constant 0 : index
    %c0_657 = arith.constant 0 : index
    %710 = vector.load %arg8[%c0_656, %c0_657] : memref<144x256xf32, #tpu.memory_space<vmem>>, vector<144x256xf32>
    %cst_658 = arith.constant dense<0.000000e+00> : vector<4x256xf32>
    %711 = tpu.matmul %709, %710, %cst_658 {dimension_numbers = #tpu.dot_dimension_numbers<[1], [0], [0], [1], [0, 0, 1, 1], [], []>} : vector<4x144xf32>, vector<144x256xf32>, vector<4x256xf32> -> vector<4x256xf32>
    %c2_659 = arith.constant 2 : index
    %c3_660 = arith.constant 3 : index
    %c0_661 = arith.constant 0 : index
    %c0_662 = arith.constant 0 : index
    %712 = vector.load %arg3[%c2_659, %c3_660, %c0_661, %c0_662] : memref<3x4x4x1xf32, #tpu.memory_space<vmem>>, vector<1x1x4x1xf32>
    %713 = vector.shape_cast %712 : vector<1x1x4x1xf32> to vector<4x1xf32>
    %714 = vector.broadcast %713 : vector<4x1xf32> to vector<4x256xf32>
    %715 = arith.addf %711, %714 : vector<4x256xf32>
    %cst_663 = arith.constant 2.000000e-01 : f32
    %716 = vector.broadcast %cst_663 : f32 to vector<4x256xf32>
    %717 = arith.mulf %716, %715 : vector<4x256xf32>
    %718 = arith.maximumf %715, %717 : vector<4x256xf32>
    %c16_664 = arith.constant 16 : index
    %c128_665 = arith.constant 128 : index
    %719 = vector.load %arg7[%c16_664, %c128_665] : memref<20x512xf32, #tpu.memory_space<vmem>>, vector<4x256xf32>
    tpu.vector_store %arg7[%c16_664, %c128_665], %718 {strides = array<i32>} : memref<20x512xf32, #tpu.memory_space<vmem>>, vector<4x256xf32>,
    %c0_666 = arith.constant 0 : index
    %c128_667 = arith.constant 128 : index
    %720 = vector.load %arg7[%c0_666, %c128_667] : memref<20x512xf32, #tpu.memory_space<vmem>>, vector<20x256xf32>
    %c2_668 = arith.constant 2 : index
    %c0_669 = arith.constant 0 : index
    %c0_670 = arith.constant 0 : index
    %721 = vector.load %arg4[%c2_668, %c0_669, %c0_670] : memref<3x4x20xf32, #tpu.memory_space<vmem>>, vector<1x4x20xf32>
    %722 = vector.shape_cast %721 : vector<1x4x20xf32> to vector<4x20xf32>
    %cst_671 = arith.constant dense<0.000000e+00> : vector<4x256xf32>
    %723 = tpu.matmul %722, %720, %cst_671 {dimension_numbers = #tpu.dot_dimension_numbers<[1], [0], [0], [1], [0, 0, 1, 1], [], []>} : vector<4x20xf32>, vector<20x256xf32>, vector<4x256xf32> -> vector<4x256xf32>
    %c2_672 = arith.constant 2 : index
    %c0_673 = arith.constant 0 : index
    %c0_674 = arith.constant 0 : index
    %724 = vector.load %arg5[%c2_672, %c0_673, %c0_674] : memref<3x4x1xf32, #tpu.memory_space<vmem>>, vector<1x4x1xf32>
    %725 = vector.shape_cast %724 : vector<1x4x1xf32> to vector<4x1xf32>
    %726 = vector.broadcast %725 : vector<4x1xf32> to vector<4x256xf32>
    %727 = arith.addf %723, %726 : vector<4x256xf32>
    %728 = vector.extract_strided_slice %720 {offsets = [0, 0], sizes = [4, 256], strides = [1, 1]} : vector<20x256xf32> to vector<4x256xf32>
    %729 = arith.addf %727, %728 : vector<4x256xf32>
    %c0_675 = arith.constant 0 : index
    %c128_676 = arith.constant 128 : index
    %730 = vector.load %arg7[%c0_675, %c128_676] : memref<20x512xf32, #tpu.memory_space<vmem>>, vector<4x256xf32>
    tpu.vector_store %arg7[%c0_675, %c128_676], %729 {strides = array<i32>} : memref<20x512xf32, #tpu.memory_space<vmem>>, vector<4x256xf32>,
    %c0_677 = arith.constant 0 : index
    %c128_678 = arith.constant 128 : index
    %731 = vector.load %arg7[%c0_677, %c128_678] : memref<20x512xf32, #tpu.memory_space<vmem>>, vector<4x256xf32>
    %cst_679 = arith.constant 2.000000e-01 : f32
    %732 = vector.broadcast %cst_679 : f32 to vector<4x256xf32>
    %733 = arith.mulf %731, %732 : vector<4x256xf32>
    %c0_680 = arith.constant 0 : index
    %c0_681 = arith.constant 0 : index
    %c0_682 = arith.constant 0 : index
    %734 = vector.load %arg1[%c0_680, %c0_681, %c0_682] : memref<1x4x256xf32, #tpu.memory_space<vmem>>, vector<1x4x256xf32>
    %735 = vector.shape_cast %734 : vector<1x4x256xf32> to vector<4x256xf32>
    %736 = arith.addf %733, %735 : vector<4x256xf32>
    %c0_683 = arith.constant 0 : index
    %c0_684 = arith.constant 0 : index
    %c0_685 = arith.constant 0 : index
    %737 = vector.load %arg6[%c0_683, %c0_684, %c0_685] : memref<1x4x256xf32, #tpu.memory_space<vmem>>, vector<1x4x256xf32>
    %738 = vector.shape_cast %737 : vector<1x4x256xf32> to vector<4x256xf32>
    %739 = vector.shape_cast %736 : vector<4x256xf32> to vector<1x4x256xf32>
    tpu.vector_store %arg6[%c0_683, %c0_684, %c0_685], %739 {strides = array<i32>} : memref<1x4x256xf32, #tpu.memory_space<vmem>>, vector<1x4x256xf32>,
    return
  }
  func.func @transform_0(%arg0: i32) -> (i32, i32, i32) {
    %c0_i32 = arith.constant 0 : i32
    %c0_i32_0 = arith.constant 0 : i32
    %c0_i32_1 = arith.constant 0 : i32
    return %arg0, %c0_i32, %c0_i32_0 : i32, i32, i32
  }
  func.func @transform_1(%arg0: i32) -> (i32, i32, i32, i32) {
    %c0_i32 = arith.constant 0 : i32
    %c0_i32_0 = arith.constant 0 : i32
    %c0_i32_1 = arith.constant 0 : i32
    %c0_i32_2 = arith.constant 0 : i32
    %c0_i32_3 = arith.constant 0 : i32
    return %c0_i32, %c0_i32_0, %c0_i32_1, %c0_i32_2 : i32, i32, i32, i32
  }
  func.func @transform_2(%arg0: i32) -> (i32, i32, i32, i32) {
    %c0_i32 = arith.constant 0 : i32
    %c0_i32_0 = arith.constant 0 : i32
    %c0_i32_1 = arith.constant 0 : i32
    %c0_i32_2 = arith.constant 0 : i32
    %c0_i32_3 = arith.constant 0 : i32
    return %c0_i32, %c0_i32_0, %c0_i32_1, %c0_i32_2 : i32, i32, i32, i32
  }
  func.func @transform_3(%arg0: i32) -> (i32, i32, i32) {
    %c0_i32 = arith.constant 0 : i32
    %c0_i32_0 = arith.constant 0 : i32
    %c0_i32_1 = arith.constant 0 : i32
    %c0_i32_2 = arith.constant 0 : i32
    return %c0_i32, %c0_i32_0, %c0_i32_1 : i32, i32, i32
  }
  func.func @transform_4(%arg0: i32) -> (i32, i32, i32) {
    %c0_i32 = arith.constant 0 : i32
    %c0_i32_0 = arith.constant 0 : i32
    %c0_i32_1 = arith.constant 0 : i32
    %c0_i32_2 = arith.constant 0 : i32
    return %c0_i32, %c0_i32_0, %c0_i32_1 : i32, i32, i32
  }
  func.func @transform_5(%arg0: i32) -> (i32, i32, i32) {
    %c0_i32 = arith.constant 0 : i32
    %c0_i32_0 = arith.constant 0 : i32
    %c0_i32_1 = arith.constant 0 : i32
    return %arg0, %c0_i32, %c0_i32_0 : i32, i32, i32
  }
}

</mosaic_0001>

<llo_original>
// kernel: tpu_custom_call.1
$region0: #{tpu_custom_call.1}
  #allocation0 [shape = 'u32[]', space=smem, size = 0x4, offset = 0x4, fixed_abs, tag = 'smem constant byte address 0x4 - core index']
  #allocation1 [shape = 'u32[144,128]{1,0:T(1,128)}', space=vmem, size = 0x12000, scoped, tag = 'internal scratch']
  #allocation2 [shape = 'f32[20,512]{1,0:T(8,128)}', space=vmem, size = 0xc000, scoped, tag = 'scratch operand']
  #allocation3 [shape = 'f32[144,256]{1,0:T(8,128)}', space=vmem, size = 0x24000, scoped, tag = 'scratch operand']
  %s0 = inlined_call_operand.vmem [shape: f32[2,4,256], index: 0, kind: input, shape index: {}]
  %s1 = inlined_call_operand.hbm [shape: f32[3,4,4,144], index: 1, kind: input, shape index: {}]
  %s2 = inlined_call_operand.vmem [shape: f32[3,4,4,1], index: 2, kind: input, shape index: {}]
  %s3 = inlined_call_operand.vmem [shape: f32[3,4,20], index: 3, kind: input, shape index: {}]
  %s4 = inlined_call_operand.vmem [shape: f32[3,4,1], index: 4, kind: input, shape index: {}]
  %s5 = inlined_call_operand.hbm [shape: f32[2,4,256], index: 5, kind: output, shape index: {}]
  %s6 = sld [smem:[#allocation0]]
  $region57: #{tpu_custom_call.1} parent=0
    _
  %s8 = ssub.s32 1, %s6
  %s9 = scalar_select 0, %s8, %s6
  $region1: #{tpu_custom_call.1} parent=0
    #allocation4 [shape = 'u8[49152]{0}', space=vmem, size = 0xc000, scoped, tag = 'input window, operand 1, single buffered']
    #allocation5 [shape = 's32[2]{0}', space=sflag, size = 0x8, scoped, tag = 'scoped memory for tpu_custom_call.1']
    #allocation6 [shape = 's32[2]{0}', space=sflag, size = 0x8, scoped, tag = 'scoped memory for tpu_custom_call.1']
    #allocation7 [shape = 'u8[8192]{0}', space=vmem, size = 0x2000, scoped, tag = 'output window, operand 0']
    %10 = vsyncpa [#allocation5], 0
    %11 = vsyncpa [#allocation6], 0
    %s12 = scalar_lea.sflag [#allocation6], 1
    %13 = vsyncpa %s12, 0
    loop: start=0, step=1, limit=4
    $region2: #{tpu_custom_call.1} parent=1 // loop_pre_header
      _
    $region3: #{tpu_custom_call.1} parent=1 // loop_header
      %s15 = sphi 0, %s19
      %p16 = scmp.ge.s32.totalorder %s15, 4
      %s25 = sphi 0, %s27
      %s28 = sphi 0, %s25
      %s29 = sphi 0, %s28
      %s45 = sphi 0, %s29
      %s49 = sphi 0, %s49
      %s51 = sphi 0, %s49
      %s52 = sphi 0, %s51
      %s66 = sphi 0, %s52
      %s70 = sphi 0, %s70
      %s72 = sphi 0, %s70
      %s73 = sphi 0, %s72
      %s87 = sphi 0, %s73
      %s91 = sphi 0, %s91
      %s93 = sphi 0, %s91
      %s94 = sphi 0, %s93
      %s108 = sphi 0, %s94
      %s112 = sphi 0, %s112
      %s114 = sphi 0, %s112
      %s115 = sphi 0, %s114
      %s129 = sphi 0, %s115
      %s135 = sphi 0, %s137
      %s138 = sphi 0, %s135
      %s139 = sphi 0, %s138
      %s155 = sphi 0, %s139
    $region4: #{tpu_custom_call.1} parent=1 // loop_header_branch
      %18 = sbr.rel (%p16) target = $region8
    $region5: #{tpu_custom_call.1} parent=1 // loop_body
      %s20 = ssub.s32 %s15, 1
      %s21 = ssub.s32 %s15, 2
      %s22 = sadd.s32 %s15, 1
      %s23 = ssub.s32 %s15, %s22
      %p24 = scmp.eq.s32.totalorder %s23, 0
      %s26 = sadd.s32 %s25, 1
      %s27 = scalar_select %p24, %s25, %s26
      %p30 = pneg %p24
      %p31 = scmp.eq.s32.totalorder %s15, 1
      %p32 = por %p30, %p31
      %p33 = scmp.ne.s32.totalorder %s25, %s28
      %p34 = scmp.eq.s32.totalorder %s15, 0
      %p35 = por %p33, %p34
      %p36 = scmp.ne.s32.totalorder %s25, %s28
      %p37 = scmp.eq.s32.totalorder %s20, 1
      %p38 = por %p36, %p37
      %p39 = scmp.ne.s32.totalorder %s28, %s29
      %p40 = scmp.eq.s32.totalorder %s20, 0
      %p41 = por %p39, %p40
      %p42 = scmp.ne.s32.totalorder %s28, %s29
      %p43 = scmp.eq.s32.totalorder %s21, 1
      %p44 = por %p42, %p43
      %p46 = scmp.ne.s32.totalorder %s29, %s45
      %p47 = scmp.eq.s32.totalorder %s21, 0
      %p48 = por %p46, %p47
      %s50 = sadd.s32 %s49, 1
      %p53 = scmp.eq.s32.totalorder %s15, 1
      %p54 = scmp.ne.s32.totalorder %s49, %s51
      %p55 = scmp.eq.s32.totalorder %s15, 0
      %p56 = por %p54, %p55
      %p57 = scmp.ne.s32.totalorder %s49, %s51
      %p58 = scmp.eq.s32.totalorder %s20, 1
      %p59 = por %p57, %p58
      %p60 = scmp.ne.s32.totalorder %s51, %s52
      %p61 = scmp.eq.s32.totalorder %s20, 0
      %p62 = por %p60, %p61
      %p63 = scmp.ne.s32.totalorder %s51, %s52
      %p64 = scmp.eq.s32.totalorder %s21, 1
      %p65 = por %p63, %p64
      %p67 = scmp.ne.s32.totalorder %s52, %s66
      %p68 = scmp.eq.s32.totalorder %s21, 0
      %p69 = por %p67, %p68
      %s71 = sadd.s32 %s70, 1
      %p74 = scmp.eq.s32.totalorder %s15, 1
      %p75 = scmp.ne.s32.totalorder %s70, %s72
      %p76 = scmp.eq.s32.totalorder %s15, 0
      %p77 = por %p75, %p76
      %p78 = scmp.ne.s32.totalorder %s70, %s72
      %p79 = scmp.eq.s32.totalorder %s20, 1
      %p80 = por %p78, %p79
      %p81 = scmp.ne.s32.totalorder %s72, %s73
      %p82 = scmp.eq.s32.totalorder %s20, 0
      %p83 = por %p81, %p82
      %p84 = scmp.ne.s32.totalorder %s72, %s73
      %p85 = scmp.eq.s32.totalorder %s21, 1
      %p86 = por %p84, %p85
      %p88 = scmp.ne.s32.totalorder %s73, %s87
      %p89 = scmp.eq.s32.totalorder %s21, 0
      %p90 = por %p88, %p89
      %s92 = sadd.s32 %s91, 1
      %p95 = scmp.eq.s32.totalorder %s15, 1
      %p96 = scmp.ne.s32.totalorder %s91, %s93
      %p97 = scmp.eq.s32.totalorder %s15, 0
      %p98 = por %p96, %p97
      %p99 = scmp.ne.s32.totalorder %s91, %s93
      %p100 = scmp.eq.s32.totalorder %s20, 1
      %p101 = por %p99, %p100
      %p102 = scmp.ne.s32.totalorder %s93, %s94
      %p103 = scmp.eq.s32.totalorder %s20, 0
      %p104 = por %p102, %p103
      %p105 = scmp.ne.s32.totalorder %s93, %s94
      %p106 = scmp.eq.s32.totalorder %s21, 1
      %p107 = por %p105, %p106
      %p109 = scmp.ne.s32.totalorder %s94, %s108
      %p110 = scmp.eq.s32.totalorder %s21, 0
      %p111 = por %p109, %p110
      %s113 = sadd.s32 %s112, 1
      %p116 = scmp.eq.s32.totalorder %s15, 1
      %p117 = scmp.ne.s32.totalorder %s112, %s114
      %p118 = scmp.eq.s32.totalorder %s15, 0
      %p119 = por %p117, %p118
      %p120 = scmp.ne.s32.totalorder %s112, %s114
      %p121 = scmp.eq.s32.totalorder %s20, 1
      %p122 = por %p120, %p121
      %p123 = scmp.ne.s32.totalorder %s114, %s115
      %p124 = scmp.eq.s32.totalorder %s20, 0
      %p125 = por %p123, %p124
      %p126 = scmp.ne.s32.totalorder %s114, %s115
      %p127 = scmp.eq.s32.totalorder %s21, 1
      %p128 = por %p126, %p127
      %p130 = scmp.ne.s32.totalorder %s115, %s129
      %p131 = scmp.eq.s32.totalorder %s21, 0
      %p132 = por %p130, %p131
      %s133 = ssub.s32 %s15, %s22
      %p134 = scmp.eq.s32.totalorder %s133, 0
      %s136 = sadd.s32 %s135, 1
      %s137 = scalar_select %p134, %s135, %s136
      %p140 = pneg %p134
      %p141 = scmp.eq.s32.totalorder %s15, 1
      %p142 = por %p140, %p141
      %p143 = scmp.ne.s32.totalorder %s135, %s138
      %p144 = scmp.eq.s32.totalorder %s15, 0
      %p145 = por %p143, %p144
      %p146 = scmp.ne.s32.totalorder %s135, %s138
      %p147 = scmp.eq.s32.totalorder %s20, 1
      %p148 = por %p146, %p147
      %p149 = scmp.ne.s32.totalorder %s138, %s139
      %p150 = scmp.eq.s32.totalorder %s20, 0
      %p151 = por %p149, %p150
      %p152 = scmp.ne.s32.totalorder %s138, %s139
      %p153 = scmp.eq.s32.totalorder %s21, 1
      %p154 = por %p152, %p153
      %p156 = scmp.ne.s32.totalorder %s139, %s155
      %p157 = scmp.eq.s32.totalorder %s21, 0
      %p158 = por %p156, %p157
      %p159 = scmp.le.s32.totalorder 1, %s15
      %p160 = scmp.lt.s32.totalorder %s15, 3
      %p161 = pnand %p159, %p160
      %p162 = pneg %p161
      // Predicated region
      $region9: #{tpu_custom_call.1} parent=5 // pred_check
        _
      $region10: #{tpu_custom_call.1} parent=5 // pred_check_branch
        %164 = sbr.rel (%p161) target = $region12
      $region11: #{tpu_custom_call.1} parent=5 // pred_region
        %s165 = ssub.s32 %s15, 1
        // Predicated region
        $region13: #{tpu_custom_call.1} parent=11 // pred_check
          %p166 = pneg %p62
        $region14: #{tpu_custom_call.1} parent=11 // pred_check_branch
          %168 = sbr.rel (%p166) target = $region16
        $region15: #{tpu_custom_call.1} parent=11 // pred_region
          %s170 = ssub.s32 1536, 1536
          %171 = vsyncadd [#allocation5], %s170
          %s172 = sshll.u32 [#allocation4], 4
          %s173 = int_to_ptr.vmem [resolvable:$true] %s172
          %178 = dma.hbm_to_vmem [thread:$0]  %s1, 1536, %s173, [#allocation5], 128, 128, 8
        $region16: #{tpu_custom_call.1} parent=11 // pred_fallthru
          _
        // Predicated region
        $region17: #{tpu_custom_call.1} parent=11 // pred_check
          %p179 = pneg %p83
        $region18: #{tpu_custom_call.1} parent=11 // pred_check_branch
          %181 = sbr.rel (%p179) target = $region20
        $region19: #{tpu_custom_call.1} parent=11 // pred_region
          _
        $region20: #{tpu_custom_call.1} parent=11 // pred_fallthru
          _
        // Predicated region
        $region21: #{tpu_custom_call.1} parent=11 // pred_check
          %p182 = pneg %p104
        $region22: #{tpu_custom_call.1} parent=11 // pred_check_branch
          %184 = sbr.rel (%p182) target = $region24
        $region23: #{tpu_custom_call.1} parent=11 // pred_region
          _
        $region24: #{tpu_custom_call.1} parent=11 // pred_fallthru
          _
        // Predicated region
        $region25: #{tpu_custom_call.1} parent=11 // pred_check
          %p185 = pneg %p125
        $region26: #{tpu_custom_call.1} parent=11 // pred_check_branch
          %187 = sbr.rel (%p185) target = $region28
        $region27: #{tpu_custom_call.1} parent=11 // pred_region
          _
        $region28: #{tpu_custom_call.1} parent=11 // pred_fallthru
          _
      $region12: #{tpu_custom_call.1} parent=5 // pred_fallthru
        _
      %p188 = scmp.lt.s32.totalorder %s15, 2
      // Predicated region
      $region29: #{tpu_custom_call.1} parent=5 // pred_check
        %p189 = pneg %p188
      $region30: #{tpu_custom_call.1} parent=5 // pred_check_branch
        %191 = sbr.rel (%p189) target = $region32
      $region31: #{tpu_custom_call.1} parent=5 // pred_region
        // Predicated region
        $region33: #{tpu_custom_call.1} parent=31 // pred_check
          %p192 = pneg %p35
        $region34: #{tpu_custom_call.1} parent=31 // pred_check_branch
          %194 = sbr.rel (%p192) target = $region36
        $region35: #{tpu_custom_call.1} parent=31 // pred_region
          %p195 = scmp.lt.s32.totalorder %s15, 1
          %s196 = scalar_select %p195, %s15, 1
          %s197 = smul.addr %s196, 2
          %s198 = smul.addr %s197, 4
          %s199 = scalar_lea.vmem %s0, %s198
        $region36: #{tpu_custom_call.1} parent=31 // pred_fallthru
          _
      $region32: #{tpu_custom_call.1} parent=5 // pred_fallthru
        _
      %p200 = scmp.le.s32.totalorder 1, %s15
      %p201 = scmp.lt.s32.totalorder %s15, 3
      %p202 = pnand %p200, %p201
      %p203 = pneg %p202
      // Predicated region
      $region37: #{tpu_custom_call.1} parent=5 // pred_check
        _
      $region38: #{tpu_custom_call.1} parent=5 // pred_check_branch
        %205 = sbr.rel (%p202) target = $region40
      $region39: #{tpu_custom_call.1} parent=5 // pred_region
        %s206 = ssub.s32 %s15, 1
        // Predicated region
        $region41: #{tpu_custom_call.1} parent=39 // pred_check
          %p207 = pneg %p62
        $region42: #{tpu_custom_call.1} parent=39 // pred_check_branch
          %209 = sbr.rel (%p207) target = $region44
        $region43: #{tpu_custom_call.1} parent=39 // pred_region
          %210 = dma.done [#allocation5], 1536
        $region44: #{tpu_custom_call.1} parent=39 // pred_fallthru
          _
        %p211 = scmp.lt.s32.totalorder %s20, 1
        %s212 = scalar_select %p211, %s20, 1
        %s213 = smul.addr %s212, 2
        %s214 = smul.addr %s213, 4
        %s215 = scalar_lea.vmem %s0, %s214
        %p216 = pneg %p41
        %p217 = pneg %p38
        %p218 = pneg %p62
        %p219 = pneg %p59
        %p220 = pneg %p83
        %p221 = pneg %p80
        %p222 = pneg %p104
        %p223 = pneg %p101
        %p224 = pneg %p125
        %p225 = pneg %p122
        %p226 = pneg %p151
        %p227 = pneg %p148
        %s228 = sand.u32 %s138, 1
        %s229 = scalar_lea.sflag [#allocation6], %s228
        %s230 = sand.u32 %s138, 1
        %s231 = smul.addr %s230, 8
        %s232 = scalar_lea.vmem [#allocation7], %s231
        %p233 = scmp.lt.s32.totalorder %s20, 1
        %s234 = scalar_select %p233, %s20, 1
        %s235 = smul.addr %s234, 2
        %s236 = smul.addr %s235, 4
        %s237 = scalar_lea.vmem %s0, %s236
        %238 = vst [vmem:[#allocation2] sm:$0xff] 0.0
        %239 = vst [vmem:[#allocation2 + $0x20] sm:$0xff] 0.0
        %240 = vst [vmem:[#allocation2 + $0x18] sm:$0xff] 0.0
        %241 = vst [vmem:[#allocation2 + $0x38] sm:$0xff] 0.0
        %v242 = vld [vmem:[%s237] sm:$0xff]
        %v244 = vcombine.high %v242, %v242
        %246 = vst [vmem:[#allocation2 + $0x8] sm:$0xf] %v242
        %247 = vst [vmem:[#allocation2 + $0x10] sm:$0xf] %v244
        %v248 = vlaneseq
        %v249 = vand.u32 %v248, 127
        %v250 = vadd.s32 %v249, 128
        %vm251 = vcmp.lt.s32.totalorder %v249, 0
        %v252 = vsub.s32 0, %v249
        %v253 = vsel %vm251, %v252, %v249
        %v254 = vshrl.u32 %v253, 4
        %v255 = vand.u32 %v253, 15
        %v256 = vsub.s32 0, %v255
        %v257 = vsel %vm251, %v256, %v255
        %vm258 = vcmp.lt.s32.totalorder %v250, 0
        %v259 = vsub.s32 0, %v250
        %v260 = vsel %vm258, %v259, %v250
        %v261 = vshrl.u32 %v260, 4
        %v262 = vand.u32 %v260, 15
        %v263 = vsub.s32 0, %v262
        %v264 = vsel %vm258, %v263, %v262
        %vm265 = vcmp.ne.s32.totalorder %v257, 0
        %vm266 = vcmp.ne.s32.totalorder %v264, 0
        %vm267 = vcmp.lt.s32.totalorder %v257, 0
        %vm268 = vcmp.lt.s32.totalorder %v264, 0
        %vm269 = vmand %vm267, %vm265
        %vm270 = vmand %vm268, %vm266
        %v271 = vadd.s32 %v257, 16
        %v272 = vadd.s32 %v264, 16
        %v273 = vsel %vm269, %v271, %v257
        %v274 = vsel %vm270, %v272, %v264
        %v275 = vadd.s32 %v273, 4294967295
        %v276 = vadd.s32 %v274, 4294967295
        %vm277 = vcmp.ge.s32.totalorder %v275, 0
        %vm278 = vcmp.ge.s32.totalorder %v276, 0
        %vm279 = vcmp.lt.s32.totalorder %v275, 16
        %vm280 = vcmp.lt.s32.totalorder %v276, 16
        %vm281 = vmand %vm277, %vm279
        %vm282 = vmand %vm278, %vm280
        %v283 = vadd.s32 %v273, 1
        %v284 = vadd.s32 %v274, 1
        %vm285 = vcmp.ge.s32.totalorder %v283, 0
        %vm286 = vcmp.ge.s32.totalorder %v284, 0
        %vm287 = vcmp.lt.s32.totalorder %v283, 16
        %vm288 = vcmp.lt.s32.totalorder %v284, 16
        %vm289 = vmand %vm285, %vm287
        %vm290 = vmand %vm286, %vm288
        %v291 = vld [vmem:[#allocation2] sm:$0xf]
        %v292 = vld [vmem:[#allocation2 + $0x8] sm:$0xf]
        %v293 = vld [vmem:[#allocation2 + $0x10] sm:$0xf]
        %v294 = vsel %vm281, 1, 0
        %v295 = vsel %vm282, 1, 0
        %vm296 = vcmp.eq.s32.totalorder %v294, 1
        %vm297 = vcmp.eq.s32.totalorder %v295, 1
        %301 = vrot.lane.b32.xlu0 %v291, 17
        %v302 = vpop.permute.xlu0 %301
        %303 = vrot.lane.b32.xlu0 %v292, 17
        %v304 = vpop.permute.xlu0 %303
        %305 = vrot.lane.b32.xlu0 %v293, 17
        %v306 = vpop.permute.xlu0 %305
        %vm307 = vcmask 138240
        %v308 = vsel %vm307, %v302, %v304
        %v309 = vsel %vm307, %v304, %v306
        %v312 = vsel %vm296, %v308, 0.0
        %v313 = vsel %vm297, %v309, 0.0
        %314 = vst [vmem:[#allocation3] sm:$0xf] %v312
        %315 = vst [vmem:[#allocation3 + $0x8] sm:$0xf] %v313
        %v316 = vld [vmem:[#allocation2] sm:$0xf]
        %v317 = vld [vmem:[#allocation2 + $0x8] sm:$0xf]
        %v318 = vld [vmem:[#allocation2 + $0x10] sm:$0xf]
        %v322 = vrot.slane %v316, 4
        %v323 = vrot.slane %v317, 4
        %v324 = vrot.slane %v318, 4
        %325 = vrot.lane.b32.xlu0 %v322, 16
        %v326 = vpop.permute.xlu0 %325
        %327 = vrot.lane.b32.xlu0 %v323, 16
        %v328 = vpop.permute.xlu0 %327
        %329 = vrot.lane.b32.xlu0 %v324, 16
        %v330 = vpop.permute.xlu0 %329
        %vm331 = vcmask 130048
        %v332 = vsel %vm331, %v326, %v328
        %v333 = vsel %vm331, %v328, %v330
        %336 = vst [vmem:[#allocation3] sm:$0xf0] %v332
        %337 = vst [vmem:[#allocation3 + $0x8] sm:$0xf0] %v333
        %v338 = vld [vmem:[#allocation2] sm:$0xf]
        %v339 = vld [vmem:[#allocation2 + $0x8] sm:$0xf]
        %v340 = vld [vmem:[#allocation2 + $0x10] sm:$0xf]
        %v341 = vsel %vm289, 1, 0
        %v342 = vsel %vm290, 1, 0
        %vm343 = vcmp.eq.s32.totalorder %v341, 1
        %vm344 = vcmp.eq.s32.totalorder %v342, 1
        %348 = vrot.lane.b32.xlu0 %v338, 15
        %v349 = vpop.permute.xlu0 %348
        %350 = vrot.lane.b32.xlu0 %v339, 15
        %v351 = vpop.permute.xlu0 %350
        %352 = vrot.lane.b32.xlu0 %v340, 15
        %v353 = vpop.permute.xlu0 %352
        %vm354 = vcmask 121856
        %v355 = vsel %vm354, %v349, %v351
        %v356 = vsel %vm354, %v351, %v353
        %v359 = vsel %vm343, %v355, 0.0
        %v360 = vsel %vm344, %v356, 0.0
        %361 = vst [vmem:[#allocation3 + $0x10] sm:$0xf] %v359
        %362 = vst [vmem:[#allocation3 + $0x18] sm:$0xf] %v360
        %v363 = vld [vmem:[#allocation2] sm:$0xf]
        %v364 = vld [vmem:[#allocation2 + $0x8] sm:$0xf]
        %v365 = vld [vmem:[#allocation2 + $0x10] sm:$0xf]
        %369 = vrot.lane.b32.xlu0 %v363, 1
        %v370 = vpop.permute.xlu0 %369
        %371 = vrot.lane.b32.xlu0 %v364, 1
        %v372 = vpop.permute.xlu0 %371
        %373 = vrot.lane.b32.xlu0 %v365, 1
        %v374 = vpop.permute.xlu0 %373
        %vm375 = vcmask 7168
        %v376 = vsel %vm375, %v370, %v372
        %v377 = vsel %vm375, %v372, %v374
        %v380 = vsel %vm296, %v376, 0.0
        %v381 = vsel %vm297, %v377, 0.0
        %v384 = vrot.slane %v380, 4
        %v385 = vrot.slane %v381, 4
        %388 = vst [vmem:[#allocation3 + $0x10] sm:$0xf0] %v384
        %389 = vst [vmem:[#allocation3 + $0x18] sm:$0xf0] %v385
        %v390 = vld [vmem:[#allocation2 + $0x8] sm:$0xf]
        %v391 = vld [vmem:[#allocation2 + $0x10] sm:$0xf]
        %392 = vst [vmem:[#allocation3 + $0x20] sm:$0xf] %v390
        %393 = vst [vmem:[#allocation3 + $0x28] sm:$0xf] %v391
        %v394 = vld [vmem:[#allocation2 + $0x8] sm:$0xf]
        %v395 = vld [vmem:[#allocation2 + $0x10] sm:$0xf]
        %v396 = vld [vmem:[#allocation2 + $0x18] sm:$0xf]
        %400 = vrot.lane.b32.xlu0 %v394, 127
        %v401 = vpop.permute.xlu0 %400
        %402 = vrot.lane.b32.xlu0 %v395, 127
        %v403 = vpop.permute.xlu0 %402
        %404 = vrot.lane.b32.xlu0 %v396, 127
        %v405 = vpop.permute.xlu0 %404
        %vm406 = vcmask 1039360
        %v407 = vsel %vm406, %v401, %v403
        %v408 = vsel %vm406, %v403, %v405
        %v411 = vsel %vm343, %v407, 0.0
        %v412 = vsel %vm344, %v408, 0.0
        %v415 = vrot.slane %v411, 4
        %v416 = vrot.slane %v412, 4
        %419 = vst [vmem:[#allocation3 + $0x20] sm:$0xf0] %v415
        %420 = vst [vmem:[#allocation3 + $0x28] sm:$0xf0] %v416
        %v421 = vld [vmem:[#allocation2 + $0x8] sm:$0xf]
        %v422 = vld [vmem:[#allocation2 + $0x10] sm:$0xf]
        %v423 = vld [vmem:[#allocation2 + $0x18] sm:$0xf]
        %427 = vrot.lane.b32.xlu0 %v421, 113
        %v428 = vpop.permute.xlu0 %427
        %429 = vrot.lane.b32.xlu0 %v422, 113
        %v430 = vpop.permute.xlu0 %429
        %431 = vrot.lane.b32.xlu0 %v423, 113
        %v432 = vpop.permute.xlu0 %431
        %vm433 = vcmask 924672
        %v434 = vsel %vm433, %v428, %v430
        %v435 = vsel %vm433, %v430, %v432
        %v438 = vsel %vm296, %v434, 0.0
        %v439 = vsel %vm297, %v435, 0.0
        %440 = vst [vmem:[#allocation3 + $0x30] sm:$0xf] %v438
        %441 = vst [vmem:[#allocation3 + $0x38] sm:$0xf] %v439
        %v442 = vld [vmem:[#allocation2 + $0x8] sm:$0xf]
        %v443 = vld [vmem:[#allocation2 + $0x10] sm:$0xf]
        %v444 = vld [vmem:[#allocation2 + $0x18] sm:$0xf]
        %v448 = vrot.slane %v442, 4
        %v449 = vrot.slane %v443, 4
        %v450 = vrot.slane %v444, 4
        %451 = vrot.lane.b32.xlu0 %v448, 112
        %v452 = vpop.permute.xlu0 %451
        %453 = vrot.lane.b32.xlu0 %v449, 112
        %v454 = vpop.permute.xlu0 %453
        %455 = vrot.lane.b32.xlu0 %v450, 112
        %v456 = vpop.permute.xlu0 %455
        %vm457 = vcmask 916480
        %v458 = vsel %vm457, %v452, %v454
        %v459 = vsel %vm457, %v454, %v456
        %462 = vst [vmem:[#allocation3 + $0x30] sm:$0xf0] %v458
        %463 = vst [vmem:[#allocation3 + $0x38] sm:$0xf0] %v459
        %v464 = vld [vmem:[#allocation2 + $0x8] sm:$0xf]
        %v465 = vld [vmem:[#allocation2 + $0x10] sm:$0xf]
        %v466 = vld [vmem:[#allocation2 + $0x18] sm:$0xf]
        %470 = vrot.lane.b32.xlu0 %v464, 111
        %v471 = vpop.permute.xlu0 %470
        %472 = vrot.lane.b32.xlu0 %v465, 111
        %v473 = vpop.permute.xlu0 %472
        %474 = vrot.lane.b32.xlu0 %v466, 111
        %v475 = vpop.permute.xlu0 %474
        %vm476 = vcmask 908288
        %v477 = vsel %vm476, %v471, %v473
        %v478 = vsel %vm476, %v473, %v475
        %v481 = vsel %vm343, %v477, 0.0
        %v482 = vsel %vm344, %v478, 0.0
        %483 = vst [vmem:[#allocation3 + $0x40] sm:$0xf] %v481
        %484 = vst [vmem:[#allocation3 + $0x48] sm:$0xf] %v482
        %v485 = vld [vmem:[#allocation4] sm:$0xff]
        %v486 = vld [vmem:[#allocation3] sm:$0xff]
        %v487 = vld [vmem:[#allocation3 + $0x8] sm:$0xff]
        %v488 = vld [vmem:[#allocation3 + $0x10] sm:$0xff]
        %v489 = vld [vmem:[#allocation3 + $0x18] sm:$0xff]
        %v490 = vld [vmem:[#allocation3 + $0x20] sm:$0xff]
        %v491 = vld [vmem:[#allocation3 + $0x28] sm:$0xff]
        %v492 = vld [vmem:[#allocation3 + $0x30] sm:$0xff]
        %v493 = vld [vmem:[#allocation3 + $0x38] sm:$0xff]
        %v494 = vld [vmem:[#allocation3 + $0x40] sm:$0xf]
        %v495 = vld [vmem:[#allocation3 + $0x48] sm:$0xf]
        %v496 = vld [vmem:[%s2] sm:$0xf]
        %498 = vset.pattern.permute.xlu0 0
        %499 = vperm.xlu0 %498, %v496
        %v500 = vpop.permute.xlu0 %499
        %vm502 = vcmask 293888
        %v504 = vsel %vm502, %v485, 0
        %vm506 = vcmask 1043456
        %v508 = vsel %vm506, %v494, 0
        %v511 = vsel %vm506, %v495, 0
        %513 = vmatprep.subr.mxu0 %v487
        %514 = vmatpush1.msra.mxu0 %v486
        %515 = vmatprep.subr.mxu0 %v489
        %516 = vmatpush1.msra.mxu0 %v488
        %517 = vmatprep.subr.mxu0 %v491
        %518 = vmatpush1.msra.mxu0 %v490
        %519 = vmatprep.subr.mxu0 %v493
        %520 = vmatpush1.msra.mxu0 %v492
        %521 = vmatprep.subr.mxu0 %v511
        %522 = vmatpush1.msra.mxu0 %v508
        %523 = vmatprep.subr.mxu0 0.0
        %524 = vmatpush1.msra.mxu0 0.0
        %525 = vmatprep.subr.mxu0 0.0
        %526 = vmatpush1.msra.mxu0 0.0
        %527 = vmatprep.subr.mxu0 0.0
        %528 = vmatpush1.msra.mxu0 0.0
        %529 = vmatprep.subr.mxu0 0.0
        %530 = vmatpush1.msra.mxu0 0.0
        %531 = vmatprep.subr.mxu0 0.0
        %532 = vmatpush1.msra.mxu0 0.0
        %533 = vmatprep.subr.mxu0 0.0
        %534 = vmatpush1.msra.mxu0 0.0
        %535 = vmatprep.subr.mxu0 0.0
        %536 = vmatpush1.msra.mxu0 0.0
        %537 = vmatprep.subr.mxu0 0.0
        %538 = vmatpush1.msra.mxu0 0.0
        %539 = vmatprep.subr.mxu0 0.0
        %540 = vmatpush1.msra.mxu0 0.0
        %541 = vmatprep.subr.mxu0 0.0
        %542 = vmatpush1.msra.mxu0 0.0
        %543 = vmatprep.subr.mxu0 0.0
        %544 = vmatpush1.msra.mxu0 0.0
        %545 = vmatprep.subr.mxu0 0.0
        %546 = vmatpush1.msra.mxu0 0.0
        %547 = vmatprep.subr.mxu0 0.0
        %548 = vmatpush1.msra.mxu0 0.0
        %549 = vmatprep.subr.mxu0 0.0
        %550 = vmatpush1.msra.mxu0 0.0
        %551 = vmatprep.subr.mxu0 0.0
        %552 = vmatpush1.msra.mxu0 0.0
        %553 = vmatprep.subr.mxu0 0.0
        %554 = vmatpush1.msra.mxu0 0.0
        %555 = vmatprep.subr.mxu0 0.0
        %556 = vmatpush1.msra.mxu0 0.0
        %557 = vmatprep.subr.mxu0 0.0
        %558 = vmatpush1.msra.mxu0 0.0
        %559 = vmatprep.subr.mxu0 0.0
        %560 = vmatpush1.msra.mxu0 0.0
        %561 = vmatprep.subr.mxu0 0.0
        %562 = vmatpush1.msra.mxu0 0.0
        %563 = vmatprep.subr.mxu0 0.0
        %564 = vmatpush1.msra.mxu0 0.0
        %565 = vmatprep.subr.mxu0 0.0
        %566 = vmatpush1.msra.mxu0 0.0
        %567 = vmatprep.subr.mxu0 0.0
        %568 = vmatpush1.msra.mxu0 0.0
        %569 = vmatprep.subr.mxu0 0.0
        %570 = vmatpush1.msra.mxu0 0.0
        %571 = vmatprep.subr.mxu0 0.0
        %572 = vmatpush1.msra.mxu0 0.0
        %573 = vmatprep.subr.mxu0 0.0
        %574 = vmatpush1.msra.mxu0 0.0
        %575 = vmatprep.subr.mxu0 0.0
        %576 = vmatpush1.msra.mxu0 0.0
        %577 = vmatprep.mubr.f32.mxu0 0.0
        %578 = vmatmul.mubr.f32.gmra.mrb[0].mxu0 %v504
        %v579 = vpop.f32.mrb[0].mxu0
        %v580 = vadd.f32 %v500, %v579
        %v581 = vpop.f32.mrb[0].mxu0
        %v582 = vadd.f32 %v500, %v581
        %583 = vdwg.mxu0
        %v584 = vmul.f32 %v580, 0.2
        %v585 = vmul.f32 %v582, 0.2
        %v586 = vmax.f32 %v580, %v584
        %v587 = vmax.f32 %v582, %v585
        %v590 = vrot.slane %v586, 4
        %v591 = vrot.slane %v587, 4
        %594 = vst [vmem:[#allocation2 + $0x8] sm:$0xf0] %v590
        %595 = vst [vmem:[#allocation2 + $0x10] sm:$0xf0] %v591
        %v596 = vld [vmem:[#allocation2] sm:$0xf0]
        %v597 = vld [vmem:[#allocation2 + $0x8] sm:$0xf0]
        %v598 = vld [vmem:[#allocation2 + $0x10] sm:$0xf0]
        %v602 = vrot.slane %v596, 4
        %v603 = vrot.slane %v597, 4
        %v604 = vrot.slane %v598, 4
        %605 = vrot.lane.b32.xlu0 %v602, 17
        %v606 = vpop.permute.xlu0 %605
        %607 = vrot.lane.b32.xlu0 %v603, 17
        %v608 = vpop.permute.xlu0 %607
        %609 = vrot.lane.b32.xlu0 %v604, 17
        %v610 = vpop.permute.xlu0 %609
        %v611 = vsel %vm307, %v606, %v608
        %v612 = vsel %vm307, %v608, %v610
        %v615 = vsel %vm296, %v611, 0.0
        %v616 = vsel %vm297, %v612, 0.0
        %v619 = vrot.slane %v615, 4
        %v620 = vrot.slane %v616, 4
        %623 = vst [vmem:[#allocation3 + $0x40] sm:$0xf0] %v619
        %624 = vst [vmem:[#allocation3 + $0x48] sm:$0xf0] %v620
        %v625 = vld [vmem:[#allocation2] sm:$0xf0]
        %v626 = vld [vmem:[#allocation2 + $0x8] sm:$0xf0]
        %v627 = vld [vmem:[#allocation2 + $0x10] sm:$0xf0]
        %v631 = vrot.slane %v625, 4
        %v632 = vrot.slane %v626, 4
        %v633 = vrot.slane %v627, 4
        %634 = vrot.lane.b32.xlu0 %v631, 16
        %v635 = vpop.permute.xlu0 %634
        %636 = vrot.lane.b32.xlu0 %v632, 16
        %v637 = vpop.permute.xlu0 %636
        %638 = vrot.lane.b32.xlu0 %v633, 16
        %v639 = vpop.permute.xlu0 %638
        %v640 = vsel %vm331, %v635, %v637
        %v641 = vsel %vm331, %v637, %v639
        %644 = vst [vmem:[#allocation3 + $0x50] sm:$0xf] %v640
        %645 = vst [vmem:[#allocation3 + $0x58] sm:$0xf] %v641
        %v646 = vld [vmem:[#allocation2] sm:$0xf0]
        %v647 = vld [vmem:[#allocation2 + $0x8] sm:$0xf0]
        %v648 = vld [vmem:[#allocation2 + $0x10] sm:$0xf0]
        %v652 = vrot.slane %v646, 4
        %v653 = vrot.slane %v647, 4
        %v654 = vrot.slane %v648, 4
        %655 = vrot.lane.b32.xlu0 %v652, 15
        %v656 = vpop.permute.xlu0 %655
        %657 = vrot.lane.b32.xlu0 %v653, 15
        %v658 = vpop.permute.xlu0 %657
        %659 = vrot.lane.b32.xlu0 %v654, 15
        %v660 = vpop.permute.xlu0 %659
        %v661 = vsel %vm354, %v656, %v658
        %v662 = vsel %vm354, %v658, %v660
        %v665 = vsel %vm343, %v661, 0.0
        %v666 = vsel %vm344, %v662, 0.0
        %v669 = vrot.slane %v665, 4
        %v670 = vrot.slane %v666, 4
        %673 = vst [vmem:[#allocation3 + $0x50] sm:$0xf0] %v669
        %674 = vst [vmem:[#allocation3 + $0x58] sm:$0xf0] %v670
        %v675 = vld [vmem:[#allocation2] sm:$0xf0]
        %v676 = vld [vmem:[#allocation2 + $0x8] sm:$0xf0]
        %v677 = vld [vmem:[#allocation2 + $0x10] sm:$0xf0]
        %v681 = vrot.slane %v675, 4
        %v682 = vrot.slane %v676, 4
        %v683 = vrot.slane %v677, 4
        %684 = vrot.lane.b32.xlu0 %v681, 1
        %v685 = vpop.permute.xlu0 %684
        %686 = vrot.lane.b32.xlu0 %v682, 1
        %v687 = vpop.permute.xlu0 %686
        %688 = vrot.lane.b32.xlu0 %v683, 1
        %v689 = vpop.permute.xlu0 %688
        %v690 = vsel %vm375, %v685, %v687
        %v691 = vsel %vm375, %v687, %v689
        %v694 = vsel %vm296, %v690, 0.0
        %v695 = vsel %vm297, %v691, 0.0
        %696 = vst [vmem:[#allocation3 + $0x60] sm:$0xf] %v694
        %697 = vst [vmem:[#allocation3 + $0x68] sm:$0xf] %v695
        %v698 = vld [vmem:[#allocation2 + $0x8] sm:$0xf0]
        %v699 = vld [vmem:[#allocation2 + $0x10] sm:$0xf0]
        %700 = vst [vmem:[#allocation3 + $0x60] sm:$0xf0] %v698
        %701 = vst [vmem:[#allocation3 + $0x68] sm:$0xf0] %v699
        %v702 = vld [vmem:[#allocation2 + $0x8] sm:$0xf0]
        %v703 = vld [vmem:[#allocation2 + $0x10] sm:$0xf0]
        %v704 = vld [vmem:[#allocation2 + $0x18] sm:$0xf0]
        %v708 = vrot.slane %v702, 4
        %v709 = vrot.slane %v703, 4
        %v710 = vrot.slane %v704, 4
        %711 = vrot.lane.b32.xlu0 %v708, 127
        %v712 = vpop.permute.xlu0 %711
        %713 = vrot.lane.b32.xlu0 %v709, 127
        %v714 = vpop.permute.xlu0 %713
        %715 = vrot.lane.b32.xlu0 %v710, 127
        %v716 = vpop.permute.xlu0 %715
        %v717 = vsel %vm406, %v712, %v714
        %v718 = vsel %vm406, %v714, %v716
        %v721 = vsel %vm343, %v717, 0.0
        %v722 = vsel %vm344, %v718, 0.0
        %723 = vst [vmem:[#allocation3 + $0x70] sm:$0xf] %v721
        %724 = vst [vmem:[#allocation3 + $0x78] sm:$0xf] %v722
        %v725 = vld [vmem:[#allocation2 + $0x8] sm:$0xf0]
        %v726 = vld [vmem:[#allocation2 + $0x10] sm:$0xf0]
        %v727 = vld [vmem:[#allocation2 + $0x18] sm:$0xf0]
        %v731 = vrot.slane %v725, 4
        %v732 = vrot.slane %v726, 4
        %v733 = vrot.slane %v727, 4
        %734 = vrot.lane.b32.xlu0 %v731, 113
        %v735 = vpop.permute.xlu0 %734
        %736 = vrot.lane.b32.xlu0 %v732, 113
        %v737 = vpop.permute.xlu0 %736
        %738 = vrot.lane.b32.xlu0 %v733, 113
        %v739 = vpop.permute.xlu0 %738
        %v740 = vsel %vm433, %v735, %v737
        %v741 = vsel %vm433, %v737, %v739
        %v744 = vsel %vm296, %v740, 0.0
        %v745 = vsel %vm297, %v741, 0.0
        %v748 = vrot.slane %v744, 4
        %v749 = vrot.slane %v745, 4
        %752 = vst [vmem:[#allocation3 + $0x70] sm:$0xf0] %v748
        %753 = vst [vmem:[#allocation3 + $0x78] sm:$0xf0] %v749
        %v754 = vld [vmem:[#allocation2 + $0x8] sm:$0xf0]
        %v755 = vld [vmem:[#allocation2 + $0x10] sm:$0xf0]
        %v756 = vld [vmem:[#allocation2 + $0x18] sm:$0xf0]
        %v760 = vrot.slane %v754, 4
        %v761 = vrot.slane %v755, 4
        %v762 = vrot.slane %v756, 4
        %763 = vrot.lane.b32.xlu0 %v760, 112
        %v764 = vpop.permute.xlu0 %763
        %765 = vrot.lane.b32.xlu0 %v761, 112
        %v766 = vpop.permute.xlu0 %765
        %767 = vrot.lane.b32.xlu0 %v762, 112
        %v768 = vpop.permute.xlu0 %767
        %v769 = vsel %vm457, %v764, %v766
        %v770 = vsel %vm457, %v766, %v768
        %773 = vst [vmem:[#allocation3 + $0x80] sm:$0xf] %v769
        %774 = vst [vmem:[#allocation3 + $0x88] sm:$0xf] %v770
        %v775 = vld [vmem:[#allocation2 + $0x8] sm:$0xf0]
        %v776 = vld [vmem:[#allocation2 + $0x10] sm:$0xf0]
        %v777 = vld [vmem:[#allocation2 + $0x18] sm:$0xf0]
        %v781 = vrot.slane %v775, 4
        %v782 = vrot.slane %v776, 4
        %v783 = vrot.slane %v777, 4
        %784 = vrot.lane.b32.xlu0 %v781, 111
        %v785 = vpop.permute.xlu0 %784
        %786 = vrot.lane.b32.xlu0 %v782, 111
        %v787 = vpop.permute.xlu0 %786
        %788 = vrot.lane.b32.xlu0 %v783, 111
        %v789 = vpop.permute.xlu0 %788
        %v790 = vsel %vm476, %v785, %v787
        %v791 = vsel %vm476, %v787, %v789
        %v794 = vsel %vm343, %v790, 0.0
        %v795 = vsel %vm344, %v791, 0.0
        %v798 = vrot.slane %v794, 4
        %v799 = vrot.slane %v795, 4
        %802 = vst [vmem:[#allocation3 + $0x80] sm:$0xf0] %v798
        %803 = vst [vmem:[#allocation3 + $0x88] sm:$0xf0] %v799
        %s804 = scalar_lea.vmem [#allocation4], 8
        %v805 = vld [vmem:[%s804] sm:$0xff]
        %v806 = vld [vmem:[#allocation3] sm:$0xff]
        %v807 = vld [vmem:[#allocation3 + $0x8] sm:$0xff]
        %v808 = vld [vmem:[#allocation3 + $0x10] sm:$0xff]
        %v809 = vld [vmem:[#allocation3 + $0x18] sm:$0xff]
        %v810 = vld [vmem:[#allocation3 + $0x20] sm:$0xff]
        %v811 = vld [vmem:[#allocation3 + $0x28] sm:$0xff]
        %v812 = vld [vmem:[#allocation3 + $0x30] sm:$0xff]
        %v813 = vld [vmem:[#allocation3 + $0x38] sm:$0xff]
        %v814 = vld [vmem:[#allocation3 + $0x40] sm:$0xff]
        %v815 = vld [vmem:[#allocation3 + $0x48] sm:$0xff]
        %v816 = vld [vmem:[#allocation3 + $0x50] sm:$0xff]
        %v817 = vld [vmem:[#allocation3 + $0x58] sm:$0xff]
        %v818 = vld [vmem:[#allocation3 + $0x60] sm:$0xff]
        %v819 = vld [vmem:[#allocation3 + $0x68] sm:$0xff]
        %v820 = vld [vmem:[#allocation3 + $0x70] sm:$0xff]
        %v821 = vld [vmem:[#allocation3 + $0x78] sm:$0xff]
        %v822 = vld [vmem:[#allocation3 + $0x80] sm:$0xff]
        %v823 = vld [vmem:[#allocation3 + $0x88] sm:$0xff]
        %s824 = scalar_lea.vmem %s2, 4
        %v825 = vld [vmem:[%s824] sm:$0xf]
        %827 = vset.pattern.permute.xlu0 0
        %828 = vperm.xlu0 %827, %v825
        %v829 = vpop.permute.xlu0 %828
        %vm831 = vcmask 588800
        %v833 = vsel %vm831, %v805, 0
        %835 = vmatprep.subr.mxu0 %v807
        %836 = vmatpush1.msra.mxu0 %v806
        %837 = vmatprep.subr.mxu0 %v809
        %838 = vmatpush1.msra.mxu0 %v808
        %839 = vmatprep.subr.mxu0 %v811
        %840 = vmatpush1.msra.mxu0 %v810
        %841 = vmatprep.subr.mxu0 %v813
        %842 = vmatpush1.msra.mxu0 %v812
        %843 = vmatprep.subr.mxu0 %v815
        %844 = vmatpush1.msra.mxu0 %v814
        %845 = vmatprep.subr.mxu0 %v817
        %846 = vmatpush1.msra.mxu0 %v816
        %847 = vmatprep.subr.mxu0 %v819
        %848 = vmatpush1.msra.mxu0 %v818
        %849 = vmatprep.subr.mxu0 %v821
        %850 = vmatpush1.msra.mxu0 %v820
        %851 = vmatprep.subr.mxu0 %v823
        %852 = vmatpush1.msra.mxu0 %v822
        %853 = vmatprep.subr.mxu0 0.0
        %854 = vmatpush1.msra.mxu0 0.0
        %855 = vmatprep.subr.mxu0 0.0
        %856 = vmatpush1.msra.mxu0 0.0
        %857 = vmatprep.subr.mxu0 0.0
        %858 = vmatpush1.msra.mxu0 0.0
        %859 = vmatprep.subr.mxu0 0.0
        %860 = vmatpush1.msra.mxu0 0.0
        %861 = vmatprep.subr.mxu0 0.0
        %862 = vmatpush1.msra.mxu0 0.0
        %863 = vmatprep.subr.mxu0 0.0
        %864 = vmatpush1.msra.mxu0 0.0
        %865 = vmatprep.subr.mxu0 0.0
        %866 = vmatpush1.msra.mxu0 0.0
        %867 = vmatprep.subr.mxu0 0.0
        %868 = vmatpush1.msra.mxu0 0.0
        %869 = vmatprep.subr.mxu0 0.0
        %870 = vmatpush1.msra.mxu0 0.0
        %871 = vmatprep.subr.mxu0 0.0
        %872 = vmatpush1.msra.mxu0 0.0
        %873 = vmatprep.subr.mxu0 0.0
        %874 = vmatpush1.msra.mxu0 0.0
        %875 = vmatprep.subr.mxu0 0.0
        %876 = vmatpush1.msra.mxu0 0.0
        %877 = vmatprep.subr.mxu0 0.0
        %878 = vmatpush1.msra.mxu0 0.0
        %879 = vmatprep.subr.mxu0 0.0
        %880 = vmatpush1.msra.mxu0 0.0
        %881 = vmatprep.subr.mxu0 0.0
        %882 = vmatpush1.msra.mxu0 0.0
        %883 = vmatprep.subr.mxu0 0.0
        %884 = vmatpush1.msra.mxu0 0.0
        %885 = vmatprep.subr.mxu0 0.0
        %886 = vmatpush1.msra.mxu0 0.0
        %887 = vmatprep.subr.mxu0 0.0
        %888 = vmatpush1.msra.mxu0 0.0
        %889 = vmatprep.subr.mxu0 0.0
        %890 = vmatpush1.msra.mxu0 0.0
        %891 = vmatprep.subr.mxu0 0.0
        %892 = vmatpush1.msra.mxu0 0.0
        %893 = vmatprep.subr.mxu0 0.0
        %894 = vmatpush1.msra.mxu0 0.0
        %895 = vmatprep.subr.mxu0 0.0
        %896 = vmatpush1.msra.mxu0 0.0
        %897 = vmatprep.subr.mxu0 0.0
        %898 = vmatpush1.msra.mxu0 0.0
        %899 = vmatprep.mubr.f32.mxu0 0.0
        %900 = vmatmul.mubr.f32.gmra.mrb[0].mxu0 %v833
        %v901 = vpop.f32.mrb[0].mxu0
        %v902 = vadd.f32 %v829, %v901
        %v903 = vpop.f32.mrb[0].mxu0
        %v904 = vadd.f32 %v829, %v903
        %905 = vdwg.mxu0
        %v906 = vmul.f32 %v902, 0.2
        %v907 = vmul.f32 %v904, 0.2
        %v908 = vmax.f32 %v902, %v906
        %v909 = vmax.f32 %v904, %v907
        %910 = vst [vmem:[#allocation2 + $0x28] sm:$0xf] %v908
        %911 = vst [vmem:[#allocation2 + $0x30] sm:$0xf] %v909
        %v912 = vld [vmem:[#allocation2 + $0x20] sm:$0xf]
        %v913 = vld [vmem:[#allocation2 + $0x28] sm:$0xf]
        %v914 = vld [vmem:[#allocation2 + $0x30] sm:$0xf]
        %918 = vrot.lane.b32.xlu0 %v912, 17
        %v919 = vpop.permute.xlu0 %918
        %920 = vrot.lane.b32.xlu0 %v913, 17
        %v921 = vpop.permute.xlu0 %920
        %922 = vrot.lane.b32.xlu0 %v914, 17
        %v923 = vpop.permute.xlu0 %922
        %v924 = vsel %vm307, %v919, %v921
        %v925 = vsel %vm307, %v921, %v923
        %v928 = vsel %vm296, %v924, 0.0
        %v929 = vsel %vm297, %v925, 0.0
        %930 = vst [vmem:[#allocation3 + $0x90] sm:$0xf] %v928
        %931 = vst [vmem:[#allocation3 + $0x98] sm:$0xf] %v929
        %v932 = vld [vmem:[#allocation2 + $0x20] sm:$0xf]
        %v933 = vld [vmem:[#allocation2 + $0x28] sm:$0xf]
        %v934 = vld [vmem:[#allocation2 + $0x30] sm:$0xf]
        %v938 = vrot.slane %v932, 4
        %v939 = vrot.slane %v933, 4
        %v940 = vrot.slane %v934, 4
        %941 = vrot.lane.b32.xlu0 %v938, 16
        %v942 = vpop.permute.xlu0 %941
        %943 = vrot.lane.b32.xlu0 %v939, 16
        %v944 = vpop.permute.xlu0 %943
        %945 = vrot.lane.b32.xlu0 %v940, 16
        %v946 = vpop.permute.xlu0 %945
        %v947 = vsel %vm331, %v942, %v944
        %v948 = vsel %vm331, %v944, %v946
        %951 = vst [vmem:[#allocation3 + $0x90] sm:$0xf0] %v947
        %952 = vst [vmem:[#allocation3 + $0x98] sm:$0xf0] %v948
        %v953 = vld [vmem:[#allocation2 + $0x20] sm:$0xf]
        %v954 = vld [vmem:[#allocation2 + $0x28] sm:$0xf]
        %v955 = vld [vmem:[#allocation2 + $0x30] sm:$0xf]
        %959 = vrot.lane.b32.xlu0 %v953, 15
        %v960 = vpop.permute.xlu0 %959
        %961 = vrot.lane.b32.xlu0 %v954, 15
        %v962 = vpop.permute.xlu0 %961
        %963 = vrot.lane.b32.xlu0 %v955, 15
        %v964 = vpop.permute.xlu0 %963
        %v965 = vsel %vm354, %v960, %v962
        %v966 = vsel %vm354, %v962, %v964
        %v969 = vsel %vm343, %v965, 0.0
        %v970 = vsel %vm344, %v966, 0.0
        %971 = vst [vmem:[#allocation3 + $0xa0] sm:$0xf] %v969
        %972 = vst [vmem:[#allocation3 + $0xa8] sm:$0xf] %v970
        %v973 = vld [vmem:[#allocation2 + $0x20] sm:$0xf]
        %v974 = vld [vmem:[#allocation2 + $0x28] sm:$0xf]
        %v975 = vld [vmem:[#allocation2 + $0x30] sm:$0xf]
        %979 = vrot.lane.b32.xlu0 %v973, 1
        %v980 = vpop.permute.xlu0 %979
        %981 = vrot.lane.b32.xlu0 %v974, 1
        %v982 = vpop.permute.xlu0 %981
        %983 = vrot.lane.b32.xlu0 %v975, 1
        %v984 = vpop.permute.xlu0 %983
        %v985 = vsel %vm375, %v980, %v982
        %v986 = vsel %vm375, %v982, %v984
        %v989 = vsel %vm296, %v985, 0.0
        %v990 = vsel %vm297, %v986, 0.0
        %v993 = vrot.slane %v989, 4
        %v994 = vrot.slane %v990, 4
        %997 = vst [vmem:[#allocation3 + $0xa0] sm:$0xf0] %v993
        %998 = vst [vmem:[#allocation3 + $0xa8] sm:$0xf0] %v994
        %v999 = vld [vmem:[#allocation2 + $0x28] sm:$0xf]
        %v1000 = vld [vmem:[#allocation2 + $0x30] sm:$0xf]
        %1001 = vst [vmem:[#allocation3 + $0xb0] sm:$0xf] %v999
        %1002 = vst [vmem:[#allocation3 + $0xb8] sm:$0xf] %v1000
        %v1003 = vld [vmem:[#allocation2 + $0x28] sm:$0xf]
        %v1004 = vld [vmem:[#allocation2 + $0x30] sm:$0xf]
        %v1005 = vld [vmem:[#allocation2 + $0x38] sm:$0xf]
        %1009 = vrot.lane.b32.xlu0 %v1003, 127
        %v1010 = vpop.permute.xlu0 %1009
        %1011 = vrot.lane.b32.xlu0 %v1004, 127
        %v1012 = vpop.permute.xlu0 %1011
        %1013 = vrot.lane.b32.xlu0 %v1005, 127
        %v1014 = vpop.permute.xlu0 %1013
        %v1015 = vsel %vm406, %v1010, %v1012
        %v1016 = vsel %vm406, %v1012, %v1014
        %v1019 = vsel %vm343, %v1015, 0.0
        %v1020 = vsel %vm344, %v1016, 0.0
        %v1023 = vrot.slane %v1019, 4
        %v1024 = vrot.slane %v1020, 4
        %1027 = vst [vmem:[#allocation3 + $0xb0] sm:$0xf0] %v1023
        %1028 = vst [vmem:[#allocation3 + $0xb8] sm:$0xf0] %v1024
        %v1029 = vld [vmem:[#allocation2 + $0x28] sm:$0xf]
        %v1030 = vld [vmem:[#allocation2 + $0x30] sm:$0xf]
        %v1031 = vld [vmem:[#allocation2 + $0x38] sm:$0xf]
        %1035 = vrot.lane.b32.xlu0 %v1029, 113
        %v1036 = vpop.permute.xlu0 %1035
        %1037 = vrot.lane.b32.xlu0 %v1030, 113
        %v1038 = vpop.permute.xlu0 %1037
        %1039 = vrot.lane.b32.xlu0 %v1031, 113
        %v1040 = vpop.permute.xlu0 %1039
        %v1041 = vsel %vm433, %v1036, %v1038
        %v1042 = vsel %vm433, %v1038, %v1040
        %v1045 = vsel %vm296, %v1041, 0.0
        %v1046 = vsel %vm297, %v1042, 0.0
        %1047 = vst [vmem:[#allocation3 + $0xc0] sm:$0xf] %v1045
        %1048 = vst [vmem:[#allocation3 + $0xc8] sm:$0xf] %v1046
        %v1049 = vld [vmem:[#allocation2 + $0x28] sm:$0xf]
        %v1050 = vld [vmem:[#allocation2 + $0x30] sm:$0xf]
        %v1051 = vld [vmem:[#allocation2 + $0x38] sm:$0xf]
        %v1055 = vrot.slane %v1049, 4
        %v1056 = vrot.slane %v1050, 4
        %v1057 = vrot.slane %v1051, 4
        %1058 = vrot.lane.b32.xlu0 %v1055, 112
        %v1059 = vpop.permute.xlu0 %1058
        %1060 = vrot.lane.b32.xlu0 %v1056, 112
        %v1061 = vpop.permute.xlu0 %1060
        %1062 = vrot.lane.b32.xlu0 %v1057, 112
        %v1063 = vpop.permute.xlu0 %1062
        %v1064 = vsel %vm457, %v1059, %v1061
        %v1065 = vsel %vm457, %v1061, %v1063
        %1068 = vst [vmem:[#allocation3 + $0xc0] sm:$0xf0] %v1064
        %1069 = vst [vmem:[#allocation3 + $0xc8] sm:$0xf0] %v1065
        %v1070 = vld [vmem:[#allocation2 + $0x28] sm:$0xf]
        %v1071 = vld [vmem:[#allocation2 + $0x30] sm:$0xf]
        %v1072 = vld [vmem:[#allocation2 + $0x38] sm:$0xf]
        %1076 = vrot.lane.b32.xlu0 %v1070, 111
        %v1077 = vpop.permute.xlu0 %1076
        %1078 = vrot.lane.b32.xlu0 %v1071, 111
        %v1079 = vpop.permute.xlu0 %1078
        %1080 = vrot.lane.b32.xlu0 %v1072, 111
        %v1081 = vpop.permute.xlu0 %1080
        %v1082 = vsel %vm476, %v1077, %v1079
        %v1083 = vsel %vm476, %v1079, %v1081
        %v1086 = vsel %vm343, %v1082, 0.0
        %v1087 = vsel %vm344, %v1083, 0.0
        %1088 = vst [vmem:[#allocation3 + $0xd0] sm:$0xf] %v1086
        %1089 = vst [vmem:[#allocation3 + $0xd8] sm:$0xf] %v1087
        %s1090 = scalar_lea.vmem [#allocation4], 16
        %v1091 = vld [vmem:[%s1090] sm:$0xff]
        %v1092 = vld [vmem:[#allocation3] sm:$0xff]
        %v1093 = vld [vmem:[#allocation3 + $0x8] sm:$0xff]
        %v1094 = vld [vmem:[#allocation3 + $0x10] sm:$0xff]
        %v1095 = vld [vmem:[#allocation3 + $0x18] sm:$0xff]
        %v1096 = vld [vmem:[#allocation3 + $0x20] sm:$0xff]
        %v1097 = vld [vmem:[#allocation3 + $0x28] sm:$0xff]
        %v1098 = vld [vmem:[#allocation3 + $0x30] sm:$0xff]
        %v1099 = vld [vmem:[#allocation3 + $0x38] sm:$0xff]
        %v1100 = vld [vmem:[#allocation3 + $0x40] sm:$0xff]
        %v1101 = vld [vmem:[#allocation3 + $0x48] sm:$0xff]
        %v1102 = vld [vmem:[#allocation3 + $0x50] sm:$0xff]
        %v1103 = vld [vmem:[#allocation3 + $0x58] sm:$0xff]
        %v1104 = vld [vmem:[#allocation3 + $0x60] sm:$0xff]
        %v1105 = vld [vmem:[#allocation3 + $0x68] sm:$0xff]
        %v1106 = vld [vmem:[#allocation3 + $0x70] sm:$0xff]
        %v1107 = vld [vmem:[#allocation3 + $0x78] sm:$0xff]
        %v1108 = vld [vmem:[#allocation3 + $0x80] sm:$0xff]
        %v1109 = vld [vmem:[#allocation3 + $0x88] sm:$0xff]
        %v1110 = vld [vmem:[#allocation3 + $0x90] sm:$0xff]
        %v1111 = vld [vmem:[#allocation3 + $0x98] sm:$0xff]
        %v1112 = vld [vmem:[#allocation3 + $0xa0] sm:$0xff]
        %v1113 = vld [vmem:[#allocation3 + $0xa8] sm:$0xff]
        %v1114 = vld [vmem:[#allocation3 + $0xb0] sm:$0xff]
        %v1115 = vld [vmem:[#allocation3 + $0xb8] sm:$0xff]
        %v1116 = vld [vmem:[#allocation3 + $0xc0] sm:$0xff]
        %v1117 = vld [vmem:[#allocation3 + $0xc8] sm:$0xff]
        %v1118 = vld [vmem:[#allocation3 + $0xd0] sm:$0xf]
        %v1119 = vld [vmem:[#allocation3 + $0xd8] sm:$0xf]
        %s1120 = scalar_lea.vmem %s2, 8
        %v1121 = vld [vmem:[%s1120] sm:$0xf]
        %1123 = vset.pattern.permute.xlu0 0
        %1124 = vperm.xlu0 %1123, %v1121
        %v1125 = vpop.permute.xlu0 %1124
        %vm1127 = vcmask 883712
        %v1129 = vsel %vm1127, %v1091, 0
        %v1132 = vsel %vm506, %v1118, 0
        %v1135 = vsel %vm506, %v1119, 0
        %1137 = vmatprep.subr.mxu0 %v1093
        %1138 = vmatpush1.msra.mxu0 %v1092
        %1139 = vmatprep.subr.mxu0 %v1095
        %1140 = vmatpush1.msra.mxu0 %v1094
        %1141 = vmatprep.subr.mxu0 %v1097
        %1142 = vmatpush1.msra.mxu0 %v1096
        %1143 = vmatprep.subr.mxu0 %v1099
        %1144 = vmatpush1.msra.mxu0 %v1098
        %1145 = vmatprep.subr.mxu0 %v1101
        %1146 = vmatpush1.msra.mxu0 %v1100
        %1147 = vmatprep.subr.mxu0 %v1103
        %1148 = vmatpush1.msra.mxu0 %v1102
        %1149 = vmatprep.subr.mxu0 %v1105
        %1150 = vmatpush1.msra.mxu0 %v1104
        %1151 = vmatprep.subr.mxu0 %v1107
        %1152 = vmatpush1.msra.mxu0 %v1106
        %1153 = vmatprep.subr.mxu0 %v1109
        %1154 = vmatpush1.msra.mxu0 %v1108
        %1155 = vmatprep.subr.mxu0 %v1111
        %1156 = vmatpush1.msra.mxu0 %v1110
        %1157 = vmatprep.subr.mxu0 %v1113
        %1158 = vmatpush1.msra.mxu0 %v1112
        %1159 = vmatprep.subr.mxu0 %v1115
        %1160 = vmatpush1.msra.mxu0 %v1114
        %1161 = vmatprep.subr.mxu0 %v1117
        %1162 = vmatpush1.msra.mxu0 %v1116
        %1163 = vmatprep.subr.mxu0 %v1135
        %1164 = vmatpush1.msra.mxu0 %v1132
        %1165 = vmatprep.subr.mxu0 0.0
        %1166 = vmatpush1.msra.mxu0 0.0
        %1167 = vmatprep.subr.mxu0 0.0
        %1168 = vmatpush1.msra.mxu0 0.0
        %1169 = vmatprep.subr.mxu0 0.0
        %1170 = vmatpush1.msra.mxu0 0.0
        %1171 = vmatprep.subr.mxu0 0.0
        %1172 = vmatpush1.msra.mxu0 0.0
        %1173 = vmatprep.subr.mxu0 0.0
        %1174 = vmatpush1.msra.mxu0 0.0
        %1175 = vmatprep.subr.mxu0 0.0
        %1176 = vmatpush1.msra.mxu0 0.0
        %1177 = vmatprep.subr.mxu0 0.0
        %1178 = vmatpush1.msra.mxu0 0.0
        %1179 = vmatprep.subr.mxu0 0.0
        %1180 = vmatpush1.msra.mxu0 0.0
        %1181 = vmatprep.subr.mxu0 0.0
        %1182 = vmatpush1.msra.mxu0 0.0
        %1183 = vmatprep.subr.mxu0 0.0
        %1184 = vmatpush1.msra.mxu0 0.0
        %1185 = vmatprep.subr.mxu0 0.0
        %1186 = vmatpush1.msra.mxu0 0.0
        %1187 = vmatprep.subr.mxu0 0.0
        %1188 = vmatpush1.msra.mxu0 0.0
        %1189 = vmatprep.subr.mxu0 0.0
        %1190 = vmatpush1.msra.mxu0 0.0
        %1191 = vmatprep.subr.mxu0 0.0
        %1192 = vmatpush1.msra.mxu0 0.0
        %1193 = vmatprep.subr.mxu0 0.0
        %1194 = vmatpush1.msra.mxu0 0.0
        %1195 = vmatprep.subr.mxu0 0.0
        %1196 = vmatpush1.msra.mxu0 0.0
        %1197 = vmatprep.subr.mxu0 0.0
        %1198 = vmatpush1.msra.mxu0 0.0
        %1199 = vmatprep.subr.mxu0 0.0
        %1200 = vmatpush1.msra.mxu0 0.0
        %1201 = vmatprep.mubr.f32.mxu0 0.0
        %1202 = vmatmul.mubr.f32.gmra.mrb[0].mxu0 %v1129
        %v1203 = vpop.f32.mrb[0].mxu0
        %v1204 = vadd.f32 %v1125, %v1203
        %v1205 = vpop.f32.mrb[0].mxu0
        %v1206 = vadd.f32 %v1125, %v1205
        %1207 = vdwg.mxu0
        %v1208 = vmul.f32 %v1204, 0.2
        %v1209 = vmul.f32 %v1206, 0.2
        %v1210 = vmax.f32 %v1204, %v1208
        %v1211 = vmax.f32 %v1206, %v1209
        %v1214 = vrot.slane %v1210, 4
        %v1215 = vrot.slane %v1211, 4
        %1218 = vst [vmem:[#allocation2 + $0x28] sm:$0xf0] %v1214
        %1219 = vst [vmem:[#allocation2 + $0x30] sm:$0xf0] %v1215
        %v1220 = vld [vmem:[#allocation2 + $0x20] sm:$0xf0]
        %v1221 = vld [vmem:[#allocation2 + $0x28] sm:$0xf0]
        %v1222 = vld [vmem:[#allocation2 + $0x30] sm:$0xf0]
        %v1226 = vrot.slane %v1220, 4
        %v1227 = vrot.slane %v1221, 4
        %v1228 = vrot.slane %v1222, 4
        %1229 = vrot.lane.b32.xlu0 %v1226, 17
        %v1230 = vpop.permute.xlu0 %1229
        %1231 = vrot.lane.b32.xlu0 %v1227, 17
        %v1232 = vpop.permute.xlu0 %1231
        %1233 = vrot.lane.b32.xlu0 %v1228, 17
        %v1234 = vpop.permute.xlu0 %1233
        %v1235 = vsel %vm307, %v1230, %v1232
        %v1236 = vsel %vm307, %v1232, %v1234
        %v1239 = vsel %vm296, %v1235, 0.0
        %v1240 = vsel %vm297, %v1236, 0.0
        %v1243 = vrot.slane %v1239, 4
        %v1244 = vrot.slane %v1240, 4
        %1247 = vst [vmem:[#allocation3 + $0xd0] sm:$0xf0] %v1243
        %1248 = vst [vmem:[#allocation3 + $0xd8] sm:$0xf0] %v1244
        %v1249 = vld [vmem:[#allocation2 + $0x20] sm:$0xf0]
        %v1250 = vld [vmem:[#allocation2 + $0x28] sm:$0xf0]
        %v1251 = vld [vmem:[#allocation2 + $0x30] sm:$0xf0]
        %v1255 = vrot.slane %v1249, 4
        %v1256 = vrot.slane %v1250, 4
        %v1257 = vrot.slane %v1251, 4
        %1258 = vrot.lane.b32.xlu0 %v1255, 16
        %v1259 = vpop.permute.xlu0 %1258
        %1260 = vrot.lane.b32.xlu0 %v1256, 16
        %v1261 = vpop.permute.xlu0 %1260
        %1262 = vrot.lane.b32.xlu0 %v1257, 16
        %v1263 = vpop.permute.xlu0 %1262
        %v1264 = vsel %vm331, %v1259, %v1261
        %v1265 = vsel %vm331, %v1261, %v1263
        %1268 = vst [vmem:[#allocation3 + $0xe0] sm:$0xf] %v1264
        %1269 = vst [vmem:[#allocation3 + $0xe8] sm:$0xf] %v1265
        %v1270 = vld [vmem:[#allocation2 + $0x20] sm:$0xf0]
        %v1271 = vld [vmem:[#allocation2 + $0x28] sm:$0xf0]
        %v1272 = vld [vmem:[#allocation2 + $0x30] sm:$0xf0]
        %v1276 = vrot.slane %v1270, 4
        %v1277 = vrot.slane %v1271, 4
        %v1278 = vrot.slane %v1272, 4
        %1279 = vrot.lane.b32.xlu0 %v1276, 15
        %v1280 = vpop.permute.xlu0 %1279
        %1281 = vrot.lane.b32.xlu0 %v1277, 15
        %v1282 = vpop.permute.xlu0 %1281
        %1283 = vrot.lane.b32.xlu0 %v1278, 15
        %v1284 = vpop.permute.xlu0 %1283
        %v1285 = vsel %vm354, %v1280, %v1282
        %v1286 = vsel %vm354, %v1282, %v1284
        %v1289 = vsel %vm343, %v1285, 0.0
        %v1290 = vsel %vm344, %v1286, 0.0
        %v1293 = vrot.slane %v1289, 4
        %v1294 = vrot.slane %v1290, 4
        %1297 = vst [vmem:[#allocation3 + $0xe0] sm:$0xf0] %v1293
        %1298 = vst [vmem:[#allocation3 + $0xe8] sm:$0xf0] %v1294
        %v1299 = vld [vmem:[#allocation2 + $0x20] sm:$0xf0]
        %v1300 = vld [vmem:[#allocation2 + $0x28] sm:$0xf0]
        %v1301 = vld [vmem:[#allocation2 + $0x30] sm:$0xf0]
        %v1305 = vrot.slane %v1299, 4
        %v1306 = vrot.slane %v1300, 4
        %v1307 = vrot.slane %v1301, 4
        %1308 = vrot.lane.b32.xlu0 %v1305, 1
        %v1309 = vpop.permute.xlu0 %1308
        %1310 = vrot.lane.b32.xlu0 %v1306, 1
        %v1311 = vpop.permute.xlu0 %1310
        %1312 = vrot.lane.b32.xlu0 %v1307, 1
        %v1313 = vpop.permute.xlu0 %1312
        %v1314 = vsel %vm375, %v1309, %v1311
        %v1315 = vsel %vm375, %v1311, %v1313
        %v1318 = vsel %vm296, %v1314, 0.0
        %v1319 = vsel %vm297, %v1315, 0.0
        %1320 = vst [vmem:[#allocation3 + $0xf0] sm:$0xf] %v1318
        %1321 = vst [vmem:[#allocation3 + $0xf8] sm:$0xf] %v1319
        %v1322 = vld [vmem:[#allocation2 + $0x28] sm:$0xf0]
        %v1323 = vld [vmem:[#allocation2 + $0x30] sm:$0xf0]
        %1324 = vst [vmem:[#allocation3 + $0xf0] sm:$0xf0] %v1322
        %1325 = vst [vmem:[#allocation3 + $0xf8] sm:$0xf0] %v1323
        %v1326 = vld [vmem:[#allocation2 + $0x28] sm:$0xf0]
        %v1327 = vld [vmem:[#allocation2 + $0x30] sm:$0xf0]
        %v1328 = vld [vmem:[#allocation2 + $0x38] sm:$0xf0]
        %v1332 = vrot.slane %v1326, 4
        %v1333 = vrot.slane %v1327, 4
        %v1334 = vrot.slane %v1328, 4
        %1335 = vrot.lane.b32.xlu0 %v1332, 127
        %v1336 = vpop.permute.xlu0 %1335
        %1337 = vrot.lane.b32.xlu0 %v1333, 127
        %v1338 = vpop.permute.xlu0 %1337
        %1339 = vrot.lane.b32.xlu0 %v1334, 127
        %v1340 = vpop.permute.xlu0 %1339
        %v1341 = vsel %vm406, %v1336, %v1338
        %v1342 = vsel %vm406, %v1338, %v1340
        %v1345 = vsel %vm343, %v1341, 0.0
        %v1346 = vsel %vm344, %v1342, 0.0
        %1347 = vst [vmem:[#allocation3 + $0x100] sm:$0xf] %v1345
        %1348 = vst [vmem:[#allocation3 + $0x108] sm:$0xf] %v1346
        %v1349 = vld [vmem:[#allocation2 + $0x28] sm:$0xf0]
        %v1350 = vld [vmem:[#allocation2 + $0x30] sm:$0xf0]
        %v1351 = vld [vmem:[#allocation2 + $0x38] sm:$0xf0]
        %v1355 = vrot.slane %v1349, 4
        %v1356 = vrot.slane %v1350, 4
        %v1357 = vrot.slane %v1351, 4
        %1358 = vrot.lane.b32.xlu0 %v1355, 113
        %v1359 = vpop.permute.xlu0 %1358
        %1360 = vrot.lane.b32.xlu0 %v1356, 113
        %v1361 = vpop.permute.xlu0 %1360
        %1362 = vrot.lane.b32.xlu0 %v1357, 113
        %v1363 = vpop.permute.xlu0 %1362
        %v1364 = vsel %vm433, %v1359, %v1361
        %v1365 = vsel %vm433, %v1361, %v1363
        %v1368 = vsel %vm296, %v1364, 0.0
        %v1369 = vsel %vm297, %v1365, 0.0
        %v1372 = vrot.slane %v1368, 4
        %v1373 = vrot.slane %v1369, 4
        %1376 = vst [vmem:[#allocation3 + $0x100] sm:$0xf0] %v1372
        %1377 = vst [vmem:[#allocation3 + $0x108] sm:$0xf0] %v1373
        %v1378 = vld [vmem:[#allocation2 + $0x28] sm:$0xf0]
        %v1379 = vld [vmem:[#allocation2 + $0x30] sm:$0xf0]
        %v1380 = vld [vmem:[#allocation2 + $0x38] sm:$0xf0]
        %v1384 = vrot.slane %v1378, 4
        %v1385 = vrot.slane %v1379, 4
        %v1386 = vrot.slane %v1380, 4
        %1387 = vrot.lane.b32.xlu0 %v1384, 112
        %v1388 = vpop.permute.xlu0 %1387
        %1389 = vrot.lane.b32.xlu0 %v1385, 112
        %v1390 = vpop.permute.xlu0 %1389
        %1391 = vrot.lane.b32.xlu0 %v1386, 112
        %v1392 = vpop.permute.xlu0 %1391
        %v1393 = vsel %vm457, %v1388, %v1390
        %v1394 = vsel %vm457, %v1390, %v1392
        %1397 = vst [vmem:[#allocation3 + $0x110] sm:$0xf] %v1393
        %1398 = vst [vmem:[#allocation3 + $0x118] sm:$0xf] %v1394
        %v1399 = vld [vmem:[#allocation2 + $0x28] sm:$0xf0]
        %v1400 = vld [vmem:[#allocation2 + $0x30] sm:$0xf0]
        %v1401 = vld [vmem:[#allocation2 + $0x38] sm:$0xf0]
        %v1405 = vrot.slane %v1399, 4
        %v1406 = vrot.slane %v1400, 4
        %v1407 = vrot.slane %v1401, 4
        %1408 = vrot.lane.b32.xlu0 %v1405, 111
        %v1409 = vpop.permute.xlu0 %1408
        %1410 = vrot.lane.b32.xlu0 %v1406, 111
        %v1411 = vpop.permute.xlu0 %1410
        %1412 = vrot.lane.b32.xlu0 %v1407, 111
        %v1413 = vpop.permute.xlu0 %1412
        %v1414 = vsel %vm476, %v1409, %v1411
        %v1415 = vsel %vm476, %v1411, %v1413
        %v1418 = vsel %vm343, %v1414, 0.0
        %v1419 = vsel %vm344, %v1415, 0.0
        %v1422 = vrot.slane %v1418, 4
        %v1423 = vrot.slane %v1419, 4
        %1426 = vst [vmem:[#allocation3 + $0x110] sm:$0xf0] %v1422
        %1427 = vst [vmem:[#allocation3 + $0x118] sm:$0xf0] %v1423
        %s1428 = scalar_lea.vmem [#allocation4], 24
        %v1429 = vld [vmem:[%s1428] sm:$0xff]
        %v1430 = vld [vmem:[#allocation3] sm:$0xff]
        %v1431 = vld [vmem:[#allocation3 + $0x8] sm:$0xff]
        %v1432 = vld [vmem:[#allocation3 + $0x10] sm:$0xff]
        %v1433 = vld [vmem:[#allocation3 + $0x18] sm:$0xff]
        %v1434 = vld [vmem:[#allocation3 + $0x20] sm:$0xff]
        %v1435 = vld [vmem:[#allocation3 + $0x28] sm:$0xff]
        %v1436 = vld [vmem:[#allocation3 + $0x30] sm:$0xff]
        %v1437 = vld [vmem:[#allocation3 + $0x38] sm:$0xff]
        %v1438 = vld [vmem:[#allocation3 + $0x40] sm:$0xff]
        %v1439 = vld [vmem:[#allocation3 + $0x48] sm:$0xff]
        %v1440 = vld [vmem:[#allocation3 + $0x50] sm:$0xff]
        %v1441 = vld [vmem:[#allocation3 + $0x58] sm:$0xff]
        %v1442 = vld [vmem:[#allocation3 + $0x60] sm:$0xff]
        %v1443 = vld [vmem:[#allocation3 + $0x68] sm:$0xff]
        %v1444 = vld [vmem:[#allocation3 + $0x70] sm:$0xff]
        %v1445 = vld [vmem:[#allocation3 + $0x78] sm:$0xff]
        %v1446 = vld [vmem:[#allocation3 + $0x80] sm:$0xff]
        %v1447 = vld [vmem:[#allocation3 + $0x88] sm:$0xff]
        %v1448 = vld [vmem:[#allocation3 + $0x90] sm:$0xff]
        %v1449 = vld [vmem:[#allocation3 + $0x98] sm:$0xff]
        %v1450 = vld [vmem:[#allocation3 + $0xa0] sm:$0xff]
        %v1451 = vld [vmem:[#allocation3 + $0xa8] sm:$0xff]
        %v1452 = vld [vmem:[#allocation3 + $0xb0] sm:$0xff]
        %v1453 = vld [vmem:[#allocation3 + $0xb8] sm:$0xff]
        %v1454 = vld [vmem:[#allocation3 + $0xc0] sm:$0xff]
        %v1455 = vld [vmem:[#allocation3 + $0xc8] sm:$0xff]
        %v1456 = vld [vmem:[#allocation3 + $0xd0] sm:$0xff]
        %v1457 = vld [vmem:[#allocation3 + $0xd8] sm:$0xff]
        %v1458 = vld [vmem:[#allocation3 + $0xe0] sm:$0xff]
        %v1459 = vld [vmem:[#allocation3 + $0xe8] sm:$0xff]
        %v1460 = vld [vmem:[#allocation3 + $0xf0] sm:$0xff]
        %v1461 = vld [vmem:[#allocation3 + $0xf8] sm:$0xff]
        %v1462 = vld [vmem:[#allocation3 + $0x100] sm:$0xff]
        %v1463 = vld [vmem:[#allocation3 + $0x108] sm:$0xff]
        %v1464 = vld [vmem:[#allocation3 + $0x110] sm:$0xff]
        %v1465 = vld [vmem:[#allocation3 + $0x118] sm:$0xff]
        %s1466 = scalar_lea.vmem %s2, 12
        %v1467 = vld [vmem:[%s1466] sm:$0xf]
        %1469 = vset.pattern.permute.xlu0 0
        %1470 = vperm.xlu0 %1469, %v1467
        %v1471 = vpop.permute.xlu0 %1470
        %v1474 = vcombine.high %v1429, %v1429
        %v1475 = vsel %vm331, %v1474, 0
        %1477 = vmatprep.subr.mxu0 %v1431
        %1478 = vmatpush1.msra.mxu0 %v1430
        %1479 = vmatprep.subr.mxu0 %v1433
        %1480 = vmatpush1.msra.mxu0 %v1432
        %1481 = vmatprep.subr.mxu0 %v1435
        %1482 = vmatpush1.msra.mxu0 %v1434
        %1483 = vmatprep.subr.mxu0 %v1437
        %1484 = vmatpush1.msra.mxu0 %v1436
        %1485 = vmatprep.subr.mxu0 %v1439
        %1486 = vmatpush1.msra.mxu0 %v1438
        %1487 = vmatprep.subr.mxu0 %v1441
        %1488 = vmatpush1.msra.mxu0 %v1440
        %1489 = vmatprep.subr.mxu0 %v1443
        %1490 = vmatpush1.msra.mxu0 %v1442
        %1491 = vmatprep.subr.mxu0 %v1445
        %1492 = vmatpush1.msra.mxu0 %v1444
        %1493 = vmatprep.subr.mxu0 %v1447
        %1494 = vmatpush1.msra.mxu0 %v1446
        %1495 = vmatprep.subr.mxu0 %v1449
        %1496 = vmatpush1.msra.mxu0 %v1448
        %1497 = vmatprep.subr.mxu0 %v1451
        %1498 = vmatpush1.msra.mxu0 %v1450
        %1499 = vmatprep.subr.mxu0 %v1453
        %1500 = vmatpush1.msra.mxu0 %v1452
        %1501 = vmatprep.subr.mxu0 %v1455
        %1502 = vmatpush1.msra.mxu0 %v1454
        %1503 = vmatprep.subr.mxu0 %v1457
        %1504 = vmatpush1.msra.mxu0 %v1456
        %1505 = vmatprep.subr.mxu0 %v1459
        %1506 = vmatpush1.msra.mxu0 %v1458
        %1507 = vmatprep.subr.mxu0 %v1461
        %1508 = vmatpush1.msra.mxu0 %v1460
        %1509 = vmatprep.subr.mxu0 %v1463
        %1510 = vmatpush1.msra.mxu0 %v1462
        %1511 = vmatprep.subr.mxu0 %v1465
        %1512 = vmatpush1.msra.mxu0 %v1464
        %1513 = vmatprep.subr.mxu0 0.0
        %1514 = vmatpush1.msra.mxu0 0.0
        %1515 = vmatprep.subr.mxu0 0.0
        %1516 = vmatpush1.msra.mxu0 0.0
        %1517 = vmatprep.subr.mxu0 0.0
        %1518 = vmatpush1.msra.mxu0 0.0
        %1519 = vmatprep.subr.mxu0 0.0
        %1520 = vmatpush1.msra.mxu0 0.0
        %1521 = vmatprep.subr.mxu0 0.0
        %1522 = vmatpush1.msra.mxu0 0.0
        %1523 = vmatprep.subr.mxu0 0.0
        %1524 = vmatpush1.msra.mxu0 0.0
        %1525 = vmatprep.subr.mxu0 0.0
        %1526 = vmatpush1.msra.mxu0 0.0
        %1527 = vmatprep.subr.mxu0 0.0
        %1528 = vmatpush1.msra.mxu0 0.0
        %1529 = vmatprep.subr.mxu0 0.0
        %1530 = vmatpush1.msra.mxu0 0.0
        %1531 = vmatprep.subr.mxu0 0.0
        %1532 = vmatpush1.msra.mxu0 0.0
        %1533 = vmatprep.subr.mxu0 0.0
        %1534 = vmatpush1.msra.mxu0 0.0
        %1535 = vmatprep.subr.mxu0 0.0
        %1536 = vmatpush1.msra.mxu0 0.0
        %1537 = vmatprep.subr.mxu0 0.0
        %1538 = vmatpush1.msra.mxu0 0.0
        %1539 = vmatprep.subr.mxu0 0.0
        %1540 = vmatpush1.msra.mxu0 0.0
        %1541 = vmatprep.mubr.f32.mxu0 %v1475
        %1542 = vmatmul.mubr.f32.gmra.mrb[0].mxu0 %v1429
        %v1543 = vpop.f32.mrb[0].mxu0
        %v1544 = vadd.f32 %v1471, %v1543
        %v1545 = vpop.f32.mrb[0].mxu0
        %v1546 = vadd.f32 %v1471, %v1545
        %1547 = vdwg.mxu0
        %v1548 = vmul.f32 %v1544, 0.2
        %v1549 = vmul.f32 %v1546, 0.2
        %v1550 = vmax.f32 %v1544, %v1548
        %v1551 = vmax.f32 %v1546, %v1549
        %1552 = vst [vmem:[#allocation2 + $0x48] sm:$0xf] %v1550
        %1553 = vst [vmem:[#allocation2 + $0x50] sm:$0xf] %v1551
        %v1554 = vld [vmem:[#allocation2 + $0x8] sm:$0xff]
        %v1555 = vld [vmem:[#allocation2 + $0x10] sm:$0xff]
        %v1556 = vld [vmem:[#allocation2 + $0x28] sm:$0xff]
        %v1557 = vld [vmem:[#allocation2 + $0x30] sm:$0xff]
        %v1558 = vld [vmem:[#allocation2 + $0x48] sm:$0xf]
        %v1559 = vld [vmem:[#allocation2 + $0x50] sm:$0xf]
        %v1560 = vld [vmem:[%s3] sm:$0xf]
        %v1561 = vld [vmem:[%s4] sm:$0xf]
        %1563 = vset.pattern.permute.xlu0 0
        %1564 = vperm.xlu0 %1563, %v1561
        %v1565 = vpop.permute.xlu0 %1564
        %vm1567 = vcmask 162816
        %v1569 = vsel %vm1567, %v1560, 0
        %v1572 = vsel %vm506, %v1558, 0
        %v1575 = vsel %vm506, %v1559, 0
        %1577 = vmatprep.subr.mxu0 %v1555
        %1578 = vmatpush1.msra.mxu0 %v1554
        %1579 = vmatprep.subr.mxu0 %v1557
        %1580 = vmatpush1.msra.mxu0 %v1556
        %1581 = vmatprep.subr.mxu0 %v1575
        %1582 = vmatpush1.msra.mxu0 %v1572
        %1583 = vmatprep.subr.mxu0 0.0
        %1584 = vmatpush1.msra.mxu0 0.0
        %1585 = vmatprep.subr.mxu0 0.0
        %1586 = vmatpush1.msra.mxu0 0.0
        %1587 = vmatprep.subr.mxu0 0.0
        %1588 = vmatpush1.msra.mxu0 0.0
        %1589 = vmatprep.subr.mxu0 0.0
        %1590 = vmatpush1.msra.mxu0 0.0
        %1591 = vmatprep.subr.mxu0 0.0
        %1592 = vmatpush1.msra.mxu0 0.0
        %1593 = vmatprep.subr.mxu0 0.0
        %1594 = vmatpush1.msra.mxu0 0.0
        %1595 = vmatprep.subr.mxu0 0.0
        %1596 = vmatpush1.msra.mxu0 0.0
        %1597 = vmatprep.subr.mxu0 0.0
        %1598 = vmatpush1.msra.mxu0 0.0
        %1599 = vmatprep.subr.mxu0 0.0
        %1600 = vmatpush1.msra.mxu0 0.0
        %1601 = vmatprep.subr.mxu0 0.0
        %1602 = vmatpush1.msra.mxu0 0.0
        %1603 = vmatprep.subr.mxu0 0.0
        %1604 = vmatpush1.msra.mxu0 0.0
        %1605 = vmatprep.subr.mxu0 0.0
        %1606 = vmatpush1.msra.mxu0 0.0
        %1607 = vmatprep.subr.mxu0 0.0
        %1608 = vmatpush1.msra.mxu0 0.0
        %1609 = vmatprep.subr.mxu0 0.0
        %1610 = vmatpush1.msra.mxu0 0.0
        %1611 = vmatprep.subr.mxu0 0.0
        %1612 = vmatpush1.msra.mxu0 0.0
        %1613 = vmatprep.subr.mxu0 0.0
        %1614 = vmatpush1.msra.mxu0 0.0
        %1615 = vmatprep.subr.mxu0 0.0
        %1616 = vmatpush1.msra.mxu0 0.0
        %1617 = vmatprep.subr.mxu0 0.0
        %1618 = vmatpush1.msra.mxu0 0.0
        %1619 = vmatprep.subr.mxu0 0.0
        %1620 = vmatpush1.msra.mxu0 0.0
        %1621 = vmatprep.subr.mxu0 0.0
        %1622 = vmatpush1.msra.mxu0 0.0
        %1623 = vmatprep.subr.mxu0 0.0
        %1624 = vmatpush1.msra.mxu0 0.0
        %1625 = vmatprep.subr.mxu0 0.0
        %1626 = vmatpush1.msra.mxu0 0.0
        %1627 = vmatprep.subr.mxu0 0.0
        %1628 = vmatpush1.msra.mxu0 0.0
        %1629 = vmatprep.subr.mxu0 0.0
        %1630 = vmatpush1.msra.mxu0 0.0
        %1631 = vmatprep.subr.mxu0 0.0
        %1632 = vmatpush1.msra.mxu0 0.0
        %1633 = vmatprep.subr.mxu0 0.0
        %1634 = vmatpush1.msra.mxu0 0.0
        %1635 = vmatprep.subr.mxu0 0.0
        %1636 = vmatpush1.msra.mxu0 0.0
        %1637 = vmatprep.subr.mxu0 0.0
        %1638 = vmatpush1.msra.mxu0 0.0
        %1639 = vmatprep.subr.mxu0 0.0
        %1640 = vmatpush1.msra.mxu0 0.0
        %1641 = vmatprep.mubr.f32.mxu0 0.0
        %1642 = vmatmul.mubr.f32.gmra.mrb[0].mxu0 %v1569
        %v1643 = vpop.f32.mrb[0].mxu0
        %v1644 = vadd.f32 %v1565, %v1643
        %v1645 = vpop.f32.mrb[0].mxu0
        %v1646 = vadd.f32 %v1565, %v1645
        %1647 = vdwg.mxu0
        %v1648 = vadd.f32 %v1644, %v1554
        %v1649 = vadd.f32 %v1646, %v1555
        %1650 = vst [vmem:[#allocation2 + $0x8] sm:$0xf] %v1648
        %1651 = vst [vmem:[#allocation2 + $0x10] sm:$0xf] %v1649
        %v1652 = vld [vmem:[#allocation2] sm:$0xf]
        %v1653 = vld [vmem:[#allocation2 + $0x8] sm:$0xf]
        %v1654 = vld [vmem:[#allocation2 + $0x10] sm:$0xf]
        %1658 = vrot.lane.b32.xlu0 %v1652, 17
        %v1659 = vpop.permute.xlu0 %1658
        %1660 = vrot.lane.b32.xlu0 %v1653, 17
        %v1661 = vpop.permute.xlu0 %1660
        %1662 = vrot.lane.b32.xlu0 %v1654, 17
        %v1663 = vpop.permute.xlu0 %1662
        %v1664 = vsel %vm307, %v1659, %v1661
        %v1665 = vsel %vm307, %v1661, %v1663
        %v1668 = vsel %vm296, %v1664, 0.0
        %v1669 = vsel %vm297, %v1665, 0.0
        %1670 = vst [vmem:[#allocation3] sm:$0xf] %v1668
        %1671 = vst [vmem:[#allocation3 + $0x8] sm:$0xf] %v1669
        %v1672 = vld [vmem:[#allocation2] sm:$0xf]
        %v1673 = vld [vmem:[#allocation2 + $0x8] sm:$0xf]
        %v1674 = vld [vmem:[#allocation2 + $0x10] sm:$0xf]
        %v1678 = vrot.slane %v1672, 4
        %v1679 = vrot.slane %v1673, 4
        %v1680 = vrot.slane %v1674, 4
        %1681 = vrot.lane.b32.xlu0 %v1678, 16
        %v1682 = vpop.permute.xlu0 %1681
        %1683 = vrot.lane.b32.xlu0 %v1679, 16
        %v1684 = vpop.permute.xlu0 %1683
        %1685 = vrot.lane.b32.xlu0 %v1680, 16
        %v1686 = vpop.permute.xlu0 %1685
        %v1687 = vsel %vm331, %v1682, %v1684
        %v1688 = vsel %vm331, %v1684, %v1686
        %1691 = vst [vmem:[#allocation3] sm:$0xf0] %v1687
        %1692 = vst [vmem:[#allocation3 + $0x8] sm:$0xf0] %v1688
        %v1693 = vld [vmem:[#allocation2] sm:$0xf]
        %v1694 = vld [vmem:[#allocation2 + $0x8] sm:$0xf]
        %v1695 = vld [vmem:[#allocation2 + $0x10] sm:$0xf]
        %1699 = vrot.lane.b32.xlu0 %v1693, 15
        %v1700 = vpop.permute.xlu0 %1699
        %1701 = vrot.lane.b32.xlu0 %v1694, 15
        %v1702 = vpop.permute.xlu0 %1701
        %1703 = vrot.lane.b32.xlu0 %v1695, 15
        %v1704 = vpop.permute.xlu0 %1703
        %v1705 = vsel %vm354, %v1700, %v1702
        %v1706 = vsel %vm354, %v1702, %v1704
        %v1709 = vsel %vm343, %v1705, 0.0
        %v1710 = vsel %vm344, %v1706, 0.0
        %1711 = vst [vmem:[#allocation3 + $0x10] sm:$0xf] %v1709
        %1712 = vst [vmem:[#allocation3 + $0x18] sm:$0xf] %v1710
        %v1713 = vld [vmem:[#allocation2] sm:$0xf]
        %v1714 = vld [vmem:[#allocation2 + $0x8] sm:$0xf]
        %v1715 = vld [vmem:[#allocation2 + $0x10] sm:$0xf]
        %1719 = vrot.lane.b32.xlu0 %v1713, 1
        %v1720 = vpop.permute.xlu0 %1719
        %1721 = vrot.lane.b32.xlu0 %v1714, 1
        %v1722 = vpop.permute.xlu0 %1721
        %1723 = vrot.lane.b32.xlu0 %v1715, 1
        %v1724 = vpop.permute.xlu0 %1723
        %v1725 = vsel %vm375, %v1720, %v1722
        %v1726 = vsel %vm375, %v1722, %v1724
        %v1729 = vsel %vm296, %v1725, 0.0
        %v1730 = vsel %vm297, %v1726, 0.0
        %v1733 = vrot.slane %v1729, 4
        %v1734 = vrot.slane %v1730, 4
        %1737 = vst [vmem:[#allocation3 + $0x10] sm:$0xf0] %v1733
        %1738 = vst [vmem:[#allocation3 + $0x18] sm:$0xf0] %v1734
        %v1739 = vld [vmem:[#allocation2 + $0x8] sm:$0xf]
        %v1740 = vld [vmem:[#allocation2 + $0x10] sm:$0xf]
        %1741 = vst [vmem:[#allocation3 + $0x20] sm:$0xf] %v1739
        %1742 = vst [vmem:[#allocation3 + $0x28] sm:$0xf] %v1740
        %v1743 = vld [vmem:[#allocation2 + $0x8] sm:$0xf]
        %v1744 = vld [vmem:[#allocation2 + $0x10] sm:$0xf]
        %v1745 = vld [vmem:[#allocation2 + $0x18] sm:$0xf]
        %1749 = vrot.lane.b32.xlu0 %v1743, 127
        %v1750 = vpop.permute.xlu0 %1749
        %1751 = vrot.lane.b32.xlu0 %v1744, 127
        %v1752 = vpop.permute.xlu0 %1751
        %1753 = vrot.lane.b32.xlu0 %v1745, 127
        %v1754 = vpop.permute.xlu0 %1753
        %v1755 = vsel %vm406, %v1750, %v1752
        %v1756 = vsel %vm406, %v1752, %v1754
        %v1759 = vsel %vm343, %v1755, 0.0
        %v1760 = vsel %vm344, %v1756, 0.0
        %v1763 = vrot.slane %v1759, 4
        %v1764 = vrot.slane %v1760, 4
        %1767 = vst [vmem:[#allocation3 + $0x20] sm:$0xf0] %v1763
        %1768 = vst [vmem:[#allocation3 + $0x28] sm:$0xf0] %v1764
        %v1769 = vld [vmem:[#allocation2 + $0x8] sm:$0xf]
        %v1770 = vld [vmem:[#allocation2 + $0x10] sm:$0xf]
        %v1771 = vld [vmem:[#allocation2 + $0x18] sm:$0xf]
        %1775 = vrot.lane.b32.xlu0 %v1769, 113
        %v1776 = vpop.permute.xlu0 %1775
        %1777 = vrot.lane.b32.xlu0 %v1770, 113
        %v1778 = vpop.permute.xlu0 %1777
        %1779 = vrot.lane.b32.xlu0 %v1771, 113
        %v1780 = vpop.permute.xlu0 %1779
        %v1781 = vsel %vm433, %v1776, %v1778
        %v1782 = vsel %vm433, %v1778, %v1780
        %v1785 = vsel %vm296, %v1781, 0.0
        %v1786 = vsel %vm297, %v1782, 0.0
        %1787 = vst [vmem:[#allocation3 + $0x30] sm:$0xf] %v1785
        %1788 = vst [vmem:[#allocation3 + $0x38] sm:$0xf] %v1786
        %v1789 = vld [vmem:[#allocation2 + $0x8] sm:$0xf]
        %v1790 = vld [vmem:[#allocation2 + $0x10] sm:$0xf]
        %v1791 = vld [vmem:[#allocation2 + $0x18] sm:$0xf]
        %v1795 = vrot.slane %v1789, 4
        %v1796 = vrot.slane %v1790, 4
        %v1797 = vrot.slane %v1791, 4
        %1798 = vrot.lane.b32.xlu0 %v1795, 112
        %v1799 = vpop.permute.xlu0 %1798
        %1800 = vrot.lane.b32.xlu0 %v1796, 112
        %v1801 = vpop.permute.xlu0 %1800
        %1802 = vrot.lane.b32.xlu0 %v1797, 112
        %v1803 = vpop.permute.xlu0 %1802
        %v1804 = vsel %vm457, %v1799, %v1801
        %v1805 = vsel %vm457, %v1801, %v1803
        %1808 = vst [vmem:[#allocation3 + $0x30] sm:$0xf0] %v1804
        %1809 = vst [vmem:[#allocation3 + $0x38] sm:$0xf0] %v1805
        %v1810 = vld [vmem:[#allocation2 + $0x8] sm:$0xf]
        %v1811 = vld [vmem:[#allocation2 + $0x10] sm:$0xf]
        %v1812 = vld [vmem:[#allocation2 + $0x18] sm:$0xf]
        %1816 = vrot.lane.b32.xlu0 %v1810, 111
        %v1817 = vpop.permute.xlu0 %1816
        %1818 = vrot.lane.b32.xlu0 %v1811, 111
        %v1819 = vpop.permute.xlu0 %1818
        %1820 = vrot.lane.b32.xlu0 %v1812, 111
        %v1821 = vpop.permute.xlu0 %1820
        %v1822 = vsel %vm476, %v1817, %v1819
        %v1823 = vsel %vm476, %v1819, %v1821
        %v1826 = vsel %vm343, %v1822, 0.0
        %v1827 = vsel %vm344, %v1823, 0.0
        %1828 = vst [vmem:[#allocation3 + $0x40] sm:$0xf] %v1826
        %1829 = vst [vmem:[#allocation3 + $0x48] sm:$0xf] %v1827
        %s1830 = scalar_lea.vmem [#allocation4], 32
        %v1831 = vld [vmem:[%s1830] sm:$0xff]
        %v1832 = vld [vmem:[#allocation3] sm:$0xff]
        %v1833 = vld [vmem:[#allocation3 + $0x8] sm:$0xff]
        %v1834 = vld [vmem:[#allocation3 + $0x10] sm:$0xff]
        %v1835 = vld [vmem:[#allocation3 + $0x18] sm:$0xff]
        %v1836 = vld [vmem:[#allocation3 + $0x20] sm:$0xff]
        %v1837 = vld [vmem:[#allocation3 + $0x28] sm:$0xff]
        %v1838 = vld [vmem:[#allocation3 + $0x30] sm:$0xff]
        %v1839 = vld [vmem:[#allocation3 + $0x38] sm:$0xff]
        %v1840 = vld [vmem:[#allocation3 + $0x40] sm:$0xf]
        %v1841 = vld [vmem:[#allocation3 + $0x48] sm:$0xf]
        %s1842 = scalar_lea.vmem %s2, 16
        %v1843 = vld [vmem:[%s1842] sm:$0xf]
        %1845 = vset.pattern.permute.xlu0 0
        %1846 = vperm.xlu0 %1845, %v1843
        %v1847 = vpop.permute.xlu0 %1846
        %v1850 = vsel %vm502, %v1831, 0
        %v1853 = vsel %vm506, %v1840, 0
        %v1856 = vsel %vm506, %v1841, 0
        %1858 = vmatprep.subr.mxu0 %v1833
        %1859 = vmatpush1.msra.mxu0 %v1832
        %1860 = vmatprep.subr.mxu0 %v1835
        %1861 = vmatpush1.msra.mxu0 %v1834
        %1862 = vmatprep.subr.mxu0 %v1837
        %1863 = vmatpush1.msra.mxu0 %v1836
        %1864 = vmatprep.subr.mxu0 %v1839
        %1865 = vmatpush1.msra.mxu0 %v1838
        %1866 = vmatprep.subr.mxu0 %v1856
        %1867 = vmatpush1.msra.mxu0 %v1853
        %1868 = vmatprep.subr.mxu0 0.0
        %1869 = vmatpush1.msra.mxu0 0.0
        %1870 = vmatprep.subr.mxu0 0.0
        %1871 = vmatpush1.msra.mxu0 0.0
        %1872 = vmatprep.subr.mxu0 0.0
        %1873 = vmatpush1.msra.mxu0 0.0
        %1874 = vmatprep.subr.mxu0 0.0
        %1875 = vmatpush1.msra.mxu0 0.0
        %1876 = vmatprep.subr.mxu0 0.0
        %1877 = vmatpush1.msra.mxu0 0.0
        %1878 = vmatprep.subr.mxu0 0.0
        %1879 = vmatpush1.msra.mxu0 0.0
        %1880 = vmatprep.subr.mxu0 0.0
        %1881 = vmatpush1.msra.mxu0 0.0
        %1882 = vmatprep.subr.mxu0 0.0
        %1883 = vmatpush1.msra.mxu0 0.0
        %1884 = vmatprep.subr.mxu0 0.0
        %1885 = vmatpush1.msra.mxu0 0.0
        %1886 = vmatprep.subr.mxu0 0.0
        %1887 = vmatpush1.msra.mxu0 0.0
        %1888 = vmatprep.subr.mxu0 0.0
        %1889 = vmatpush1.msra.mxu0 0.0
        %1890 = vmatprep.subr.mxu0 0.0
        %1891 = vmatpush1.msra.mxu0 0.0
        %1892 = vmatprep.subr.mxu0 0.0
        %1893 = vmatpush1.msra.mxu0 0.0
        %1894 = vmatprep.subr.mxu0 0.0
        %1895 = vmatpush1.msra.mxu0 0.0
        %1896 = vmatprep.subr.mxu0 0.0
        %1897 = vmatpush1.msra.mxu0 0.0
        %1898 = vmatprep.subr.mxu0 0.0
        %1899 = vmatpush1.msra.mxu0 0.0
        %1900 = vmatprep.subr.mxu0 0.0
        %1901 = vmatpush1.msra.mxu0 0.0
        %1902 = vmatprep.subr.mxu0 0.0
        %1903 = vmatpush1.msra.mxu0 0.0
        %1904 = vmatprep.subr.mxu0 0.0
        %1905 = vmatpush1.msra.mxu0 0.0
        %1906 = vmatprep.subr.mxu0 0.0
        %1907 = vmatpush1.msra.mxu0 0.0
        %1908 = vmatprep.subr.mxu0 0.0
        %1909 = vmatpush1.msra.mxu0 0.0
        %1910 = vmatprep.subr.mxu0 0.0
        %1911 = vmatpush1.msra.mxu0 0.0
        %1912 = vmatprep.subr.mxu0 0.0
        %1913 = vmatpush1.msra.mxu0 0.0
        %1914 = vmatprep.subr.mxu0 0.0
        %1915 = vmatpush1.msra.mxu0 0.0
        %1916 = vmatprep.subr.mxu0 0.0
        %1917 = vmatpush1.msra.mxu0 0.0
        %1918 = vmatprep.subr.mxu0 0.0
        %1919 = vmatpush1.msra.mxu0 0.0
        %1920 = vmatprep.subr.mxu0 0.0
        %1921 = vmatpush1.msra.mxu0 0.0
        %1922 = vmatprep.mubr.f32.mxu0 0.0
        %1923 = vmatmul.mubr.f32.gmra.mrb[0].mxu0 %v1850
        %v1924 = vpop.f32.mrb[0].mxu0
        %v1925 = vadd.f32 %v1847, %v1924
        %v1926 = vpop.f32.mrb[0].mxu0
        %v1927 = vadd.f32 %v1847, %v1926
        %1928 = vdwg.mxu0
        %v1929 = vmul.f32 %v1925, 0.2
        %v1930 = vmul.f32 %v1927, 0.2
        %v1931 = vmax.f32 %v1925, %v1929
        %v1932 = vmax.f32 %v1927, %v1930
        %v1935 = vrot.slane %v1931, 4
        %v1936 = vrot.slane %v1932, 4
        %1939 = vst [vmem:[#allocation2 + $0x8] sm:$0xf0] %v1935
        %1940 = vst [vmem:[#allocation2 + $0x10] sm:$0xf0] %v1936
        %v1941 = vld [vmem:[#allocation2] sm:$0xf0]
        %v1942 = vld [vmem:[#allocation2 + $0x8] sm:$0xf0]
        %v1943 = vld [vmem:[#allocation2 + $0x10] sm:$0xf0]
        %v1947 = vrot.slane %v1941, 4
        %v1948 = vrot.slane %v1942, 4
        %v1949 = vrot.slane %v1943, 4
        %1950 = vrot.lane.b32.xlu0 %v1947, 17
        %v1951 = vpop.permute.xlu0 %1950
        %1952 = vrot.lane.b32.xlu0 %v1948, 17
        %v1953 = vpop.permute.xlu0 %1952
        %1954 = vrot.lane.b32.xlu0 %v1949, 17
        %v1955 = vpop.permute.xlu0 %1954
        %v1956 = vsel %vm307, %v1951, %v1953
        %v1957 = vsel %vm307, %v1953, %v1955
        %v1960 = vsel %vm296, %v1956, 0.0
        %v1961 = vsel %vm297, %v1957, 0.0
        %v1964 = vrot.slane %v1960, 4
        %v1965 = vrot.slane %v1961, 4
        %1968 = vst [vmem:[#allocation3 + $0x40] sm:$0xf0] %v1964
        %1969 = vst [vmem:[#allocation3 + $0x48] sm:$0xf0] %v1965
        %v1970 = vld [vmem:[#allocation2] sm:$0xf0]
        %v1971 = vld [vmem:[#allocation2 + $0x8] sm:$0xf0]
        %v1972 = vld [vmem:[#allocation2 + $0x10] sm:$0xf0]
        %v1976 = vrot.slane %v1970, 4
        %v1977 = vrot.slane %v1971, 4
        %v1978 = vrot.slane %v1972, 4
        %1979 = vrot.lane.b32.xlu0 %v1976, 16
        %v1980 = vpop.permute.xlu0 %1979
        %1981 = vrot.lane.b32.xlu0 %v1977, 16
        %v1982 = vpop.permute.xlu0 %1981
        %1983 = vrot.lane.b32.xlu0 %v1978, 16
        %v1984 = vpop.permute.xlu0 %1983
        %v1985 = vsel %vm331, %v1980, %v1982
        %v1986 = vsel %vm331, %v1982, %v1984
        %1989 = vst [vmem:[#allocation3 + $0x50] sm:$0xf] %v1985
        %1990 = vst [vmem:[#allocation3 + $0x58] sm:$0xf] %v1986
        %v1991 = vld [vmem:[#allocation2] sm:$0xf0]
        %v1992 = vld [vmem:[#allocation2 + $0x8] sm:$0xf0]
        %v1993 = vld [vmem:[#allocation2 + $0x10] sm:$0xf0]
        %v1997 = vrot.slane %v1991, 4
        %v1998 = vrot.slane %v1992, 4
        %v1999 = vrot.slane %v1993, 4
        %2000 = vrot.lane.b32.xlu0 %v1997, 15
        %v2001 = vpop.permute.xlu0 %2000
        %2002 = vrot.lane.b32.xlu0 %v1998, 15
        %v2003 = vpop.permute.xlu0 %2002
        %2004 = vrot.lane.b32.xlu0 %v1999, 15
        %v2005 = vpop.permute.xlu0 %2004
        %v2006 = vsel %vm354, %v2001, %v2003
        %v2007 = vsel %vm354, %v2003, %v2005
        %v2010 = vsel %vm343, %v2006, 0.0
        %v2011 = vsel %vm344, %v2007, 0.0
        %v2014 = vrot.slane %v2010, 4
        %v2015 = vrot.slane %v2011, 4
        %2018 = vst [vmem:[#allocation3 + $0x50] sm:$0xf0] %v2014
        %2019 = vst [vmem:[#allocation3 + $0x58] sm:$0xf0] %v2015
        %v2020 = vld [vmem:[#allocation2] sm:$0xf0]
        %v2021 = vld [vmem:[#allocation2 + $0x8] sm:$0xf0]
        %v2022 = vld [vmem:[#allocation2 + $0x10] sm:$0xf0]
        %v2026 = vrot.slane %v2020, 4
        %v2027 = vrot.slane %v2021, 4
        %v2028 = vrot.slane %v2022, 4
        %2029 = vrot.lane.b32.xlu0 %v2026, 1
        %v2030 = vpop.permute.xlu0 %2029
        %2031 = vrot.lane.b32.xlu0 %v2027, 1
        %v2032 = vpop.permute.xlu0 %2031
        %2033 = vrot.lane.b32.xlu0 %v2028, 1
        %v2034 = vpop.permute.xlu0 %2033
        %v2035 = vsel %vm375, %v2030, %v2032
        %v2036 = vsel %vm375, %v2032, %v2034
        %v2039 = vsel %vm296, %v2035, 0.0
        %v2040 = vsel %vm297, %v2036, 0.0
        %2041 = vst [vmem:[#allocation3 + $0x60] sm:$0xf] %v2039
        %2042 = vst [vmem:[#allocation3 + $0x68] sm:$0xf] %v2040
        %v2043 = vld [vmem:[#allocation2 + $0x8] sm:$0xf0]
        %v2044 = vld [vmem:[#allocation2 + $0x10] sm:$0xf0]
        %2045 = vst [vmem:[#allocation3 + $0x60] sm:$0xf0] %v2043
        %2046 = vst [vmem:[#allocation3 + $0x68] sm:$0xf0] %v2044
        %v2047 = vld [vmem:[#allocation2 + $0x8] sm:$0xf0]
        %v2048 = vld [vmem:[#allocation2 + $0x10] sm:$0xf0]
        %v2049 = vld [vmem:[#allocation2 + $0x18] sm:$0xf0]
        %v2053 = vrot.slane %v2047, 4
        %v2054 = vrot.slane %v2048, 4
        %v2055 = vrot.slane %v2049, 4
        %2056 = vrot.lane.b32.xlu0 %v2053, 127
        %v2057 = vpop.permute.xlu0 %2056
        %2058 = vrot.lane.b32.xlu0 %v2054, 127
        %v2059 = vpop.permute.xlu0 %2058
        %2060 = vrot.lane.b32.xlu0 %v2055, 127
        %v2061 = vpop.permute.xlu0 %2060
        %v2062 = vsel %vm406, %v2057, %v2059
        %v2063 = vsel %vm406, %v2059, %v2061
        %v2066 = vsel %vm343, %v2062, 0.0
        %v2067 = vsel %vm344, %v2063, 0.0
        %2068 = vst [vmem:[#allocation3 + $0x70] sm:$0xf] %v2066
        %2069 = vst [vmem:[#allocation3 + $0x78] sm:$0xf] %v2067
        %v2070 = vld [vmem:[#allocation2 + $0x8] sm:$0xf0]
        %v2071 = vld [vmem:[#allocation2 + $0x10] sm:$0xf0]
        %v2072 = vld [vmem:[#allocation2 + $0x18] sm:$0xf0]
        %v2076 = vrot.slane %v2070, 4
        %v2077 = vrot.slane %v2071, 4
        %v2078 = vrot.slane %v2072, 4
        %2079 = vrot.lane.b32.xlu0 %v2076, 113
        %v2080 = vpop.permute.xlu0 %2079
        %2081 = vrot.lane.b32.xlu0 %v2077, 113
        %v2082 = vpop.permute.xlu0 %2081
        %2083 = vrot.lane.b32.xlu0 %v2078, 113
        %v2084 = vpop.permute.xlu0 %2083
        %v2085 = vsel %vm433, %v2080, %v2082
        %v2086 = vsel %vm433, %v2082, %v2084
        %v2089 = vsel %vm296, %v2085, 0.0
        %v2090 = vsel %vm297, %v2086, 0.0
        %v2093 = vrot.slane %v2089, 4
        %v2094 = vrot.slane %v2090, 4
        %2097 = vst [vmem:[#allocation3 + $0x70] sm:$0xf0] %v2093
        %2098 = vst [vmem:[#allocation3 + $0x78] sm:$0xf0] %v2094
        %v2099 = vld [vmem:[#allocation2 + $0x8] sm:$0xf0]
        %v2100 = vld [vmem:[#allocation2 + $0x10] sm:$0xf0]
        %v2101 = vld [vmem:[#allocation2 + $0x18] sm:$0xf0]
        %v2105 = vrot.slane %v2099, 4
        %v2106 = vrot.slane %v2100, 4
        %v2107 = vrot.slane %v2101, 4
        %2108 = vrot.lane.b32.xlu0 %v2105, 112
        %v2109 = vpop.permute.xlu0 %2108
        %2110 = vrot.lane.b32.xlu0 %v2106, 112
        %v2111 = vpop.permute.xlu0 %2110
        %2112 = vrot.lane.b32.xlu0 %v2107, 112
        %v2113 = vpop.permute.xlu0 %2112
        %v2114 = vsel %vm457, %v2109, %v2111
        %v2115 = vsel %vm457, %v2111, %v2113
        %2118 = vst [vmem:[#allocation3 + $0x80] sm:$0xf] %v2114
        %2119 = vst [vmem:[#allocation3 + $0x88] sm:$0xf] %v2115
        %v2120 = vld [vmem:[#allocation2 + $0x8] sm:$0xf0]
        %v2121 = vld [vmem:[#allocation2 + $0x10] sm:$0xf0]
        %v2122 = vld [vmem:[#allocation2 + $0x18] sm:$0xf0]
        %v2126 = vrot.slane %v2120, 4
        %v2127 = vrot.slane %v2121, 4
        %v2128 = vrot.slane %v2122, 4
        %2129 = vrot.lane.b32.xlu0 %v2126, 111
        %v2130 = vpop.permute.xlu0 %2129
        %2131 = vrot.lane.b32.xlu0 %v2127, 111
        %v2132 = vpop.permute.xlu0 %2131
        %2133 = vrot.lane.b32.xlu0 %v2128, 111
        %v2134 = vpop.permute.xlu0 %2133
        %v2135 = vsel %vm476, %v2130, %v2132
        %v2136 = vsel %vm476, %v2132, %v2134
        %v2139 = vsel %vm343, %v2135, 0.0
        %v2140 = vsel %vm344, %v2136, 0.0
        %v2143 = vrot.slane %v2139, 4
        %v2144 = vrot.slane %v2140, 4
        %2147 = vst [vmem:[#allocation3 + $0x80] sm:$0xf0] %v2143
        %2148 = vst [vmem:[#allocation3 + $0x88] sm:$0xf0] %v2144
        %s2149 = scalar_lea.vmem [#allocation4], 40
        %v2150 = vld [vmem:[%s2149] sm:$0xff]
        %v2151 = vld [vmem:[#allocation3] sm:$0xff]
        %v2152 = vld [vmem:[#allocation3 + $0x8] sm:$0xff]
        %v2153 = vld [vmem:[#allocation3 + $0x10] sm:$0xff]
        %v2154 = vld [vmem:[#allocation3 + $0x18] sm:$0xff]
        %v2155 = vld [vmem:[#allocation3 + $0x20] sm:$0xff]
        %v2156 = vld [vmem:[#allocation3 + $0x28] sm:$0xff]
        %v2157 = vld [vmem:[#allocation3 + $0x30] sm:$0xff]
        %v2158 = vld [vmem:[#allocation3 + $0x38] sm:$0xff]
        %v2159 = vld [vmem:[#allocation3 + $0x40] sm:$0xff]
        %v2160 = vld [vmem:[#allocation3 + $0x48] sm:$0xff]
        %v2161 = vld [vmem:[#allocation3 + $0x50] sm:$0xff]
        %v2162 = vld [vmem:[#allocation3 + $0x58] sm:$0xff]
        %v2163 = vld [vmem:[#allocation3 + $0x60] sm:$0xff]
        %v2164 = vld [vmem:[#allocation3 + $0x68] sm:$0xff]
        %v2165 = vld [vmem:[#allocation3 + $0x70] sm:$0xff]
        %v2166 = vld [vmem:[#allocation3 + $0x78] sm:$0xff]
        %v2167 = vld [vmem:[#allocation3 + $0x80] sm:$0xff]
        %v2168 = vld [vmem:[#allocation3 + $0x88] sm:$0xff]
        %s2169 = scalar_lea.vmem %s2, 20
        %v2170 = vld [vmem:[%s2169] sm:$0xf]
        %2172 = vset.pattern.permute.xlu0 0
        %2173 = vperm.xlu0 %2172, %v2170
        %v2174 = vpop.permute.xlu0 %2173
        %v2177 = vsel %vm831, %v2150, 0
        %2179 = vmatprep.subr.mxu0 %v2152
        %2180 = vmatpush1.msra.mxu0 %v2151
        %2181 = vmatprep.subr.mxu0 %v2154
        %2182 = vmatpush1.msra.mxu0 %v2153
        %2183 = vmatprep.subr.mxu0 %v2156
        %2184 = vmatpush1.msra.mxu0 %v2155
        %2185 = vmatprep.subr.mxu0 %v2158
        %2186 = vmatpush1.msra.mxu0 %v2157
        %2187 = vmatprep.subr.mxu0 %v2160
        %2188 = vmatpush1.msra.mxu0 %v2159
        %2189 = vmatprep.subr.mxu0 %v2162
        %2190 = vmatpush1.msra.mxu0 %v2161
        %2191 = vmatprep.subr.mxu0 %v2164
        %2192 = vmatpush1.msra.mxu0 %v2163
        %2193 = vmatprep.subr.mxu0 %v2166
        %2194 = vmatpush1.msra.mxu0 %v2165
        %2195 = vmatprep.subr.mxu0 %v2168
        %2196 = vmatpush1.msra.mxu0 %v2167
        %2197 = vmatprep.subr.mxu0 0.0
        %2198 = vmatpush1.msra.mxu0 0.0
        %2199 = vmatprep.subr.mxu0 0.0
        %2200 = vmatpush1.msra.mxu0 0.0
        %2201 = vmatprep.subr.mxu0 0.0
        %2202 = vmatpush1.msra.mxu0 0.0
        %2203 = vmatprep.subr.mxu0 0.0
        %2204 = vmatpush1.msra.mxu0 0.0
        %2205 = vmatprep.subr.mxu0 0.0
        %2206 = vmatpush1.msra.mxu0 0.0
        %2207 = vmatprep.subr.mxu0 0.0
        %2208 = vmatpush1.msra.mxu0 0.0
        %2209 = vmatprep.subr.mxu0 0.0
        %2210 = vmatpush1.msra.mxu0 0.0
        %2211 = vmatprep.subr.mxu0 0.0
        %2212 = vmatpush1.msra.mxu0 0.0
        %2213 = vmatprep.subr.mxu0 0.0
        %2214 = vmatpush1.msra.mxu0 0.0
        %2215 = vmatprep.subr.mxu0 0.0
        %2216 = vmatpush1.msra.mxu0 0.0
        %2217 = vmatprep.subr.mxu0 0.0
        %2218 = vmatpush1.msra.mxu0 0.0
        %2219 = vmatprep.subr.mxu0 0.0
        %2220 = vmatpush1.msra.mxu0 0.0
        %2221 = vmatprep.subr.mxu0 0.0
        %2222 = vmatpush1.msra.mxu0 0.0
        %2223 = vmatprep.subr.mxu0 0.0
        %2224 = vmatpush1.msra.mxu0 0.0
        %2225 = vmatprep.subr.mxu0 0.0
        %2226 = vmatpush1.msra.mxu0 0.0
        %2227 = vmatprep.subr.mxu0 0.0
        %2228 = vmatpush1.msra.mxu0 0.0
        %2229 = vmatprep.subr.mxu0 0.0
        %2230 = vmatpush1.msra.mxu0 0.0
        %2231 = vmatprep.subr.mxu0 0.0
        %2232 = vmatpush1.msra.mxu0 0.0
        %2233 = vmatprep.subr.mxu0 0.0
        %2234 = vmatpush1.msra.mxu0 0.0
        %2235 = vmatprep.subr.mxu0 0.0
        %2236 = vmatpush1.msra.mxu0 0.0
        %2237 = vmatprep.subr.mxu0 0.0
        %2238 = vmatpush1.msra.mxu0 0.0
        %2239 = vmatprep.subr.mxu0 0.0
        %2240 = vmatpush1.msra.mxu0 0.0
        %2241 = vmatprep.subr.mxu0 0.0
        %2242 = vmatpush1.msra.mxu0 0.0
        %2243 = vmatprep.mubr.f32.mxu0 0.0
        %2244 = vmatmul.mubr.f32.gmra.mrb[0].mxu0 %v2177
        %v2245 = vpop.f32.mrb[0].mxu0
        %v2246 = vadd.f32 %v2174, %v2245
        %v2247 = vpop.f32.mrb[0].mxu0
        %v2248 = vadd.f32 %v2174, %v2247
        %2249 = vdwg.mxu0
        %v2250 = vmul.f32 %v2246, 0.2
        %v2251 = vmul.f32 %v2248, 0.2
        %v2252 = vmax.f32 %v2246, %v2250
        %v2253 = vmax.f32 %v2248, %v2251
        %2254 = vst [vmem:[#allocation2 + $0x28] sm:$0xf] %v2252
        %2255 = vst [vmem:[#allocation2 + $0x30] sm:$0xf] %v2253
        %v2256 = vld [vmem:[#allocation2 + $0x20] sm:$0xf]
        %v2257 = vld [vmem:[#allocation2 + $0x28] sm:$0xf]
        %v2258 = vld [vmem:[#allocation2 + $0x30] sm:$0xf]
        %2262 = vrot.lane.b32.xlu0 %v2256, 17
        %v2263 = vpop.permute.xlu0 %2262
        %2264 = vrot.lane.b32.xlu0 %v2257, 17
        %v2265 = vpop.permute.xlu0 %2264
        %2266 = vrot.lane.b32.xlu0 %v2258, 17
        %v2267 = vpop.permute.xlu0 %2266
        %v2268 = vsel %vm307, %v2263, %v2265
        %v2269 = vsel %vm307, %v2265, %v2267
        %v2272 = vsel %vm296, %v2268, 0.0
        %v2273 = vsel %vm297, %v2269, 0.0
        %2274 = vst [vmem:[#allocation3 + $0x90] sm:$0xf] %v2272
        %2275 = vst [vmem:[#allocation3 + $0x98] sm:$0xf] %v2273
        %v2276 = vld [vmem:[#allocation2 + $0x20] sm:$0xf]
        %v2277 = vld [vmem:[#allocation2 + $0x28] sm:$0xf]
        %v2278 = vld [vmem:[#allocation2 + $0x30] sm:$0xf]
        %v2282 = vrot.slane %v2276, 4
        %v2283 = vrot.slane %v2277, 4
        %v2284 = vrot.slane %v2278, 4
        %2285 = vrot.lane.b32.xlu0 %v2282, 16
        %v2286 = vpop.permute.xlu0 %2285
        %2287 = vrot.lane.b32.xlu0 %v2283, 16
        %v2288 = vpop.permute.xlu0 %2287
        %2289 = vrot.lane.b32.xlu0 %v2284, 16
        %v2290 = vpop.permute.xlu0 %2289
        %v2291 = vsel %vm331, %v2286, %v2288
        %v2292 = vsel %vm331, %v2288, %v2290
        %2295 = vst [vmem:[#allocation3 + $0x90] sm:$0xf0] %v2291
        %2296 = vst [vmem:[#allocation3 + $0x98] sm:$0xf0] %v2292
        %v2297 = vld [vmem:[#allocation2 + $0x20] sm:$0xf]
        %v2298 = vld [vmem:[#allocation2 + $0x28] sm:$0xf]
        %v2299 = vld [vmem:[#allocation2 + $0x30] sm:$0xf]
        %2303 = vrot.lane.b32.xlu0 %v2297, 15
        %v2304 = vpop.permute.xlu0 %2303
        %2305 = vrot.lane.b32.xlu0 %v2298, 15
        %v2306 = vpop.permute.xlu0 %2305
        %2307 = vrot.lane.b32.xlu0 %v2299, 15
        %v2308 = vpop.permute.xlu0 %2307
        %v2309 = vsel %vm354, %v2304, %v2306
        %v2310 = vsel %vm354, %v2306, %v2308
        %v2313 = vsel %vm343, %v2309, 0.0
        %v2314 = vsel %vm344, %v2310, 0.0
        %2315 = vst [vmem:[#allocation3 + $0xa0] sm:$0xf] %v2313
        %2316 = vst [vmem:[#allocation3 + $0xa8] sm:$0xf] %v2314
        %v2317 = vld [vmem:[#allocation2 + $0x20] sm:$0xf]
        %v2318 = vld [vmem:[#allocation2 + $0x28] sm:$0xf]
        %v2319 = vld [vmem:[#allocation2 + $0x30] sm:$0xf]
        %2323 = vrot.lane.b32.xlu0 %v2317, 1
        %v2324 = vpop.permute.xlu0 %2323
        %2325 = vrot.lane.b32.xlu0 %v2318, 1
        %v2326 = vpop.permute.xlu0 %2325
        %2327 = vrot.lane.b32.xlu0 %v2319, 1
        %v2328 = vpop.permute.xlu0 %2327
        %v2329 = vsel %vm375, %v2324, %v2326
        %v2330 = vsel %vm375, %v2326, %v2328
        %v2333 = vsel %vm296, %v2329, 0.0
        %v2334 = vsel %vm297, %v2330, 0.0
        %v2337 = vrot.slane %v2333, 4
        %v2338 = vrot.slane %v2334, 4
        %2341 = vst [vmem:[#allocation3 + $0xa0] sm:$0xf0] %v2337
        %2342 = vst [vmem:[#allocation3 + $0xa8] sm:$0xf0] %v2338
        %v2343 = vld [vmem:[#allocation2 + $0x28] sm:$0xf]
        %v2344 = vld [vmem:[#allocation2 + $0x30] sm:$0xf]
        %2345 = vst [vmem:[#allocation3 + $0xb0] sm:$0xf] %v2343
        %2346 = vst [vmem:[#allocation3 + $0xb8] sm:$0xf] %v2344
        %v2347 = vld [vmem:[#allocation2 + $0x28] sm:$0xf]
        %v2348 = vld [vmem:[#allocation2 + $0x30] sm:$0xf]
        %v2349 = vld [vmem:[#allocation2 + $0x38] sm:$0xf]
        %2353 = vrot.lane.b32.xlu0 %v2347, 127
        %v2354 = vpop.permute.xlu0 %2353
        %2355 = vrot.lane.b32.xlu0 %v2348, 127
        %v2356 = vpop.permute.xlu0 %2355
        %2357 = vrot.lane.b32.xlu0 %v2349, 127
        %v2358 = vpop.permute.xlu0 %2357
        %v2359 = vsel %vm406, %v2354, %v2356
        %v2360 = vsel %vm406, %v2356, %v2358
        %v2363 = vsel %vm343, %v2359, 0.0
        %v2364 = vsel %vm344, %v2360, 0.0
        %v2367 = vrot.slane %v2363, 4
        %v2368 = vrot.slane %v2364, 4
        %2371 = vst [vmem:[#allocation3 + $0xb0] sm:$0xf0] %v2367
        %2372 = vst [vmem:[#allocation3 + $0xb8] sm:$0xf0] %v2368
        %v2373 = vld [vmem:[#allocation2 + $0x28] sm:$0xf]
        %v2374 = vld [vmem:[#allocation2 + $0x30] sm:$0xf]
        %v2375 = vld [vmem:[#allocation2 + $0x38] sm:$0xf]
        %2379 = vrot.lane.b32.xlu0 %v2373, 113
        %v2380 = vpop.permute.xlu0 %2379
        %2381 = vrot.lane.b32.xlu0 %v2374, 113
        %v2382 = vpop.permute.xlu0 %2381
        %2383 = vrot.lane.b32.xlu0 %v2375, 113
        %v2384 = vpop.permute.xlu0 %2383
        %v2385 = vsel %vm433, %v2380, %v2382
        %v2386 = vsel %vm433, %v2382, %v2384
        %v2389 = vsel %vm296, %v2385, 0.0
        %v2390 = vsel %vm297, %v2386, 0.0
        %2391 = vst [vmem:[#allocation3 + $0xc0] sm:$0xf] %v2389
        %2392 = vst [vmem:[#allocation3 + $0xc8] sm:$0xf] %v2390
        %v2393 = vld [vmem:[#allocation2 + $0x28] sm:$0xf]
        %v2394 = vld [vmem:[#allocation2 + $0x30] sm:$0xf]
        %v2395 = vld [vmem:[#allocation2 + $0x38] sm:$0xf]
        %v2399 = vrot.slane %v2393, 4
        %v2400 = vrot.slane %v2394, 4
        %v2401 = vrot.slane %v2395, 4
        %2402 = vrot.lane.b32.xlu0 %v2399, 112
        %v2403 = vpop.permute.xlu0 %2402
        %2404 = vrot.lane.b32.xlu0 %v2400, 112
        %v2405 = vpop.permute.xlu0 %2404
        %2406 = vrot.lane.b32.xlu0 %v2401, 112
        %v2407 = vpop.permute.xlu0 %2406
        %v2408 = vsel %vm457, %v2403, %v2405
        %v2409 = vsel %vm457, %v2405, %v2407
        %2412 = vst [vmem:[#allocation3 + $0xc0] sm:$0xf0] %v2408
        %2413 = vst [vmem:[#allocation3 + $0xc8] sm:$0xf0] %v2409
        %v2414 = vld [vmem:[#allocation2 + $0x28] sm:$0xf]
        %v2415 = vld [vmem:[#allocation2 + $0x30] sm:$0xf]
        %v2416 = vld [vmem:[#allocation2 + $0x38] sm:$0xf]
        %2420 = vrot.lane.b32.xlu0 %v2414, 111
        %v2421 = vpop.permute.xlu0 %2420
        %2422 = vrot.lane.b32.xlu0 %v2415, 111
        %v2423 = vpop.permute.xlu0 %2422
        %2424 = vrot.lane.b32.xlu0 %v2416, 111
        %v2425 = vpop.permute.xlu0 %2424
        %v2426 = vsel %vm476, %v2421, %v2423
        %v2427 = vsel %vm476, %v2423, %v2425
        %v2430 = vsel %vm343, %v2426, 0.0
        %v2431 = vsel %vm344, %v2427, 0.0
        %2432 = vst [vmem:[#allocation3 + $0xd0] sm:$0xf] %v2430
        %2433 = vst [vmem:[#allocation3 + $0xd8] sm:$0xf] %v2431
        %s2434 = scalar_lea.vmem [#allocation4], 48
        %v2435 = vld [vmem:[%s2434] sm:$0xff]
        %v2436 = vld [vmem:[#allocation3] sm:$0xff]
        %v2437 = vld [vmem:[#allocation3 + $0x8] sm:$0xff]
        %v2438 = vld [vmem:[#allocation3 + $0x10] sm:$0xff]
        %v2439 = vld [vmem:[#allocation3 + $0x18] sm:$0xff]
        %v2440 = vld [vmem:[#allocation3 + $0x20] sm:$0xff]
        %v2441 = vld [vmem:[#allocation3 + $0x28] sm:$0xff]
        %v2442 = vld [vmem:[#allocation3 + $0x30] sm:$0xff]
        %v2443 = vld [vmem:[#allocation3 + $0x38] sm:$0xff]
        %v2444 = vld [vmem:[#allocation3 + $0x40] sm:$0xff]
        %v2445 = vld [vmem:[#allocation3 + $0x48] sm:$0xff]
        %v2446 = vld [vmem:[#allocation3 + $0x50] sm:$0xff]
        %v2447 = vld [vmem:[#allocation3 + $0x58] sm:$0xff]
        %v2448 = vld [vmem:[#allocation3 + $0x60] sm:$0xff]
        %v2449 = vld [vmem:[#allocation3 + $0x68] sm:$0xff]
        %v2450 = vld [vmem:[#allocation3 + $0x70] sm:$0xff]
        %v2451 = vld [vmem:[#allocation3 + $0x78] sm:$0xff]
        %v2452 = vld [vmem:[#allocation3 + $0x80] sm:$0xff]
        %v2453 = vld [vmem:[#allocation3 + $0x88] sm:$0xff]
        %v2454 = vld [vmem:[#allocation3 + $0x90] sm:$0xff]
        %v2455 = vld [vmem:[#allocation3 + $0x98] sm:$0xff]
        %v2456 = vld [vmem:[#allocation3 + $0xa0] sm:$0xff]
        %v2457 = vld [vmem:[#allocation3 + $0xa8] sm:$0xff]
        %v2458 = vld [vmem:[#allocation3 + $0xb0] sm:$0xff]
        %v2459 = vld [vmem:[#allocation3 + $0xb8] sm:$0xff]
        %v2460 = vld [vmem:[#allocation3 + $0xc0] sm:$0xff]
        %v2461 = vld [vmem:[#allocation3 + $0xc8] sm:$0xff]
        %v2462 = vld [vmem:[#allocation3 + $0xd0] sm:$0xf]
        %v2463 = vld [vmem:[#allocation3 + $0xd8] sm:$0xf]
        %s2464 = scalar_lea.vmem %s2, 24
        %v2465 = vld [vmem:[%s2464] sm:$0xf]
        %2467 = vset.pattern.permute.xlu0 0
        %2468 = vperm.xlu0 %2467, %v2465
        %v2469 = vpop.permute.xlu0 %2468
        %v2472 = vsel %vm1127, %v2435, 0
        %v2475 = vsel %vm506, %v2462, 0
        %v2478 = vsel %vm506, %v2463, 0
        %2480 = vmatprep.subr.mxu0 %v2437
        %2481 = vmatpush1.msra.mxu0 %v2436
        %2482 = vmatprep.subr.mxu0 %v2439
        %2483 = vmatpush1.msra.mxu0 %v2438
        %2484 = vmatprep.subr.mxu0 %v2441
        %2485 = vmatpush1.msra.mxu0 %v2440
        %2486 = vmatprep.subr.mxu0 %v2443
        %2487 = vmatpush1.msra.mxu0 %v2442
        %2488 = vmatprep.subr.mxu0 %v2445
        %2489 = vmatpush1.msra.mxu0 %v2444
        %2490 = vmatprep.subr.mxu0 %v2447
        %2491 = vmatpush1.msra.mxu0 %v2446
        %2492 = vmatprep.subr.mxu0 %v2449
        %2493 = vmatpush1.msra.mxu0 %v2448
        %2494 = vmatprep.subr.mxu0 %v2451
        %2495 = vmatpush1.msra.mxu0 %v2450
        %2496 = vmatprep.subr.mxu0 %v2453
        %2497 = vmatpush1.msra.mxu0 %v2452
        %2498 = vmatprep.subr.mxu0 %v2455
        %2499 = vmatpush1.msra.mxu0 %v2454
        %2500 = vmatprep.subr.mxu0 %v2457
        %2501 = vmatpush1.msra.mxu0 %v2456
        %2502 = vmatprep.subr.mxu0 %v2459
        %2503 = vmatpush1.msra.mxu0 %v2458
        %2504 = vmatprep.subr.mxu0 %v2461
        %2505 = vmatpush1.msra.mxu0 %v2460
        %2506 = vmatprep.subr.mxu0 %v2478
        %2507 = vmatpush1.msra.mxu0 %v2475
        %2508 = vmatprep.subr.mxu0 0.0
        %2509 = vmatpush1.msra.mxu0 0.0
        %2510 = vmatprep.subr.mxu0 0.0
        %2511 = vmatpush1.msra.mxu0 0.0
        %2512 = vmatprep.subr.mxu0 0.0
        %2513 = vmatpush1.msra.mxu0 0.0
        %2514 = vmatprep.subr.mxu0 0.0
        %2515 = vmatpush1.msra.mxu0 0.0
        %2516 = vmatprep.subr.mxu0 0.0
        %2517 = vmatpush1.msra.mxu0 0.0
        %2518 = vmatprep.subr.mxu0 0.0
        %2519 = vmatpush1.msra.mxu0 0.0
        %2520 = vmatprep.subr.mxu0 0.0
        %2521 = vmatpush1.msra.mxu0 0.0
        %2522 = vmatprep.subr.mxu0 0.0
        %2523 = vmatpush1.msra.mxu0 0.0
        %2524 = vmatprep.subr.mxu0 0.0
        %2525 = vmatpush1.msra.mxu0 0.0
        %2526 = vmatprep.subr.mxu0 0.0
        %2527 = vmatpush1.msra.mxu0 0.0
        %2528 = vmatprep.subr.mxu0 0.0
        %2529 = vmatpush1.msra.mxu0 0.0
        %2530 = vmatprep.subr.mxu0 0.0
        %2531 = vmatpush1.msra.mxu0 0.0
        %2532 = vmatprep.subr.mxu0 0.0
        %2533 = vmatpush1.msra.mxu0 0.0
        %2534 = vmatprep.subr.mxu0 0.0
        %2535 = vmatpush1.msra.mxu0 0.0
        %2536 = vmatprep.subr.mxu0 0.0
        %2537 = vmatpush1.msra.mxu0 0.0
        %2538 = vmatprep.subr.mxu0 0.0
        %2539 = vmatpush1.msra.mxu0 0.0
        %2540 = vmatprep.subr.mxu0 0.0
        %2541 = vmatpush1.msra.mxu0 0.0
        %2542 = vmatprep.subr.mxu0 0.0
        %2543 = vmatpush1.msra.mxu0 0.0
        %2544 = vmatprep.mubr.f32.mxu0 0.0
        %2545 = vmatmul.mubr.f32.gmra.mrb[0].mxu0 %v2472
        %v2546 = vpop.f32.mrb[0].mxu0
        %v2547 = vadd.f32 %v2469, %v2546
        %v2548 = vpop.f32.mrb[0].mxu0
        %v2549 = vadd.f32 %v2469, %v2548
        %2550 = vdwg.mxu0
        %v2551 = vmul.f32 %v2547, 0.2
        %v2552 = vmul.f32 %v2549, 0.2
        %v2553 = vmax.f32 %v2547, %v2551
        %v2554 = vmax.f32 %v2549, %v2552
        %v2557 = vrot.slane %v2553, 4
        %v2558 = vrot.slane %v2554, 4
        %2561 = vst [vmem:[#allocation2 + $0x28] sm:$0xf0] %v2557
        %2562 = vst [vmem:[#allocation2 + $0x30] sm:$0xf0] %v2558
        %v2563 = vld [vmem:[#allocation2 + $0x20] sm:$0xf0]
        %v2564 = vld [vmem:[#allocation2 + $0x28] sm:$0xf0]
        %v2565 = vld [vmem:[#allocation2 + $0x30] sm:$0xf0]
        %v2569 = vrot.slane %v2563, 4
        %v2570 = vrot.slane %v2564, 4
        %v2571 = vrot.slane %v2565, 4
        %2572 = vrot.lane.b32.xlu0 %v2569, 17
        %v2573 = vpop.permute.xlu0 %2572
        %2574 = vrot.lane.b32.xlu0 %v2570, 17
        %v2575 = vpop.permute.xlu0 %2574
        %2576 = vrot.lane.b32.xlu0 %v2571, 17
        %v2577 = vpop.permute.xlu0 %2576
        %v2578 = vsel %vm307, %v2573, %v2575
        %v2579 = vsel %vm307, %v2575, %v2577
        %v2582 = vsel %vm296, %v2578, 0.0
        %v2583 = vsel %vm297, %v2579, 0.0
        %v2586 = vrot.slane %v2582, 4
        %v2587 = vrot.slane %v2583, 4
        %2590 = vst [vmem:[#allocation3 + $0xd0] sm:$0xf0] %v2586
        %2591 = vst [vmem:[#allocation3 + $0xd8] sm:$0xf0] %v2587
        %v2592 = vld [vmem:[#allocation2 + $0x20] sm:$0xf0]
        %v2593 = vld [vmem:[#allocation2 + $0x28] sm:$0xf0]
        %v2594 = vld [vmem:[#allocation2 + $0x30] sm:$0xf0]
        %v2598 = vrot.slane %v2592, 4
        %v2599 = vrot.slane %v2593, 4
        %v2600 = vrot.slane %v2594, 4
        %2601 = vrot.lane.b32.xlu0 %v2598, 16
        %v2602 = vpop.permute.xlu0 %2601
        %2603 = vrot.lane.b32.xlu0 %v2599, 16
        %v2604 = vpop.permute.xlu0 %2603
        %2605 = vrot.lane.b32.xlu0 %v2600, 16
        %v2606 = vpop.permute.xlu0 %2605
        %v2607 = vsel %vm331, %v2602, %v2604
        %v2608 = vsel %vm331, %v2604, %v2606
        %2611 = vst [vmem:[#allocation3 + $0xe0] sm:$0xf] %v2607
        %2612 = vst [vmem:[#allocation3 + $0xe8] sm:$0xf] %v2608
        %v2613 = vld [vmem:[#allocation2 + $0x20] sm:$0xf0]
        %v2614 = vld [vmem:[#allocation2 + $0x28] sm:$0xf0]
        %v2615 = vld [vmem:[#allocation2 + $0x30] sm:$0xf0]
        %v2619 = vrot.slane %v2613, 4
        %v2620 = vrot.slane %v2614, 4
        %v2621 = vrot.slane %v2615, 4
        %2622 = vrot.lane.b32.xlu0 %v2619, 15
        %v2623 = vpop.permute.xlu0 %2622
        %2624 = vrot.lane.b32.xlu0 %v2620, 15
        %v2625 = vpop.permute.xlu0 %2624
        %2626 = vrot.lane.b32.xlu0 %v2621, 15
        %v2627 = vpop.permute.xlu0 %2626
        %v2628 = vsel %vm354, %v2623, %v2625
        %v2629 = vsel %vm354, %v2625, %v2627
        %v2632 = vsel %vm343, %v2628, 0.0
        %v2633 = vsel %vm344, %v2629, 0.0
        %v2636 = vrot.slane %v2632, 4
        %v2637 = vrot.slane %v2633, 4
        %2640 = vst [vmem:[#allocation3 + $0xe0] sm:$0xf0] %v2636
        %2641 = vst [vmem:[#allocation3 + $0xe8] sm:$0xf0] %v2637
        %v2642 = vld [vmem:[#allocation2 + $0x20] sm:$0xf0]
        %v2643 = vld [vmem:[#allocation2 + $0x28] sm:$0xf0]
        %v2644 = vld [vmem:[#allocation2 + $0x30] sm:$0xf0]
        %v2648 = vrot.slane %v2642, 4
        %v2649 = vrot.slane %v2643, 4
        %v2650 = vrot.slane %v2644, 4
        %2651 = vrot.lane.b32.xlu0 %v2648, 1
        %v2652 = vpop.permute.xlu0 %2651
        %2653 = vrot.lane.b32.xlu0 %v2649, 1
        %v2654 = vpop.permute.xlu0 %2653
        %2655 = vrot.lane.b32.xlu0 %v2650, 1
        %v2656 = vpop.permute.xlu0 %2655
        %v2657 = vsel %vm375, %v2652, %v2654
        %v2658 = vsel %vm375, %v2654, %v2656
        %v2661 = vsel %vm296, %v2657, 0.0
        %v2662 = vsel %vm297, %v2658, 0.0
        %2663 = vst [vmem:[#allocation3 + $0xf0] sm:$0xf] %v2661
        %2664 = vst [vmem:[#allocation3 + $0xf8] sm:$0xf] %v2662
        %v2665 = vld [vmem:[#allocation2 + $0x28] sm:$0xf0]
        %v2666 = vld [vmem:[#allocation2 + $0x30] sm:$0xf0]
        %2667 = vst [vmem:[#allocation3 + $0xf0] sm:$0xf0] %v2665
        %2668 = vst [vmem:[#allocation3 + $0xf8] sm:$0xf0] %v2666
        %v2669 = vld [vmem:[#allocation2 + $0x28] sm:$0xf0]
        %v2670 = vld [vmem:[#allocation2 + $0x30] sm:$0xf0]
        %v2671 = vld [vmem:[#allocation2 + $0x38] sm:$0xf0]
        %v2675 = vrot.slane %v2669, 4
        %v2676 = vrot.slane %v2670, 4
        %v2677 = vrot.slane %v2671, 4
        %2678 = vrot.lane.b32.xlu0 %v2675, 127
        %v2679 = vpop.permute.xlu0 %2678
        %2680 = vrot.lane.b32.xlu0 %v2676, 127
        %v2681 = vpop.permute.xlu0 %2680
        %2682 = vrot.lane.b32.xlu0 %v2677, 127
        %v2683 = vpop.permute.xlu0 %2682
        %v2684 = vsel %vm406, %v2679, %v2681
        %v2685 = vsel %vm406, %v2681, %v2683
        %v2688 = vsel %vm343, %v2684, 0.0
        %v2689 = vsel %vm344, %v2685, 0.0
        %2690 = vst [vmem:[#allocation3 + $0x100] sm:$0xf] %v2688
        %2691 = vst [vmem:[#allocation3 + $0x108] sm:$0xf] %v2689
        %v2692 = vld [vmem:[#allocation2 + $0x28] sm:$0xf0]
        %v2693 = vld [vmem:[#allocation2 + $0x30] sm:$0xf0]
        %v2694 = vld [vmem:[#allocation2 + $0x38] sm:$0xf0]
        %v2698 = vrot.slane %v2692, 4
        %v2699 = vrot.slane %v2693, 4
        %v2700 = vrot.slane %v2694, 4
        %2701 = vrot.lane.b32.xlu0 %v2698, 113
        %v2702 = vpop.permute.xlu0 %2701
        %2703 = vrot.lane.b32.xlu0 %v2699, 113
        %v2704 = vpop.permute.xlu0 %2703
        %2705 = vrot.lane.b32.xlu0 %v2700, 113
        %v2706 = vpop.permute.xlu0 %2705
        %v2707 = vsel %vm433, %v2702, %v2704
        %v2708 = vsel %vm433, %v2704, %v2706
        %v2711 = vsel %vm296, %v2707, 0.0
        %v2712 = vsel %vm297, %v2708, 0.0
        %v2715 = vrot.slane %v2711, 4
        %v2716 = vrot.slane %v2712, 4
        %2719 = vst [vmem:[#allocation3 + $0x100] sm:$0xf0] %v2715
        %2720 = vst [vmem:[#allocation3 + $0x108] sm:$0xf0] %v2716
        %v2721 = vld [vmem:[#allocation2 + $0x28] sm:$0xf0]
        %v2722 = vld [vmem:[#allocation2 + $0x30] sm:$0xf0]
        %v2723 = vld [vmem:[#allocation2 + $0x38] sm:$0xf0]
        %v2727 = vrot.slane %v2721, 4
        %v2728 = vrot.slane %v2722, 4
        %v2729 = vrot.slane %v2723, 4
        %2730 = vrot.lane.b32.xlu0 %v2727, 112
        %v2731 = vpop.permute.xlu0 %2730
        %2732 = vrot.lane.b32.xlu0 %v2728, 112
        %v2733 = vpop.permute.xlu0 %2732
        %2734 = vrot.lane.b32.xlu0 %v2729, 112
        %v2735 = vpop.permute.xlu0 %2734
        %v2736 = vsel %vm457, %v2731, %v2733
        %v2737 = vsel %vm457, %v2733, %v2735
        %2740 = vst [vmem:[#allocation3 + $0x110] sm:$0xf] %v2736
        %2741 = vst [vmem:[#allocation3 + $0x118] sm:$0xf] %v2737
        %v2742 = vld [vmem:[#allocation2 + $0x28] sm:$0xf0]
        %v2743 = vld [vmem:[#allocation2 + $0x30] sm:$0xf0]
        %v2744 = vld [vmem:[#allocation2 + $0x38] sm:$0xf0]
        %v2748 = vrot.slane %v2742, 4
        %v2749 = vrot.slane %v2743, 4
        %v2750 = vrot.slane %v2744, 4
        %2751 = vrot.lane.b32.xlu0 %v2748, 111
        %v2752 = vpop.permute.xlu0 %2751
        %2753 = vrot.lane.b32.xlu0 %v2749, 111
        %v2754 = vpop.permute.xlu0 %2753
        %2755 = vrot.lane.b32.xlu0 %v2750, 111
        %v2756 = vpop.permute.xlu0 %2755
        %v2757 = vsel %vm476, %v2752, %v2754
        %v2758 = vsel %vm476, %v2754, %v2756
        %v2761 = vsel %vm343, %v2757, 0.0
        %v2762 = vsel %vm344, %v2758, 0.0
        %v2765 = vrot.slane %v2761, 4
        %v2766 = vrot.slane %v2762, 4
        %2769 = vst [vmem:[#allocation3 + $0x110] sm:$0xf0] %v2765
        %2770 = vst [vmem:[#allocation3 + $0x118] sm:$0xf0] %v2766
        %s2771 = scalar_lea.vmem [#allocation4], 56
        %v2772 = vld [vmem:[%s2771] sm:$0xff]
        %v2773 = vld [vmem:[#allocation3] sm:$0xff]
        %v2774 = vld [vmem:[#allocation3 + $0x8] sm:$0xff]
        %v2775 = vld [vmem:[#allocation3 + $0x10] sm:$0xff]
        %v2776 = vld [vmem:[#allocation3 + $0x18] sm:$0xff]
        %v2777 = vld [vmem:[#allocation3 + $0x20] sm:$0xff]
        %v2778 = vld [vmem:[#allocation3 + $0x28] sm:$0xff]
        %v2779 = vld [vmem:[#allocation3 + $0x30] sm:$0xff]
        %v2780 = vld [vmem:[#allocation3 + $0x38] sm:$0xff]
        %v2781 = vld [vmem:[#allocation3 + $0x40] sm:$0xff]
        %v2782 = vld [vmem:[#allocation3 + $0x48] sm:$0xff]
        %v2783 = vld [vmem:[#allocation3 + $0x50] sm:$0xff]
        %v2784 = vld [vmem:[#allocation3 + $0x58] sm:$0xff]
        %v2785 = vld [vmem:[#allocation3 + $0x60] sm:$0xff]
        %v2786 = vld [vmem:[#allocation3 + $0x68] sm:$0xff]
        %v2787 = vld [vmem:[#allocation3 + $0x70] sm:$0xff]
        %v2788 = vld [vmem:[#allocation3 + $0x78] sm:$0xff]
        %v2789 = vld [vmem:[#allocation3 + $0x80] sm:$0xff]
        %v2790 = vld [vmem:[#allocation3 + $0x88] sm:$0xff]
        %v2791 = vld [vmem:[#allocation3 + $0x90] sm:$0xff]
        %v2792 = vld [vmem:[#allocation3 + $0x98] sm:$0xff]
        %v2793 = vld [vmem:[#allocation3 + $0xa0] sm:$0xff]
        %v2794 = vld [vmem:[#allocation3 + $0xa8] sm:$0xff]
        %v2795 = vld [vmem:[#allocation3 + $0xb0] sm:$0xff]
        %v2796 = vld [vmem:[#allocation3 + $0xb8] sm:$0xff]
        %v2797 = vld [vmem:[#allocation3 + $0xc0] sm:$0xff]
        %v2798 = vld [vmem:[#allocation3 + $0xc8] sm:$0xff]
        %v2799 = vld [vmem:[#allocation3 + $0xd0] sm:$0xff]
        %v2800 = vld [vmem:[#allocation3 + $0xd8] sm:$0xff]
        %v2801 = vld [vmem:[#allocation3 + $0xe0] sm:$0xff]
        %v2802 = vld [vmem:[#allocation3 + $0xe8] sm:$0xff]
        %v2803 = vld [vmem:[#allocation3 + $0xf0] sm:$0xff]
        %v2804 = vld [vmem:[#allocation3 + $0xf8] sm:$0xff]
        %v2805 = vld [vmem:[#allocation3 + $0x100] sm:$0xff]
        %v2806 = vld [vmem:[#allocation3 + $0x108] sm:$0xff]
        %v2807 = vld [vmem:[#allocation3 + $0x110] sm:$0xff]
        %v2808 = vld [vmem:[#allocation3 + $0x118] sm:$0xff]
        %s2809 = scalar_lea.vmem %s2, 28
        %v2810 = vld [vmem:[%s2809] sm:$0xf]
        %2812 = vset.pattern.permute.xlu0 0
        %2813 = vperm.xlu0 %2812, %v2810
        %v2814 = vpop.permute.xlu0 %2813
        %v2817 = vcombine.high %v2772, %v2772
        %v2818 = vsel %vm331, %v2817, 0
        %2820 = vmatprep.subr.mxu0 %v2774
        %2821 = vmatpush1.msra.mxu0 %v2773
        %2822 = vmatprep.subr.mxu0 %v2776
        %2823 = vmatpush1.msra.mxu0 %v2775
        %2824 = vmatprep.subr.mxu0 %v2778
        %2825 = vmatpush1.msra.mxu0 %v2777
        %2826 = vmatprep.subr.mxu0 %v2780
        %2827 = vmatpush1.msra.mxu0 %v2779
        %2828 = vmatprep.subr.mxu0 %v2782
        %2829 = vmatpush1.msra.mxu0 %v2781
        %2830 = vmatprep.subr.mxu0 %v2784
        %2831 = vmatpush1.msra.mxu0 %v2783
        %2832 = vmatprep.subr.mxu0 %v2786
        %2833 = vmatpush1.msra.mxu0 %v2785
        %2834 = vmatprep.subr.mxu0 %v2788
        %2835 = vmatpush1.msra.mxu0 %v2787
        %2836 = vmatprep.subr.mxu0 %v2790
        %2837 = vmatpush1.msra.mxu0 %v2789
        %2838 = vmatprep.subr.mxu0 %v2792
        %2839 = vmatpush1.msra.mxu0 %v2791
        %2840 = vmatprep.subr.mxu0 %v2794
        %2841 = vmatpush1.msra.mxu0 %v2793
        %2842 = vmatprep.subr.mxu0 %v2796
        %2843 = vmatpush1.msra.mxu0 %v2795
        %2844 = vmatprep.subr.mxu0 %v2798
        %2845 = vmatpush1.msra.mxu0 %v2797
        %2846 = vmatprep.subr.mxu0 %v2800
        %2847 = vmatpush1.msra.mxu0 %v2799
        %2848 = vmatprep.subr.mxu0 %v2802
        %2849 = vmatpush1.msra.mxu0 %v2801
        %2850 = vmatprep.subr.mxu0 %v2804
        %2851 = vmatpush1.msra.mxu0 %v2803
        %2852 = vmatprep.subr.mxu0 %v2806
        %2853 = vmatpush1.msra.mxu0 %v2805
        %2854 = vmatprep.subr.mxu0 %v2808
        %2855 = vmatpush1.msra.mxu0 %v2807
        %2856 = vmatprep.subr.mxu0 0.0
        %2857 = vmatpush1.msra.mxu0 0.0
        %2858 = vmatprep.subr.mxu0 0.0
        %2859 = vmatpush1.msra.mxu0 0.0
        %2860 = vmatprep.subr.mxu0 0.0
        %2861 = vmatpush1.msra.mxu0 0.0
        %2862 = vmatprep.subr.mxu0 0.0
        %2863 = vmatpush1.msra.mxu0 0.0
        %2864 = vmatprep.subr.mxu0 0.0
        %2865 = vmatpush1.msra.mxu0 0.0
        %2866 = vmatprep.subr.mxu0 0.0
        %2867 = vmatpush1.msra.mxu0 0.0
        %2868 = vmatprep.subr.mxu0 0.0
        %2869 = vmatpush1.msra.mxu0 0.0
        %2870 = vmatprep.subr.mxu0 0.0
        %2871 = vmatpush1.msra.mxu0 0.0
        %2872 = vmatprep.subr.mxu0 0.0
        %2873 = vmatpush1.msra.mxu0 0.0
        %2874 = vmatprep.subr.mxu0 0.0
        %2875 = vmatpush1.msra.mxu0 0.0
        %2876 = vmatprep.subr.mxu0 0.0
        %2877 = vmatpush1.msra.mxu0 0.0
        %2878 = vmatprep.subr.mxu0 0.0
        %2879 = vmatpush1.msra.mxu0 0.0
        %2880 = vmatprep.subr.mxu0 0.0
        %2881 = vmatpush1.msra.mxu0 0.0
        %2882 = vmatprep.subr.mxu0 0.0
        %2883 = vmatpush1.msra.mxu0 0.0
        %2884 = vmatprep.mubr.f32.mxu0 %v2818
        %2885 = vmatmul.mubr.f32.gmra.mrb[0].mxu0 %v2772
        %v2886 = vpop.f32.mrb[0].mxu0
        %v2887 = vadd.f32 %v2814, %v2886
        %v2888 = vpop.f32.mrb[0].mxu0
        %v2889 = vadd.f32 %v2814, %v2888
        %2890 = vdwg.mxu0
        %v2891 = vmul.f32 %v2887, 0.2
        %v2892 = vmul.f32 %v2889, 0.2
        %v2893 = vmax.f32 %v2887, %v2891
        %v2894 = vmax.f32 %v2889, %v2892
        %2895 = vst [vmem:[#allocation2 + $0x48] sm:$0xf] %v2893
        %2896 = vst [vmem:[#allocation2 + $0x50] sm:$0xf] %v2894
        %v2897 = vld [vmem:[#allocation2 + $0x8] sm:$0xff]
        %v2898 = vld [vmem:[#allocation2 + $0x10] sm:$0xff]
        %v2899 = vld [vmem:[#allocation2 + $0x28] sm:$0xff]
        %v2900 = vld [vmem:[#allocation2 + $0x30] sm:$0xff]
        %v2901 = vld [vmem:[#allocation2 + $0x48] sm:$0xf]
        %v2902 = vld [vmem:[#allocation2 + $0x50] sm:$0xf]
        %s2903 = scalar_lea.vmem %s3, 4
        %v2904 = vld [vmem:[%s2903] sm:$0xf]
        %s2905 = scalar_lea.vmem %s4, 4
        %v2906 = vld [vmem:[%s2905] sm:$0xf]
        %2908 = vset.pattern.permute.xlu0 0
        %2909 = vperm.xlu0 %2908, %v2906
        %v2910 = vpop.permute.xlu0 %2909
        %v2913 = vsel %vm1567, %v2904, 0
        %v2916 = vsel %vm506, %v2901, 0
        %v2919 = vsel %vm506, %v2902, 0
        %2921 = vmatprep.subr.mxu0 %v2898
        %2922 = vmatpush1.msra.mxu0 %v2897
        %2923 = vmatprep.subr.mxu0 %v2900
        %2924 = vmatpush1.msra.mxu0 %v2899
        %2925 = vmatprep.subr.mxu0 %v2919
        %2926 = vmatpush1.msra.mxu0 %v2916
        %2927 = vmatprep.subr.mxu0 0.0
        %2928 = vmatpush1.msra.mxu0 0.0
        %2929 = vmatprep.subr.mxu0 0.0
        %2930 = vmatpush1.msra.mxu0 0.0
        %2931 = vmatprep.subr.mxu0 0.0
        %2932 = vmatpush1.msra.mxu0 0.0
        %2933 = vmatprep.subr.mxu0 0.0
        %2934 = vmatpush1.msra.mxu0 0.0
        %2935 = vmatprep.subr.mxu0 0.0
        %2936 = vmatpush1.msra.mxu0 0.0
        %2937 = vmatprep.subr.mxu0 0.0
        %2938 = vmatpush1.msra.mxu0 0.0
        %2939 = vmatprep.subr.mxu0 0.0
        %2940 = vmatpush1.msra.mxu0 0.0
        %2941 = vmatprep.subr.mxu0 0.0
        %2942 = vmatpush1.msra.mxu0 0.0
        %2943 = vmatprep.subr.mxu0 0.0
        %2944 = vmatpush1.msra.mxu0 0.0
        %2945 = vmatprep.subr.mxu0 0.0
        %2946 = vmatpush1.msra.mxu0 0.0
        %2947 = vmatprep.subr.mxu0 0.0
        %2948 = vmatpush1.msra.mxu0 0.0
        %2949 = vmatprep.subr.mxu0 0.0
        %2950 = vmatpush1.msra.mxu0 0.0
        %2951 = vmatprep.subr.mxu0 0.0
        %2952 = vmatpush1.msra.mxu0 0.0
        %2953 = vmatprep.subr.mxu0 0.0
        %2954 = vmatpush1.msra.mxu0 0.0
        %2955 = vmatprep.subr.mxu0 0.0
        %2956 = vmatpush1.msra.mxu0 0.0
        %2957 = vmatprep.subr.mxu0 0.0
        %2958 = vmatpush1.msra.mxu0 0.0
        %2959 = vmatprep.subr.mxu0 0.0
        %2960 = vmatpush1.msra.mxu0 0.0
        %2961 = vmatprep.subr.mxu0 0.0
        %2962 = vmatpush1.msra.mxu0 0.0
        %2963 = vmatprep.subr.mxu0 0.0
        %2964 = vmatpush1.msra.mxu0 0.0
        %2965 = vmatprep.subr.mxu0 0.0
        %2966 = vmatpush1.msra.mxu0 0.0
        %2967 = vmatprep.subr.mxu0 0.0
        %2968 = vmatpush1.msra.mxu0 0.0
        %2969 = vmatprep.subr.mxu0 0.0
        %2970 = vmatpush1.msra.mxu0 0.0
        %2971 = vmatprep.subr.mxu0 0.0
        %2972 = vmatpush1.msra.mxu0 0.0
        %2973 = vmatprep.subr.mxu0 0.0
        %2974 = vmatpush1.msra.mxu0 0.0
        %2975 = vmatprep.subr.mxu0 0.0
        %2976 = vmatpush1.msra.mxu0 0.0
        %2977 = vmatprep.subr.mxu0 0.0
        %2978 = vmatpush1.msra.mxu0 0.0
        %2979 = vmatprep.subr.mxu0 0.0
        %2980 = vmatpush1.msra.mxu0 0.0
        %2981 = vmatprep.subr.mxu0 0.0
        %2982 = vmatpush1.msra.mxu0 0.0
        %2983 = vmatprep.subr.mxu0 0.0
        %2984 = vmatpush1.msra.mxu0 0.0
        %2985 = vmatprep.mubr.f32.mxu0 0.0
        %2986 = vmatmul.mubr.f32.gmra.mrb[0].mxu0 %v2913
        %v2987 = vpop.f32.mrb[0].mxu0
        %v2988 = vadd.f32 %v2910, %v2987
        %v2989 = vpop.f32.mrb[0].mxu0
        %v2990 = vadd.f32 %v2910, %v2989
        %2991 = vdwg.mxu0
        %v2992 = vadd.f32 %v2988, %v2897
        %v2993 = vadd.f32 %v2990, %v2898
        %2994 = vst [vmem:[#allocation2 + $0x8] sm:$0xf] %v2992
        %2995 = vst [vmem:[#allocation2 + $0x10] sm:$0xf] %v2993
        %v2996 = vld [vmem:[#allocation2] sm:$0xf]
        %v2997 = vld [vmem:[#allocation2 + $0x8] sm:$0xf]
        %v2998 = vld [vmem:[#allocation2 + $0x10] sm:$0xf]
        %3002 = vrot.lane.b32.xlu0 %v2996, 17
        %v3003 = vpop.permute.xlu0 %3002
        %3004 = vrot.lane.b32.xlu0 %v2997, 17
        %v3005 = vpop.permute.xlu0 %3004
        %3006 = vrot.lane.b32.xlu0 %v2998, 17
        %v3007 = vpop.permute.xlu0 %3006
        %v3008 = vsel %vm307, %v3003, %v3005
        %v3009 = vsel %vm307, %v3005, %v3007
        %v3012 = vsel %vm296, %v3008, 0.0
        %v3013 = vsel %vm297, %v3009, 0.0
        %3014 = vst [vmem:[#allocation3] sm:$0xf] %v3012
        %3015 = vst [vmem:[#allocation3 + $0x8] sm:$0xf] %v3013
        %v3016 = vld [vmem:[#allocation2] sm:$0xf]
        %v3017 = vld [vmem:[#allocation2 + $0x8] sm:$0xf]
        %v3018 = vld [vmem:[#allocation2 + $0x10] sm:$0xf]
        %v3022 = vrot.slane %v3016, 4
        %v3023 = vrot.slane %v3017, 4
        %v3024 = vrot.slane %v3018, 4
        %3025 = vrot.lane.b32.xlu0 %v3022, 16
        %v3026 = vpop.permute.xlu0 %3025
        %3027 = vrot.lane.b32.xlu0 %v3023, 16
        %v3028 = vpop.permute.xlu0 %3027
        %3029 = vrot.lane.b32.xlu0 %v3024, 16
        %v3030 = vpop.permute.xlu0 %3029
        %v3031 = vsel %vm331, %v3026, %v3028
        %v3032 = vsel %vm331, %v3028, %v3030
        %3035 = vst [vmem:[#allocation3] sm:$0xf0] %v3031
        %3036 = vst [vmem:[#allocation3 + $0x8] sm:$0xf0] %v3032
        %v3037 = vld [vmem:[#allocation2] sm:$0xf]
        %v3038 = vld [vmem:[#allocation2 + $0x8] sm:$0xf]
        %v3039 = vld [vmem:[#allocation2 + $0x10] sm:$0xf]
        %3043 = vrot.lane.b32.xlu0 %v3037, 15
        %v3044 = vpop.permute.xlu0 %3043
        %3045 = vrot.lane.b32.xlu0 %v3038, 15
        %v3046 = vpop.permute.xlu0 %3045
        %3047 = vrot.lane.b32.xlu0 %v3039, 15
        %v3048 = vpop.permute.xlu0 %3047
        %v3049 = vsel %vm354, %v3044, %v3046
        %v3050 = vsel %vm354, %v3046, %v3048
        %v3053 = vsel %vm343, %v3049, 0.0
        %v3054 = vsel %vm344, %v3050, 0.0
        %3055 = vst [vmem:[#allocation3 + $0x10] sm:$0xf] %v3053
        %3056 = vst [vmem:[#allocation3 + $0x18] sm:$0xf] %v3054
        %v3057 = vld [vmem:[#allocation2] sm:$0xf]
        %v3058 = vld [vmem:[#allocation2 + $0x8] sm:$0xf]
        %v3059 = vld [vmem:[#allocation2 + $0x10] sm:$0xf]
        %3063 = vrot.lane.b32.xlu0 %v3057, 1
        %v3064 = vpop.permute.xlu0 %3063
        %3065 = vrot.lane.b32.xlu0 %v3058, 1
        %v3066 = vpop.permute.xlu0 %3065
        %3067 = vrot.lane.b32.xlu0 %v3059, 1
        %v3068 = vpop.permute.xlu0 %3067
        %v3069 = vsel %vm375, %v3064, %v3066
        %v3070 = vsel %vm375, %v3066, %v3068
        %v3073 = vsel %vm296, %v3069, 0.0
        %v3074 = vsel %vm297, %v3070, 0.0
        %v3077 = vrot.slane %v3073, 4
        %v3078 = vrot.slane %v3074, 4
        %3081 = vst [vmem:[#allocation3 + $0x10] sm:$0xf0] %v3077
        %3082 = vst [vmem:[#allocation3 + $0x18] sm:$0xf0] %v3078
        %v3083 = vld [vmem:[#allocation2 + $0x8] sm:$0xf]
        %v3084 = vld [vmem:[#allocation2 + $0x10] sm:$0xf]
        %3085 = vst [vmem:[#allocation3 + $0x20] sm:$0xf] %v3083
        %3086 = vst [vmem:[#allocation3 + $0x28] sm:$0xf] %v3084
        %v3087 = vld [vmem:[#allocation2 + $0x8] sm:$0xf]
        %v3088 = vld [vmem:[#allocation2 + $0x10] sm:$0xf]
        %v3089 = vld [vmem:[#allocation2 + $0x18] sm:$0xf]
        %3093 = vrot.lane.b32.xlu0 %v3087, 127
        %v3094 = vpop.permute.xlu0 %3093
        %3095 = vrot.lane.b32.xlu0 %v3088, 127
        %v3096 = vpop.permute.xlu0 %3095
        %3097 = vrot.lane.b32.xlu0 %v3089, 127
        %v3098 = vpop.permute.xlu0 %3097
        %v3099 = vsel %vm406, %v3094, %v3096
        %v3100 = vsel %vm406, %v3096, %v3098
        %v3103 = vsel %vm343, %v3099, 0.0
        %v3104 = vsel %vm344, %v3100, 0.0
        %v3107 = vrot.slane %v3103, 4
        %v3108 = vrot.slane %v3104, 4
        %3111 = vst [vmem:[#allocation3 + $0x20] sm:$0xf0] %v3107
        %3112 = vst [vmem:[#allocation3 + $0x28] sm:$0xf0] %v3108
        %v3113 = vld [vmem:[#allocation2 + $0x8] sm:$0xf]
        %v3114 = vld [vmem:[#allocation2 + $0x10] sm:$0xf]
        %v3115 = vld [vmem:[#allocation2 + $0x18] sm:$0xf]
        %3119 = vrot.lane.b32.xlu0 %v3113, 113
        %v3120 = vpop.permute.xlu0 %3119
        %3121 = vrot.lane.b32.xlu0 %v3114, 113
        %v3122 = vpop.permute.xlu0 %3121
        %3123 = vrot.lane.b32.xlu0 %v3115, 113
        %v3124 = vpop.permute.xlu0 %3123
        %v3125 = vsel %vm433, %v3120, %v3122
        %v3126 = vsel %vm433, %v3122, %v3124
        %v3129 = vsel %vm296, %v3125, 0.0
        %v3130 = vsel %vm297, %v3126, 0.0
        %3131 = vst [vmem:[#allocation3 + $0x30] sm:$0xf] %v3129
        %3132 = vst [vmem:[#allocation3 + $0x38] sm:$0xf] %v3130
        %v3133 = vld [vmem:[#allocation2 + $0x8] sm:$0xf]
        %v3134 = vld [vmem:[#allocation2 + $0x10] sm:$0xf]
        %v3135 = vld [vmem:[#allocation2 + $0x18] sm:$0xf]
        %v3139 = vrot.slane %v3133, 4
        %v3140 = vrot.slane %v3134, 4
        %v3141 = vrot.slane %v3135, 4
        %3142 = vrot.lane.b32.xlu0 %v3139, 112
        %v3143 = vpop.permute.xlu0 %3142
        %3144 = vrot.lane.b32.xlu0 %v3140, 112
        %v3145 = vpop.permute.xlu0 %3144
        %3146 = vrot.lane.b32.xlu0 %v3141, 112
        %v3147 = vpop.permute.xlu0 %3146
        %v3148 = vsel %vm457, %v3143, %v3145
        %v3149 = vsel %vm457, %v3145, %v3147
        %3152 = vst [vmem:[#allocation3 + $0x30] sm:$0xf0] %v3148
        %3153 = vst [vmem:[#allocation3 + $0x38] sm:$0xf0] %v3149
        %v3154 = vld [vmem:[#allocation2 + $0x8] sm:$0xf]
        %v3155 = vld [vmem:[#allocation2 + $0x10] sm:$0xf]
        %v3156 = vld [vmem:[#allocation2 + $0x18] sm:$0xf]
        %3160 = vrot.lane.b32.xlu0 %v3154, 111
        %v3161 = vpop.permute.xlu0 %3160
        %3162 = vrot.lane.b32.xlu0 %v3155, 111
        %v3163 = vpop.permute.xlu0 %3162
        %3164 = vrot.lane.b32.xlu0 %v3156, 111
        %v3165 = vpop.permute.xlu0 %3164
        %v3166 = vsel %vm476, %v3161, %v3163
        %v3167 = vsel %vm476, %v3163, %v3165
        %v3170 = vsel %vm343, %v3166, 0.0
        %v3171 = vsel %vm344, %v3167, 0.0
        %3172 = vst [vmem:[#allocation3 + $0x40] sm:$0xf] %v3170
        %3173 = vst [vmem:[#allocation3 + $0x48] sm:$0xf] %v3171
        %s3174 = scalar_lea.vmem [#allocation4], 64
        %v3175 = vld [vmem:[%s3174] sm:$0xff]
        %v3176 = vld [vmem:[#allocation3] sm:$0xff]
        %v3177 = vld [vmem:[#allocation3 + $0x8] sm:$0xff]
        %v3178 = vld [vmem:[#allocation3 + $0x10] sm:$0xff]
        %v3179 = vld [vmem:[#allocation3 + $0x18] sm:$0xff]
        %v3180 = vld [vmem:[#allocation3 + $0x20] sm:$0xff]
        %v3181 = vld [vmem:[#allocation3 + $0x28] sm:$0xff]
        %v3182 = vld [vmem:[#allocation3 + $0x30] sm:$0xff]
        %v3183 = vld [vmem:[#allocation3 + $0x38] sm:$0xff]
        %v3184 = vld [vmem:[#allocation3 + $0x40] sm:$0xf]
        %v3185 = vld [vmem:[#allocation3 + $0x48] sm:$0xf]
        %s3186 = scalar_lea.vmem %s2, 32
        %v3187 = vld [vmem:[%s3186] sm:$0xf]
        %3189 = vset.pattern.permute.xlu0 0
        %3190 = vperm.xlu0 %3189, %v3187
        %v3191 = vpop.permute.xlu0 %3190
        %v3194 = vsel %vm502, %v3175, 0
        %v3197 = vsel %vm506, %v3184, 0
        %v3200 = vsel %vm506, %v3185, 0
        %3202 = vmatprep.subr.mxu0 %v3177
        %3203 = vmatpush1.msra.mxu0 %v3176
        %3204 = vmatprep.subr.mxu0 %v3179
        %3205 = vmatpush1.msra.mxu0 %v3178
        %3206 = vmatprep.subr.mxu0 %v3181
        %3207 = vmatpush1.msra.mxu0 %v3180
        %3208 = vmatprep.subr.mxu0 %v3183
        %3209 = vmatpush1.msra.mxu0 %v3182
        %3210 = vmatprep.subr.mxu0 %v3200
        %3211 = vmatpush1.msra.mxu0 %v3197
        %3212 = vmatprep.subr.mxu0 0.0
        %3213 = vmatpush1.msra.mxu0 0.0
        %3214 = vmatprep.subr.mxu0 0.0
        %3215 = vmatpush1.msra.mxu0 0.0
        %3216 = vmatprep.subr.mxu0 0.0
        %3217 = vmatpush1.msra.mxu0 0.0
        %3218 = vmatprep.subr.mxu0 0.0
        %3219 = vmatpush1.msra.mxu0 0.0
        %3220 = vmatprep.subr.mxu0 0.0
        %3221 = vmatpush1.msra.mxu0 0.0
        %3222 = vmatprep.subr.mxu0 0.0
        %3223 = vmatpush1.msra.mxu0 0.0
        %3224 = vmatprep.subr.mxu0 0.0
        %3225 = vmatpush1.msra.mxu0 0.0
        %3226 = vmatprep.subr.mxu0 0.0
        %3227 = vmatpush1.msra.mxu0 0.0
        %3228 = vmatprep.subr.mxu0 0.0
        %3229 = vmatpush1.msra.mxu0 0.0
        %3230 = vmatprep.subr.mxu0 0.0
        %3231 = vmatpush1.msra.mxu0 0.0
        %3232 = vmatprep.subr.mxu0 0.0
        %3233 = vmatpush1.msra.mxu0 0.0
        %3234 = vmatprep.subr.mxu0 0.0
        %3235 = vmatpush1.msra.mxu0 0.0
        %3236 = vmatprep.subr.mxu0 0.0
        %3237 = vmatpush1.msra.mxu0 0.0
        %3238 = vmatprep.subr.mxu0 0.0
        %3239 = vmatpush1.msra.mxu0 0.0
        %3240 = vmatprep.subr.mxu0 0.0
        %3241 = vmatpush1.msra.mxu0 0.0
        %3242 = vmatprep.subr.mxu0 0.0
        %3243 = vmatpush1.msra.mxu0 0.0
        %3244 = vmatprep.subr.mxu0 0.0
        %3245 = vmatpush1.msra.mxu0 0.0
        %3246 = vmatprep.subr.mxu0 0.0
        %3247 = vmatpush1.msra.mxu0 0.0
        %3248 = vmatprep.subr.mxu0 0.0
        %3249 = vmatpush1.msra.mxu0 0.0
        %3250 = vmatprep.subr.mxu0 0.0
        %3251 = vmatpush1.msra.mxu0 0.0
        %3252 = vmatprep.subr.mxu0 0.0
        %3253 = vmatpush1.msra.mxu0 0.0
        %3254 = vmatprep.subr.mxu0 0.0
        %3255 = vmatpush1.msra.mxu0 0.0
        %3256 = vmatprep.subr.mxu0 0.0
        %3257 = vmatpush1.msra.mxu0 0.0
        %3258 = vmatprep.subr.mxu0 0.0
        %3259 = vmatpush1.msra.mxu0 0.0
        %3260 = vmatprep.subr.mxu0 0.0
        %3261 = vmatpush1.msra.mxu0 0.0
        %3262 = vmatprep.subr.mxu0 0.0
        %3263 = vmatpush1.msra.mxu0 0.0
        %3264 = vmatprep.subr.mxu0 0.0
        %3265 = vmatpush1.msra.mxu0 0.0
        %3266 = vmatprep.mubr.f32.mxu0 0.0
        %3267 = vmatmul.mubr.f32.gmra.mrb[0].mxu0 %v3194
        %v3268 = vpop.f32.mrb[0].mxu0
        %v3269 = vadd.f32 %v3191, %v3268
        %v3270 = vpop.f32.mrb[0].mxu0
        %v3271 = vadd.f32 %v3191, %v3270
        %3272 = vdwg.mxu0
        %v3273 = vmul.f32 %v3269, 0.2
        %v3274 = vmul.f32 %v3271, 0.2
        %v3275 = vmax.f32 %v3269, %v3273
        %v3276 = vmax.f32 %v3271, %v3274
        %v3279 = vrot.slane %v3275, 4
        %v3280 = vrot.slane %v3276, 4
        %3283 = vst [vmem:[#allocation2 + $0x8] sm:$0xf0] %v3279
        %3284 = vst [vmem:[#allocation2 + $0x10] sm:$0xf0] %v3280
        %v3285 = vld [vmem:[#allocation2] sm:$0xf0]
        %v3286 = vld [vmem:[#allocation2 + $0x8] sm:$0xf0]
        %v3287 = vld [vmem:[#allocation2 + $0x10] sm:$0xf0]
        %v3291 = vrot.slane %v3285, 4
        %v3292 = vrot.slane %v3286, 4
        %v3293 = vrot.slane %v3287, 4
        %3294 = vrot.lane.b32.xlu0 %v3291, 17
        %v3295 = vpop.permute.xlu0 %3294
        %3296 = vrot.lane.b32.xlu0 %v3292, 17
        %v3297 = vpop.permute.xlu0 %3296
        %3298 = vrot.lane.b32.xlu0 %v3293, 17
        %v3299 = vpop.permute.xlu0 %3298
        %v3300 = vsel %vm307, %v3295, %v3297
        %v3301 = vsel %vm307, %v3297, %v3299
        %v3304 = vsel %vm296, %v3300, 0.0
        %v3305 = vsel %vm297, %v3301, 0.0
        %v3308 = vrot.slane %v3304, 4
        %v3309 = vrot.slane %v3305, 4
        %3312 = vst [vmem:[#allocation3 + $0x40] sm:$0xf0] %v3308
        %3313 = vst [vmem:[#allocation3 + $0x48] sm:$0xf0] %v3309
        %v3314 = vld [vmem:[#allocation2] sm:$0xf0]
        %v3315 = vld [vmem:[#allocation2 + $0x8] sm:$0xf0]
        %v3316 = vld [vmem:[#allocation2 + $0x10] sm:$0xf0]
        %v3320 = vrot.slane %v3314, 4
        %v3321 = vrot.slane %v3315, 4
        %v3322 = vrot.slane %v3316, 4
        %3323 = vrot.lane.b32.xlu0 %v3320, 16
        %v3324 = vpop.permute.xlu0 %3323
        %3325 = vrot.lane.b32.xlu0 %v3321, 16
        %v3326 = vpop.permute.xlu0 %3325
        %3327 = vrot.lane.b32.xlu0 %v3322, 16
        %v3328 = vpop.permute.xlu0 %3327
        %v3329 = vsel %vm331, %v3324, %v3326
        %v3330 = vsel %vm331, %v3326, %v3328
        %3333 = vst [vmem:[#allocation3 + $0x50] sm:$0xf] %v3329
        %3334 = vst [vmem:[#allocation3 + $0x58] sm:$0xf] %v3330
        %v3335 = vld [vmem:[#allocation2] sm:$0xf0]
        %v3336 = vld [vmem:[#allocation2 + $0x8] sm:$0xf0]
        %v3337 = vld [vmem:[#allocation2 + $0x10] sm:$0xf0]
        %v3341 = vrot.slane %v3335, 4
        %v3342 = vrot.slane %v3336, 4
        %v3343 = vrot.slane %v3337, 4
        %3344 = vrot.lane.b32.xlu0 %v3341, 15
        %v3345 = vpop.permute.xlu0 %3344
        %3346 = vrot.lane.b32.xlu0 %v3342, 15
        %v3347 = vpop.permute.xlu0 %3346
        %3348 = vrot.lane.b32.xlu0 %v3343, 15
        %v3349 = vpop.permute.xlu0 %3348
        %v3350 = vsel %vm354, %v3345, %v3347
        %v3351 = vsel %vm354, %v3347, %v3349
        %v3354 = vsel %vm343, %v3350, 0.0
        %v3355 = vsel %vm344, %v3351, 0.0
        %v3358 = vrot.slane %v3354, 4
        %v3359 = vrot.slane %v3355, 4
        %3362 = vst [vmem:[#allocation3 + $0x50] sm:$0xf0] %v3358
        %3363 = vst [vmem:[#allocation3 + $0x58] sm:$0xf0] %v3359
        %v3364 = vld [vmem:[#allocation2] sm:$0xf0]
        %v3365 = vld [vmem:[#allocation2 + $0x8] sm:$0xf0]
        %v3366 = vld [vmem:[#allocation2 + $0x10] sm:$0xf0]
        %v3370 = vrot.slane %v3364, 4
        %v3371 = vrot.slane %v3365, 4
        %v3372 = vrot.slane %v3366, 4
        %3373 = vrot.lane.b32.xlu0 %v3370, 1
        %v3374 = vpop.permute.xlu0 %3373
        %3375 = vrot.lane.b32.xlu0 %v3371, 1
        %v3376 = vpop.permute.xlu0 %3375
        %3377 = vrot.lane.b32.xlu0 %v3372, 1
        %v3378 = vpop.permute.xlu0 %3377
        %v3379 = vsel %vm375, %v3374, %v3376
        %v3380 = vsel %vm375, %v3376, %v3378
        %v3383 = vsel %vm296, %v3379, 0.0
        %v3384 = vsel %vm297, %v3380, 0.0
        %3385 = vst [vmem:[#allocation3 + $0x60] sm:$0xf] %v3383
        %3386 = vst [vmem:[#allocation3 + $0x68] sm:$0xf] %v3384
        %v3387 = vld [vmem:[#allocation2 + $0x8] sm:$0xf0]
        %v3388 = vld [vmem:[#allocation2 + $0x10] sm:$0xf0]
        %3389 = vst [vmem:[#allocation3 + $0x60] sm:$0xf0] %v3387
        %3390 = vst [vmem:[#allocation3 + $0x68] sm:$0xf0] %v3388
        %v3391 = vld [vmem:[#allocation2 + $0x8] sm:$0xf0]
        %v3392 = vld [vmem:[#allocation2 + $0x10] sm:$0xf0]
        %v3393 = vld [vmem:[#allocation2 + $0x18] sm:$0xf0]
        %v3397 = vrot.slane %v3391, 4
        %v3398 = vrot.slane %v3392, 4
        %v3399 = vrot.slane %v3393, 4
        %3400 = vrot.lane.b32.xlu0 %v3397, 127
        %v3401 = vpop.permute.xlu0 %3400
        %3402 = vrot.lane.b32.xlu0 %v3398, 127
        %v3403 = vpop.permute.xlu0 %3402
        %3404 = vrot.lane.b32.xlu0 %v3399, 127
        %v3405 = vpop.permute.xlu0 %3404
        %v3406 = vsel %vm406, %v3401, %v3403
        %v3407 = vsel %vm406, %v3403, %v3405
        %v3410 = vsel %vm343, %v3406, 0.0
        %v3411 = vsel %vm344, %v3407, 0.0
        %3412 = vst [vmem:[#allocation3 + $0x70] sm:$0xf] %v3410
        %3413 = vst [vmem:[#allocation3 + $0x78] sm:$0xf] %v3411
        %v3414 = vld [vmem:[#allocation2 + $0x8] sm:$0xf0]
        %v3415 = vld [vmem:[#allocation2 + $0x10] sm:$0xf0]
        %v3416 = vld [vmem:[#allocation2 + $0x18] sm:$0xf0]
        %v3420 = vrot.slane %v3414, 4
        %v3421 = vrot.slane %v3415, 4
        %v3422 = vrot.slane %v3416, 4
        %3423 = vrot.lane.b32.xlu0 %v3420, 113
        %v3424 = vpop.permute.xlu0 %3423
        %3425 = vrot.lane.b32.xlu0 %v3421, 113
        %v3426 = vpop.permute.xlu0 %3425
        %3427 = vrot.lane.b32.xlu0 %v3422, 113
        %v3428 = vpop.permute.xlu0 %3427
        %v3429 = vsel %vm433, %v3424, %v3426
        %v3430 = vsel %vm433, %v3426, %v3428
        %v3433 = vsel %vm296, %v3429, 0.0
        %v3434 = vsel %vm297, %v3430, 0.0
        %v3437 = vrot.slane %v3433, 4
        %v3438 = vrot.slane %v3434, 4
        %3441 = vst [vmem:[#allocation3 + $0x70] sm:$0xf0] %v3437
        %3442 = vst [vmem:[#allocation3 + $0x78] sm:$0xf0] %v3438
        %v3443 = vld [vmem:[#allocation2 + $0x8] sm:$0xf0]
        %v3444 = vld [vmem:[#allocation2 + $0x10] sm:$0xf0]
        %v3445 = vld [vmem:[#allocation2 + $0x18] sm:$0xf0]
        %v3449 = vrot.slane %v3443, 4
        %v3450 = vrot.slane %v3444, 4
        %v3451 = vrot.slane %v3445, 4
        %3452 = vrot.lane.b32.xlu0 %v3449, 112
        %v3453 = vpop.permute.xlu0 %3452
        %3454 = vrot.lane.b32.xlu0 %v3450, 112
        %v3455 = vpop.permute.xlu0 %3454
        %3456 = vrot.lane.b32.xlu0 %v3451, 112
        %v3457 = vpop.permute.xlu0 %3456
        %v3458 = vsel %vm457, %v3453, %v3455
        %v3459 = vsel %vm457, %v3455, %v3457
        %3462 = vst [vmem:[#allocation3 + $0x80] sm:$0xf] %v3458
        %3463 = vst [vmem:[#allocation3 + $0x88] sm:$0xf] %v3459
        %v3464 = vld [vmem:[#allocation2 + $0x8] sm:$0xf0]
        %v3465 = vld [vmem:[#allocation2 + $0x10] sm:$0xf0]
        %v3466 = vld [vmem:[#allocation2 + $0x18] sm:$0xf0]
        %v3470 = vrot.slane %v3464, 4
        %v3471 = vrot.slane %v3465, 4
        %v3472 = vrot.slane %v3466, 4
        %3473 = vrot.lane.b32.xlu0 %v3470, 111
        %v3474 = vpop.permute.xlu0 %3473
        %3475 = vrot.lane.b32.xlu0 %v3471, 111
        %v3476 = vpop.permute.xlu0 %3475
        %3477 = vrot.lane.b32.xlu0 %v3472, 111
        %v3478 = vpop.permute.xlu0 %3477
        %v3479 = vsel %vm476, %v3474, %v3476
        %v3480 = vsel %vm476, %v3476, %v3478
        %v3483 = vsel %vm343, %v3479, 0.0
        %v3484 = vsel %vm344, %v3480, 0.0
        %v3487 = vrot.slane %v3483, 4
        %v3488 = vrot.slane %v3484, 4
        %3491 = vst [vmem:[#allocation3 + $0x80] sm:$0xf0] %v3487
        %3492 = vst [vmem:[#allocation3 + $0x88] sm:$0xf0] %v3488
        %s3493 = scalar_lea.vmem [#allocation4], 72
        %v3494 = vld [vmem:[%s3493] sm:$0xff]
        %v3495 = vld [vmem:[#allocation3] sm:$0xff]
        %v3496 = vld [vmem:[#allocation3 + $0x8] sm:$0xff]
        %v3497 = vld [vmem:[#allocation3 + $0x10] sm:$0xff]
        %v3498 = vld [vmem:[#allocation3 + $0x18] sm:$0xff]
        %v3499 = vld [vmem:[#allocation3 + $0x20] sm:$0xff]
        %v3500 = vld [vmem:[#allocation3 + $0x28] sm:$0xff]
        %v3501 = vld [vmem:[#allocation3 + $0x30] sm:$0xff]
        %v3502 = vld [vmem:[#allocation3 + $0x38] sm:$0xff]
        %v3503 = vld [vmem:[#allocation3 + $0x40] sm:$0xff]
        %v3504 = vld [vmem:[#allocation3 + $0x48] sm:$0xff]
        %v3505 = vld [vmem:[#allocation3 + $0x50] sm:$0xff]
        %v3506 = vld [vmem:[#allocation3 + $0x58] sm:$0xff]
        %v3507 = vld [vmem:[#allocation3 + $0x60] sm:$0xff]
        %v3508 = vld [vmem:[#allocation3 + $0x68] sm:$0xff]
        %v3509 = vld [vmem:[#allocation3 + $0x70] sm:$0xff]
        %v3510 = vld [vmem:[#allocation3 + $0x78] sm:$0xff]
        %v3511 = vld [vmem:[#allocation3 + $0x80] sm:$0xff]
        %v3512 = vld [vmem:[#allocation3 + $0x88] sm:$0xff]
        %s3513 = scalar_lea.vmem %s2, 36
        %v3514 = vld [vmem:[%s3513] sm:$0xf]
        %3516 = vset.pattern.permute.xlu0 0
        %3517 = vperm.xlu0 %3516, %v3514
        %v3518 = vpop.permute.xlu0 %3517
        %v3521 = vsel %vm831, %v3494, 0
        %3523 = vmatprep.subr.mxu0 %v3496
        %3524 = vmatpush1.msra.mxu0 %v3495
        %3525 = vmatprep.subr.mxu0 %v3498
        %3526 = vmatpush1.msra.mxu0 %v3497
        %3527 = vmatprep.subr.mxu0 %v3500
        %3528 = vmatpush1.msra.mxu0 %v3499
        %3529 = vmatprep.subr.mxu0 %v3502
        %3530 = vmatpush1.msra.mxu0 %v3501
        %3531 = vmatprep.subr.mxu0 %v3504
        %3532 = vmatpush1.msra.mxu0 %v3503
        %3533 = vmatprep.subr.mxu0 %v3506
        %3534 = vmatpush1.msra.mxu0 %v3505
        %3535 = vmatprep.subr.mxu0 %v3508
        %3536 = vmatpush1.msra.mxu0 %v3507
        %3537 = vmatprep.subr.mxu0 %v3510
        %3538 = vmatpush1.msra.mxu0 %v3509
        %3539 = vmatprep.subr.mxu0 %v3512
        %3540 = vmatpush1.msra.mxu0 %v3511
        %3541 = vmatprep.subr.mxu0 0.0
        %3542 = vmatpush1.msra.mxu0 0.0
        %3543 = vmatprep.subr.mxu0 0.0
        %3544 = vmatpush1.msra.mxu0 0.0
        %3545 = vmatprep.subr.mxu0 0.0
        %3546 = vmatpush1.msra.mxu0 0.0
        %3547 = vmatprep.subr.mxu0 0.0
        %3548 = vmatpush1.msra.mxu0 0.0
        %3549 = vmatprep.subr.mxu0 0.0
        %3550 = vmatpush1.msra.mxu0 0.0
        %3551 = vmatprep.subr.mxu0 0.0
        %3552 = vmatpush1.msra.mxu0 0.0
        %3553 = vmatprep.subr.mxu0 0.0
        %3554 = vmatpush1.msra.mxu0 0.0
        %3555 = vmatprep.subr.mxu0 0.0
        %3556 = vmatpush1.msra.mxu0 0.0
        %3557 = vmatprep.subr.mxu0 0.0
        %3558 = vmatpush1.msra.mxu0 0.0
        %3559 = vmatprep.subr.mxu0 0.0
        %3560 = vmatpush1.msra.mxu0 0.0
        %3561 = vmatprep.subr.mxu0 0.0
        %3562 = vmatpush1.msra.mxu0 0.0
        %3563 = vmatprep.subr.mxu0 0.0
        %3564 = vmatpush1.msra.mxu0 0.0
        %3565 = vmatprep.subr.mxu0 0.0
        %3566 = vmatpush1.msra.mxu0 0.0
        %3567 = vmatprep.subr.mxu0 0.0
        %3568 = vmatpush1.msra.mxu0 0.0
        %3569 = vmatprep.subr.mxu0 0.0
        %3570 = vmatpush1.msra.mxu0 0.0
        %3571 = vmatprep.subr.mxu0 0.0
        %3572 = vmatpush1.msra.mxu0 0.0
        %3573 = vmatprep.subr.mxu0 0.0
        %3574 = vmatpush1.msra.mxu0 0.0
        %3575 = vmatprep.subr.mxu0 0.0
        %3576 = vmatpush1.msra.mxu0 0.0
        %3577 = vmatprep.subr.mxu0 0.0
        %3578 = vmatpush1.msra.mxu0 0.0
        %3579 = vmatprep.subr.mxu0 0.0
        %3580 = vmatpush1.msra.mxu0 0.0
        %3581 = vmatprep.subr.mxu0 0.0
        %3582 = vmatpush1.msra.mxu0 0.0
        %3583 = vmatprep.subr.mxu0 0.0
        %3584 = vmatpush1.msra.mxu0 0.0
        %3585 = vmatprep.subr.mxu0 0.0
        %3586 = vmatpush1.msra.mxu0 0.0
        %3587 = vmatprep.mubr.f32.mxu0 0.0
        %3588 = vmatmul.mubr.f32.gmra.mrb[0].mxu0 %v3521
        %v3589 = vpop.f32.mrb[0].mxu0
        %v3590 = vadd.f32 %v3518, %v3589
        %v3591 = vpop.f32.mrb[0].mxu0
        %v3592 = vadd.f32 %v3518, %v3591
        %3593 = vdwg.mxu0
        %v3594 = vmul.f32 %v3590, 0.2
        %v3595 = vmul.f32 %v3592, 0.2
        %v3596 = vmax.f32 %v3590, %v3594
        %v3597 = vmax.f32 %v3592, %v3595
        %3598 = vst [vmem:[#allocation2 + $0x28] sm:$0xf] %v3596
        %3599 = vst [vmem:[#allocation2 + $0x30] sm:$0xf] %v3597
        %v3600 = vld [vmem:[#allocation2 + $0x20] sm:$0xf]
        %v3601 = vld [vmem:[#allocation2 + $0x28] sm:$0xf]
        %v3602 = vld [vmem:[#allocation2 + $0x30] sm:$0xf]
        %3606 = vrot.lane.b32.xlu0 %v3600, 17
        %v3607 = vpop.permute.xlu0 %3606
        %3608 = vrot.lane.b32.xlu0 %v3601, 17
        %v3609 = vpop.permute.xlu0 %3608
        %3610 = vrot.lane.b32.xlu0 %v3602, 17
        %v3611 = vpop.permute.xlu0 %3610
        %v3612 = vsel %vm307, %v3607, %v3609
        %v3613 = vsel %vm307, %v3609, %v3611
        %v3616 = vsel %vm296, %v3612, 0.0
        %v3617 = vsel %vm297, %v3613, 0.0
        %3618 = vst [vmem:[#allocation3 + $0x90] sm:$0xf] %v3616
        %3619 = vst [vmem:[#allocation3 + $0x98] sm:$0xf] %v3617
        %v3620 = vld [vmem:[#allocation2 + $0x20] sm:$0xf]
        %v3621 = vld [vmem:[#allocation2 + $0x28] sm:$0xf]
        %v3622 = vld [vmem:[#allocation2 + $0x30] sm:$0xf]
        %v3626 = vrot.slane %v3620, 4
        %v3627 = vrot.slane %v3621, 4
        %v3628 = vrot.slane %v3622, 4
        %3629 = vrot.lane.b32.xlu0 %v3626, 16
        %v3630 = vpop.permute.xlu0 %3629
        %3631 = vrot.lane.b32.xlu0 %v3627, 16
        %v3632 = vpop.permute.xlu0 %3631
        %3633 = vrot.lane.b32.xlu0 %v3628, 16
        %v3634 = vpop.permute.xlu0 %3633
        %v3635 = vsel %vm331, %v3630, %v3632
        %v3636 = vsel %vm331, %v3632, %v3634
        %3639 = vst [vmem:[#allocation3 + $0x90] sm:$0xf0] %v3635
        %3640 = vst [vmem:[#allocation3 + $0x98] sm:$0xf0] %v3636
        %v3641 = vld [vmem:[#allocation2 + $0x20] sm:$0xf]
        %v3642 = vld [vmem:[#allocation2 + $0x28] sm:$0xf]
        %v3643 = vld [vmem:[#allocation2 + $0x30] sm:$0xf]
        %3647 = vrot.lane.b32.xlu0 %v3641, 15
        %v3648 = vpop.permute.xlu0 %3647
        %3649 = vrot.lane.b32.xlu0 %v3642, 15
        %v3650 = vpop.permute.xlu0 %3649
        %3651 = vrot.lane.b32.xlu0 %v3643, 15
        %v3652 = vpop.permute.xlu0 %3651
        %v3653 = vsel %vm354, %v3648, %v3650
        %v3654 = vsel %vm354, %v3650, %v3652
        %v3657 = vsel %vm343, %v3653, 0.0
        %v3658 = vsel %vm344, %v3654, 0.0
        %3659 = vst [vmem:[#allocation3 + $0xa0] sm:$0xf] %v3657
        %3660 = vst [vmem:[#allocation3 + $0xa8] sm:$0xf] %v3658
        %v3661 = vld [vmem:[#allocation2 + $0x20] sm:$0xf]
        %v3662 = vld [vmem:[#allocation2 + $0x28] sm:$0xf]
        %v3663 = vld [vmem:[#allocation2 + $0x30] sm:$0xf]
        %3667 = vrot.lane.b32.xlu0 %v3661, 1
        %v3668 = vpop.permute.xlu0 %3667
        %3669 = vrot.lane.b32.xlu0 %v3662, 1
        %v3670 = vpop.permute.xlu0 %3669
        %3671 = vrot.lane.b32.xlu0 %v3663, 1
        %v3672 = vpop.permute.xlu0 %3671
        %v3673 = vsel %vm375, %v3668, %v3670
        %v3674 = vsel %vm375, %v3670, %v3672
        %v3677 = vsel %vm296, %v3673, 0.0
        %v3678 = vsel %vm297, %v3674, 0.0
        %v3681 = vrot.slane %v3677, 4
        %v3682 = vrot.slane %v3678, 4
        %3685 = vst [vmem:[#allocation3 + $0xa0] sm:$0xf0] %v3681
        %3686 = vst [vmem:[#allocation3 + $0xa8] sm:$0xf0] %v3682
        %v3687 = vld [vmem:[#allocation2 + $0x28] sm:$0xf]
        %v3688 = vld [vmem:[#allocation2 + $0x30] sm:$0xf]
        %3689 = vst [vmem:[#allocation3 + $0xb0] sm:$0xf] %v3687
        %3690 = vst [vmem:[#allocation3 + $0xb8] sm:$0xf] %v3688
        %v3691 = vld [vmem:[#allocation2 + $0x28] sm:$0xf]
        %v3692 = vld [vmem:[#allocation2 + $0x30] sm:$0xf]
        %v3693 = vld [vmem:[#allocation2 + $0x38] sm:$0xf]
        %3697 = vrot.lane.b32.xlu0 %v3691, 127
        %v3698 = vpop.permute.xlu0 %3697
        %3699 = vrot.lane.b32.xlu0 %v3692, 127
        %v3700 = vpop.permute.xlu0 %3699
        %3701 = vrot.lane.b32.xlu0 %v3693, 127
        %v3702 = vpop.permute.xlu0 %3701
        %v3703 = vsel %vm406, %v3698, %v3700
        %v3704 = vsel %vm406, %v3700, %v3702
        %v3707 = vsel %vm343, %v3703, 0.0
        %v3708 = vsel %vm344, %v3704, 0.0
        %v3711 = vrot.slane %v3707, 4
        %v3712 = vrot.slane %v3708, 4
        %3715 = vst [vmem:[#allocation3 + $0xb0] sm:$0xf0] %v3711
        %3716 = vst [vmem:[#allocation3 + $0xb8] sm:$0xf0] %v3712
        %v3717 = vld [vmem:[#allocation2 + $0x28] sm:$0xf]
        %v3718 = vld [vmem:[#allocation2 + $0x30] sm:$0xf]
        %v3719 = vld [vmem:[#allocation2 + $0x38] sm:$0xf]
        %3723 = vrot.lane.b32.xlu0 %v3717, 113
        %v3724 = vpop.permute.xlu0 %3723
        %3725 = vrot.lane.b32.xlu0 %v3718, 113
        %v3726 = vpop.permute.xlu0 %3725
        %3727 = vrot.lane.b32.xlu0 %v3719, 113
        %v3728 = vpop.permute.xlu0 %3727
        %v3729 = vsel %vm433, %v3724, %v3726
        %v3730 = vsel %vm433, %v3726, %v3728
        %v3733 = vsel %vm296, %v3729, 0.0
        %v3734 = vsel %vm297, %v3730, 0.0
        %3735 = vst [vmem:[#allocation3 + $0xc0] sm:$0xf] %v3733
        %3736 = vst [vmem:[#allocation3 + $0xc8] sm:$0xf] %v3734
        %v3737 = vld [vmem:[#allocation2 + $0x28] sm:$0xf]
        %v3738 = vld [vmem:[#allocation2 + $0x30] sm:$0xf]
        %v3739 = vld [vmem:[#allocation2 + $0x38] sm:$0xf]
        %v3743 = vrot.slane %v3737, 4
        %v3744 = vrot.slane %v3738, 4
        %v3745 = vrot.slane %v3739, 4
        %3746 = vrot.lane.b32.xlu0 %v3743, 112
        %v3747 = vpop.permute.xlu0 %3746
        %3748 = vrot.lane.b32.xlu0 %v3744, 112
        %v3749 = vpop.permute.xlu0 %3748
        %3750 = vrot.lane.b32.xlu0 %v3745, 112
        %v3751 = vpop.permute.xlu0 %3750
        %v3752 = vsel %vm457, %v3747, %v3749
        %v3753 = vsel %vm457, %v3749, %v3751
        %3756 = vst [vmem:[#allocation3 + $0xc0] sm:$0xf0] %v3752
        %3757 = vst [vmem:[#allocation3 + $0xc8] sm:$0xf0] %v3753
        %v3758 = vld [vmem:[#allocation2 + $0x28] sm:$0xf]
        %v3759 = vld [vmem:[#allocation2 + $0x30] sm:$0xf]
        %v3760 = vld [vmem:[#allocation2 + $0x38] sm:$0xf]
        %3764 = vrot.lane.b32.xlu0 %v3758, 111
        %v3765 = vpop.permute.xlu0 %3764
        %3766 = vrot.lane.b32.xlu0 %v3759, 111
        %v3767 = vpop.permute.xlu0 %3766
        %3768 = vrot.lane.b32.xlu0 %v3760, 111
        %v3769 = vpop.permute.xlu0 %3768
        %v3770 = vsel %vm476, %v3765, %v3767
        %v3771 = vsel %vm476, %v3767, %v3769
        %v3774 = vsel %vm343, %v3770, 0.0
        %v3775 = vsel %vm344, %v3771, 0.0
        %3776 = vst [vmem:[#allocation3 + $0xd0] sm:$0xf] %v3774
        %3777 = vst [vmem:[#allocation3 + $0xd8] sm:$0xf] %v3775
        %s3778 = scalar_lea.vmem [#allocation4], 80
        %v3779 = vld [vmem:[%s3778] sm:$0xff]
        %v3780 = vld [vmem:[#allocation3] sm:$0xff]
        %v3781 = vld [vmem:[#allocation3 + $0x8] sm:$0xff]
        %v3782 = vld [vmem:[#allocation3 + $0x10] sm:$0xff]
        %v3783 = vld [vmem:[#allocation3 + $0x18] sm:$0xff]
        %v3784 = vld [vmem:[#allocation3 + $0x20] sm:$0xff]
        %v3785 = vld [vmem:[#allocation3 + $0x28] sm:$0xff]
        %v3786 = vld [vmem:[#allocation3 + $0x30] sm:$0xff]
        %v3787 = vld [vmem:[#allocation3 + $0x38] sm:$0xff]
        %v3788 = vld [vmem:[#allocation3 + $0x40] sm:$0xff]
        %v3789 = vld [vmem:[#allocation3 + $0x48] sm:$0xff]
        %v3790 = vld [vmem:[#allocation3 + $0x50] sm:$0xff]
        %v3791 = vld [vmem:[#allocation3 + $0x58] sm:$0xff]
        %v3792 = vld [vmem:[#allocation3 + $0x60] sm:$0xff]
        %v3793 = vld [vmem:[#allocation3 + $0x68] sm:$0xff]
        %v3794 = vld [vmem:[#allocation3 + $0x70] sm:$0xff]
        %v3795 = vld [vmem:[#allocation3 + $0x78] sm:$0xff]
        %v3796 = vld [vmem:[#allocation3 + $0x80] sm:$0xff]
        %v3797 = vld [vmem:[#allocation3 + $0x88] sm:$0xff]
        %v3798 = vld [vmem:[#allocation3 + $0x90] sm:$0xff]
        %v3799 = vld [vmem:[#allocation3 + $0x98] sm:$0xff]
        %v3800 = vld [vmem:[#allocation3 + $0xa0] sm:$0xff]
        %v3801 = vld [vmem:[#allocation3 + $0xa8] sm:$0xff]
        %v3802 = vld [vmem:[#allocation3 + $0xb0] sm:$0xff]
        %v3803 = vld [vmem:[#allocation3 + $0xb8] sm:$0xff]
        %v3804 = vld [vmem:[#allocation3 + $0xc0] sm:$0xff]
        %v3805 = vld [vmem:[#allocation3 + $0xc8] sm:$0xff]
        %v3806 = vld [vmem:[#allocation3 + $0xd0] sm:$0xf]
        %v3807 = vld [vmem:[#allocation3 + $0xd8] sm:$0xf]
        %s3808 = scalar_lea.vmem %s2, 40
        %v3809 = vld [vmem:[%s3808] sm:$0xf]
        %3811 = vset.pattern.permute.xlu0 0
        %3812 = vperm.xlu0 %3811, %v3809
        %v3813 = vpop.permute.xlu0 %3812
        %v3816 = vsel %vm1127, %v3779, 0
        %v3819 = vsel %vm506, %v3806, 0
        %v3822 = vsel %vm506, %v3807, 0
        %3824 = vmatprep.subr.mxu0 %v3781
        %3825 = vmatpush1.msra.mxu0 %v3780
        %3826 = vmatprep.subr.mxu0 %v3783
        %3827 = vmatpush1.msra.mxu0 %v3782
        %3828 = vmatprep.subr.mxu0 %v3785
        %3829 = vmatpush1.msra.mxu0 %v3784
        %3830 = vmatprep.subr.mxu0 %v3787
        %3831 = vmatpush1.msra.mxu0 %v3786
        %3832 = vmatprep.subr.mxu0 %v3789
        %3833 = vmatpush1.msra.mxu0 %v3788
        %3834 = vmatprep.subr.mxu0 %v3791
        %3835 = vmatpush1.msra.mxu0 %v3790
        %3836 = vmatprep.subr.mxu0 %v3793
        %3837 = vmatpush1.msra.mxu0 %v3792
        %3838 = vmatprep.subr.mxu0 %v3795
        %3839 = vmatpush1.msra.mxu0 %v3794
        %3840 = vmatprep.subr.mxu0 %v3797
        %3841 = vmatpush1.msra.mxu0 %v3796
        %3842 = vmatprep.subr.mxu0 %v3799
        %3843 = vmatpush1.msra.mxu0 %v3798
        %3844 = vmatprep.subr.mxu0 %v3801
        %3845 = vmatpush1.msra.mxu0 %v3800
        %3846 = vmatprep.subr.mxu0 %v3803
        %3847 = vmatpush1.msra.mxu0 %v3802
        %3848 = vmatprep.subr.mxu0 %v3805
        %3849 = vmatpush1.msra.mxu0 %v3804
        %3850 = vmatprep.subr.mxu0 %v3822
        %3851 = vmatpush1.msra.mxu0 %v3819
        %3852 = vmatprep.subr.mxu0 0.0
        %3853 = vmatpush1.msra.mxu0 0.0
        %3854 = vmatprep.subr.mxu0 0.0
        %3855 = vmatpush1.msra.mxu0 0.0
        %3856 = vmatprep.subr.mxu0 0.0
        %3857 = vmatpush1.msra.mxu0 0.0
        %3858 = vmatprep.subr.mxu0 0.0
        %3859 = vmatpush1.msra.mxu0 0.0
        %3860 = vmatprep.subr.mxu0 0.0
        %3861 = vmatpush1.msra.mxu0 0.0
        %3862 = vmatprep.subr.mxu0 0.0
        %3863 = vmatpush1.msra.mxu0 0.0
        %3864 = vmatprep.subr.mxu0 0.0
        %3865 = vmatpush1.msra.mxu0 0.0
        %3866 = vmatprep.subr.mxu0 0.0
        %3867 = vmatpush1.msra.mxu0 0.0
        %3868 = vmatprep.subr.mxu0 0.0
        %3869 = vmatpush1.msra.mxu0 0.0
        %3870 = vmatprep.subr.mxu0 0.0
        %3871 = vmatpush1.msra.mxu0 0.0
        %3872 = vmatprep.subr.mxu0 0.0
        %3873 = vmatpush1.msra.mxu0 0.0
        %3874 = vmatprep.subr.mxu0 0.0
        %3875 = vmatpush1.msra.mxu0 0.0
        %3876 = vmatprep.subr.mxu0 0.0
        %3877 = vmatpush1.msra.mxu0 0.0
        %3878 = vmatprep.subr.mxu0 0.0
        %3879 = vmatpush1.msra.mxu0 0.0
        %3880 = vmatprep.subr.mxu0 0.0
        %3881 = vmatpush1.msra.mxu0 0.0
        %3882 = vmatprep.subr.mxu0 0.0
        %3883 = vmatpush1.msra.mxu0 0.0
        %3884 = vmatprep.subr.mxu0 0.0
        %3885 = vmatpush1.msra.mxu0 0.0
        %3886 = vmatprep.subr.mxu0 0.0
        %3887 = vmatpush1.msra.mxu0 0.0
        %3888 = vmatprep.mubr.f32.mxu0 0.0
        %3889 = vmatmul.mubr.f32.gmra.mrb[0].mxu0 %v3816
        %v3890 = vpop.f32.mrb[0].mxu0
        %v3891 = vadd.f32 %v3813, %v3890
        %v3892 = vpop.f32.mrb[0].mxu0
        %v3893 = vadd.f32 %v3813, %v3892
        %3894 = vdwg.mxu0
        %v3895 = vmul.f32 %v3891, 0.2
        %v3896 = vmul.f32 %v3893, 0.2
        %v3897 = vmax.f32 %v3891, %v3895
        %v3898 = vmax.f32 %v3893, %v3896
        %v3901 = vrot.slane %v3897, 4
        %v3902 = vrot.slane %v3898, 4
        %3905 = vst [vmem:[#allocation2 + $0x28] sm:$0xf0] %v3901
        %3906 = vst [vmem:[#allocation2 + $0x30] sm:$0xf0] %v3902
        %v3907 = vld [vmem:[#allocation2 + $0x20] sm:$0xf0]
        %v3908 = vld [vmem:[#allocation2 + $0x28] sm:$0xf0]
        %v3909 = vld [vmem:[#allocation2 + $0x30] sm:$0xf0]
        %v3913 = vrot.slane %v3907, 4
        %v3914 = vrot.slane %v3908, 4
        %v3915 = vrot.slane %v3909, 4
        %3916 = vrot.lane.b32.xlu0 %v3913, 17
        %v3917 = vpop.permute.xlu0 %3916
        %3918 = vrot.lane.b32.xlu0 %v3914, 17
        %v3919 = vpop.permute.xlu0 %3918
        %3920 = vrot.lane.b32.xlu0 %v3915, 17
        %v3921 = vpop.permute.xlu0 %3920
        %v3922 = vsel %vm307, %v3917, %v3919
        %v3923 = vsel %vm307, %v3919, %v3921
        %v3926 = vsel %vm296, %v3922, 0.0
        %v3927 = vsel %vm297, %v3923, 0.0
        %v3930 = vrot.slane %v3926, 4
        %v3931 = vrot.slane %v3927, 4
        %3934 = vst [vmem:[#allocation3 + $0xd0] sm:$0xf0] %v3930
        %3935 = vst [vmem:[#allocation3 + $0xd8] sm:$0xf0] %v3931
        %v3936 = vld [vmem:[#allocation2 + $0x20] sm:$0xf0]
        %v3937 = vld [vmem:[#allocation2 + $0x28] sm:$0xf0]
        %v3938 = vld [vmem:[#allocation2 + $0x30] sm:$0xf0]
        %v3942 = vrot.slane %v3936, 4
        %v3943 = vrot.slane %v3937, 4
        %v3944 = vrot.slane %v3938, 4
        %3945 = vrot.lane.b32.xlu0 %v3942, 16
        %v3946 = vpop.permute.xlu0 %3945
        %3947 = vrot.lane.b32.xlu0 %v3943, 16
        %v3948 = vpop.permute.xlu0 %3947
        %3949 = vrot.lane.b32.xlu0 %v3944, 16
        %v3950 = vpop.permute.xlu0 %3949
        %v3951 = vsel %vm331, %v3946, %v3948
        %v3952 = vsel %vm331, %v3948, %v3950
        %3955 = vst [vmem:[#allocation3 + $0xe0] sm:$0xf] %v3951
        %3956 = vst [vmem:[#allocation3 + $0xe8] sm:$0xf] %v3952
        %v3957 = vld [vmem:[#allocation2 + $0x20] sm:$0xf0]
        %v3958 = vld [vmem:[#allocation2 + $0x28] sm:$0xf0]
        %v3959 = vld [vmem:[#allocation2 + $0x30] sm:$0xf0]
        %v3963 = vrot.slane %v3957, 4
        %v3964 = vrot.slane %v3958, 4
        %v3965 = vrot.slane %v3959, 4
        %3966 = vrot.lane.b32.xlu0 %v3963, 15
        %v3967 = vpop.permute.xlu0 %3966
        %3968 = vrot.lane.b32.xlu0 %v3964, 15
        %v3969 = vpop.permute.xlu0 %3968
        %3970 = vrot.lane.b32.xlu0 %v3965, 15
        %v3971 = vpop.permute.xlu0 %3970
        %v3972 = vsel %vm354, %v3967, %v3969
        %v3973 = vsel %vm354, %v3969, %v3971
        %v3976 = vsel %vm343, %v3972, 0.0
        %v3977 = vsel %vm344, %v3973, 0.0
        %v3980 = vrot.slane %v3976, 4
        %v3981 = vrot.slane %v3977, 4
        %3984 = vst [vmem:[#allocation3 + $0xe0] sm:$0xf0] %v3980
        %3985 = vst [vmem:[#allocation3 + $0xe8] sm:$0xf0] %v3981
        %v3986 = vld [vmem:[#allocation2 + $0x20] sm:$0xf0]
        %v3987 = vld [vmem:[#allocation2 + $0x28] sm:$0xf0]
        %v3988 = vld [vmem:[#allocation2 + $0x30] sm:$0xf0]
        %v3992 = vrot.slane %v3986, 4
        %v3993 = vrot.slane %v3987, 4
        %v3994 = vrot.slane %v3988, 4
        %3995 = vrot.lane.b32.xlu0 %v3992, 1
        %v3996 = vpop.permute.xlu0 %3995
        %3997 = vrot.lane.b32.xlu0 %v3993, 1
        %v3998 = vpop.permute.xlu0 %3997
        %3999 = vrot.lane.b32.xlu0 %v3994, 1
        %v4000 = vpop.permute.xlu0 %3999
        %v4001 = vsel %vm375, %v3996, %v3998
        %v4002 = vsel %vm375, %v3998, %v4000
        %v4005 = vsel %vm296, %v4001, 0.0
        %v4006 = vsel %vm297, %v4002, 0.0
        %4007 = vst [vmem:[#allocation3 + $0xf0] sm:$0xf] %v4005
        %4008 = vst [vmem:[#allocation3 + $0xf8] sm:$0xf] %v4006
        %v4009 = vld [vmem:[#allocation2 + $0x28] sm:$0xf0]
        %v4010 = vld [vmem:[#allocation2 + $0x30] sm:$0xf0]
        %4011 = vst [vmem:[#allocation3 + $0xf0] sm:$0xf0] %v4009
        %4012 = vst [vmem:[#allocation3 + $0xf8] sm:$0xf0] %v4010
        %v4013 = vld [vmem:[#allocation2 + $0x28] sm:$0xf0]
        %v4014 = vld [vmem:[#allocation2 + $0x30] sm:$0xf0]
        %v4015 = vld [vmem:[#allocation2 + $0x38] sm:$0xf0]
        %v4019 = vrot.slane %v4013, 4
        %v4020 = vrot.slane %v4014, 4
        %v4021 = vrot.slane %v4015, 4
        %4022 = vrot.lane.b32.xlu0 %v4019, 127
        %v4023 = vpop.permute.xlu0 %4022
        %4024 = vrot.lane.b32.xlu0 %v4020, 127
        %v4025 = vpop.permute.xlu0 %4024
        %4026 = vrot.lane.b32.xlu0 %v4021, 127
        %v4027 = vpop.permute.xlu0 %4026
        %v4028 = vsel %vm406, %v4023, %v4025
        %v4029 = vsel %vm406, %v4025, %v4027
        %v4032 = vsel %vm343, %v4028, 0.0
        %v4033 = vsel %vm344, %v4029, 0.0
        %4034 = vst [vmem:[#allocation3 + $0x100] sm:$0xf] %v4032
        %4035 = vst [vmem:[#allocation3 + $0x108] sm:$0xf] %v4033
        %v4036 = vld [vmem:[#allocation2 + $0x28] sm:$0xf0]
        %v4037 = vld [vmem:[#allocation2 + $0x30] sm:$0xf0]
        %v4038 = vld [vmem:[#allocation2 + $0x38] sm:$0xf0]
        %v4042 = vrot.slane %v4036, 4
        %v4043 = vrot.slane %v4037, 4
        %v4044 = vrot.slane %v4038, 4
        %4045 = vrot.lane.b32.xlu0 %v4042, 113
        %v4046 = vpop.permute.xlu0 %4045
        %4047 = vrot.lane.b32.xlu0 %v4043, 113
        %v4048 = vpop.permute.xlu0 %4047
        %4049 = vrot.lane.b32.xlu0 %v4044, 113
        %v4050 = vpop.permute.xlu0 %4049
        %v4051 = vsel %vm433, %v4046, %v4048
        %v4052 = vsel %vm433, %v4048, %v4050
        %v4055 = vsel %vm296, %v4051, 0.0
        %v4056 = vsel %vm297, %v4052, 0.0
        %v4059 = vrot.slane %v4055, 4
        %v4060 = vrot.slane %v4056, 4
        %4063 = vst [vmem:[#allocation3 + $0x100] sm:$0xf0] %v4059
        %4064 = vst [vmem:[#allocation3 + $0x108] sm:$0xf0] %v4060
        %v4065 = vld [vmem:[#allocation2 + $0x28] sm:$0xf0]
        %v4066 = vld [vmem:[#allocation2 + $0x30] sm:$0xf0]
        %v4067 = vld [vmem:[#allocation2 + $0x38] sm:$0xf0]
        %v4071 = vrot.slane %v4065, 4
        %v4072 = vrot.slane %v4066, 4
        %v4073 = vrot.slane %v4067, 4
        %4074 = vrot.lane.b32.xlu0 %v4071, 112
        %v4075 = vpop.permute.xlu0 %4074
        %4076 = vrot.lane.b32.xlu0 %v4072, 112
        %v4077 = vpop.permute.xlu0 %4076
        %4078 = vrot.lane.b32.xlu0 %v4073, 112
        %v4079 = vpop.permute.xlu0 %4078
        %v4080 = vsel %vm457, %v4075, %v4077
        %v4081 = vsel %vm457, %v4077, %v4079
        %4084 = vst [vmem:[#allocation3 + $0x110] sm:$0xf] %v4080
        %4085 = vst [vmem:[#allocation3 + $0x118] sm:$0xf] %v4081
        %v4086 = vld [vmem:[#allocation2 + $0x28] sm:$0xf0]
        %v4087 = vld [vmem:[#allocation2 + $0x30] sm:$0xf0]
        %v4088 = vld [vmem:[#allocation2 + $0x38] sm:$0xf0]
        %v4092 = vrot.slane %v4086, 4
        %v4093 = vrot.slane %v4087, 4
        %v4094 = vrot.slane %v4088, 4
        %4095 = vrot.lane.b32.xlu0 %v4092, 111
        %v4096 = vpop.permute.xlu0 %4095
        %4097 = vrot.lane.b32.xlu0 %v4093, 111
        %v4098 = vpop.permute.xlu0 %4097
        %4099 = vrot.lane.b32.xlu0 %v4094, 111
        %v4100 = vpop.permute.xlu0 %4099
        %v4101 = vsel %vm476, %v4096, %v4098
        %v4102 = vsel %vm476, %v4098, %v4100
        %v4105 = vsel %vm343, %v4101, 0.0
        %v4106 = vsel %vm344, %v4102, 0.0
        %v4109 = vrot.slane %v4105, 4
        %v4110 = vrot.slane %v4106, 4
        %4113 = vst [vmem:[#allocation3 + $0x110] sm:$0xf0] %v4109
        %4114 = vst [vmem:[#allocation3 + $0x118] sm:$0xf0] %v4110
        %s4115 = scalar_lea.vmem [#allocation4], 88
        %v4116 = vld [vmem:[%s4115] sm:$0xff]
        %v4117 = vld [vmem:[#allocation3] sm:$0xff]
        %v4118 = vld [vmem:[#allocation3 + $0x8] sm:$0xff]
        %v4119 = vld [vmem:[#allocation3 + $0x10] sm:$0xff]
        %v4120 = vld [vmem:[#allocation3 + $0x18] sm:$0xff]
        %v4121 = vld [vmem:[#allocation3 + $0x20] sm:$0xff]
        %v4122 = vld [vmem:[#allocation3 + $0x28] sm:$0xff]
        %v4123 = vld [vmem:[#allocation3 + $0x30] sm:$0xff]
        %v4124 = vld [vmem:[#allocation3 + $0x38] sm:$0xff]
        %v4125 = vld [vmem:[#allocation3 + $0x40] sm:$0xff]
        %v4126 = vld [vmem:[#allocation3 + $0x48] sm:$0xff]
        %v4127 = vld [vmem:[#allocation3 + $0x50] sm:$0xff]
        %v4128 = vld [vmem:[#allocation3 + $0x58] sm:$0xff]
        %v4129 = vld [vmem:[#allocation3 + $0x60] sm:$0xff]
        %v4130 = vld [vmem:[#allocation3 + $0x68] sm:$0xff]
        %v4131 = vld [vmem:[#allocation3 + $0x70] sm:$0xff]
        %v4132 = vld [vmem:[#allocation3 + $0x78] sm:$0xff]
        %v4133 = vld [vmem:[#allocation3 + $0x80] sm:$0xff]
        %v4134 = vld [vmem:[#allocation3 + $0x88] sm:$0xff]
        %v4135 = vld [vmem:[#allocation3 + $0x90] sm:$0xff]
        %v4136 = vld [vmem:[#allocation3 + $0x98] sm:$0xff]
        %v4137 = vld [vmem:[#allocation3 + $0xa0] sm:$0xff]
        %v4138 = vld [vmem:[#allocation3 + $0xa8] sm:$0xff]
        %v4139 = vld [vmem:[#allocation3 + $0xb0] sm:$0xff]
        %v4140 = vld [vmem:[#allocation3 + $0xb8] sm:$0xff]
        %v4141 = vld [vmem:[#allocation3 + $0xc0] sm:$0xff]
        %v4142 = vld [vmem:[#allocation3 + $0xc8] sm:$0xff]
        %v4143 = vld [vmem:[#allocation3 + $0xd0] sm:$0xff]
        %v4144 = vld [vmem:[#allocation3 + $0xd8] sm:$0xff]
        %v4145 = vld [vmem:[#allocation3 + $0xe0] sm:$0xff]
        %v4146 = vld [vmem:[#allocation3 + $0xe8] sm:$0xff]
        %v4147 = vld [vmem:[#allocation3 + $0xf0] sm:$0xff]
        %v4148 = vld [vmem:[#allocation3 + $0xf8] sm:$0xff]
        %v4149 = vld [vmem:[#allocation3 + $0x100] sm:$0xff]
        %v4150 = vld [vmem:[#allocation3 + $0x108] sm:$0xff]
        %v4151 = vld [vmem:[#allocation3 + $0x110] sm:$0xff]
        %v4152 = vld [vmem:[#allocation3 + $0x118] sm:$0xff]
        %s4153 = scalar_lea.vmem %s2, 44
        %v4154 = vld [vmem:[%s4153] sm:$0xf]
        %4156 = vset.pattern.permute.xlu0 0
        %4157 = vperm.xlu0 %4156, %v4154
        %v4158 = vpop.permute.xlu0 %4157
        %v4161 = vcombine.high %v4116, %v4116
        %v4162 = vsel %vm331, %v4161, 0
        %4164 = vmatprep.subr.mxu0 %v4118
        %4165 = vmatpush1.msra.mxu0 %v4117
        %4166 = vmatprep.subr.mxu0 %v4120
        %4167 = vmatpush1.msra.mxu0 %v4119
        %4168 = vmatprep.subr.mxu0 %v4122
        %4169 = vmatpush1.msra.mxu0 %v4121
        %4170 = vmatprep.subr.mxu0 %v4124
        %4171 = vmatpush1.msra.mxu0 %v4123
        %4172 = vmatprep.subr.mxu0 %v4126
        %4173 = vmatpush1.msra.mxu0 %v4125
        %4174 = vmatprep.subr.mxu0 %v4128
        %4175 = vmatpush1.msra.mxu0 %v4127
        %4176 = vmatprep.subr.mxu0 %v4130
        %4177 = vmatpush1.msra.mxu0 %v4129
        %4178 = vmatprep.subr.mxu0 %v4132
        %4179 = vmatpush1.msra.mxu0 %v4131
        %4180 = vmatprep.subr.mxu0 %v4134
        %4181 = vmatpush1.msra.mxu0 %v4133
        %4182 = vmatprep.subr.mxu0 %v4136
        %4183 = vmatpush1.msra.mxu0 %v4135
        %4184 = vmatprep.subr.mxu0 %v4138
        %4185 = vmatpush1.msra.mxu0 %v4137
        %4186 = vmatprep.subr.mxu0 %v4140
        %4187 = vmatpush1.msra.mxu0 %v4139
        %4188 = vmatprep.subr.mxu0 %v4142
        %4189 = vmatpush1.msra.mxu0 %v4141
        %4190 = vmatprep.subr.mxu0 %v4144
        %4191 = vmatpush1.msra.mxu0 %v4143
        %4192 = vmatprep.subr.mxu0 %v4146
        %4193 = vmatpush1.msra.mxu0 %v4145
        %4194 = vmatprep.subr.mxu0 %v4148
        %4195 = vmatpush1.msra.mxu0 %v4147
        %4196 = vmatprep.subr.mxu0 %v4150
        %4197 = vmatpush1.msra.mxu0 %v4149
        %4198 = vmatprep.subr.mxu0 %v4152
        %4199 = vmatpush1.msra.mxu0 %v4151
        %4200 = vmatprep.subr.mxu0 0.0
        %4201 = vmatpush1.msra.mxu0 0.0
        %4202 = vmatprep.subr.mxu0 0.0
        %4203 = vmatpush1.msra.mxu0 0.0
        %4204 = vmatprep.subr.mxu0 0.0
        %4205 = vmatpush1.msra.mxu0 0.0
        %4206 = vmatprep.subr.mxu0 0.0
        %4207 = vmatpush1.msra.mxu0 0.0
        %4208 = vmatprep.subr.mxu0 0.0
        %4209 = vmatpush1.msra.mxu0 0.0
        %4210 = vmatprep.subr.mxu0 0.0
        %4211 = vmatpush1.msra.mxu0 0.0
        %4212 = vmatprep.subr.mxu0 0.0
        %4213 = vmatpush1.msra.mxu0 0.0
        %4214 = vmatprep.subr.mxu0 0.0
        %4215 = vmatpush1.msra.mxu0 0.0
        %4216 = vmatprep.subr.mxu0 0.0
        %4217 = vmatpush1.msra.mxu0 0.0
        %4218 = vmatprep.subr.mxu0 0.0
        %4219 = vmatpush1.msra.mxu0 0.0
        %4220 = vmatprep.subr.mxu0 0.0
        %4221 = vmatpush1.msra.mxu0 0.0
        %4222 = vmatprep.subr.mxu0 0.0
        %4223 = vmatpush1.msra.mxu0 0.0
        %4224 = vmatprep.subr.mxu0 0.0
        %4225 = vmatpush1.msra.mxu0 0.0
        %4226 = vmatprep.subr.mxu0 0.0
        %4227 = vmatpush1.msra.mxu0 0.0
        %4228 = vmatprep.mubr.f32.mxu0 %v4162
        %4229 = vmatmul.mubr.f32.gmra.mrb[0].mxu0 %v4116
        %v4230 = vpop.f32.mrb[0].mxu0
        %v4231 = vadd.f32 %v4158, %v4230
        %v4232 = vpop.f32.mrb[0].mxu0
        %v4233 = vadd.f32 %v4158, %v4232
        %4234 = vdwg.mxu0
        %v4235 = vmul.f32 %v4231, 0.2
        %v4236 = vmul.f32 %v4233, 0.2
        %v4237 = vmax.f32 %v4231, %v4235
        %v4238 = vmax.f32 %v4233, %v4236
        %4239 = vst [vmem:[#allocation2 + $0x48] sm:$0xf] %v4237
        %4240 = vst [vmem:[#allocation2 + $0x50] sm:$0xf] %v4238
        %v4241 = vld [vmem:[#allocation2 + $0x8] sm:$0xff]
        %v4242 = vld [vmem:[#allocation2 + $0x10] sm:$0xff]
        %v4243 = vld [vmem:[#allocation2 + $0x28] sm:$0xff]
        %v4244 = vld [vmem:[#allocation2 + $0x30] sm:$0xff]
        %v4245 = vld [vmem:[#allocation2 + $0x48] sm:$0xf]
        %v4246 = vld [vmem:[#allocation2 + $0x50] sm:$0xf]
        %s4247 = scalar_lea.vmem %s3, 8
        %v4248 = vld [vmem:[%s4247] sm:$0xf]
        %s4249 = scalar_lea.vmem %s4, 8
        %v4250 = vld [vmem:[%s4249] sm:$0xf]
        %4252 = vset.pattern.permute.xlu0 0
        %4253 = vperm.xlu0 %4252, %v4250
        %v4254 = vpop.permute.xlu0 %4253
        %v4257 = vsel %vm1567, %v4248, 0
        %v4260 = vsel %vm506, %v4245, 0
        %v4263 = vsel %vm506, %v4246, 0
        %4265 = vmatprep.subr.mxu0 %v4242
        %4266 = vmatpush1.msra.mxu0 %v4241
        %4267 = vmatprep.subr.mxu0 %v4244
        %4268 = vmatpush1.msra.mxu0 %v4243
        %4269 = vmatprep.subr.mxu0 %v4263
        %4270 = vmatpush1.msra.mxu0 %v4260
        %4271 = vmatprep.subr.mxu0 0.0
        %4272 = vmatpush1.msra.mxu0 0.0
        %4273 = vmatprep.subr.mxu0 0.0
        %4274 = vmatpush1.msra.mxu0 0.0
        %4275 = vmatprep.subr.mxu0 0.0
        %4276 = vmatpush1.msra.mxu0 0.0
        %4277 = vmatprep.subr.mxu0 0.0
        %4278 = vmatpush1.msra.mxu0 0.0
        %4279 = vmatprep.subr.mxu0 0.0
        %4280 = vmatpush1.msra.mxu0 0.0
        %4281 = vmatprep.subr.mxu0 0.0
        %4282 = vmatpush1.msra.mxu0 0.0
        %4283 = vmatprep.subr.mxu0 0.0
        %4284 = vmatpush1.msra.mxu0 0.0
        %4285 = vmatprep.subr.mxu0 0.0
        %4286 = vmatpush1.msra.mxu0 0.0
        %4287 = vmatprep.subr.mxu0 0.0
        %4288 = vmatpush1.msra.mxu0 0.0
        %4289 = vmatprep.subr.mxu0 0.0
        %4290 = vmatpush1.msra.mxu0 0.0
        %4291 = vmatprep.subr.mxu0 0.0
        %4292 = vmatpush1.msra.mxu0 0.0
        %4293 = vmatprep.subr.mxu0 0.0
        %4294 = vmatpush1.msra.mxu0 0.0
        %4295 = vmatprep.subr.mxu0 0.0
        %4296 = vmatpush1.msra.mxu0 0.0
        %4297 = vmatprep.subr.mxu0 0.0
        %4298 = vmatpush1.msra.mxu0 0.0
        %4299 = vmatprep.subr.mxu0 0.0
        %4300 = vmatpush1.msra.mxu0 0.0
        %4301 = vmatprep.subr.mxu0 0.0
        %4302 = vmatpush1.msra.mxu0 0.0
        %4303 = vmatprep.subr.mxu0 0.0
        %4304 = vmatpush1.msra.mxu0 0.0
        %4305 = vmatprep.subr.mxu0 0.0
        %4306 = vmatpush1.msra.mxu0 0.0
        %4307 = vmatprep.subr.mxu0 0.0
        %4308 = vmatpush1.msra.mxu0 0.0
        %4309 = vmatprep.subr.mxu0 0.0
        %4310 = vmatpush1.msra.mxu0 0.0
        %4311 = vmatprep.subr.mxu0 0.0
        %4312 = vmatpush1.msra.mxu0 0.0
        %4313 = vmatprep.subr.mxu0 0.0
        %4314 = vmatpush1.msra.mxu0 0.0
        %4315 = vmatprep.subr.mxu0 0.0
        %4316 = vmatpush1.msra.mxu0 0.0
        %4317 = vmatprep.subr.mxu0 0.0
        %4318 = vmatpush1.msra.mxu0 0.0
        %4319 = vmatprep.subr.mxu0 0.0
        %4320 = vmatpush1.msra.mxu0 0.0
        %4321 = vmatprep.subr.mxu0 0.0
        %4322 = vmatpush1.msra.mxu0 0.0
        %4323 = vmatprep.subr.mxu0 0.0
        %4324 = vmatpush1.msra.mxu0 0.0
        %4325 = vmatprep.subr.mxu0 0.0
        %4326 = vmatpush1.msra.mxu0 0.0
        %4327 = vmatprep.subr.mxu0 0.0
        %4328 = vmatpush1.msra.mxu0 0.0
        %4329 = vmatprep.mubr.f32.mxu0 0.0
        %4330 = vmatmul.mubr.f32.gmra.mrb[0].mxu0 %v4257
        %v4331 = vpop.f32.mrb[0].mxu0
        %v4332 = vadd.f32 %v4254, %v4331
        %v4333 = vpop.f32.mrb[0].mxu0
        %v4334 = vadd.f32 %v4254, %v4333
        %4335 = vdwg.mxu0
        %v4336 = vadd.f32 %v4332, %v4241
        %v4337 = vadd.f32 %v4334, %v4242
        %4338 = vst [vmem:[#allocation2 + $0x8] sm:$0xf] %v4336
        %4339 = vst [vmem:[#allocation2 + $0x10] sm:$0xf] %v4337
        %v4340 = vld [vmem:[#allocation2 + $0x8] sm:$0xf]
        %v4341 = vld [vmem:[#allocation2 + $0x10] sm:$0xf]
        %v4342 = vmul.f32 %v4340, 0.2
        %v4343 = vmul.f32 %v4341, 0.2
        %v4344 = vld [vmem:[%s237] sm:$0xff]
        %v4346 = vcombine.high %v4344, %v4344
        %v4348 = vadd.f32 %v4342, %v4344
        %v4349 = vadd.f32 %v4343, %v4346
        %v4352 = vcombine.low %v4348, %v4349
        %4354 = vst [vmem:[%s232] sm:$0xff] %v4352
        %s4355 = sand.u32 %s138, 1
        %s4356 = scalar_lea.sflag [#allocation6], %s4355
        %s4357 = sand.u32 %s138, 1
        %s4358 = smul.addr %s4357, 8
        %s4359 = scalar_lea.vmem [#allocation7], %s4358
        // Predicated region
        $region45: #{tpu_custom_call.1} parent=39 // pred_check
          %p4360 = pneg %p148
        $region46: #{tpu_custom_call.1} parent=39 // pred_check_branch
          %4362 = sbr.rel (%p4360) target = $region48
        $region47: #{tpu_custom_call.1} parent=39 // pred_region
          %s4364 = ssub.s32 128, 128
          %4365 = vsyncadd %s4356, %s4364
          %s4366 = smul.addr %s20, 2
          %s4367 = smul.addr %s4366, 64
          %s4368 = scalar_lea.hbm %s5, %s4367
          %s4370 = sshll.u32 %s4359, 4
          %s4371 = int_to_ptr.vmem [resolvable:$true] %s4370
          %4373 = dma.vmem_to_hbm [thread:$0]  %s4371, 128, %s4368, %s4356
        $region48: #{tpu_custom_call.1} parent=39 // pred_fallthru
          _
      $region40: #{tpu_custom_call.1} parent=5 // pred_fallthru
        _
      %p4374 = scmp.le.s32.totalorder 2, %s15
      // Predicated region
      $region49: #{tpu_custom_call.1} parent=5 // pred_check
        %p4375 = pneg %p4374
      $region50: #{tpu_custom_call.1} parent=5 // pred_check_branch
        %4377 = sbr.rel (%p4375) target = $region52
      $region51: #{tpu_custom_call.1} parent=5 // pred_region
        %s4378 = ssub.s32 %s15, 2
        // Predicated region
        $region53: #{tpu_custom_call.1} parent=51 // pred_check
          %p4379 = pneg %p154
        $region54: #{tpu_custom_call.1} parent=51 // pred_check_branch
          %4381 = sbr.rel (%p4379) target = $region56
        $region55: #{tpu_custom_call.1} parent=51 // pred_region
          %s4382 = sand.u32 %s139, 1
          %s4383 = scalar_lea.sflag [#allocation6], %s4382
          %s4384 = sand.u32 %s139, 1
          %s4385 = smul.addr %s4384, 8
          %s4386 = scalar_lea.vmem [#allocation7], %s4385
          %4387 = dma.done %s4383, 128
        $region56: #{tpu_custom_call.1} parent=51 // pred_fallthru
          _
      $region52: #{tpu_custom_call.1} parent=5 // pred_fallthru
        _
    $region6: #{tpu_custom_call.1} parent=1 // loop_footer
      %s19 = sadd.s32 1, %s15
    $region7: #{tpu_custom_call.1} parent=1 // loop_footer_branch
      %14 = sbr.rel target = $region3
    $region8: #{tpu_custom_call.1} parent=1 // loop_exit
      _
    %4388 = vsyncpa [#allocation5], 1
    %s4389 = scalar_lea.sflag [#allocation5], 1
    %4390 = vsyncpa %s4389, 1
    %4391 = vsyncpa [#allocation6], 1
    %s4392 = scalar_lea.sflag [#allocation6], 1
    %4393 = vsyncpa %s4392, 1

</llo_original>
